<compile_context>
chip_gen: v5e
topology: v5e:2x2
jax: 0.10.0
libtpu: 0.0.40
codegen_flags: <defaults>
</compile_context>

<pallas_src>
import jax
import jax.numpy as jnp
from jax.experimental import pallas as pl
from jax.experimental.pallas import tpu as pltpu

BN_EPS = 1e-5
LANE = 128  # channel padding target: lane-dense loads/stores


# ------------------------------ Pallas kernel ------------------------------- #

def _make_block_kernel(s, ho, wo, cin_p, cout_p, has_proj):
    """Fused BasicBlock kernel: conv1+bn1+relu -> conv2+bn2 -> +residual -> relu."""
    npix = ho * wo
    k1 = 9 * cin_p   # conv1 contraction length (im2col K)
    k2 = 9 * cout_p  # conv2 contraction length

    def kernel(xph_ref, w1_ref, b1_ref, w2_ref, b2_ref, *rest):
        if has_proj:
            wd_ref, bd_ref, o_ref, col_ref, ypad_ref = rest
        else:
            o_ref, col_ref, ypad_ref = rest

        # ---- conv1 (3x3 / stride s) + folded BN1 + ReLU -------------------- #
        # Pack the 9 shifted taps (read directly from the bf16 input block)
        # into a bf16 im2col scratch, then contract once over K = 9*cin_p.
        for ky in range(3):
            for kx in range(3):
                idx = ky * 3 + kx
                ph = (ky % s) * s + (kx % s)
                ro, co = ky // s, kx // s
                tap = xph_ref[ph, ro:ro + ho, co:co + wo, :]
                col_ref[:, idx * cin_p:(idx + 1) * cin_p] = tap.reshape(npix, cin_p)
        y1 = jnp.dot(col_ref[:, :k1], w1_ref[...],
                     preferred_element_type=jnp.float32) + b1_ref[...]
        y1 = jnp.maximum(y1, 0.0)

        # Halo'd bf16 copy of y1 so conv2's taps (zero padding = 1) stay in
        # VMEM.  Only the 1-pixel border is zeroed (interior fully rewritten
        # below); done every step so "parallel" batch sharding stays correct.
        zrow = jnp.zeros((1, wo + 2, cout_p), jnp.bfloat16)
        zcol = jnp.zeros((ho + 2, 1, cout_p), jnp.bfloat16)
        ypad_ref[0:1] = zrow
        ypad_ref[ho + 1:ho + 2] = zrow
        ypad_ref[:, 0:1, :] = zcol
        ypad_ref[:, wo + 1:wo + 2, :] = zcol
        ypad_ref[1:ho + 1, 1:wo + 1, :] = (
            y1.reshape(ho, wo, cout_p).astype(jnp.bfloat16))

        # ---- conv2 (3x3 / stride 1) + folded BN2 --------------------------- #
        for ky in range(3):
            for kx in range(3):
                idx = ky * 3 + kx
                tap = ypad_ref[ky:ky + ho, kx:kx + wo, :]
                col_ref[:, idx * cout_p:(idx + 1) * cout_p] = tap.reshape(npix, cout_p)
        y2 = jnp.dot(col_ref[:, :k2], w2_ref[...],
                     preferred_element_type=jnp.float32) + b2_ref[...]

        # ---- residual branch + final ReLU ----------------------------------- #
        rp = (1 % s) * s + (1 % s)
        off = 1 // s
        xres = xph_ref[rp, off:off + ho, off:off + wo, :].reshape(npix, cin_p)
        if has_proj:
            res = jnp.dot(xres, wd_ref[...],
                          preferred_element_type=jnp.float32) + bd_ref[...]
        else:
            res = xres.astype(jnp.float32)   # identity: cin_p == cout_p

        o_ref[...] = jnp.maximum(y2 + res, 0.0).astype(o_ref.dtype)

    return kernel


# -------------------------------- JAX glue ---------------------------------- #

def _round_up(v, m):
    return (v + m - 1) // m * m


def _fold_conv_bn(w, bn):
    """Fold eval-mode BatchNorm into the conv weight; returns (w*scale, bias)."""
    gamma, beta, mean, var = bn
    scale = gamma / jnp.sqrt(var + BN_EPS)
    return w * scale[:, None, None, None], beta - mean * scale


def _pack_w3x3(w, cin_p, cout_p):
    """(Cout, Cin, 3, 3) -> (9*Cin_p, Cout_p) bf16 for the fused im2col matmul."""
    cout, cin = w.shape[0], w.shape[1]
    w = jnp.transpose(w, (2, 3, 1, 0)).reshape(9, cin, cout)
    w = jnp.pad(w, ((0, 0), (0, cin_p - cin), (0, cout_p - cout)))
    return w.reshape(9 * cin_p, cout_p).astype(jnp.bfloat16)


def _pad_bias(b, cout_p):
    return jnp.pad(b, (0, cout_p - b.shape[0])).astype(jnp.float32).reshape(1, cout_p)


def _make_phases(xp, s):
    """Split the spatially padded NHWC input into s*s stride phases.

    Returns (N*s*s, Hp, Wp, C) where phase (a, b) at (r, c) holds
    x_pad[s*r + a, s*c + b]; every conv tap is then a contiguous slice.
    """
    n, hq, wq, c = xp.shape
    if s == 1:
        return xp, 1, hq, wq
    hp, wp = -(-hq // s), -(-wq // s)
    xp = jnp.pad(xp, ((0, 0), (0, hp * s - hq), (0, wp * s - wq), (0, 0)))
    xp = xp.reshape(n, hp, s, wp, s, c).transpose(0, 2, 4, 1, 3, 5)
    return xp.reshape(n * s * s, hp, wp, c), s * s, hp, wp


def basic_block_pallas(x_nchw, params, stride, has_proj):
    # NCHW f32 in/out mirrors the PyTorch module interface.
    # TODO(synk): when chaining blocks, keep activations in the kernel's
    # channel-padded NHWC bf16 layout between blocks instead of this round-trip.
    x = jnp.transpose(x_nchw, (0, 2, 3, 1)).astype(jnp.float32)  # NCHW -> NHWC
    n, h, w, c_in = x.shape
    c_out = params["w1"].shape[0]
    cin_p, cout_p = _round_up(c_in, LANE), _round_up(c_out, LANE)
    ho = (h + 2 - 3) // stride + 1
    wo = (w + 2 - 3) // stride + 1
    npix = ho * wo

    # Fold BN into weights, pack for the fused-K matmuls (lane-padded channels).
    w1f, b1 = _fold_conv_bn(params["w1"], params["bn1"])
    w2f, b2 = _fold_conv_bn(params["w2"], params["bn2"])
    w1p, b1p = _pack_w3x3(w1f, cin_p, cout_p), _pad_bias(b1, cout_p)
    w2p, b2p = _pack_w3x3(w2f, cout_p, cout_p), _pad_bias(b2, cout_p)

    # Pad input (1-pixel halo + channel pad), ship across HBM as bf16 phases.
    xq = jnp.pad(x, ((0, 0), (1, 1), (1, 1), (0, cin_p - c_in))).astype(jnp.bfloat16)
    xph, n_phases, hp, wp = _make_phases(xq, stride)

    inputs = [xph, w1p, b1p, w2p, b2p]
    in_specs = [
        pl.BlockSpec((n_phases, hp, wp, cin_p), lambda i: (i, 0, 0, 0)),
        pl.BlockSpec((9 * cin_p, cout_p), lambda i: (0, 0)),
        pl.BlockSpec((1, cout_p), lambda i: (0, 0)),
        pl.BlockSpec((9 * cout_p, cout_p), lambda i: (0, 0)),
        pl.BlockSpec((1, cout_p), lambda i: (0, 0)),
    ]
    if has_proj:
        wdf, bd = _fold_conv_bn(params["wd"], params["bnd"])
        wdp = jnp.pad(wdf[:, :, 0, 0].T,
                      ((0, cin_p - c_in), (0, cout_p - c_out))).astype(jnp.bfloat16)
        inputs += [wdp, _pad_bias(bd, cout_p)]
        in_specs += [pl.BlockSpec((cin_p, cout_p), lambda i: (0, 0)),
                     pl.BlockSpec((1, cout_p), lambda i: (0, 0))]

    kernel = _make_block_kernel(stride, ho, wo, cin_p, cout_p, has_proj)
    k_col = 9 * max(cin_p, cout_p)   # shared im2col scratch width (bf16)

    out = pl.pallas_call(
        kernel,
        out_shape=jax.ShapeDtypeStruct((n * npix, cout_p), jnp.bfloat16),
        grid_spec=pltpu.PrefetchScalarGridSpec(
            num_scalar_prefetch=0,
            grid=(n,),
            in_specs=in_specs,
            out_specs=pl.BlockSpec((npix, cout_p), lambda i: (i, 0)),
            scratch_shapes=[
                pltpu.VMEM((npix, k_col), jnp.bfloat16),             # shared im2col
                pltpu.VMEM((ho + 2, wo + 2, cout_p), jnp.bfloat16),  # halo'd y1
            ],
        ),
        compiler_params=pltpu.CompilerParams(
            dimension_semantics=("parallel",),
            vmem_limit_bytes=32 * 1024 * 1024,
        ),
    )(*inputs)

    out = out.reshape(n, ho, wo, cout_p)[..., :c_out].astype(jnp.float32)
    return jnp.transpose(out, (0, 3, 1, 2))  # back to NCHW


# ------------------------ pure-JAX reference (check) ------------------------- #

def ref_basic_block(x_nchw, p, stride, has_proj):
    def conv(x, w, st, pad):
        return jax.lax.conv_general_dilated(
            x, w, (st, st), [(pad, pad), (pad, pad)],
            dimension_numbers=("NCHW", "OIHW", "NCHW"))

    def bn(x, bnp):
        g, b, m, v = bnp
        s = g / jnp.sqrt(v + BN_EPS)
        return x * s[None, :, None, None] + (b - m * s)[None, :, None, None]

    y = jax.nn.relu(bn(conv(x_nchw, p["w1"], stride, 1), p["bn1"]))
    y = bn(conv(y, p["w2"], 1, 1), p["bn2"])
    xr = bn(conv(x_nchw, p["wd"], stride, 0), p["bnd"]) if has_proj else x_nchw
    return jax.nn.relu(xr + y)


# ----------------------------------- main ------------------------------------ #

if __name__ == "__main__":
    key = jax.random.PRNGKey(0)

    def bn_params(k, c):
        ka, kb, kc, kd = jax.random.split(k, 4)
        return (1.0 + 0.1 * jax.random.normal(ka, (c,), jnp.float32),
                0.1 * jax.random.normal(kb, (c,), jnp.float32),
                0.1 * jax.random.normal(kc, (c,), jnp.float32),
                1.0 + 0.1 * jnp.abs(jax.random.normal(kd, (c,), jnp.float32)))

    def make_params(k, c_in, c_out, has_proj):
        ks = jax.random.split(k, 6)
        p = {"w1": 0.1 * jax.random.normal(ks[0], (c_out, c_in, 3, 3), jnp.float32),
             "bn1": bn_params(ks[1], c_out),
             "w2": 0.1 * jax.random.normal(ks[2], (c_out, c_out, 3, 3), jnp.float32),
             "bn2": bn_params(ks[3], c_out)}
        if has_proj:
            p["wd"] = 0.1 * jax.random.normal(ks[4], (c_out, c_in, 1, 1), jnp.float32)
            p["bnd"] = bn_params(ks[5], c_out)
        return p

    # (name, N, c_in, c_out, H, W, is_downsample) — mirrors BasicBlock.__init__
    configs = [
        ("proj_s1",    2, 4, 8, 16, 16, False),  # c_in != c_out -> 1x1/s1 projection
        ("identity",   2, 8, 8, 16, 16, False),  # pure identity residual
        ("downsample", 2, 4, 8, 16, 16, True),   # stride 2 + 1x1/s2 projection
    ]

    keys = jax.random.split(key, len(configs))
    for (name, n, c_in, c_out, h, w, is_ds), k in zip(configs, keys):
        stride = 2 if is_ds else 1
        has_proj = is_ds or (c_in != c_out)
        kp, kx = jax.random.split(k)
        params = make_params(kp, c_in, c_out, has_proj)
        x = jax.random.normal(kx, (n, c_in, h, w), jnp.float32)  # NCHW like PyTorch

        out = jax.block_until_ready(basic_block_pallas(x, params, stride, has_proj))
        ref = ref_basic_block(x, params, stride, has_proj)

        assert out.shape == ref.shape, (name, out.shape, ref.shape)
        # bf16 activations/weights/output with f32 accumulation -> loose tolerance.
        assert bool(jnp.allclose(out, ref, atol=5e-2, rtol=5e-2)), (
            name, float(jnp.max(jnp.abs(out - ref))))

    print("KERNEL_OK")
</pallas_src>

<mosaic_0001>
module attributes {stable_mosaic.version = 11 : i64} {
  func.func @kernel(%arg0: i32, %arg1: memref<1x18x18x128xbf16, #tpu.memory_space<vmem>>, %arg2: memref<1152x128xbf16, #tpu.memory_space<vmem>>, %arg3: memref<1x128xf32, #tpu.memory_space<vmem>>, %arg4: memref<1152x128xbf16, #tpu.memory_space<vmem>>, %arg5: memref<1x128xf32, #tpu.memory_space<vmem>>, %arg6: memref<128x128xbf16, #tpu.memory_space<vmem>>, %arg7: memref<1x128xf32, #tpu.memory_space<vmem>>, %arg8: memref<256x128xbf16, #tpu.memory_space<vmem>>, %arg9: memref<256x1152xbf16, #tpu.memory_space<vmem>>, %arg10: memref<18x18x128xbf16, #tpu.memory_space<vmem>>) attributes {dimension_semantics = [#tpu.dimension_semantics<parallel>], iteration_bounds = array<i64: 2>, scalar_prefetch = 0 : i64, scratch_operands = 2 : i64, tpu.core_type = #tpu.core_type<tc>, window_params = [{transform_indices = @transform_0, window_bounds = array<i64: 1, 18, 18, 128>}, {pipeline_mode = #tpu.pipeline_mode<synchronous>, transform_indices = @transform_1, window_bounds = array<i64: 1152, 128>}, {pipeline_mode = #tpu.pipeline_mode<synchronous>, transform_indices = @transform_2, window_bounds = array<i64: 1, 128>}, {pipeline_mode = #tpu.pipeline_mode<synchronous>, transform_indices = @transform_3, window_bounds = array<i64: 1152, 128>}, {pipeline_mode = #tpu.pipeline_mode<synchronous>, transform_indices = @transform_4, window_bounds = array<i64: 1, 128>}, {pipeline_mode = #tpu.pipeline_mode<synchronous>, transform_indices = @transform_5, window_bounds = array<i64: 128, 128>}, {pipeline_mode = #tpu.pipeline_mode<synchronous>, transform_indices = @transform_6, window_bounds = array<i64: 1, 128>}, {transform_indices = @transform_7, window_bounds = array<i64: 256, 128>}]} {
    %c0 = arith.constant 0 : index
    %c0_0 = arith.constant 0 : index
    %c0_1 = arith.constant 0 : index
    %c0_2 = arith.constant 0 : index
    %0 = vector.load %arg1[%c0, %c0_0, %c0_1, %c0_2] : memref<1x18x18x128xbf16, #tpu.memory_space<vmem>>, vector<1x16x16x128xbf16>
    %1 = vector.shape_cast %0 : vector<1x16x16x128xbf16> to vector<16x16x128xbf16>
    %2 = vector.shape_cast %1 : vector<16x16x128xbf16> to vector<256x128xbf16>
    %c0_3 = arith.constant 0 : index
    %c0_4 = arith.constant 0 : index
    %3 = vector.load %arg9[%c0_3, %c0_4] : memref<256x1152xbf16, #tpu.memory_space<vmem>>, vector<256x128xbf16>
    tpu.vector_store %arg9[%c0_3, %c0_4], %2 {strides = array<i32>} : memref<256x1152xbf16, #tpu.memory_space<vmem>>, vector<256x128xbf16>,
    %c0_5 = arith.constant 0 : index
    %c0_6 = arith.constant 0 : index
    %c1 = arith.constant 1 : index
    %c0_7 = arith.constant 0 : index
    %4 = vector.load %arg1[%c0_5, %c0_6, %c1, %c0_7] : memref<1x18x18x128xbf16, #tpu.memory_space<vmem>>, vector<1x16x16x128xbf16>
    %5 = vector.shape_cast %4 : vector<1x16x16x128xbf16> to vector<16x16x128xbf16>
    %6 = vector.shape_cast %5 : vector<16x16x128xbf16> to vector<256x128xbf16>
    %c0_8 = arith.constant 0 : index
    %c128 = arith.constant 128 : index
    %7 = vector.load %arg9[%c0_8, %c128] : memref<256x1152xbf16, #tpu.memory_space<vmem>>, vector<256x128xbf16>
    tpu.vector_store %arg9[%c0_8, %c128], %6 {strides = array<i32>} : memref<256x1152xbf16, #tpu.memory_space<vmem>>, vector<256x128xbf16>,
    %c0_9 = arith.constant 0 : index
    %c0_10 = arith.constant 0 : index
    %c2 = arith.constant 2 : index
    %c0_11 = arith.constant 0 : index
    %8 = vector.load %arg1[%c0_9, %c0_10, %c2, %c0_11] : memref<1x18x18x128xbf16, #tpu.memory_space<vmem>>, vector<1x16x16x128xbf16>
    %9 = vector.shape_cast %8 : vector<1x16x16x128xbf16> to vector<16x16x128xbf16>
    %10 = vector.shape_cast %9 : vector<16x16x128xbf16> to vector<256x128xbf16>
    %c0_12 = arith.constant 0 : index
    %c256 = arith.constant 256 : index
    %11 = vector.load %arg9[%c0_12, %c256] : memref<256x1152xbf16, #tpu.memory_space<vmem>>, vector<256x128xbf16>
    tpu.vector_store %arg9[%c0_12, %c256], %10 {strides = array<i32>} : memref<256x1152xbf16, #tpu.memory_space<vmem>>, vector<256x128xbf16>,
    %c0_13 = arith.constant 0 : index
    %c1_14 = arith.constant 1 : index
    %c0_15 = arith.constant 0 : index
    %c0_16 = arith.constant 0 : index
    %12 = vector.load %arg1[%c0_13, %c1_14, %c0_15, %c0_16] : memref<1x18x18x128xbf16, #tpu.memory_space<vmem>>, vector<1x16x16x128xbf16>
    %13 = vector.shape_cast %12 : vector<1x16x16x128xbf16> to vector<16x16x128xbf16>
    %14 = vector.shape_cast %13 : vector<16x16x128xbf16> to vector<256x128xbf16>
    %c0_17 = arith.constant 0 : index
    %c384 = arith.constant 384 : index
    %15 = vector.load %arg9[%c0_17, %c384] : memref<256x1152xbf16, #tpu.memory_space<vmem>>, vector<256x128xbf16>
    tpu.vector_store %arg9[%c0_17, %c384], %14 {strides = array<i32>} : memref<256x1152xbf16, #tpu.memory_space<vmem>>, vector<256x128xbf16>,
    %c0_18 = arith.constant 0 : index
    %c1_19 = arith.constant 1 : index
    %c1_20 = arith.constant 1 : index
    %c0_21 = arith.constant 0 : index
    %16 = vector.load %arg1[%c0_18, %c1_19, %c1_20, %c0_21] : memref<1x18x18x128xbf16, #tpu.memory_space<vmem>>, vector<1x16x16x128xbf16>
    %17 = vector.shape_cast %16 : vector<1x16x16x128xbf16> to vector<16x16x128xbf16>
    %18 = vector.shape_cast %17 : vector<16x16x128xbf16> to vector<256x128xbf16>
    %c0_22 = arith.constant 0 : index
    %c512 = arith.constant 512 : index
    %19 = vector.load %arg9[%c0_22, %c512] : memref<256x1152xbf16, #tpu.memory_space<vmem>>, vector<256x128xbf16>
    tpu.vector_store %arg9[%c0_22, %c512], %18 {strides = array<i32>} : memref<256x1152xbf16, #tpu.memory_space<vmem>>, vector<256x128xbf16>,
    %c0_23 = arith.constant 0 : index
    %c1_24 = arith.constant 1 : index
    %c2_25 = arith.constant 2 : index
    %c0_26 = arith.constant 0 : index
    %20 = vector.load %arg1[%c0_23, %c1_24, %c2_25, %c0_26] : memref<1x18x18x128xbf16, #tpu.memory_space<vmem>>, vector<1x16x16x128xbf16>
    %21 = vector.shape_cast %20 : vector<1x16x16x128xbf16> to vector<16x16x128xbf16>
    %22 = vector.shape_cast %21 : vector<16x16x128xbf16> to vector<256x128xbf16>
    %c0_27 = arith.constant 0 : index
    %c640 = arith.constant 640 : index
    %23 = vector.load %arg9[%c0_27, %c640] : memref<256x1152xbf16, #tpu.memory_space<vmem>>, vector<256x128xbf16>
    tpu.vector_store %arg9[%c0_27, %c640], %22 {strides = array<i32>} : memref<256x1152xbf16, #tpu.memory_space<vmem>>, vector<256x128xbf16>,
    %c0_28 = arith.constant 0 : index
    %c2_29 = arith.constant 2 : index
    %c0_30 = arith.constant 0 : index
    %c0_31 = arith.constant 0 : index
    %24 = vector.load %arg1[%c0_28, %c2_29, %c0_30, %c0_31] : memref<1x18x18x128xbf16, #tpu.memory_space<vmem>>, vector<1x16x16x128xbf16>
    %25 = vector.shape_cast %24 : vector<1x16x16x128xbf16> to vector<16x16x128xbf16>
    %26 = vector.shape_cast %25 : vector<16x16x128xbf16> to vector<256x128xbf16>
    %c0_32 = arith.constant 0 : index
    %c768 = arith.constant 768 : index
    %27 = vector.load %arg9[%c0_32, %c768] : memref<256x1152xbf16, #tpu.memory_space<vmem>>, vector<256x128xbf16>
    tpu.vector_store %arg9[%c0_32, %c768], %26 {strides = array<i32>} : memref<256x1152xbf16, #tpu.memory_space<vmem>>, vector<256x128xbf16>,
    %c0_33 = arith.constant 0 : index
    %c2_34 = arith.constant 2 : index
    %c1_35 = arith.constant 1 : index
    %c0_36 = arith.constant 0 : index
    %28 = vector.load %arg1[%c0_33, %c2_34, %c1_35, %c0_36] : memref<1x18x18x128xbf16, #tpu.memory_space<vmem>>, vector<1x16x16x128xbf16>
    %29 = vector.shape_cast %28 : vector<1x16x16x128xbf16> to vector<16x16x128xbf16>
    %30 = vector.shape_cast %29 : vector<16x16x128xbf16> to vector<256x128xbf16>
    %c0_37 = arith.constant 0 : index
    %c896 = arith.constant 896 : index
    %31 = vector.load %arg9[%c0_37, %c896] : memref<256x1152xbf16, #tpu.memory_space<vmem>>, vector<256x128xbf16>
    tpu.vector_store %arg9[%c0_37, %c896], %30 {strides = array<i32>} : memref<256x1152xbf16, #tpu.memory_space<vmem>>, vector<256x128xbf16>,
    %c0_38 = arith.constant 0 : index
    %c2_39 = arith.constant 2 : index
    %c2_40 = arith.constant 2 : index
    %c0_41 = arith.constant 0 : index
    %32 = vector.load %arg1[%c0_38, %c2_39, %c2_40, %c0_41] : memref<1x18x18x128xbf16, #tpu.memory_space<vmem>>, vector<1x16x16x128xbf16>
    %33 = vector.shape_cast %32 : vector<1x16x16x128xbf16> to vector<16x16x128xbf16>
    %34 = vector.shape_cast %33 : vector<16x16x128xbf16> to vector<256x128xbf16>
    %c0_42 = arith.constant 0 : index
    %c1024 = arith.constant 1024 : index
    %35 = vector.load %arg9[%c0_42, %c1024] : memref<256x1152xbf16, #tpu.memory_space<vmem>>, vector<256x128xbf16>
    tpu.vector_store %arg9[%c0_42, %c1024], %34 {strides = array<i32>} : memref<256x1152xbf16, #tpu.memory_space<vmem>>, vector<256x128xbf16>,
    %c0_43 = arith.constant 0 : index
    %c0_44 = arith.constant 0 : index
    %36 = vector.load %arg9[%c0_43, %c0_44] : memref<256x1152xbf16, #tpu.memory_space<vmem>>, vector<256x1152xbf16>
    %c0_45 = arith.constant 0 : index
    %c0_46 = arith.constant 0 : index
    %37 = vector.load %arg2[%c0_45, %c0_46] : memref<1152x128xbf16, #tpu.memory_space<vmem>>, vector<1152x128xbf16>
    %cst = arith.constant dense<0.000000e+00> : vector<256x128xf32>
    %38 = tpu.matmul %36, %37, %cst {dimension_numbers = #tpu.dot_dimension_numbers<[1], [0], [0], [1], [0, 0, 1, 1], [], []>} : vector<256x1152xbf16>, vector<1152x128xbf16>, vector<256x128xf32> -> vector<256x128xf32>
    %c0_47 = arith.constant 0 : index
    %c0_48 = arith.constant 0 : index
    %39 = vector.load %arg3[%c0_47, %c0_48] : memref<1x128xf32, #tpu.memory_space<vmem>>, vector<1x128xf32>
    %40 = vector.broadcast %39 : vector<1x128xf32> to vector<256x128xf32>
    %41 = arith.addf %38, %40 : vector<256x128xf32>
    %cst_49 = arith.constant 0.000000e+00 : f32
    %42 = vector.broadcast %cst_49 : f32 to vector<256x128xf32>
    %43 = arith.maximumf %41, %42 : vector<256x128xf32>
    %cst_50 = arith.constant 0.000000e+00 : bf16
    %44 = vector.broadcast %cst_50 : bf16 to vector<1x18x128xbf16>
    %cst_51 = arith.constant 0.000000e+00 : bf16
    %45 = vector.broadcast %cst_51 : bf16 to vector<18x1x128xbf16>
    %c0_52 = arith.constant 0 : index
    %c0_53 = arith.constant 0 : index
    %c0_54 = arith.constant 0 : index
    %46 = vector.load %arg10[%c0_52, %c0_53, %c0_54] : memref<18x18x128xbf16, #tpu.memory_space<vmem>>, vector<1x18x128xbf16>
    tpu.vector_store %arg10[%c0_52, %c0_53, %c0_54], %44 {strides = array<i32>} : memref<18x18x128xbf16, #tpu.memory_space<vmem>>, vector<1x18x128xbf16>,
    %c17 = arith.constant 17 : index
    %c0_55 = arith.constant 0 : index
    %c0_56 = arith.constant 0 : index
    %47 = vector.load %arg10[%c17, %c0_55, %c0_56] : memref<18x18x128xbf16, #tpu.memory_space<vmem>>, vector<1x18x128xbf16>
    tpu.vector_store %arg10[%c17, %c0_55, %c0_56], %44 {strides = array<i32>} : memref<18x18x128xbf16, #tpu.memory_space<vmem>>, vector<1x18x128xbf16>,
    %c0_57 = arith.constant 0 : index
    %c0_58 = arith.constant 0 : index
    %c0_59 = arith.constant 0 : index
    %48 = vector.load %arg10[%c0_57, %c0_58, %c0_59] : memref<18x18x128xbf16, #tpu.memory_space<vmem>>, vector<18x1x128xbf16>
    tpu.vector_store %arg10[%c0_57, %c0_58, %c0_59], %45 {strides = array<i32>} : memref<18x18x128xbf16, #tpu.memory_space<vmem>>, vector<18x1x128xbf16>,
    %c0_60 = arith.constant 0 : index
    %c17_61 = arith.constant 17 : index
    %c0_62 = arith.constant 0 : index
    %49 = vector.load %arg10[%c0_60, %c17_61, %c0_62] : memref<18x18x128xbf16, #tpu.memory_space<vmem>>, vector<18x1x128xbf16>
    tpu.vector_store %arg10[%c0_60, %c17_61, %c0_62], %45 {strides = array<i32>} : memref<18x18x128xbf16, #tpu.memory_space<vmem>>, vector<18x1x128xbf16>,
    %50 = vector.shape_cast %43 : vector<256x128xf32> to vector<16x16x128xf32>
    %51 = arith.truncf %50 : vector<16x16x128xf32> to vector<16x16x128xbf16>
    %c1_63 = arith.constant 1 : index
    %c1_64 = arith.constant 1 : index
    %c0_65 = arith.constant 0 : index
    %52 = vector.load %arg10[%c1_63, %c1_64, %c0_65] : memref<18x18x128xbf16, #tpu.memory_space<vmem>>, vector<16x16x128xbf16>
    tpu.vector_store %arg10[%c1_63, %c1_64, %c0_65], %51 {strides = array<i32>} : memref<18x18x128xbf16, #tpu.memory_space<vmem>>, vector<16x16x128xbf16>,
    %c0_66 = arith.constant 0 : index
    %c0_67 = arith.constant 0 : index
    %c0_68 = arith.constant 0 : index
    %53 = vector.load %arg10[%c0_66, %c0_67, %c0_68] : memref<18x18x128xbf16, #tpu.memory_space<vmem>>, vector<16x16x128xbf16>
    %54 = vector.shape_cast %53 : vector<16x16x128xbf16> to vector<256x128xbf16>
    %c0_69 = arith.constant 0 : index
    %c0_70 = arith.constant 0 : index
    %55 = vector.load %arg9[%c0_69, %c0_70] : memref<256x1152xbf16, #tpu.memory_space<vmem>>, vector<256x128xbf16>
    tpu.vector_store %arg9[%c0_69, %c0_70], %54 {strides = array<i32>} : memref<256x1152xbf16, #tpu.memory_space<vmem>>, vector<256x128xbf16>,
    %c0_71 = arith.constant 0 : index
    %c1_72 = arith.constant 1 : index
    %c0_73 = arith.constant 0 : index
    %56 = vector.load %arg10[%c0_71, %c1_72, %c0_73] : memref<18x18x128xbf16, #tpu.memory_space<vmem>>, vector<16x16x128xbf16>
    %57 = vector.shape_cast %56 : vector<16x16x128xbf16> to vector<256x128xbf16>
    %c0_74 = arith.constant 0 : index
    %c128_75 = arith.constant 128 : index
    %58 = vector.load %arg9[%c0_74, %c128_75] : memref<256x1152xbf16, #tpu.memory_space<vmem>>, vector<256x128xbf16>
    tpu.vector_store %arg9[%c0_74, %c128_75], %57 {strides = array<i32>} : memref<256x1152xbf16, #tpu.memory_space<vmem>>, vector<256x128xbf16>,
    %c0_76 = arith.constant 0 : index
    %c2_77 = arith.constant 2 : index
    %c0_78 = arith.constant 0 : index
    %59 = vector.load %arg10[%c0_76, %c2_77, %c0_78] : memref<18x18x128xbf16, #tpu.memory_space<vmem>>, vector<16x16x128xbf16>
    %60 = vector.shape_cast %59 : vector<16x16x128xbf16> to vector<256x128xbf16>
    %c0_79 = arith.constant 0 : index
    %c256_80 = arith.constant 256 : index
    %61 = vector.load %arg9[%c0_79, %c256_80] : memref<256x1152xbf16, #tpu.memory_space<vmem>>, vector<256x128xbf16>
    tpu.vector_store %arg9[%c0_79, %c256_80], %60 {strides = array<i32>} : memref<256x1152xbf16, #tpu.memory_space<vmem>>, vector<256x128xbf16>,
    %c1_81 = arith.constant 1 : index
    %c0_82 = arith.constant 0 : index
    %c0_83 = arith.constant 0 : index
    %62 = vector.load %arg10[%c1_81, %c0_82, %c0_83] : memref<18x18x128xbf16, #tpu.memory_space<vmem>>, vector<16x16x128xbf16>
    %63 = vector.shape_cast %62 : vector<16x16x128xbf16> to vector<256x128xbf16>
    %c0_84 = arith.constant 0 : index
    %c384_85 = arith.constant 384 : index
    %64 = vector.load %arg9[%c0_84, %c384_85] : memref<256x1152xbf16, #tpu.memory_space<vmem>>, vector<256x128xbf16>
    tpu.vector_store %arg9[%c0_84, %c384_85], %63 {strides = array<i32>} : memref<256x1152xbf16, #tpu.memory_space<vmem>>, vector<256x128xbf16>,
    %c1_86 = arith.constant 1 : index
    %c1_87 = arith.constant 1 : index
    %c0_88 = arith.constant 0 : index
    %65 = vector.load %arg10[%c1_86, %c1_87, %c0_88] : memref<18x18x128xbf16, #tpu.memory_space<vmem>>, vector<16x16x128xbf16>
    %66 = vector.shape_cast %65 : vector<16x16x128xbf16> to vector<256x128xbf16>
    %c0_89 = arith.constant 0 : index
    %c512_90 = arith.constant 512 : index
    %67 = vector.load %arg9[%c0_89, %c512_90] : memref<256x1152xbf16, #tpu.memory_space<vmem>>, vector<256x128xbf16>
    tpu.vector_store %arg9[%c0_89, %c512_90], %66 {strides = array<i32>} : memref<256x1152xbf16, #tpu.memory_space<vmem>>, vector<256x128xbf16>,
    %c1_91 = arith.constant 1 : index
    %c2_92 = arith.constant 2 : index
    %c0_93 = arith.constant 0 : index
    %68 = vector.load %arg10[%c1_91, %c2_92, %c0_93] : memref<18x18x128xbf16, #tpu.memory_space<vmem>>, vector<16x16x128xbf16>
    %69 = vector.shape_cast %68 : vector<16x16x128xbf16> to vector<256x128xbf16>
    %c0_94 = arith.constant 0 : index
    %c640_95 = arith.constant 640 : index
    %70 = vector.load %arg9[%c0_94, %c640_95] : memref<256x1152xbf16, #tpu.memory_space<vmem>>, vector<256x128xbf16>
    tpu.vector_store %arg9[%c0_94, %c640_95], %69 {strides = array<i32>} : memref<256x1152xbf16, #tpu.memory_space<vmem>>, vector<256x128xbf16>,
    %c2_96 = arith.constant 2 : index
    %c0_97 = arith.constant 0 : index
    %c0_98 = arith.constant 0 : index
    %71 = vector.load %arg10[%c2_96, %c0_97, %c0_98] : memref<18x18x128xbf16, #tpu.memory_space<vmem>>, vector<16x16x128xbf16>
    %72 = vector.shape_cast %71 : vector<16x16x128xbf16> to vector<256x128xbf16>
    %c0_99 = arith.constant 0 : index
    %c768_100 = arith.constant 768 : index
    %73 = vector.load %arg9[%c0_99, %c768_100] : memref<256x1152xbf16, #tpu.memory_space<vmem>>, vector<256x128xbf16>
    tpu.vector_store %arg9[%c0_99, %c768_100], %72 {strides = array<i32>} : memref<256x1152xbf16, #tpu.memory_space<vmem>>, vector<256x128xbf16>,
    %c2_101 = arith.constant 2 : index
    %c1_102 = arith.constant 1 : index
    %c0_103 = arith.constant 0 : index
    %74 = vector.load %arg10[%c2_101, %c1_102, %c0_103] : memref<18x18x128xbf16, #tpu.memory_space<vmem>>, vector<16x16x128xbf16>
    %75 = vector.shape_cast %74 : vector<16x16x128xbf16> to vector<256x128xbf16>
    %c0_104 = arith.constant 0 : index
    %c896_105 = arith.constant 896 : index
    %76 = vector.load %arg9[%c0_104, %c896_105] : memref<256x1152xbf16, #tpu.memory_space<vmem>>, vector<256x128xbf16>
    tpu.vector_store %arg9[%c0_104, %c896_105], %75 {strides = array<i32>} : memref<256x1152xbf16, #tpu.memory_space<vmem>>, vector<256x128xbf16>,
    %c2_106 = arith.constant 2 : index
    %c2_107 = arith.constant 2 : index
    %c0_108 = arith.constant 0 : index
    %77 = vector.load %arg10[%c2_106, %c2_107, %c0_108] : memref<18x18x128xbf16, #tpu.memory_space<vmem>>, vector<16x16x128xbf16>
    %78 = vector.shape_cast %77 : vector<16x16x128xbf16> to vector<256x128xbf16>
    %c0_109 = arith.constant 0 : index
    %c1024_110 = arith.constant 1024 : index
    %79 = vector.load %arg9[%c0_109, %c1024_110] : memref<256x1152xbf16, #tpu.memory_space<vmem>>, vector<256x128xbf16>
    tpu.vector_store %arg9[%c0_109, %c1024_110], %78 {strides = array<i32>} : memref<256x1152xbf16, #tpu.memory_space<vmem>>, vector<256x128xbf16>,
    %c0_111 = arith.constant 0 : index
    %c0_112 = arith.constant 0 : index
    %80 = vector.load %arg9[%c0_111, %c0_112] : memref<256x1152xbf16, #tpu.memory_space<vmem>>, vector<256x1152xbf16>
    %c0_113 = arith.constant 0 : index
    %c0_114 = arith.constant 0 : index
    %81 = vector.load %arg4[%c0_113, %c0_114] : memref<1152x128xbf16, #tpu.memory_space<vmem>>, vector<1152x128xbf16>
    %cst_115 = arith.constant dense<0.000000e+00> : vector<256x128xf32>
    %82 = tpu.matmul %80, %81, %cst_115 {dimension_numbers = #tpu.dot_dimension_numbers<[1], [0], [0], [1], [0, 0, 1, 1], [], []>} : vector<256x1152xbf16>, vector<1152x128xbf16>, vector<256x128xf32> -> vector<256x128xf32>
    %c0_116 = arith.constant 0 : index
    %c0_117 = arith.constant 0 : index
    %83 = vector.load %arg5[%c0_116, %c0_117] : memref<1x128xf32, #tpu.memory_space<vmem>>, vector<1x128xf32>
    %84 = vector.broadcast %83 : vector<1x128xf32> to vector<256x128xf32>
    %85 = arith.addf %82, %84 : vector<256x128xf32>
    %c0_118 = arith.constant 0 : index
    %c1_119 = arith.constant 1 : index
    %c1_120 = arith.constant 1 : index
    %c0_121 = arith.constant 0 : index
    %86 = vector.load %arg1[%c0_118, %c1_119, %c1_120, %c0_121] : memref<1x18x18x128xbf16, #tpu.memory_space<vmem>>, vector<1x16x16x128xbf16>
    %87 = vector.shape_cast %86 : vector<1x16x16x128xbf16> to vector<16x16x128xbf16>
    %88 = vector.shape_cast %87 : vector<16x16x128xbf16> to vector<256x128xbf16>
    %c0_122 = arith.constant 0 : index
    %c0_123 = arith.constant 0 : index
    %89 = vector.load %arg6[%c0_122, %c0_123] : memref<128x128xbf16, #tpu.memory_space<vmem>>, vector<128x128xbf16>
    %cst_124 = arith.constant dense<0.000000e+00> : vector<256x128xf32>
    %90 = tpu.matmul %88, %89, %cst_124 {dimension_numbers = #tpu.dot_dimension_numbers<[1], [0], [0], [1], [0, 0, 1, 1], [], []>} : vector<256x128xbf16>, vector<128x128xbf16>, vector<256x128xf32> -> vector<256x128xf32>
    %c0_125 = arith.constant 0 : index
    %c0_126 = arith.constant 0 : index
    %91 = vector.load %arg7[%c0_125, %c0_126] : memref<1x128xf32, #tpu.memory_space<vmem>>, vector<1x128xf32>
    %92 = vector.broadcast %91 : vector<1x128xf32> to vector<256x128xf32>
    %93 = arith.addf %90, %92 : vector<256x128xf32>
    %94 = arith.addf %85, %93 : vector<256x128xf32>
    %cst_127 = arith.constant 0.000000e+00 : f32
    %95 = vector.broadcast %cst_127 : f32 to vector<256x128xf32>
    %96 = arith.maximumf %94, %95 : vector<256x128xf32>
    %97 = arith.truncf %96 : vector<256x128xf32> to vector<256x128xbf16>
    %c0_128 = arith.constant 0 : index
    %c0_129 = arith.constant 0 : index
    %98 = vector.load %arg8[%c0_128, %c0_129] : memref<256x128xbf16, #tpu.memory_space<vmem>>, vector<256x128xbf16>
    tpu.vector_store %arg8[%c0_128, %c0_129], %97 {strides = array<i32>} : memref<256x128xbf16, #tpu.memory_space<vmem>>, vector<256x128xbf16>,
    return
  }
  func.func @transform_0(%arg0: i32) -> (i32, i32, i32, i32) {
    %c0_i32 = arith.constant 0 : i32
    %c0_i32_0 = arith.constant 0 : i32
    %c0_i32_1 = arith.constant 0 : i32
    %c0_i32_2 = arith.constant 0 : i32
    return %arg0, %c0_i32, %c0_i32_0, %c0_i32_1 : i32, i32, i32, i32
  }
  func.func @transform_1(%arg0: i32) -> (i32, i32) {
    %c0_i32 = arith.constant 0 : i32
    %c0_i32_0 = arith.constant 0 : i32
    %c0_i32_1 = arith.constant 0 : i32
    return %c0_i32, %c0_i32_0 : i32, i32
  }
  func.func @transform_2(%arg0: i32) -> (i32, i32) {
    %c0_i32 = arith.constant 0 : i32
    %c0_i32_0 = arith.constant 0 : i32
    %c0_i32_1 = arith.constant 0 : i32
    return %c0_i32, %c0_i32_0 : i32, i32
  }
  func.func @transform_3(%arg0: i32) -> (i32, i32) {
    %c0_i32 = arith.constant 0 : i32
    %c0_i32_0 = arith.constant 0 : i32
    %c0_i32_1 = arith.constant 0 : i32
    return %c0_i32, %c0_i32_0 : i32, i32
  }
  func.func @transform_4(%arg0: i32) -> (i32, i32) {
    %c0_i32 = arith.constant 0 : i32
    %c0_i32_0 = arith.constant 0 : i32
    %c0_i32_1 = arith.constant 0 : i32
    return %c0_i32, %c0_i32_0 : i32, i32
  }
  func.func @transform_5(%arg0: i32) -> (i32, i32) {
    %c0_i32 = arith.constant 0 : i32
    %c0_i32_0 = arith.constant 0 : i32
    %c0_i32_1 = arith.constant 0 : i32
    return %c0_i32, %c0_i32_0 : i32, i32
  }
  func.func @transform_6(%arg0: i32) -> (i32, i32) {
    %c0_i32 = arith.constant 0 : i32
    %c0_i32_0 = arith.constant 0 : i32
    %c0_i32_1 = arith.constant 0 : i32
    return %c0_i32, %c0_i32_0 : i32, i32
  }
  func.func @transform_7(%arg0: i32) -> (i32, i32) {
    %c0_i32 = arith.constant 0 : i32
    %c0_i32_0 = arith.constant 0 : i32
    return %arg0, %c0_i32 : i32, i32
  }
}

</mosaic_0001>

<llo_original>
// kernel: tpu_custom_call.1
$region0: #{tpu_custom_call.1}
  #allocation0 [shape = 'u32[]', space=smem, size = 0x4, offset = 0x4, fixed_abs, tag = 'smem constant byte address 0x4 - core index']
  #allocation1 [shape = 'u32[72,128]{1,0:T(1,128)}', space=vmem, size = 0x9000, scoped, tag = 'internal scratch']
  #allocation2 [shape = 'bf16[256,1152]{1,0:T(8,128)(2,1)}', space=vmem, size = 0x90000, scoped, tag = 'scratch operand']
  #allocation3 [shape = 'bf16[18,18,128]{2,1,0:T(8,128)(2,1)}', space=vmem, size = 0x1b000, scoped, tag = 'scratch operand']
  %s0 = inlined_call_operand.vmem [shape: bf16[2,18,18,128], index: 0, kind: input, shape index: {}]
  %s1 = inlined_call_operand.vmem [shape: bf16[1152,128], index: 1, kind: input, shape index: {}]
  %s2 = inlined_call_operand.vmem [shape: f32[1,128], index: 2, kind: input, shape index: {}]
  %s3 = inlined_call_operand.hbm [shape: bf16[1152,128], index: 3, kind: input, shape index: {}]
  %s4 = inlined_call_operand.vmem [shape: f32[1,128], index: 4, kind: input, shape index: {}]
  %s5 = inlined_call_operand.vmem [shape: bf16[128,128], index: 5, kind: input, shape index: {}]
  %s6 = inlined_call_operand.vmem [shape: f32[1,128], index: 6, kind: input, shape index: {}]
  %s7 = inlined_call_operand.hbm [shape: bf16[512,128], index: 7, kind: output, shape index: {}]
  %s8 = sld [smem:[#allocation0]]
  $region65: #{tpu_custom_call.1} parent=0
    _
  %s10 = ssub.s32 1, %s8
  %s11 = scalar_select 0, %s10, %s8
  $region1: #{tpu_custom_call.1} parent=0
    #allocation4 [shape = 'u8[294912]{0}', space=vmem, size = 0x48000, scoped, tag = 'input window, operand 3, single buffered']
    #allocation5 [shape = 's32[2]{0}', space=sflag, size = 0x8, scoped, tag = 'scoped memory for tpu_custom_call.1']
    #allocation6 [shape = 's32[2]{0}', space=sflag, size = 0x8, scoped, tag = 'scoped memory for tpu_custom_call.1']
    #allocation7 [shape = 'u8[131072]{0}', space=vmem, size = 0x20000, scoped, tag = 'output window, operand 0']
    %12 = vsyncpa [#allocation5], 0
    %13 = vsyncpa [#allocation6], 0
    %s14 = scalar_lea.sflag [#allocation6], 1
    %15 = vsyncpa %s14, 0
    loop: start=0, step=1, limit=4
    $region2: #{tpu_custom_call.1} parent=1 // loop_pre_header
      _
    $region3: #{tpu_custom_call.1} parent=1 // loop_header
      %s17 = sphi 0, %s21
      %p18 = scmp.ge.s32.totalorder %s17, 4
      %s27 = sphi 0, %s29
      %s30 = sphi 0, %s27
      %s31 = sphi 0, %s30
      %s47 = sphi 0, %s31
      %s51 = sphi 0, %s51
      %s53 = sphi 0, %s51
      %s54 = sphi 0, %s53
      %s68 = sphi 0, %s54
      %s72 = sphi 0, %s72
      %s74 = sphi 0, %s72
      %s75 = sphi 0, %s74
      %s89 = sphi 0, %s75
      %s93 = sphi 0, %s93
      %s95 = sphi 0, %s93
      %s96 = sphi 0, %s95
      %s110 = sphi 0, %s96
      %s114 = sphi 0, %s114
      %s116 = sphi 0, %s114
      %s117 = sphi 0, %s116
      %s131 = sphi 0, %s117
      %s135 = sphi 0, %s135
      %s137 = sphi 0, %s135
      %s138 = sphi 0, %s137
      %s152 = sphi 0, %s138
      %s156 = sphi 0, %s156
      %s158 = sphi 0, %s156
      %s159 = sphi 0, %s158
      %s173 = sphi 0, %s159
      %s179 = sphi 0, %s181
      %s182 = sphi 0, %s179
      %s183 = sphi 0, %s182
      %s199 = sphi 0, %s183
    $region4: #{tpu_custom_call.1} parent=1 // loop_header_branch
      %20 = sbr.rel (%p18) target = $region8
    $region5: #{tpu_custom_call.1} parent=1 // loop_body
      %s22 = ssub.s32 %s17, 1
      %s23 = ssub.s32 %s17, 2
      %s24 = sadd.s32 %s17, 1
      %s25 = ssub.s32 %s17, %s24
      %p26 = scmp.eq.s32.totalorder %s25, 0
      %s28 = sadd.s32 %s27, 1
      %s29 = scalar_select %p26, %s27, %s28
      %p32 = pneg %p26
      %p33 = scmp.eq.s32.totalorder %s17, 1
      %p34 = por %p32, %p33
      %p35 = scmp.ne.s32.totalorder %s27, %s30
      %p36 = scmp.eq.s32.totalorder %s17, 0
      %p37 = por %p35, %p36
      %p38 = scmp.ne.s32.totalorder %s27, %s30
      %p39 = scmp.eq.s32.totalorder %s22, 1
      %p40 = por %p38, %p39
      %p41 = scmp.ne.s32.totalorder %s30, %s31
      %p42 = scmp.eq.s32.totalorder %s22, 0
      %p43 = por %p41, %p42
      %p44 = scmp.ne.s32.totalorder %s30, %s31
      %p45 = scmp.eq.s32.totalorder %s23, 1
      %p46 = por %p44, %p45
      %p48 = scmp.ne.s32.totalorder %s31, %s47
      %p49 = scmp.eq.s32.totalorder %s23, 0
      %p50 = por %p48, %p49
      %s52 = sadd.s32 %s51, 1
      %p55 = scmp.eq.s32.totalorder %s17, 1
      %p56 = scmp.ne.s32.totalorder %s51, %s53
      %p57 = scmp.eq.s32.totalorder %s17, 0
      %p58 = por %p56, %p57
      %p59 = scmp.ne.s32.totalorder %s51, %s53
      %p60 = scmp.eq.s32.totalorder %s22, 1
      %p61 = por %p59, %p60
      %p62 = scmp.ne.s32.totalorder %s53, %s54
      %p63 = scmp.eq.s32.totalorder %s22, 0
      %p64 = por %p62, %p63
      %p65 = scmp.ne.s32.totalorder %s53, %s54
      %p66 = scmp.eq.s32.totalorder %s23, 1
      %p67 = por %p65, %p66
      %p69 = scmp.ne.s32.totalorder %s54, %s68
      %p70 = scmp.eq.s32.totalorder %s23, 0
      %p71 = por %p69, %p70
      %s73 = sadd.s32 %s72, 1
      %p76 = scmp.eq.s32.totalorder %s17, 1
      %p77 = scmp.ne.s32.totalorder %s72, %s74
      %p78 = scmp.eq.s32.totalorder %s17, 0
      %p79 = por %p77, %p78
      %p80 = scmp.ne.s32.totalorder %s72, %s74
      %p81 = scmp.eq.s32.totalorder %s22, 1
      %p82 = por %p80, %p81
      %p83 = scmp.ne.s32.totalorder %s74, %s75
      %p84 = scmp.eq.s32.totalorder %s22, 0
      %p85 = por %p83, %p84
      %p86 = scmp.ne.s32.totalorder %s74, %s75
      %p87 = scmp.eq.s32.totalorder %s23, 1
      %p88 = por %p86, %p87
      %p90 = scmp.ne.s32.totalorder %s75, %s89
      %p91 = scmp.eq.s32.totalorder %s23, 0
      %p92 = por %p90, %p91
      %s94 = sadd.s32 %s93, 1
      %p97 = scmp.eq.s32.totalorder %s17, 1
      %p98 = scmp.ne.s32.totalorder %s93, %s95
      %p99 = scmp.eq.s32.totalorder %s17, 0
      %p100 = por %p98, %p99
      %p101 = scmp.ne.s32.totalorder %s93, %s95
      %p102 = scmp.eq.s32.totalorder %s22, 1
      %p103 = por %p101, %p102
      %p104 = scmp.ne.s32.totalorder %s95, %s96
      %p105 = scmp.eq.s32.totalorder %s22, 0
      %p106 = por %p104, %p105
      %p107 = scmp.ne.s32.totalorder %s95, %s96
      %p108 = scmp.eq.s32.totalorder %s23, 1
      %p109 = por %p107, %p108
      %p111 = scmp.ne.s32.totalorder %s96, %s110
      %p112 = scmp.eq.s32.totalorder %s23, 0
      %p113 = por %p111, %p112
      %s115 = sadd.s32 %s114, 1
      %p118 = scmp.eq.s32.totalorder %s17, 1
      %p119 = scmp.ne.s32.totalorder %s114, %s116
      %p120 = scmp.eq.s32.totalorder %s17, 0
      %p121 = por %p119, %p120
      %p122 = scmp.ne.s32.totalorder %s114, %s116
      %p123 = scmp.eq.s32.totalorder %s22, 1
      %p124 = por %p122, %p123
      %p125 = scmp.ne.s32.totalorder %s116, %s117
      %p126 = scmp.eq.s32.totalorder %s22, 0
      %p127 = por %p125, %p126
      %p128 = scmp.ne.s32.totalorder %s116, %s117
      %p129 = scmp.eq.s32.totalorder %s23, 1
      %p130 = por %p128, %p129
      %p132 = scmp.ne.s32.totalorder %s117, %s131
      %p133 = scmp.eq.s32.totalorder %s23, 0
      %p134 = por %p132, %p133
      %s136 = sadd.s32 %s135, 1
      %p139 = scmp.eq.s32.totalorder %s17, 1
      %p140 = scmp.ne.s32.totalorder %s135, %s137
      %p141 = scmp.eq.s32.totalorder %s17, 0
      %p142 = por %p140, %p141
      %p143 = scmp.ne.s32.totalorder %s135, %s137
      %p144 = scmp.eq.s32.totalorder %s22, 1
      %p145 = por %p143, %p144
      %p146 = scmp.ne.s32.totalorder %s137, %s138
      %p147 = scmp.eq.s32.totalorder %s22, 0
      %p148 = por %p146, %p147
      %p149 = scmp.ne.s32.totalorder %s137, %s138
      %p150 = scmp.eq.s32.totalorder %s23, 1
      %p151 = por %p149, %p150
      %p153 = scmp.ne.s32.totalorder %s138, %s152
      %p154 = scmp.eq.s32.totalorder %s23, 0
      %p155 = por %p153, %p154
      %s157 = sadd.s32 %s156, 1
      %p160 = scmp.eq.s32.totalorder %s17, 1
      %p161 = scmp.ne.s32.totalorder %s156, %s158
      %p162 = scmp.eq.s32.totalorder %s17, 0
      %p163 = por %p161, %p162
      %p164 = scmp.ne.s32.totalorder %s156, %s158
      %p165 = scmp.eq.s32.totalorder %s22, 1
      %p166 = por %p164, %p165
      %p167 = scmp.ne.s32.totalorder %s158, %s159
      %p168 = scmp.eq.s32.totalorder %s22, 0
      %p169 = por %p167, %p168
      %p170 = scmp.ne.s32.totalorder %s158, %s159
      %p171 = scmp.eq.s32.totalorder %s23, 1
      %p172 = por %p170, %p171
      %p174 = scmp.ne.s32.totalorder %s159, %s173
      %p175 = scmp.eq.s32.totalorder %s23, 0
      %p176 = por %p174, %p175
      %s177 = ssub.s32 %s17, %s24
      %p178 = scmp.eq.s32.totalorder %s177, 0
      %s180 = sadd.s32 %s179, 1
      %s181 = scalar_select %p178, %s179, %s180
      %p184 = pneg %p178
      %p185 = scmp.eq.s32.totalorder %s17, 1
      %p186 = por %p184, %p185
      %p187 = scmp.ne.s32.totalorder %s179, %s182
      %p188 = scmp.eq.s32.totalorder %s17, 0
      %p189 = por %p187, %p188
      %p190 = scmp.ne.s32.totalorder %s179, %s182
      %p191 = scmp.eq.s32.totalorder %s22, 1
      %p192 = por %p190, %p191
      %p193 = scmp.ne.s32.totalorder %s182, %s183
      %p194 = scmp.eq.s32.totalorder %s22, 0
      %p195 = por %p193, %p194
      %p196 = scmp.ne.s32.totalorder %s182, %s183
      %p197 = scmp.eq.s32.totalorder %s23, 1
      %p198 = por %p196, %p197
      %p200 = scmp.ne.s32.totalorder %s183, %s199
      %p201 = scmp.eq.s32.totalorder %s23, 0
      %p202 = por %p200, %p201
      %p203 = scmp.le.s32.totalorder 1, %s17
      %p204 = scmp.lt.s32.totalorder %s17, 3
      %p205 = pnand %p203, %p204
      %p206 = pneg %p205
      // Predicated region
      $region9: #{tpu_custom_call.1} parent=5 // pred_check
        _
      $region10: #{tpu_custom_call.1} parent=5 // pred_check_branch
        %208 = sbr.rel (%p205) target = $region12
      $region11: #{tpu_custom_call.1} parent=5 // pred_region
        %s209 = ssub.s32 %s17, 1
        // Predicated region
        $region13: #{tpu_custom_call.1} parent=11 // pred_check
          %p210 = pneg %p64
        $region14: #{tpu_custom_call.1} parent=11 // pred_check_branch
          %212 = sbr.rel (%p210) target = $region16
        $region15: #{tpu_custom_call.1} parent=11 // pred_region
          _
        $region16: #{tpu_custom_call.1} parent=11 // pred_fallthru
          _
        // Predicated region
        $region17: #{tpu_custom_call.1} parent=11 // pred_check
          %p213 = pneg %p85
        $region18: #{tpu_custom_call.1} parent=11 // pred_check_branch
          %215 = sbr.rel (%p213) target = $region20
        $region19: #{tpu_custom_call.1} parent=11 // pred_region
          _
        $region20: #{tpu_custom_call.1} parent=11 // pred_fallthru
          _
        // Predicated region
        $region21: #{tpu_custom_call.1} parent=11 // pred_check
          %p216 = pneg %p106
        $region22: #{tpu_custom_call.1} parent=11 // pred_check_branch
          %218 = sbr.rel (%p216) target = $region24
        $region23: #{tpu_custom_call.1} parent=11 // pred_region
          %220 = vsyncadd [#allocation5], 0
          %s221 = sshll.u32 %s3, 4
          %s222 = int_to_ptr.hbm [resolvable:$true] %s221
          %s223 = sshll.u32 [#allocation4], 4
          %s224 = int_to_ptr.vmem [resolvable:$true] %s223
          %229 = dma.hbm_to_vmem [thread:$0]  %s222, 9216, %s224, [#allocation5], 64, 64, 4
        $region24: #{tpu_custom_call.1} parent=11 // pred_fallthru
          _
        // Predicated region
        $region25: #{tpu_custom_call.1} parent=11 // pred_check
          %p230 = pneg %p127
        $region26: #{tpu_custom_call.1} parent=11 // pred_check_branch
          %232 = sbr.rel (%p230) target = $region28
        $region27: #{tpu_custom_call.1} parent=11 // pred_region
          _
        $region28: #{tpu_custom_call.1} parent=11 // pred_fallthru
          _
        // Predicated region
        $region29: #{tpu_custom_call.1} parent=11 // pred_check
          %p233 = pneg %p148
        $region30: #{tpu_custom_call.1} parent=11 // pred_check_branch
          %235 = sbr.rel (%p233) target = $region32
        $region31: #{tpu_custom_call.1} parent=11 // pred_region
          _
        $region32: #{tpu_custom_call.1} parent=11 // pred_fallthru
          _
        // Predicated region
        $region33: #{tpu_custom_call.1} parent=11 // pred_check
          %p236 = pneg %p169
        $region34: #{tpu_custom_call.1} parent=11 // pred_check_branch
          %238 = sbr.rel (%p236) target = $region36
        $region35: #{tpu_custom_call.1} parent=11 // pred_region
          _
        $region36: #{tpu_custom_call.1} parent=11 // pred_fallthru
          _
      $region12: #{tpu_custom_call.1} parent=5 // pred_fallthru
        _
      %p239 = scmp.lt.s32.totalorder %s17, 2
      // Predicated region
      $region37: #{tpu_custom_call.1} parent=5 // pred_check
        %p240 = pneg %p239
      $region38: #{tpu_custom_call.1} parent=5 // pred_check_branch
        %242 = sbr.rel (%p240) target = $region40
      $region39: #{tpu_custom_call.1} parent=5 // pred_region
        // Predicated region
        $region41: #{tpu_custom_call.1} parent=39 // pred_check
          %p243 = pneg %p37
        $region42: #{tpu_custom_call.1} parent=39 // pred_check_branch
          %245 = sbr.rel (%p243) target = $region44
        $region43: #{tpu_custom_call.1} parent=39 // pred_region
          %p246 = scmp.lt.s32.totalorder %s17, 1
          %s247 = scalar_select %p246, %s17, 1
          %s248 = smul.addr %s247, 54
          %s249 = smul.addr %s248, 4
          %s250 = scalar_lea.vmem %s0, %s249
        $region44: #{tpu_custom_call.1} parent=39 // pred_fallthru
          _
      $region40: #{tpu_custom_call.1} parent=5 // pred_fallthru
        _
      %p251 = scmp.le.s32.totalorder 1, %s17
      %p252 = scmp.lt.s32.totalorder %s17, 3
      %p253 = pnand %p251, %p252
      %p254 = pneg %p253
      // Predicated region
      $region45: #{tpu_custom_call.1} parent=5 // pred_check
        _
      $region46: #{tpu_custom_call.1} parent=5 // pred_check_branch
        %256 = sbr.rel (%p253) target = $region48
      $region47: #{tpu_custom_call.1} parent=5 // pred_region
        %s257 = ssub.s32 %s17, 1
        // Predicated region
        $region49: #{tpu_custom_call.1} parent=47 // pred_check
          %p258 = pneg %p106
        $region50: #{tpu_custom_call.1} parent=47 // pred_check_branch
          %260 = sbr.rel (%p258) target = $region52
        $region51: #{tpu_custom_call.1} parent=47 // pred_region
          %262 = dma.done [#allocation5], 9216
        $region52: #{tpu_custom_call.1} parent=47 // pred_fallthru
          _
        %p263 = scmp.lt.s32.totalorder %s22, 1
        %s264 = scalar_select %p263, %s22, 1
        %s265 = smul.addr %s264, 54
        %s266 = smul.addr %s265, 4
        %s267 = scalar_lea.vmem %s0, %s266
        %p268 = pneg %p43
        %p269 = pneg %p40
        %p270 = pneg %p64
        %p271 = pneg %p61
        %p272 = pneg %p85
        %p273 = pneg %p82
        %p274 = pneg %p106
        %p275 = pneg %p103
        %p276 = pneg %p127
        %p277 = pneg %p124
        %p278 = pneg %p148
        %p279 = pneg %p145
        %p280 = pneg %p169
        %p281 = pneg %p166
        %p282 = pneg %p195
        %p283 = pneg %p192
        %s284 = sand.u32 %s182, 1
        %s285 = scalar_lea.sflag [#allocation6], %s284
        %s286 = sand.u32 %s182, 1
        %s287 = smul.addr %s286, 128
        %s288 = scalar_lea.vmem [#allocation7], %s287
        %p289 = scmp.lt.s32.totalorder %s22, 1
        %s290 = scalar_select %p289, %s22, 1
        %s291 = smul.addr %s290, 54
        %s292 = smul.addr %s291, 4
        %s293 = scalar_lea.vmem %s0, %s292
        %s294 = smul.u32 32, %s22
        %v296 = vld [vmem:[%s293] sm:$0xf]
        %v297 = vld [vmem:[%s293 + $0x4] sm:$0xf]
        %v298 = vld [vmem:[%s293 + $0xc] sm:$0xf]
        %v299 = vld [vmem:[%s293 + $0x10] sm:$0xf]
        %v300 = vld [vmem:[%s293 + $0x18] sm:$0xf]
        %v301 = vld [vmem:[%s293 + $0x1c] sm:$0xf]
        %v302 = vld [vmem:[%s293 + $0x24] sm:$0xf]
        %v303 = vld [vmem:[%s293 + $0x28] sm:$0xf]
        %v304 = vld [vmem:[%s293 + $0x30] sm:$0xf]
        %v305 = vld [vmem:[%s293 + $0x34] sm:$0xf]
        %v306 = vld [vmem:[%s293 + $0x3c] sm:$0xf]
        %v307 = vld [vmem:[%s293 + $0x40] sm:$0xf]
        %v308 = vld [vmem:[%s293 + $0x48] sm:$0xf]
        %v309 = vld [vmem:[%s293 + $0x4c] sm:$0xf]
        %v310 = vld [vmem:[%s293 + $0x54] sm:$0xf]
        %v311 = vld [vmem:[%s293 + $0x58] sm:$0xf]
        %v312 = vld [vmem:[%s293 + $0x60] sm:$0xf]
        %v313 = vld [vmem:[%s293 + $0x64] sm:$0xf]
        %v314 = vld [vmem:[%s293 + $0x6c] sm:$0xf]
        %v315 = vld [vmem:[%s293 + $0x70] sm:$0xf]
        %v316 = vld [vmem:[%s293 + $0x78] sm:$0xf]
        %v317 = vld [vmem:[%s293 + $0x7c] sm:$0xf]
        %v318 = vld [vmem:[%s293 + $0x84] sm:$0xf]
        %v319 = vld [vmem:[%s293 + $0x88] sm:$0xf]
        %v320 = vld [vmem:[%s293 + $0x90] sm:$0xf]
        %v321 = vld [vmem:[%s293 + $0x94] sm:$0xf]
        %v322 = vld [vmem:[%s293 + $0x9c] sm:$0xf]
        %v323 = vld [vmem:[%s293 + $0xa0] sm:$0xf]
        %v324 = vld [vmem:[%s293 + $0xa8] sm:$0xf]
        %v325 = vld [vmem:[%s293 + $0xac] sm:$0xf]
        %v326 = vld [vmem:[%s293 + $0xb4] sm:$0xf]
        %v327 = vld [vmem:[%s293 + $0xb8] sm:$0xf]
        %328 = vst [vmem:[#allocation2] sm:$0xf] %v296
        %329 = vst [vmem:[#allocation2 + $0x24] sm:$0xf] %v297
        %330 = vst [vmem:[#allocation2 + $0x48] sm:$0xf] %v298
        %331 = vst [vmem:[#allocation2 + $0x6c] sm:$0xf] %v299
        %332 = vst [vmem:[#allocation2 + $0x90] sm:$0xf] %v300
        %333 = vst [vmem:[#allocation2 + $0xb4] sm:$0xf] %v301
        %334 = vst [vmem:[#allocation2 + $0xd8] sm:$0xf] %v302
        %335 = vst [vmem:[#allocation2 + $0xfc] sm:$0xf] %v303
        %336 = vst [vmem:[#allocation2 + $0x120] sm:$0xf] %v304
        %337 = vst [vmem:[#allocation2 + $0x144] sm:$0xf] %v305
        %338 = vst [vmem:[#allocation2 + $0x168] sm:$0xf] %v306
        %339 = vst [vmem:[#allocation2 + $0x18c] sm:$0xf] %v307
        %340 = vst [vmem:[#allocation2 + $0x1b0] sm:$0xf] %v308
        %341 = vst [vmem:[#allocation2 + $0x1d4] sm:$0xf] %v309
        %342 = vst [vmem:[#allocation2 + $0x1f8] sm:$0xf] %v310
        %343 = vst [vmem:[#allocation2 + $0x21c] sm:$0xf] %v311
        %344 = vst [vmem:[#allocation2 + $0x240] sm:$0xf] %v312
        %345 = vst [vmem:[#allocation2 + $0x264] sm:$0xf] %v313
        %346 = vst [vmem:[#allocation2 + $0x288] sm:$0xf] %v314
        %347 = vst [vmem:[#allocation2 + $0x2ac] sm:$0xf] %v315
        %348 = vst [vmem:[#allocation2 + $0x2d0] sm:$0xf] %v316
        %349 = vst [vmem:[#allocation2 + $0x2f4] sm:$0xf] %v317
        %350 = vst [vmem:[#allocation2 + $0x318] sm:$0xf] %v318
        %351 = vst [vmem:[#allocation2 + $0x33c] sm:$0xf] %v319
        %352 = vst [vmem:[#allocation2 + $0x360] sm:$0xf] %v320
        %353 = vst [vmem:[#allocation2 + $0x384] sm:$0xf] %v321
        %354 = vst [vmem:[#allocation2 + $0x3a8] sm:$0xf] %v322
        %355 = vst [vmem:[#allocation2 + $0x3cc] sm:$0xf] %v323
        %356 = vst [vmem:[#allocation2 + $0x3f0] sm:$0xf] %v324
        %357 = vst [vmem:[#allocation2 + $0x414] sm:$0xf] %v325
        %358 = vst [vmem:[#allocation2 + $0x438] sm:$0xf] %v326
        %359 = vst [vmem:[#allocation2 + $0x45c] sm:$0xf] %v327
        %v360 = vld [vmem:[%s293] sm:$0xf]
        %v361 = vld [vmem:[%s293 + $0x4] sm:$0xf]
        %v362 = vld [vmem:[%s293 + $0x8] sm:$0x1]
        %v363 = vld [vmem:[%s293 + $0xc] sm:$0xf]
        %v364 = vld [vmem:[%s293 + $0x10] sm:$0xf]
        %v365 = vld [vmem:[%s293 + $0x14] sm:$0x1]
        %v366 = vld [vmem:[%s293 + $0x18] sm:$0xf]
        %v367 = vld [vmem:[%s293 + $0x1c] sm:$0xf]
        %v368 = vld [vmem:[%s293 + $0x20] sm:$0x1]
        %v369 = vld [vmem:[%s293 + $0x24] sm:$0xf]
        %v370 = vld [vmem:[%s293 + $0x28] sm:$0xf]
        %v371 = vld [vmem:[%s293 + $0x2c] sm:$0x1]
        %v372 = vld [vmem:[%s293 + $0x30] sm:$0xf]
        %v373 = vld [vmem:[%s293 + $0x34] sm:$0xf]
        %v374 = vld [vmem:[%s293 + $0x38] sm:$0x1]
        %v375 = vld [vmem:[%s293 + $0x3c] sm:$0xf]
        %v376 = vld [vmem:[%s293 + $0x40] sm:$0xf]
        %v377 = vld [vmem:[%s293 + $0x44] sm:$0x1]
        %v378 = vld [vmem:[%s293 + $0x48] sm:$0xf]
        %v379 = vld [vmem:[%s293 + $0x4c] sm:$0xf]
        %v380 = vld [vmem:[%s293 + $0x50] sm:$0x1]
        %v381 = vld [vmem:[%s293 + $0x54] sm:$0xf]
        %v382 = vld [vmem:[%s293 + $0x58] sm:$0xf]
        %v383 = vld [vmem:[%s293 + $0x5c] sm:$0x1]
        %v384 = vld [vmem:[%s293 + $0x60] sm:$0xf]
        %v385 = vld [vmem:[%s293 + $0x64] sm:$0xf]
        %v386 = vld [vmem:[%s293 + $0x68] sm:$0x1]
        %v387 = vld [vmem:[%s293 + $0x6c] sm:$0xf]
        %v388 = vld [vmem:[%s293 + $0x70] sm:$0xf]
        %v389 = vld [vmem:[%s293 + $0x74] sm:$0x1]
        %v390 = vld [vmem:[%s293 + $0x78] sm:$0xf]
        %v391 = vld [vmem:[%s293 + $0x7c] sm:$0xf]
        %v392 = vld [vmem:[%s293 + $0x80] sm:$0x1]
        %v393 = vld [vmem:[%s293 + $0x84] sm:$0xf]
        %v394 = vld [vmem:[%s293 + $0x88] sm:$0xf]
        %v395 = vld [vmem:[%s293 + $0x8c] sm:$0x1]
        %v396 = vld [vmem:[%s293 + $0x90] sm:$0xf]
        %v397 = vld [vmem:[%s293 + $0x94] sm:$0xf]
        %v398 = vld [vmem:[%s293 + $0x98] sm:$0x1]
        %v399 = vld [vmem:[%s293 + $0x9c] sm:$0xf]
        %v400 = vld [vmem:[%s293 + $0xa0] sm:$0xf]
        %v401 = vld [vmem:[%s293 + $0xa4] sm:$0x1]
        %v402 = vld [vmem:[%s293 + $0xa8] sm:$0xf]
        %v403 = vld [vmem:[%s293 + $0xac] sm:$0xf]
        %v404 = vld [vmem:[%s293 + $0xb0] sm:$0x1]
        %v405 = vld [vmem:[%s293 + $0xb4] sm:$0xf]
        %v406 = vld [vmem:[%s293 + $0xb8] sm:$0xf]
        %v407 = vld [vmem:[%s293 + $0xbc] sm:$0x1]
        %vm408 = vsmask.f32 3328
        %vm409 = vsmask.f32 7440
        %vm410 = vmor %vm408, %vm409
        %v412 = vshrl.u32 %v360, 16
        %v414 = vrot.slane %v412, 4
        %v415 = vshll.u32 %v360, 16
        %v417 = vrot.slane %v415, 5
        %v418 = vor.u32 %v414, %v417
        %v419 = vrot.slane %v418, 4
        %v421 = vshll.u32 %v361, 16
        %v423 = vrot.slane %v421, 5
        %v424 = vsel %vm410, %v419, %v423
        %v425 = vshrl.u32 %v361, 16
        %v427 = vrot.slane %v425, 4
        %v428 = vor.u32 %v427, %v423
        %v429 = vrot.slane %v428, 4
        %v431 = vshll.u32 %v362, 16
        %v433 = vrot.slane %v431, 5
        %v434 = vsel %vm410, %v429, %v433
        %v436 = vshrl.u32 %v363, 16
        %v438 = vrot.slane %v436, 4
        %v439 = vshll.u32 %v363, 16
        %v441 = vrot.slane %v439, 5
        %v442 = vor.u32 %v438, %v441
        %v443 = vrot.slane %v442, 4
        %v445 = vshll.u32 %v364, 16
        %v447 = vrot.slane %v445, 5
        %v448 = vsel %vm410, %v443, %v447
        %v449 = vshrl.u32 %v364, 16
        %v451 = vrot.slane %v449, 4
        %v452 = vor.u32 %v451, %v447
        %v453 = vrot.slane %v452, 4
        %v455 = vshll.u32 %v365, 16
        %v457 = vrot.slane %v455, 5
        %v458 = vsel %vm410, %v453, %v457
        %v460 = vshrl.u32 %v366, 16
        %v462 = vrot.slane %v460, 4
        %v463 = vshll.u32 %v366, 16
        %v465 = vrot.slane %v463, 5
        %v466 = vor.u32 %v462, %v465
        %v467 = vrot.slane %v466, 4
        %v469 = vshll.u32 %v367, 16
        %v471 = vrot.slane %v469, 5
        %v472 = vsel %vm410, %v467, %v471
        %v473 = vshrl.u32 %v367, 16
        %v475 = vrot.slane %v473, 4
        %v476 = vor.u32 %v475, %v471
        %v477 = vrot.slane %v476, 4
        %v479 = vshll.u32 %v368, 16
        %v481 = vrot.slane %v479, 5
        %v482 = vsel %vm410, %v477, %v481
        %v484 = vshrl.u32 %v369, 16
        %v486 = vrot.slane %v484, 4
        %v487 = vshll.u32 %v369, 16
        %v489 = vrot.slane %v487, 5
        %v490 = vor.u32 %v486, %v489
        %v491 = vrot.slane %v490, 4
        %v493 = vshll.u32 %v370, 16
        %v495 = vrot.slane %v493, 5
        %v496 = vsel %vm410, %v491, %v495
        %v497 = vshrl.u32 %v370, 16
        %v499 = vrot.slane %v497, 4
        %v500 = vor.u32 %v499, %v495
        %v501 = vrot.slane %v500, 4
        %v503 = vshll.u32 %v371, 16
        %v505 = vrot.slane %v503, 5
        %v506 = vsel %vm410, %v501, %v505
        %v508 = vshrl.u32 %v372, 16
        %v510 = vrot.slane %v508, 4
        %v511 = vshll.u32 %v372, 16
        %v513 = vrot.slane %v511, 5
        %v514 = vor.u32 %v510, %v513
        %v515 = vrot.slane %v514, 4
        %v517 = vshll.u32 %v373, 16
        %v519 = vrot.slane %v517, 5
        %v520 = vsel %vm410, %v515, %v519
        %v521 = vshrl.u32 %v373, 16
        %v523 = vrot.slane %v521, 4
        %v524 = vor.u32 %v523, %v519
        %v525 = vrot.slane %v524, 4
        %v527 = vshll.u32 %v374, 16
        %v529 = vrot.slane %v527, 5
        %v530 = vsel %vm410, %v525, %v529
        %v532 = vshrl.u32 %v375, 16
        %v534 = vrot.slane %v532, 4
        %v535 = vshll.u32 %v375, 16
        %v537 = vrot.slane %v535, 5
        %v538 = vor.u32 %v534, %v537
        %v539 = vrot.slane %v538, 4
        %v541 = vshll.u32 %v376, 16
        %v543 = vrot.slane %v541, 5
        %v544 = vsel %vm410, %v539, %v543
        %v545 = vshrl.u32 %v376, 16
        %v547 = vrot.slane %v545, 4
        %v548 = vor.u32 %v547, %v543
        %v549 = vrot.slane %v548, 4
        %v551 = vshll.u32 %v377, 16
        %v553 = vrot.slane %v551, 5
        %v554 = vsel %vm410, %v549, %v553
        %v556 = vshrl.u32 %v378, 16
        %v558 = vrot.slane %v556, 4
        %v559 = vshll.u32 %v378, 16
        %v561 = vrot.slane %v559, 5
        %v562 = vor.u32 %v558, %v561
        %v563 = vrot.slane %v562, 4
        %v565 = vshll.u32 %v379, 16
        %v567 = vrot.slane %v565, 5
        %v568 = vsel %vm410, %v563, %v567
        %v569 = vshrl.u32 %v379, 16
        %v571 = vrot.slane %v569, 4
        %v572 = vor.u32 %v571, %v567
        %v573 = vrot.slane %v572, 4
        %v575 = vshll.u32 %v380, 16
        %v577 = vrot.slane %v575, 5
        %v578 = vsel %vm410, %v573, %v577
        %v580 = vshrl.u32 %v381, 16
        %v582 = vrot.slane %v580, 4
        %v583 = vshll.u32 %v381, 16
        %v585 = vrot.slane %v583, 5
        %v586 = vor.u32 %v582, %v585
        %v587 = vrot.slane %v586, 4
        %v589 = vshll.u32 %v382, 16
        %v591 = vrot.slane %v589, 5
        %v592 = vsel %vm410, %v587, %v591
        %v593 = vshrl.u32 %v382, 16
        %v595 = vrot.slane %v593, 4
        %v596 = vor.u32 %v595, %v591
        %v597 = vrot.slane %v596, 4
        %v599 = vshll.u32 %v383, 16
        %v601 = vrot.slane %v599, 5
        %v602 = vsel %vm410, %v597, %v601
        %v604 = vshrl.u32 %v384, 16
        %v606 = vrot.slane %v604, 4
        %v607 = vshll.u32 %v384, 16
        %v609 = vrot.slane %v607, 5
        %v610 = vor.u32 %v606, %v609
        %v611 = vrot.slane %v610, 4
        %v613 = vshll.u32 %v385, 16
        %v615 = vrot.slane %v613, 5
        %v616 = vsel %vm410, %v611, %v615
        %v617 = vshrl.u32 %v385, 16
        %v619 = vrot.slane %v617, 4
        %v620 = vor.u32 %v619, %v615
        %v621 = vrot.slane %v620, 4
        %v623 = vshll.u32 %v386, 16
        %v625 = vrot.slane %v623, 5
        %v626 = vsel %vm410, %v621, %v625
        %v628 = vshrl.u32 %v387, 16
        %v630 = vrot.slane %v628, 4
        %v631 = vshll.u32 %v387, 16
        %v633 = vrot.slane %v631, 5
        %v634 = vor.u32 %v630, %v633
        %v635 = vrot.slane %v634, 4
        %v637 = vshll.u32 %v388, 16
        %v639 = vrot.slane %v637, 5
        %v640 = vsel %vm410, %v635, %v639
        %v641 = vshrl.u32 %v388, 16
        %v643 = vrot.slane %v641, 4
        %v644 = vor.u32 %v643, %v639
        %v645 = vrot.slane %v644, 4
        %v647 = vshll.u32 %v389, 16
        %v649 = vrot.slane %v647, 5
        %v650 = vsel %vm410, %v645, %v649
        %v652 = vshrl.u32 %v390, 16
        %v654 = vrot.slane %v652, 4
        %v655 = vshll.u32 %v390, 16
        %v657 = vrot.slane %v655, 5
        %v658 = vor.u32 %v654, %v657
        %v659 = vrot.slane %v658, 4
        %v661 = vshll.u32 %v391, 16
        %v663 = vrot.slane %v661, 5
        %v664 = vsel %vm410, %v659, %v663
        %v665 = vshrl.u32 %v391, 16
        %v667 = vrot.slane %v665, 4
        %v668 = vor.u32 %v667, %v663
        %v669 = vrot.slane %v668, 4
        %v671 = vshll.u32 %v392, 16
        %v673 = vrot.slane %v671, 5
        %v674 = vsel %vm410, %v669, %v673
        %v676 = vshrl.u32 %v393, 16
        %v678 = vrot.slane %v676, 4
        %v679 = vshll.u32 %v393, 16
        %v681 = vrot.slane %v679, 5
        %v682 = vor.u32 %v678, %v681
        %v683 = vrot.slane %v682, 4
        %v685 = vshll.u32 %v394, 16
        %v687 = vrot.slane %v685, 5
        %v688 = vsel %vm410, %v683, %v687
        %v689 = vshrl.u32 %v394, 16
        %v691 = vrot.slane %v689, 4
        %v692 = vor.u32 %v691, %v687
        %v693 = vrot.slane %v692, 4
        %v695 = vshll.u32 %v395, 16
        %v697 = vrot.slane %v695, 5
        %v698 = vsel %vm410, %v693, %v697
        %v700 = vshrl.u32 %v396, 16
        %v702 = vrot.slane %v700, 4
        %v703 = vshll.u32 %v396, 16
        %v705 = vrot.slane %v703, 5
        %v706 = vor.u32 %v702, %v705
        %v707 = vrot.slane %v706, 4
        %v709 = vshll.u32 %v397, 16
        %v711 = vrot.slane %v709, 5
        %v712 = vsel %vm410, %v707, %v711
        %v713 = vshrl.u32 %v397, 16
        %v715 = vrot.slane %v713, 4
        %v716 = vor.u32 %v715, %v711
        %v717 = vrot.slane %v716, 4
        %v719 = vshll.u32 %v398, 16
        %v721 = vrot.slane %v719, 5
        %v722 = vsel %vm410, %v717, %v721
        %v724 = vshrl.u32 %v399, 16
        %v726 = vrot.slane %v724, 4
        %v727 = vshll.u32 %v399, 16
        %v729 = vrot.slane %v727, 5
        %v730 = vor.u32 %v726, %v729
        %v731 = vrot.slane %v730, 4
        %v733 = vshll.u32 %v400, 16
        %v735 = vrot.slane %v733, 5
        %v736 = vsel %vm410, %v731, %v735
        %v737 = vshrl.u32 %v400, 16
        %v739 = vrot.slane %v737, 4
        %v740 = vor.u32 %v739, %v735
        %v741 = vrot.slane %v740, 4
        %v743 = vshll.u32 %v401, 16
        %v745 = vrot.slane %v743, 5
        %v746 = vsel %vm410, %v741, %v745
        %v748 = vshrl.u32 %v402, 16
        %v750 = vrot.slane %v748, 4
        %v751 = vshll.u32 %v402, 16
        %v753 = vrot.slane %v751, 5
        %v754 = vor.u32 %v750, %v753
        %v755 = vrot.slane %v754, 4
        %v757 = vshll.u32 %v403, 16
        %v759 = vrot.slane %v757, 5
        %v760 = vsel %vm410, %v755, %v759
        %v761 = vshrl.u32 %v403, 16
        %v763 = vrot.slane %v761, 4
        %v764 = vor.u32 %v763, %v759
        %v765 = vrot.slane %v764, 4
        %v767 = vshll.u32 %v404, 16
        %v769 = vrot.slane %v767, 5
        %v770 = vsel %vm410, %v765, %v769
        %v772 = vshrl.u32 %v405, 16
        %v774 = vrot.slane %v772, 4
        %v775 = vshll.u32 %v405, 16
        %v777 = vrot.slane %v775, 5
        %v778 = vor.u32 %v774, %v777
        %v779 = vrot.slane %v778, 4
        %v781 = vshll.u32 %v406, 16
        %v783 = vrot.slane %v781, 5
        %v784 = vsel %vm410, %v779, %v783
        %v785 = vshrl.u32 %v406, 16
        %v787 = vrot.slane %v785, 4
        %v788 = vor.u32 %v787, %v783
        %v789 = vrot.slane %v788, 4
        %v791 = vshll.u32 %v407, 16
        %v793 = vrot.slane %v791, 5
        %v794 = vsel %vm410, %v789, %v793
        %827 = vst [vmem:[#allocation2 + $0x4] sm:$0xf] %v424
        %828 = vst [vmem:[#allocation2 + $0x28] sm:$0xf] %v434
        %829 = vst [vmem:[#allocation2 + $0x4c] sm:$0xf] %v448
        %830 = vst [vmem:[#allocation2 + $0x70] sm:$0xf] %v458
        %831 = vst [vmem:[#allocation2 + $0x94] sm:$0xf] %v472
        %832 = vst [vmem:[#allocation2 + $0xb8] sm:$0xf] %v482
        %833 = vst [vmem:[#allocation2 + $0xdc] sm:$0xf] %v496
        %834 = vst [vmem:[#allocation2 + $0x100] sm:$0xf] %v506
        %835 = vst [vmem:[#allocation2 + $0x124] sm:$0xf] %v520
        %836 = vst [vmem:[#allocation2 + $0x148] sm:$0xf] %v530
        %837 = vst [vmem:[#allocation2 + $0x16c] sm:$0xf] %v544
        %838 = vst [vmem:[#allocation2 + $0x190] sm:$0xf] %v554
        %839 = vst [vmem:[#allocation2 + $0x1b4] sm:$0xf] %v568
        %840 = vst [vmem:[#allocation2 + $0x1d8] sm:$0xf] %v578
        %841 = vst [vmem:[#allocation2 + $0x1fc] sm:$0xf] %v592
        %842 = vst [vmem:[#allocation2 + $0x220] sm:$0xf] %v602
        %843 = vst [vmem:[#allocation2 + $0x244] sm:$0xf] %v616
        %844 = vst [vmem:[#allocation2 + $0x268] sm:$0xf] %v626
        %845 = vst [vmem:[#allocation2 + $0x28c] sm:$0xf] %v640
        %846 = vst [vmem:[#allocation2 + $0x2b0] sm:$0xf] %v650
        %847 = vst [vmem:[#allocation2 + $0x2d4] sm:$0xf] %v664
        %848 = vst [vmem:[#allocation2 + $0x2f8] sm:$0xf] %v674
        %849 = vst [vmem:[#allocation2 + $0x31c] sm:$0xf] %v688
        %850 = vst [vmem:[#allocation2 + $0x340] sm:$0xf] %v698
        %851 = vst [vmem:[#allocation2 + $0x364] sm:$0xf] %v712
        %852 = vst [vmem:[#allocation2 + $0x388] sm:$0xf] %v722
        %853 = vst [vmem:[#allocation2 + $0x3ac] sm:$0xf] %v736
        %854 = vst [vmem:[#allocation2 + $0x3d0] sm:$0xf] %v746
        %855 = vst [vmem:[#allocation2 + $0x3f4] sm:$0xf] %v760
        %856 = vst [vmem:[#allocation2 + $0x418] sm:$0xf] %v770
        %857 = vst [vmem:[#allocation2 + $0x43c] sm:$0xf] %v784
        %858 = vst [vmem:[#allocation2 + $0x460] sm:$0xf] %v794
        %v859 = vld [vmem:[%s293] sm:$0xe]
        %v860 = vld [vmem:[%s293 + $0x4] sm:$0xf]
        %v861 = vld [vmem:[%s293 + $0x8] sm:$0x1]
        %v862 = vld [vmem:[%s293 + $0xc] sm:$0xe]
        %v863 = vld [vmem:[%s293 + $0x10] sm:$0xf]
        %v864 = vld [vmem:[%s293 + $0x14] sm:$0x1]
        %v865 = vld [vmem:[%s293 + $0x18] sm:$0xe]
        %v866 = vld [vmem:[%s293 + $0x1c] sm:$0xf]
        %v867 = vld [vmem:[%s293 + $0x20] sm:$0x1]
        %v868 = vld [vmem:[%s293 + $0x24] sm:$0xe]
        %v869 = vld [vmem:[%s293 + $0x28] sm:$0xf]
        %v870 = vld [vmem:[%s293 + $0x2c] sm:$0x1]
        %v871 = vld [vmem:[%s293 + $0x30] sm:$0xe]
        %v872 = vld [vmem:[%s293 + $0x34] sm:$0xf]
        %v873 = vld [vmem:[%s293 + $0x38] sm:$0x1]
        %v874 = vld [vmem:[%s293 + $0x3c] sm:$0xe]
        %v875 = vld [vmem:[%s293 + $0x40] sm:$0xf]
        %v876 = vld [vmem:[%s293 + $0x44] sm:$0x1]
        %v877 = vld [vmem:[%s293 + $0x48] sm:$0xe]
        %v878 = vld [vmem:[%s293 + $0x4c] sm:$0xf]
        %v879 = vld [vmem:[%s293 + $0x50] sm:$0x1]
        %v880 = vld [vmem:[%s293 + $0x54] sm:$0xe]
        %v881 = vld [vmem:[%s293 + $0x58] sm:$0xf]
        %v882 = vld [vmem:[%s293 + $0x5c] sm:$0x1]
        %v883 = vld [vmem:[%s293 + $0x60] sm:$0xe]
        %v884 = vld [vmem:[%s293 + $0x64] sm:$0xf]
        %v885 = vld [vmem:[%s293 + $0x68] sm:$0x1]
        %v886 = vld [vmem:[%s293 + $0x6c] sm:$0xe]
        %v887 = vld [vmem:[%s293 + $0x70] sm:$0xf]
        %v888 = vld [vmem:[%s293 + $0x74] sm:$0x1]
        %v889 = vld [vmem:[%s293 + $0x78] sm:$0xe]
        %v890 = vld [vmem:[%s293 + $0x7c] sm:$0xf]
        %v891 = vld [vmem:[%s293 + $0x80] sm:$0x1]
        %v892 = vld [vmem:[%s293 + $0x84] sm:$0xe]
        %v893 = vld [vmem:[%s293 + $0x88] sm:$0xf]
        %v894 = vld [vmem:[%s293 + $0x8c] sm:$0x1]
        %v895 = vld [vmem:[%s293 + $0x90] sm:$0xe]
        %v896 = vld [vmem:[%s293 + $0x94] sm:$0xf]
        %v897 = vld [vmem:[%s293 + $0x98] sm:$0x1]
        %v898 = vld [vmem:[%s293 + $0x9c] sm:$0xe]
        %v899 = vld [vmem:[%s293 + $0xa0] sm:$0xf]
        %v900 = vld [vmem:[%s293 + $0xa4] sm:$0x1]
        %v901 = vld [vmem:[%s293 + $0xa8] sm:$0xe]
        %v902 = vld [vmem:[%s293 + $0xac] sm:$0xf]
        %v903 = vld [vmem:[%s293 + $0xb0] sm:$0x1]
        %v904 = vld [vmem:[%s293 + $0xb4] sm:$0xe]
        %v905 = vld [vmem:[%s293 + $0xb8] sm:$0xf]
        %v906 = vld [vmem:[%s293 + $0xbc] sm:$0x1]
        %vm955 = vcmask 1042432
        %vm956 = vcmask 1046532
        %vm957 = vmor %vm955, %vm956
        %v958 = vrot.slane %v859, 5
        %v959 = vrot.slane %v958, 4
        %v960 = vrot.slane %v860, 5
        %v961 = vsel %vm957, %v959, %v960
        %v962 = vrot.slane %v960, 4
        %v963 = vrot.slane %v861, 5
        %v964 = vsel %vm957, %v962, %v963
        %v965 = vrot.slane %v862, 5
        %v966 = vrot.slane %v965, 4
        %v967 = vrot.slane %v863, 5
        %v968 = vsel %vm957, %v966, %v967
        %v969 = vrot.slane %v967, 4
        %v970 = vrot.slane %v864, 5
        %v971 = vsel %vm957, %v969, %v970
        %v972 = vrot.slane %v865, 5
        %v973 = vrot.slane %v972, 4
        %v974 = vrot.slane %v866, 5
        %v975 = vsel %vm957, %v973, %v974
        %v976 = vrot.slane %v974, 4
        %v977 = vrot.slane %v867, 5
        %v978 = vsel %vm957, %v976, %v977
        %v979 = vrot.slane %v868, 5
        %v980 = vrot.slane %v979, 4
        %v981 = vrot.slane %v869, 5
        %v982 = vsel %vm957, %v980, %v981
        %v983 = vrot.slane %v981, 4
        %v984 = vrot.slane %v870, 5
        %v985 = vsel %vm957, %v983, %v984
        %v986 = vrot.slane %v871, 5
        %v987 = vrot.slane %v986, 4
        %v988 = vrot.slane %v872, 5
        %v989 = vsel %vm957, %v987, %v988
        %v990 = vrot.slane %v988, 4
        %v991 = vrot.slane %v873, 5
        %v992 = vsel %vm957, %v990, %v991
        %v993 = vrot.slane %v874, 5
        %v994 = vrot.slane %v993, 4
        %v995 = vrot.slane %v875, 5
        %v996 = vsel %vm957, %v994, %v995
        %v997 = vrot.slane %v995, 4
        %v998 = vrot.slane %v876, 5
        %v999 = vsel %vm957, %v997, %v998
        %v1000 = vrot.slane %v877, 5
        %v1001 = vrot.slane %v1000, 4
        %v1002 = vrot.slane %v878, 5
        %v1003 = vsel %vm957, %v1001, %v1002
        %v1004 = vrot.slane %v1002, 4
        %v1005 = vrot.slane %v879, 5
        %v1006 = vsel %vm957, %v1004, %v1005
        %v1007 = vrot.slane %v880, 5
        %v1008 = vrot.slane %v1007, 4
        %v1009 = vrot.slane %v881, 5
        %v1010 = vsel %vm957, %v1008, %v1009
        %v1011 = vrot.slane %v1009, 4
        %v1012 = vrot.slane %v882, 5
        %v1013 = vsel %vm957, %v1011, %v1012
        %v1014 = vrot.slane %v883, 5
        %v1015 = vrot.slane %v1014, 4
        %v1016 = vrot.slane %v884, 5
        %v1017 = vsel %vm957, %v1015, %v1016
        %v1018 = vrot.slane %v1016, 4
        %v1019 = vrot.slane %v885, 5
        %v1020 = vsel %vm957, %v1018, %v1019
        %v1021 = vrot.slane %v886, 5
        %v1022 = vrot.slane %v1021, 4
        %v1023 = vrot.slane %v887, 5
        %v1024 = vsel %vm957, %v1022, %v1023
        %v1025 = vrot.slane %v1023, 4
        %v1026 = vrot.slane %v888, 5
        %v1027 = vsel %vm957, %v1025, %v1026
        %v1028 = vrot.slane %v889, 5
        %v1029 = vrot.slane %v1028, 4
        %v1030 = vrot.slane %v890, 5
        %v1031 = vsel %vm957, %v1029, %v1030
        %v1032 = vrot.slane %v1030, 4
        %v1033 = vrot.slane %v891, 5
        %v1034 = vsel %vm957, %v1032, %v1033
        %v1035 = vrot.slane %v892, 5
        %v1036 = vrot.slane %v1035, 4
        %v1037 = vrot.slane %v893, 5
        %v1038 = vsel %vm957, %v1036, %v1037
        %v1039 = vrot.slane %v1037, 4
        %v1040 = vrot.slane %v894, 5
        %v1041 = vsel %vm957, %v1039, %v1040
        %v1042 = vrot.slane %v895, 5
        %v1043 = vrot.slane %v1042, 4
        %v1044 = vrot.slane %v896, 5
        %v1045 = vsel %vm957, %v1043, %v1044
        %v1046 = vrot.slane %v1044, 4
        %v1047 = vrot.slane %v897, 5
        %v1048 = vsel %vm957, %v1046, %v1047
        %v1049 = vrot.slane %v898, 5
        %v1050 = vrot.slane %v1049, 4
        %v1051 = vrot.slane %v899, 5
        %v1052 = vsel %vm957, %v1050, %v1051
        %v1053 = vrot.slane %v1051, 4
        %v1054 = vrot.slane %v900, 5
        %v1055 = vsel %vm957, %v1053, %v1054
        %v1056 = vrot.slane %v901, 5
        %v1057 = vrot.slane %v1056, 4
        %v1058 = vrot.slane %v902, 5
        %v1059 = vsel %vm957, %v1057, %v1058
        %v1060 = vrot.slane %v1058, 4
        %v1061 = vrot.slane %v903, 5
        %v1062 = vsel %vm957, %v1060, %v1061
        %v1063 = vrot.slane %v904, 5
        %v1064 = vrot.slane %v1063, 4
        %v1065 = vrot.slane %v905, 5
        %v1066 = vsel %vm957, %v1064, %v1065
        %v1067 = vrot.slane %v1065, 4
        %v1068 = vrot.slane %v906, 5
        %v1069 = vsel %vm957, %v1067, %v1068
        %1102 = vst [vmem:[#allocation2 + $0x8] sm:$0xf] %v961
        %1103 = vst [vmem:[#allocation2 + $0x2c] sm:$0xf] %v964
        %1104 = vst [vmem:[#allocation2 + $0x50] sm:$0xf] %v968
        %1105 = vst [vmem:[#allocation2 + $0x74] sm:$0xf] %v971
        %1106 = vst [vmem:[#allocation2 + $0x98] sm:$0xf] %v975
        %1107 = vst [vmem:[#allocation2 + $0xbc] sm:$0xf] %v978
        %1108 = vst [vmem:[#allocation2 + $0xe0] sm:$0xf] %v982
        %1109 = vst [vmem:[#allocation2 + $0x104] sm:$0xf] %v985
        %1110 = vst [vmem:[#allocation2 + $0x128] sm:$0xf] %v989
        %1111 = vst [vmem:[#allocation2 + $0x14c] sm:$0xf] %v992
        %1112 = vst [vmem:[#allocation2 + $0x170] sm:$0xf] %v996
        %1113 = vst [vmem:[#allocation2 + $0x194] sm:$0xf] %v999
        %1114 = vst [vmem:[#allocation2 + $0x1b8] sm:$0xf] %v1003
        %1115 = vst [vmem:[#allocation2 + $0x1dc] sm:$0xf] %v1006
        %1116 = vst [vmem:[#allocation2 + $0x200] sm:$0xf] %v1010
        %1117 = vst [vmem:[#allocation2 + $0x224] sm:$0xf] %v1013
        %1118 = vst [vmem:[#allocation2 + $0x248] sm:$0xf] %v1017
        %1119 = vst [vmem:[#allocation2 + $0x26c] sm:$0xf] %v1020
        %1120 = vst [vmem:[#allocation2 + $0x290] sm:$0xf] %v1024
        %1121 = vst [vmem:[#allocation2 + $0x2b4] sm:$0xf] %v1027
        %1122 = vst [vmem:[#allocation2 + $0x2d8] sm:$0xf] %v1031
        %1123 = vst [vmem:[#allocation2 + $0x2fc] sm:$0xf] %v1034
        %1124 = vst [vmem:[#allocation2 + $0x320] sm:$0xf] %v1038
        %1125 = vst [vmem:[#allocation2 + $0x344] sm:$0xf] %v1041
        %1126 = vst [vmem:[#allocation2 + $0x368] sm:$0xf] %v1045
        %1127 = vst [vmem:[#allocation2 + $0x38c] sm:$0xf] %v1048
        %1128 = vst [vmem:[#allocation2 + $0x3b0] sm:$0xf] %v1052
        %1129 = vst [vmem:[#allocation2 + $0x3d4] sm:$0xf] %v1055
        %1130 = vst [vmem:[#allocation2 + $0x3f8] sm:$0xf] %v1059
        %1131 = vst [vmem:[#allocation2 + $0x41c] sm:$0xf] %v1062
        %1132 = vst [vmem:[#allocation2 + $0x440] sm:$0xf] %v1066
        %1133 = vst [vmem:[#allocation2 + $0x464] sm:$0xf] %v1069
        %s1134 = scalar_lea.vmem %s293, 12
        %v1135 = vld [vmem:[%s1134] sm:$0xf]
        %v1136 = vld [vmem:[%s1134 + $0x4] sm:$0xf]
        %v1137 = vld [vmem:[%s1134 + $0xc] sm:$0xf]
        %v1138 = vld [vmem:[%s1134 + $0x10] sm:$0xf]
        %v1139 = vld [vmem:[%s1134 + $0x18] sm:$0xf]
        %v1140 = vld [vmem:[%s1134 + $0x1c] sm:$0xf]
        %v1141 = vld [vmem:[%s1134 + $0x24] sm:$0xf]
        %v1142 = vld [vmem:[%s1134 + $0x28] sm:$0xf]
        %v1143 = vld [vmem:[%s1134 + $0x30] sm:$0xf]
        %v1144 = vld [vmem:[%s1134 + $0x34] sm:$0xf]
        %v1145 = vld [vmem:[%s1134 + $0x3c] sm:$0xf]
        %v1146 = vld [vmem:[%s1134 + $0x40] sm:$0xf]
        %v1147 = vld [vmem:[%s1134 + $0x48] sm:$0xf]
        %v1148 = vld [vmem:[%s1134 + $0x4c] sm:$0xf]
        %v1149 = vld [vmem:[%s1134 + $0x54] sm:$0xf]
        %v1150 = vld [vmem:[%s1134 + $0x58] sm:$0xf]
        %v1151 = vld [vmem:[%s1134 + $0x60] sm:$0xf]
        %v1152 = vld [vmem:[%s1134 + $0x64] sm:$0xf]
        %v1153 = vld [vmem:[%s1134 + $0x6c] sm:$0xf]
        %v1154 = vld [vmem:[%s1134 + $0x70] sm:$0xf]
        %v1155 = vld [vmem:[%s1134 + $0x78] sm:$0xf]
        %v1156 = vld [vmem:[%s1134 + $0x7c] sm:$0xf]
        %v1157 = vld [vmem:[%s1134 + $0x84] sm:$0xf]
        %v1158 = vld [vmem:[%s1134 + $0x88] sm:$0xf]
        %v1159 = vld [vmem:[%s1134 + $0x90] sm:$0xf]
        %v1160 = vld [vmem:[%s1134 + $0x94] sm:$0xf]
        %v1161 = vld [vmem:[%s1134 + $0x9c] sm:$0xf]
        %v1162 = vld [vmem:[%s1134 + $0xa0] sm:$0xf]
        %v1163 = vld [vmem:[%s1134 + $0xa8] sm:$0xf]
        %v1164 = vld [vmem:[%s1134 + $0xac] sm:$0xf]
        %v1165 = vld [vmem:[%s1134 + $0xb4] sm:$0xf]
        %v1166 = vld [vmem:[%s1134 + $0xb8] sm:$0xf]
        %1167 = vst [vmem:[#allocation2 + $0xc] sm:$0xf] %v1135
        %1168 = vst [vmem:[#allocation2 + $0x30] sm:$0xf] %v1136
        %1169 = vst [vmem:[#allocation2 + $0x54] sm:$0xf] %v1137
        %1170 = vst [vmem:[#allocation2 + $0x78] sm:$0xf] %v1138
        %1171 = vst [vmem:[#allocation2 + $0x9c] sm:$0xf] %v1139
        %1172 = vst [vmem:[#allocation2 + $0xc0] sm:$0xf] %v1140
        %1173 = vst [vmem:[#allocation2 + $0xe4] sm:$0xf] %v1141
        %1174 = vst [vmem:[#allocation2 + $0x108] sm:$0xf] %v1142
        %1175 = vst [vmem:[#allocation2 + $0x12c] sm:$0xf] %v1143
        %1176 = vst [vmem:[#allocation2 + $0x150] sm:$0xf] %v1144
        %1177 = vst [vmem:[#allocation2 + $0x174] sm:$0xf] %v1145
        %1178 = vst [vmem:[#allocation2 + $0x198] sm:$0xf] %v1146
        %1179 = vst [vmem:[#allocation2 + $0x1bc] sm:$0xf] %v1147
        %1180 = vst [vmem:[#allocation2 + $0x1e0] sm:$0xf] %v1148
        %1181 = vst [vmem:[#allocation2 + $0x204] sm:$0xf] %v1149
        %1182 = vst [vmem:[#allocation2 + $0x228] sm:$0xf] %v1150
        %1183 = vst [vmem:[#allocation2 + $0x24c] sm:$0xf] %v1151
        %1184 = vst [vmem:[#allocation2 + $0x270] sm:$0xf] %v1152
        %1185 = vst [vmem:[#allocation2 + $0x294] sm:$0xf] %v1153
        %1186 = vst [vmem:[#allocation2 + $0x2b8] sm:$0xf] %v1154
        %1187 = vst [vmem:[#allocation2 + $0x2dc] sm:$0xf] %v1155
        %1188 = vst [vmem:[#allocation2 + $0x300] sm:$0xf] %v1156
        %1189 = vst [vmem:[#allocation2 + $0x324] sm:$0xf] %v1157
        %1190 = vst [vmem:[#allocation2 + $0x348] sm:$0xf] %v1158
        %1191 = vst [vmem:[#allocation2 + $0x36c] sm:$0xf] %v1159
        %1192 = vst [vmem:[#allocation2 + $0x390] sm:$0xf] %v1160
        %1193 = vst [vmem:[#allocation2 + $0x3b4] sm:$0xf] %v1161
        %1194 = vst [vmem:[#allocation2 + $0x3d8] sm:$0xf] %v1162
        %1195 = vst [vmem:[#allocation2 + $0x3fc] sm:$0xf] %v1163
        %1196 = vst [vmem:[#allocation2 + $0x420] sm:$0xf] %v1164
        %1197 = vst [vmem:[#allocation2 + $0x444] sm:$0xf] %v1165
        %1198 = vst [vmem:[#allocation2 + $0x468] sm:$0xf] %v1166
        %v1199 = vld [vmem:[%s1134] sm:$0xf]
        %v1200 = vld [vmem:[%s1134 + $0x4] sm:$0xf]
        %v1201 = vld [vmem:[%s1134 + $0x8] sm:$0x1]
        %v1202 = vld [vmem:[%s1134 + $0xc] sm:$0xf]
        %v1203 = vld [vmem:[%s1134 + $0x10] sm:$0xf]
        %v1204 = vld [vmem:[%s1134 + $0x14] sm:$0x1]
        %v1205 = vld [vmem:[%s1134 + $0x18] sm:$0xf]
        %v1206 = vld [vmem:[%s1134 + $0x1c] sm:$0xf]
        %v1207 = vld [vmem:[%s1134 + $0x20] sm:$0x1]
        %v1208 = vld [vmem:[%s1134 + $0x24] sm:$0xf]
        %v1209 = vld [vmem:[%s1134 + $0x28] sm:$0xf]
        %v1210 = vld [vmem:[%s1134 + $0x2c] sm:$0x1]
        %v1211 = vld [vmem:[%s1134 + $0x30] sm:$0xf]
        %v1212 = vld [vmem:[%s1134 + $0x34] sm:$0xf]
        %v1213 = vld [vmem:[%s1134 + $0x38] sm:$0x1]
        %v1214 = vld [vmem:[%s1134 + $0x3c] sm:$0xf]
        %v1215 = vld [vmem:[%s1134 + $0x40] sm:$0xf]
        %v1216 = vld [vmem:[%s1134 + $0x44] sm:$0x1]
        %v1217 = vld [vmem:[%s1134 + $0x48] sm:$0xf]
        %v1218 = vld [vmem:[%s1134 + $0x4c] sm:$0xf]
        %v1219 = vld [vmem:[%s1134 + $0x50] sm:$0x1]
        %v1220 = vld [vmem:[%s1134 + $0x54] sm:$0xf]
        %v1221 = vld [vmem:[%s1134 + $0x58] sm:$0xf]
        %v1222 = vld [vmem:[%s1134 + $0x5c] sm:$0x1]
        %v1223 = vld [vmem:[%s1134 + $0x60] sm:$0xf]
        %v1224 = vld [vmem:[%s1134 + $0x64] sm:$0xf]
        %v1225 = vld [vmem:[%s1134 + $0x68] sm:$0x1]
        %v1226 = vld [vmem:[%s1134 + $0x6c] sm:$0xf]
        %v1227 = vld [vmem:[%s1134 + $0x70] sm:$0xf]
        %v1228 = vld [vmem:[%s1134 + $0x74] sm:$0x1]
        %v1229 = vld [vmem:[%s1134 + $0x78] sm:$0xf]
        %v1230 = vld [vmem:[%s1134 + $0x7c] sm:$0xf]
        %v1231 = vld [vmem:[%s1134 + $0x80] sm:$0x1]
        %v1232 = vld [vmem:[%s1134 + $0x84] sm:$0xf]
        %v1233 = vld [vmem:[%s1134 + $0x88] sm:$0xf]
        %v1234 = vld [vmem:[%s1134 + $0x8c] sm:$0x1]
        %v1235 = vld [vmem:[%s1134 + $0x90] sm:$0xf]
        %v1236 = vld [vmem:[%s1134 + $0x94] sm:$0xf]
        %v1237 = vld [vmem:[%s1134 + $0x98] sm:$0x1]
        %v1238 = vld [vmem:[%s1134 + $0x9c] sm:$0xf]
        %v1239 = vld [vmem:[%s1134 + $0xa0] sm:$0xf]
        %v1240 = vld [vmem:[%s1134 + $0xa4] sm:$0x1]
        %v1241 = vld [vmem:[%s1134 + $0xa8] sm:$0xf]
        %v1242 = vld [vmem:[%s1134 + $0xac] sm:$0xf]
        %v1243 = vld [vmem:[%s1134 + $0xb0] sm:$0x1]
        %v1244 = vld [vmem:[%s1134 + $0xb4] sm:$0xf]
        %v1245 = vld [vmem:[%s1134 + $0xb8] sm:$0xf]
        %v1246 = vld [vmem:[%s1134 + $0xbc] sm:$0x1]
        %v1248 = vshrl.u32 %v1199, 16
        %v1250 = vrot.slane %v1248, 4
        %v1251 = vshll.u32 %v1199, 16
        %v1253 = vrot.slane %v1251, 5
        %v1254 = vor.u32 %v1250, %v1253
        %v1255 = vrot.slane %v1254, 4
        %v1257 = vshll.u32 %v1200, 16
        %v1259 = vrot.slane %v1257, 5
        %v1260 = vsel %vm410, %v1255, %v1259
        %v1261 = vshrl.u32 %v1200, 16
        %v1263 = vrot.slane %v1261, 4
        %v1264 = vor.u32 %v1263, %v1259
        %v1265 = vrot.slane %v1264, 4
        %v1267 = vshll.u32 %v1201, 16
        %v1269 = vrot.slane %v1267, 5
        %v1270 = vsel %vm410, %v1265, %v1269
        %v1272 = vshrl.u32 %v1202, 16
        %v1274 = vrot.slane %v1272, 4
        %v1275 = vshll.u32 %v1202, 16
        %v1277 = vrot.slane %v1275, 5
        %v1278 = vor.u32 %v1274, %v1277
        %v1279 = vrot.slane %v1278, 4
        %v1281 = vshll.u32 %v1203, 16
        %v1283 = vrot.slane %v1281, 5
        %v1284 = vsel %vm410, %v1279, %v1283
        %v1285 = vshrl.u32 %v1203, 16
        %v1287 = vrot.slane %v1285, 4
        %v1288 = vor.u32 %v1287, %v1283
        %v1289 = vrot.slane %v1288, 4
        %v1291 = vshll.u32 %v1204, 16
        %v1293 = vrot.slane %v1291, 5
        %v1294 = vsel %vm410, %v1289, %v1293
        %v1296 = vshrl.u32 %v1205, 16
        %v1298 = vrot.slane %v1296, 4
        %v1299 = vshll.u32 %v1205, 16
        %v1301 = vrot.slane %v1299, 5
        %v1302 = vor.u32 %v1298, %v1301
        %v1303 = vrot.slane %v1302, 4
        %v1305 = vshll.u32 %v1206, 16
        %v1307 = vrot.slane %v1305, 5
        %v1308 = vsel %vm410, %v1303, %v1307
        %v1309 = vshrl.u32 %v1206, 16
        %v1311 = vrot.slane %v1309, 4
        %v1312 = vor.u32 %v1311, %v1307
        %v1313 = vrot.slane %v1312, 4
        %v1315 = vshll.u32 %v1207, 16
        %v1317 = vrot.slane %v1315, 5
        %v1318 = vsel %vm410, %v1313, %v1317
        %v1320 = vshrl.u32 %v1208, 16
        %v1322 = vrot.slane %v1320, 4
        %v1323 = vshll.u32 %v1208, 16
        %v1325 = vrot.slane %v1323, 5
        %v1326 = vor.u32 %v1322, %v1325
        %v1327 = vrot.slane %v1326, 4
        %v1329 = vshll.u32 %v1209, 16
        %v1331 = vrot.slane %v1329, 5
        %v1332 = vsel %vm410, %v1327, %v1331
        %v1333 = vshrl.u32 %v1209, 16
        %v1335 = vrot.slane %v1333, 4
        %v1336 = vor.u32 %v1335, %v1331
        %v1337 = vrot.slane %v1336, 4
        %v1339 = vshll.u32 %v1210, 16
        %v1341 = vrot.slane %v1339, 5
        %v1342 = vsel %vm410, %v1337, %v1341
        %v1344 = vshrl.u32 %v1211, 16
        %v1346 = vrot.slane %v1344, 4
        %v1347 = vshll.u32 %v1211, 16
        %v1349 = vrot.slane %v1347, 5
        %v1350 = vor.u32 %v1346, %v1349
        %v1351 = vrot.slane %v1350, 4
        %v1353 = vshll.u32 %v1212, 16
        %v1355 = vrot.slane %v1353, 5
        %v1356 = vsel %vm410, %v1351, %v1355
        %v1357 = vshrl.u32 %v1212, 16
        %v1359 = vrot.slane %v1357, 4
        %v1360 = vor.u32 %v1359, %v1355
        %v1361 = vrot.slane %v1360, 4
        %v1363 = vshll.u32 %v1213, 16
        %v1365 = vrot.slane %v1363, 5
        %v1366 = vsel %vm410, %v1361, %v1365
        %v1368 = vshrl.u32 %v1214, 16
        %v1370 = vrot.slane %v1368, 4
        %v1371 = vshll.u32 %v1214, 16
        %v1373 = vrot.slane %v1371, 5
        %v1374 = vor.u32 %v1370, %v1373
        %v1375 = vrot.slane %v1374, 4
        %v1377 = vshll.u32 %v1215, 16
        %v1379 = vrot.slane %v1377, 5
        %v1380 = vsel %vm410, %v1375, %v1379
        %v1381 = vshrl.u32 %v1215, 16
        %v1383 = vrot.slane %v1381, 4
        %v1384 = vor.u32 %v1383, %v1379
        %v1385 = vrot.slane %v1384, 4
        %v1387 = vshll.u32 %v1216, 16
        %v1389 = vrot.slane %v1387, 5
        %v1390 = vsel %vm410, %v1385, %v1389
        %v1392 = vshrl.u32 %v1217, 16
        %v1394 = vrot.slane %v1392, 4
        %v1395 = vshll.u32 %v1217, 16
        %v1397 = vrot.slane %v1395, 5
        %v1398 = vor.u32 %v1394, %v1397
        %v1399 = vrot.slane %v1398, 4
        %v1401 = vshll.u32 %v1218, 16
        %v1403 = vrot.slane %v1401, 5
        %v1404 = vsel %vm410, %v1399, %v1403
        %v1405 = vshrl.u32 %v1218, 16
        %v1407 = vrot.slane %v1405, 4
        %v1408 = vor.u32 %v1407, %v1403
        %v1409 = vrot.slane %v1408, 4
        %v1411 = vshll.u32 %v1219, 16
        %v1413 = vrot.slane %v1411, 5
        %v1414 = vsel %vm410, %v1409, %v1413
        %v1416 = vshrl.u32 %v1220, 16
        %v1418 = vrot.slane %v1416, 4
        %v1419 = vshll.u32 %v1220, 16
        %v1421 = vrot.slane %v1419, 5
        %v1422 = vor.u32 %v1418, %v1421
        %v1423 = vrot.slane %v1422, 4
        %v1425 = vshll.u32 %v1221, 16
        %v1427 = vrot.slane %v1425, 5
        %v1428 = vsel %vm410, %v1423, %v1427
        %v1429 = vshrl.u32 %v1221, 16
        %v1431 = vrot.slane %v1429, 4
        %v1432 = vor.u32 %v1431, %v1427
        %v1433 = vrot.slane %v1432, 4
        %v1435 = vshll.u32 %v1222, 16
        %v1437 = vrot.slane %v1435, 5
        %v1438 = vsel %vm410, %v1433, %v1437
        %v1440 = vshrl.u32 %v1223, 16
        %v1442 = vrot.slane %v1440, 4
        %v1443 = vshll.u32 %v1223, 16
        %v1445 = vrot.slane %v1443, 5
        %v1446 = vor.u32 %v1442, %v1445
        %v1447 = vrot.slane %v1446, 4
        %v1449 = vshll.u32 %v1224, 16
        %v1451 = vrot.slane %v1449, 5
        %v1452 = vsel %vm410, %v1447, %v1451
        %v1453 = vshrl.u32 %v1224, 16
        %v1455 = vrot.slane %v1453, 4
        %v1456 = vor.u32 %v1455, %v1451
        %v1457 = vrot.slane %v1456, 4
        %v1459 = vshll.u32 %v1225, 16
        %v1461 = vrot.slane %v1459, 5
        %v1462 = vsel %vm410, %v1457, %v1461
        %v1464 = vshrl.u32 %v1226, 16
        %v1466 = vrot.slane %v1464, 4
        %v1467 = vshll.u32 %v1226, 16
        %v1469 = vrot.slane %v1467, 5
        %v1470 = vor.u32 %v1466, %v1469
        %v1471 = vrot.slane %v1470, 4
        %v1473 = vshll.u32 %v1227, 16
        %v1475 = vrot.slane %v1473, 5
        %v1476 = vsel %vm410, %v1471, %v1475
        %v1477 = vshrl.u32 %v1227, 16
        %v1479 = vrot.slane %v1477, 4
        %v1480 = vor.u32 %v1479, %v1475
        %v1481 = vrot.slane %v1480, 4
        %v1483 = vshll.u32 %v1228, 16
        %v1485 = vrot.slane %v1483, 5
        %v1486 = vsel %vm410, %v1481, %v1485
        %v1488 = vshrl.u32 %v1229, 16
        %v1490 = vrot.slane %v1488, 4
        %v1491 = vshll.u32 %v1229, 16
        %v1493 = vrot.slane %v1491, 5
        %v1494 = vor.u32 %v1490, %v1493
        %v1495 = vrot.slane %v1494, 4
        %v1497 = vshll.u32 %v1230, 16
        %v1499 = vrot.slane %v1497, 5
        %v1500 = vsel %vm410, %v1495, %v1499
        %v1501 = vshrl.u32 %v1230, 16
        %v1503 = vrot.slane %v1501, 4
        %v1504 = vor.u32 %v1503, %v1499
        %v1505 = vrot.slane %v1504, 4
        %v1507 = vshll.u32 %v1231, 16
        %v1509 = vrot.slane %v1507, 5
        %v1510 = vsel %vm410, %v1505, %v1509
        %v1512 = vshrl.u32 %v1232, 16
        %v1514 = vrot.slane %v1512, 4
        %v1515 = vshll.u32 %v1232, 16
        %v1517 = vrot.slane %v1515, 5
        %v1518 = vor.u32 %v1514, %v1517
        %v1519 = vrot.slane %v1518, 4
        %v1521 = vshll.u32 %v1233, 16
        %v1523 = vrot.slane %v1521, 5
        %v1524 = vsel %vm410, %v1519, %v1523
        %v1525 = vshrl.u32 %v1233, 16
        %v1527 = vrot.slane %v1525, 4
        %v1528 = vor.u32 %v1527, %v1523
        %v1529 = vrot.slane %v1528, 4
        %v1531 = vshll.u32 %v1234, 16
        %v1533 = vrot.slane %v1531, 5
        %v1534 = vsel %vm410, %v1529, %v1533
        %v1536 = vshrl.u32 %v1235, 16
        %v1538 = vrot.slane %v1536, 4
        %v1539 = vshll.u32 %v1235, 16
        %v1541 = vrot.slane %v1539, 5
        %v1542 = vor.u32 %v1538, %v1541
        %v1543 = vrot.slane %v1542, 4
        %v1545 = vshll.u32 %v1236, 16
        %v1547 = vrot.slane %v1545, 5
        %v1548 = vsel %vm410, %v1543, %v1547
        %v1549 = vshrl.u32 %v1236, 16
        %v1551 = vrot.slane %v1549, 4
        %v1552 = vor.u32 %v1551, %v1547
        %v1553 = vrot.slane %v1552, 4
        %v1555 = vshll.u32 %v1237, 16
        %v1557 = vrot.slane %v1555, 5
        %v1558 = vsel %vm410, %v1553, %v1557
        %v1560 = vshrl.u32 %v1238, 16
        %v1562 = vrot.slane %v1560, 4
        %v1563 = vshll.u32 %v1238, 16
        %v1565 = vrot.slane %v1563, 5
        %v1566 = vor.u32 %v1562, %v1565
        %v1567 = vrot.slane %v1566, 4
        %v1569 = vshll.u32 %v1239, 16
        %v1571 = vrot.slane %v1569, 5
        %v1572 = vsel %vm410, %v1567, %v1571
        %v1573 = vshrl.u32 %v1239, 16
        %v1575 = vrot.slane %v1573, 4
        %v1576 = vor.u32 %v1575, %v1571
        %v1577 = vrot.slane %v1576, 4
        %v1579 = vshll.u32 %v1240, 16
        %v1581 = vrot.slane %v1579, 5
        %v1582 = vsel %vm410, %v1577, %v1581
        %v1584 = vshrl.u32 %v1241, 16
        %v1586 = vrot.slane %v1584, 4
        %v1587 = vshll.u32 %v1241, 16
        %v1589 = vrot.slane %v1587, 5
        %v1590 = vor.u32 %v1586, %v1589
        %v1591 = vrot.slane %v1590, 4
        %v1593 = vshll.u32 %v1242, 16
        %v1595 = vrot.slane %v1593, 5
        %v1596 = vsel %vm410, %v1591, %v1595
        %v1597 = vshrl.u32 %v1242, 16
        %v1599 = vrot.slane %v1597, 4
        %v1600 = vor.u32 %v1599, %v1595
        %v1601 = vrot.slane %v1600, 4
        %v1603 = vshll.u32 %v1243, 16
        %v1605 = vrot.slane %v1603, 5
        %v1606 = vsel %vm410, %v1601, %v1605
        %v1608 = vshrl.u32 %v1244, 16
        %v1610 = vrot.slane %v1608, 4
        %v1611 = vshll.u32 %v1244, 16
        %v1613 = vrot.slane %v1611, 5
        %v1614 = vor.u32 %v1610, %v1613
        %v1615 = vrot.slane %v1614, 4
        %v1617 = vshll.u32 %v1245, 16
        %v1619 = vrot.slane %v1617, 5
        %v1620 = vsel %vm410, %v1615, %v1619
        %v1621 = vshrl.u32 %v1245, 16
        %v1623 = vrot.slane %v1621, 4
        %v1624 = vor.u32 %v1623, %v1619
        %v1625 = vrot.slane %v1624, 4
        %v1627 = vshll.u32 %v1246, 16
        %v1629 = vrot.slane %v1627, 5
        %v1630 = vsel %vm410, %v1625, %v1629
        %1663 = vst [vmem:[#allocation2 + $0x10] sm:$0xf] %v1260
        %1664 = vst [vmem:[#allocation2 + $0x34] sm:$0xf] %v1270
        %1665 = vst [vmem:[#allocation2 + $0x58] sm:$0xf] %v1284
        %1666 = vst [vmem:[#allocation2 + $0x7c] sm:$0xf] %v1294
        %1667 = vst [vmem:[#allocation2 + $0xa0] sm:$0xf] %v1308
        %1668 = vst [vmem:[#allocation2 + $0xc4] sm:$0xf] %v1318
        %1669 = vst [vmem:[#allocation2 + $0xe8] sm:$0xf] %v1332
        %1670 = vst [vmem:[#allocation2 + $0x10c] sm:$0xf] %v1342
        %1671 = vst [vmem:[#allocation2 + $0x130] sm:$0xf] %v1356
        %1672 = vst [vmem:[#allocation2 + $0x154] sm:$0xf] %v1366
        %1673 = vst [vmem:[#allocation2 + $0x178] sm:$0xf] %v1380
        %1674 = vst [vmem:[#allocation2 + $0x19c] sm:$0xf] %v1390
        %1675 = vst [vmem:[#allocation2 + $0x1c0] sm:$0xf] %v1404
        %1676 = vst [vmem:[#allocation2 + $0x1e4] sm:$0xf] %v1414
        %1677 = vst [vmem:[#allocation2 + $0x208] sm:$0xf] %v1428
        %1678 = vst [vmem:[#allocation2 + $0x22c] sm:$0xf] %v1438
        %1679 = vst [vmem:[#allocation2 + $0x250] sm:$0xf] %v1452
        %1680 = vst [vmem:[#allocation2 + $0x274] sm:$0xf] %v1462
        %1681 = vst [vmem:[#allocation2 + $0x298] sm:$0xf] %v1476
        %1682 = vst [vmem:[#allocation2 + $0x2bc] sm:$0xf] %v1486
        %1683 = vst [vmem:[#allocation2 + $0x2e0] sm:$0xf] %v1500
        %1684 = vst [vmem:[#allocation2 + $0x304] sm:$0xf] %v1510
        %1685 = vst [vmem:[#allocation2 + $0x328] sm:$0xf] %v1524
        %1686 = vst [vmem:[#allocation2 + $0x34c] sm:$0xf] %v1534
        %1687 = vst [vmem:[#allocation2 + $0x370] sm:$0xf] %v1548
        %1688 = vst [vmem:[#allocation2 + $0x394] sm:$0xf] %v1558
        %1689 = vst [vmem:[#allocation2 + $0x3b8] sm:$0xf] %v1572
        %1690 = vst [vmem:[#allocation2 + $0x3dc] sm:$0xf] %v1582
        %1691 = vst [vmem:[#allocation2 + $0x400] sm:$0xf] %v1596
        %1692 = vst [vmem:[#allocation2 + $0x424] sm:$0xf] %v1606
        %1693 = vst [vmem:[#allocation2 + $0x448] sm:$0xf] %v1620
        %1694 = vst [vmem:[#allocation2 + $0x46c] sm:$0xf] %v1630
        %v1695 = vld [vmem:[%s1134] sm:$0xe]
        %v1696 = vld [vmem:[%s1134 + $0x4] sm:$0xf]
        %v1697 = vld [vmem:[%s1134 + $0x8] sm:$0x1]
        %v1698 = vld [vmem:[%s1134 + $0xc] sm:$0xe]
        %v1699 = vld [vmem:[%s1134 + $0x10] sm:$0xf]
        %v1700 = vld [vmem:[%s1134 + $0x14] sm:$0x1]
        %v1701 = vld [vmem:[%s1134 + $0x18] sm:$0xe]
        %v1702 = vld [vmem:[%s1134 + $0x1c] sm:$0xf]
        %v1703 = vld [vmem:[%s1134 + $0x20] sm:$0x1]
        %v1704 = vld [vmem:[%s1134 + $0x24] sm:$0xe]
        %v1705 = vld [vmem:[%s1134 + $0x28] sm:$0xf]
        %v1706 = vld [vmem:[%s1134 + $0x2c] sm:$0x1]
        %v1707 = vld [vmem:[%s1134 + $0x30] sm:$0xe]
        %v1708 = vld [vmem:[%s1134 + $0x34] sm:$0xf]
        %v1709 = vld [vmem:[%s1134 + $0x38] sm:$0x1]
        %v1710 = vld [vmem:[%s1134 + $0x3c] sm:$0xe]
        %v1711 = vld [vmem:[%s1134 + $0x40] sm:$0xf]
        %v1712 = vld [vmem:[%s1134 + $0x44] sm:$0x1]
        %v1713 = vld [vmem:[%s1134 + $0x48] sm:$0xe]
        %v1714 = vld [vmem:[%s1134 + $0x4c] sm:$0xf]
        %v1715 = vld [vmem:[%s1134 + $0x50] sm:$0x1]
        %v1716 = vld [vmem:[%s1134 + $0x54] sm:$0xe]
        %v1717 = vld [vmem:[%s1134 + $0x58] sm:$0xf]
        %v1718 = vld [vmem:[%s1134 + $0x5c] sm:$0x1]
        %v1719 = vld [vmem:[%s1134 + $0x60] sm:$0xe]
        %v1720 = vld [vmem:[%s1134 + $0x64] sm:$0xf]
        %v1721 = vld [vmem:[%s1134 + $0x68] sm:$0x1]
        %v1722 = vld [vmem:[%s1134 + $0x6c] sm:$0xe]
        %v1723 = vld [vmem:[%s1134 + $0x70] sm:$0xf]
        %v1724 = vld [vmem:[%s1134 + $0x74] sm:$0x1]
        %v1725 = vld [vmem:[%s1134 + $0x78] sm:$0xe]
        %v1726 = vld [vmem:[%s1134 + $0x7c] sm:$0xf]
        %v1727 = vld [vmem:[%s1134 + $0x80] sm:$0x1]
        %v1728 = vld [vmem:[%s1134 + $0x84] sm:$0xe]
        %v1729 = vld [vmem:[%s1134 + $0x88] sm:$0xf]
        %v1730 = vld [vmem:[%s1134 + $0x8c] sm:$0x1]
        %v1731 = vld [vmem:[%s1134 + $0x90] sm:$0xe]
        %v1732 = vld [vmem:[%s1134 + $0x94] sm:$0xf]
        %v1733 = vld [vmem:[%s1134 + $0x98] sm:$0x1]
        %v1734 = vld [vmem:[%s1134 + $0x9c] sm:$0xe]
        %v1735 = vld [vmem:[%s1134 + $0xa0] sm:$0xf]
        %v1736 = vld [vmem:[%s1134 + $0xa4] sm:$0x1]
        %v1737 = vld [vmem:[%s1134 + $0xa8] sm:$0xe]
        %v1738 = vld [vmem:[%s1134 + $0xac] sm:$0xf]
        %v1739 = vld [vmem:[%s1134 + $0xb0] sm:$0x1]
        %v1740 = vld [vmem:[%s1134 + $0xb4] sm:$0xe]
        %v1741 = vld [vmem:[%s1134 + $0xb8] sm:$0xf]
        %v1742 = vld [vmem:[%s1134 + $0xbc] sm:$0x1]
        %v1791 = vrot.slane %v1695, 5
        %v1792 = vrot.slane %v1791, 4
        %v1793 = vrot.slane %v1696, 5
        %v1794 = vsel %vm957, %v1792, %v1793
        %v1795 = vrot.slane %v1793, 4
        %v1796 = vrot.slane %v1697, 5
        %v1797 = vsel %vm957, %v1795, %v1796
        %v1798 = vrot.slane %v1698, 5
        %v1799 = vrot.slane %v1798, 4
        %v1800 = vrot.slane %v1699, 5
        %v1801 = vsel %vm957, %v1799, %v1800
        %v1802 = vrot.slane %v1800, 4
        %v1803 = vrot.slane %v1700, 5
        %v1804 = vsel %vm957, %v1802, %v1803
        %v1805 = vrot.slane %v1701, 5
        %v1806 = vrot.slane %v1805, 4
        %v1807 = vrot.slane %v1702, 5
        %v1808 = vsel %vm957, %v1806, %v1807
        %v1809 = vrot.slane %v1807, 4
        %v1810 = vrot.slane %v1703, 5
        %v1811 = vsel %vm957, %v1809, %v1810
        %v1812 = vrot.slane %v1704, 5
        %v1813 = vrot.slane %v1812, 4
        %v1814 = vrot.slane %v1705, 5
        %v1815 = vsel %vm957, %v1813, %v1814
        %v1816 = vrot.slane %v1814, 4
        %v1817 = vrot.slane %v1706, 5
        %v1818 = vsel %vm957, %v1816, %v1817
        %v1819 = vrot.slane %v1707, 5
        %v1820 = vrot.slane %v1819, 4
        %v1821 = vrot.slane %v1708, 5
        %v1822 = vsel %vm957, %v1820, %v1821
        %v1823 = vrot.slane %v1821, 4
        %v1824 = vrot.slane %v1709, 5
        %v1825 = vsel %vm957, %v1823, %v1824
        %v1826 = vrot.slane %v1710, 5
        %v1827 = vrot.slane %v1826, 4
        %v1828 = vrot.slane %v1711, 5
        %v1829 = vsel %vm957, %v1827, %v1828
        %v1830 = vrot.slane %v1828, 4
        %v1831 = vrot.slane %v1712, 5
        %v1832 = vsel %vm957, %v1830, %v1831
        %v1833 = vrot.slane %v1713, 5
        %v1834 = vrot.slane %v1833, 4
        %v1835 = vrot.slane %v1714, 5
        %v1836 = vsel %vm957, %v1834, %v1835
        %v1837 = vrot.slane %v1835, 4
        %v1838 = vrot.slane %v1715, 5
        %v1839 = vsel %vm957, %v1837, %v1838
        %v1840 = vrot.slane %v1716, 5
        %v1841 = vrot.slane %v1840, 4
        %v1842 = vrot.slane %v1717, 5
        %v1843 = vsel %vm957, %v1841, %v1842
        %v1844 = vrot.slane %v1842, 4
        %v1845 = vrot.slane %v1718, 5
        %v1846 = vsel %vm957, %v1844, %v1845
        %v1847 = vrot.slane %v1719, 5
        %v1848 = vrot.slane %v1847, 4
        %v1849 = vrot.slane %v1720, 5
        %v1850 = vsel %vm957, %v1848, %v1849
        %v1851 = vrot.slane %v1849, 4
        %v1852 = vrot.slane %v1721, 5
        %v1853 = vsel %vm957, %v1851, %v1852
        %v1854 = vrot.slane %v1722, 5
        %v1855 = vrot.slane %v1854, 4
        %v1856 = vrot.slane %v1723, 5
        %v1857 = vsel %vm957, %v1855, %v1856
        %v1858 = vrot.slane %v1856, 4
        %v1859 = vrot.slane %v1724, 5
        %v1860 = vsel %vm957, %v1858, %v1859
        %v1861 = vrot.slane %v1725, 5
        %v1862 = vrot.slane %v1861, 4
        %v1863 = vrot.slane %v1726, 5
        %v1864 = vsel %vm957, %v1862, %v1863
        %v1865 = vrot.slane %v1863, 4
        %v1866 = vrot.slane %v1727, 5
        %v1867 = vsel %vm957, %v1865, %v1866
        %v1868 = vrot.slane %v1728, 5
        %v1869 = vrot.slane %v1868, 4
        %v1870 = vrot.slane %v1729, 5
        %v1871 = vsel %vm957, %v1869, %v1870
        %v1872 = vrot.slane %v1870, 4
        %v1873 = vrot.slane %v1730, 5
        %v1874 = vsel %vm957, %v1872, %v1873
        %v1875 = vrot.slane %v1731, 5
        %v1876 = vrot.slane %v1875, 4
        %v1877 = vrot.slane %v1732, 5
        %v1878 = vsel %vm957, %v1876, %v1877
        %v1879 = vrot.slane %v1877, 4
        %v1880 = vrot.slane %v1733, 5
        %v1881 = vsel %vm957, %v1879, %v1880
        %v1882 = vrot.slane %v1734, 5
        %v1883 = vrot.slane %v1882, 4
        %v1884 = vrot.slane %v1735, 5
        %v1885 = vsel %vm957, %v1883, %v1884
        %v1886 = vrot.slane %v1884, 4
        %v1887 = vrot.slane %v1736, 5
        %v1888 = vsel %vm957, %v1886, %v1887
        %v1889 = vrot.slane %v1737, 5
        %v1890 = vrot.slane %v1889, 4
        %v1891 = vrot.slane %v1738, 5
        %v1892 = vsel %vm957, %v1890, %v1891
        %v1893 = vrot.slane %v1891, 4
        %v1894 = vrot.slane %v1739, 5
        %v1895 = vsel %vm957, %v1893, %v1894
        %v1896 = vrot.slane %v1740, 5
        %v1897 = vrot.slane %v1896, 4
        %v1898 = vrot.slane %v1741, 5
        %v1899 = vsel %vm957, %v1897, %v1898
        %v1900 = vrot.slane %v1898, 4
        %v1901 = vrot.slane %v1742, 5
        %v1902 = vsel %vm957, %v1900, %v1901
        %1935 = vst [vmem:[#allocation2 + $0x14] sm:$0xf] %v1794
        %1936 = vst [vmem:[#allocation2 + $0x38] sm:$0xf] %v1797
        %1937 = vst [vmem:[#allocation2 + $0x5c] sm:$0xf] %v1801
        %1938 = vst [vmem:[#allocation2 + $0x80] sm:$0xf] %v1804
        %1939 = vst [vmem:[#allocation2 + $0xa4] sm:$0xf] %v1808
        %1940 = vst [vmem:[#allocation2 + $0xc8] sm:$0xf] %v1811
        %1941 = vst [vmem:[#allocation2 + $0xec] sm:$0xf] %v1815
        %1942 = vst [vmem:[#allocation2 + $0x110] sm:$0xf] %v1818
        %1943 = vst [vmem:[#allocation2 + $0x134] sm:$0xf] %v1822
        %1944 = vst [vmem:[#allocation2 + $0x158] sm:$0xf] %v1825
        %1945 = vst [vmem:[#allocation2 + $0x17c] sm:$0xf] %v1829
        %1946 = vst [vmem:[#allocation2 + $0x1a0] sm:$0xf] %v1832
        %1947 = vst [vmem:[#allocation2 + $0x1c4] sm:$0xf] %v1836
        %1948 = vst [vmem:[#allocation2 + $0x1e8] sm:$0xf] %v1839
        %1949 = vst [vmem:[#allocation2 + $0x20c] sm:$0xf] %v1843
        %1950 = vst [vmem:[#allocation2 + $0x230] sm:$0xf] %v1846
        %1951 = vst [vmem:[#allocation2 + $0x254] sm:$0xf] %v1850
        %1952 = vst [vmem:[#allocation2 + $0x278] sm:$0xf] %v1853
        %1953 = vst [vmem:[#allocation2 + $0x29c] sm:$0xf] %v1857
        %1954 = vst [vmem:[#allocation2 + $0x2c0] sm:$0xf] %v1860
        %1955 = vst [vmem:[#allocation2 + $0x2e4] sm:$0xf] %v1864
        %1956 = vst [vmem:[#allocation2 + $0x308] sm:$0xf] %v1867
        %1957 = vst [vmem:[#allocation2 + $0x32c] sm:$0xf] %v1871
        %1958 = vst [vmem:[#allocation2 + $0x350] sm:$0xf] %v1874
        %1959 = vst [vmem:[#allocation2 + $0x374] sm:$0xf] %v1878
        %1960 = vst [vmem:[#allocation2 + $0x398] sm:$0xf] %v1881
        %1961 = vst [vmem:[#allocation2 + $0x3bc] sm:$0xf] %v1885
        %1962 = vst [vmem:[#allocation2 + $0x3e0] sm:$0xf] %v1888
        %1963 = vst [vmem:[#allocation2 + $0x404] sm:$0xf] %v1892
        %1964 = vst [vmem:[#allocation2 + $0x428] sm:$0xf] %v1895
        %1965 = vst [vmem:[#allocation2 + $0x44c] sm:$0xf] %v1899
        %1966 = vst [vmem:[#allocation2 + $0x470] sm:$0xf] %v1902
        %s1967 = scalar_lea.vmem %s293, 24
        %v1968 = vld [vmem:[%s1967] sm:$0xf]
        %v1969 = vld [vmem:[%s1967 + $0x4] sm:$0xf]
        %v1970 = vld [vmem:[%s1967 + $0xc] sm:$0xf]
        %v1971 = vld [vmem:[%s1967 + $0x10] sm:$0xf]
        %v1972 = vld [vmem:[%s1967 + $0x18] sm:$0xf]
        %v1973 = vld [vmem:[%s1967 + $0x1c] sm:$0xf]
        %v1974 = vld [vmem:[%s1967 + $0x24] sm:$0xf]
        %v1975 = vld [vmem:[%s1967 + $0x28] sm:$0xf]
        %v1976 = vld [vmem:[%s1967 + $0x30] sm:$0xf]
        %v1977 = vld [vmem:[%s1967 + $0x34] sm:$0xf]
        %v1978 = vld [vmem:[%s1967 + $0x3c] sm:$0xf]
        %v1979 = vld [vmem:[%s1967 + $0x40] sm:$0xf]
        %v1980 = vld [vmem:[%s1967 + $0x48] sm:$0xf]
        %v1981 = vld [vmem:[%s1967 + $0x4c] sm:$0xf]
        %v1982 = vld [vmem:[%s1967 + $0x54] sm:$0xf]
        %v1983 = vld [vmem:[%s1967 + $0x58] sm:$0xf]
        %v1984 = vld [vmem:[%s1967 + $0x60] sm:$0xf]
        %v1985 = vld [vmem:[%s1967 + $0x64] sm:$0xf]
        %v1986 = vld [vmem:[%s1967 + $0x6c] sm:$0xf]
        %v1987 = vld [vmem:[%s1967 + $0x70] sm:$0xf]
        %v1988 = vld [vmem:[%s1967 + $0x78] sm:$0xf]
        %v1989 = vld [vmem:[%s1967 + $0x7c] sm:$0xf]
        %v1990 = vld [vmem:[%s1967 + $0x84] sm:$0xf]
        %v1991 = vld [vmem:[%s1967 + $0x88] sm:$0xf]
        %v1992 = vld [vmem:[%s1967 + $0x90] sm:$0xf]
        %v1993 = vld [vmem:[%s1967 + $0x94] sm:$0xf]
        %v1994 = vld [vmem:[%s1967 + $0x9c] sm:$0xf]
        %v1995 = vld [vmem:[%s1967 + $0xa0] sm:$0xf]
        %v1996 = vld [vmem:[%s1967 + $0xa8] sm:$0xf]
        %v1997 = vld [vmem:[%s1967 + $0xac] sm:$0xf]
        %v1998 = vld [vmem:[%s1967 + $0xb4] sm:$0xf]
        %v1999 = vld [vmem:[%s1967 + $0xb8] sm:$0xf]
        %2000 = vst [vmem:[#allocation2 + $0x18] sm:$0xf] %v1968
        %2001 = vst [vmem:[#allocation2 + $0x3c] sm:$0xf] %v1969
        %2002 = vst [vmem:[#allocation2 + $0x60] sm:$0xf] %v1970
        %2003 = vst [vmem:[#allocation2 + $0x84] sm:$0xf] %v1971
        %2004 = vst [vmem:[#allocation2 + $0xa8] sm:$0xf] %v1972
        %2005 = vst [vmem:[#allocation2 + $0xcc] sm:$0xf] %v1973
        %2006 = vst [vmem:[#allocation2 + $0xf0] sm:$0xf] %v1974
        %2007 = vst [vmem:[#allocation2 + $0x114] sm:$0xf] %v1975
        %2008 = vst [vmem:[#allocation2 + $0x138] sm:$0xf] %v1976
        %2009 = vst [vmem:[#allocation2 + $0x15c] sm:$0xf] %v1977
        %2010 = vst [vmem:[#allocation2 + $0x180] sm:$0xf] %v1978
        %2011 = vst [vmem:[#allocation2 + $0x1a4] sm:$0xf] %v1979
        %2012 = vst [vmem:[#allocation2 + $0x1c8] sm:$0xf] %v1980
        %2013 = vst [vmem:[#allocation2 + $0x1ec] sm:$0xf] %v1981
        %2014 = vst [vmem:[#allocation2 + $0x210] sm:$0xf] %v1982
        %2015 = vst [vmem:[#allocation2 + $0x234] sm:$0xf] %v1983
        %2016 = vst [vmem:[#allocation2 + $0x258] sm:$0xf] %v1984
        %2017 = vst [vmem:[#allocation2 + $0x27c] sm:$0xf] %v1985
        %2018 = vst [vmem:[#allocation2 + $0x2a0] sm:$0xf] %v1986
        %2019 = vst [vmem:[#allocation2 + $0x2c4] sm:$0xf] %v1987
        %2020 = vst [vmem:[#allocation2 + $0x2e8] sm:$0xf] %v1988
        %2021 = vst [vmem:[#allocation2 + $0x30c] sm:$0xf] %v1989
        %2022 = vst [vmem:[#allocation2 + $0x330] sm:$0xf] %v1990
        %2023 = vst [vmem:[#allocation2 + $0x354] sm:$0xf] %v1991
        %2024 = vst [vmem:[#allocation2 + $0x378] sm:$0xf] %v1992
        %2025 = vst [vmem:[#allocation2 + $0x39c] sm:$0xf] %v1993
        %2026 = vst [vmem:[#allocation2 + $0x3c0] sm:$0xf] %v1994
        %2027 = vst [vmem:[#allocation2 + $0x3e4] sm:$0xf] %v1995
        %2028 = vst [vmem:[#allocation2 + $0x408] sm:$0xf] %v1996
        %2029 = vst [vmem:[#allocation2 + $0x42c] sm:$0xf] %v1997
        %2030 = vst [vmem:[#allocation2 + $0x450] sm:$0xf] %v1998
        %2031 = vst [vmem:[#allocation2 + $0x474] sm:$0xf] %v1999
        %v2032 = vld [vmem:[%s1967] sm:$0xf]
        %v2033 = vld [vmem:[%s1967 + $0x4] sm:$0xf]
        %v2034 = vld [vmem:[%s1967 + $0x8] sm:$0x1]
        %v2035 = vld [vmem:[%s1967 + $0xc] sm:$0xf]
        %v2036 = vld [vmem:[%s1967 + $0x10] sm:$0xf]
        %v2037 = vld [vmem:[%s1967 + $0x14] sm:$0x1]
        %v2038 = vld [vmem:[%s1967 + $0x18] sm:$0xf]
        %v2039 = vld [vmem:[%s1967 + $0x1c] sm:$0xf]
        %v2040 = vld [vmem:[%s1967 + $0x20] sm:$0x1]
        %v2041 = vld [vmem:[%s1967 + $0x24] sm:$0xf]
        %v2042 = vld [vmem:[%s1967 + $0x28] sm:$0xf]
        %v2043 = vld [vmem:[%s1967 + $0x2c] sm:$0x1]
        %v2044 = vld [vmem:[%s1967 + $0x30] sm:$0xf]
        %v2045 = vld [vmem:[%s1967 + $0x34] sm:$0xf]
        %v2046 = vld [vmem:[%s1967 + $0x38] sm:$0x1]
        %v2047 = vld [vmem:[%s1967 + $0x3c] sm:$0xf]
        %v2048 = vld [vmem:[%s1967 + $0x40] sm:$0xf]
        %v2049 = vld [vmem:[%s1967 + $0x44] sm:$0x1]
        %v2050 = vld [vmem:[%s1967 + $0x48] sm:$0xf]
        %v2051 = vld [vmem:[%s1967 + $0x4c] sm:$0xf]
        %v2052 = vld [vmem:[%s1967 + $0x50] sm:$0x1]
        %v2053 = vld [vmem:[%s1967 + $0x54] sm:$0xf]
        %v2054 = vld [vmem:[%s1967 + $0x58] sm:$0xf]
        %v2055 = vld [vmem:[%s1967 + $0x5c] sm:$0x1]
        %v2056 = vld [vmem:[%s1967 + $0x60] sm:$0xf]
        %v2057 = vld [vmem:[%s1967 + $0x64] sm:$0xf]
        %v2058 = vld [vmem:[%s1967 + $0x68] sm:$0x1]
        %v2059 = vld [vmem:[%s1967 + $0x6c] sm:$0xf]
        %v2060 = vld [vmem:[%s1967 + $0x70] sm:$0xf]
        %v2061 = vld [vmem:[%s1967 + $0x74] sm:$0x1]
        %v2062 = vld [vmem:[%s1967 + $0x78] sm:$0xf]
        %v2063 = vld [vmem:[%s1967 + $0x7c] sm:$0xf]
        %v2064 = vld [vmem:[%s1967 + $0x80] sm:$0x1]
        %v2065 = vld [vmem:[%s1967 + $0x84] sm:$0xf]
        %v2066 = vld [vmem:[%s1967 + $0x88] sm:$0xf]
        %v2067 = vld [vmem:[%s1967 + $0x8c] sm:$0x1]
        %v2068 = vld [vmem:[%s1967 + $0x90] sm:$0xf]
        %v2069 = vld [vmem:[%s1967 + $0x94] sm:$0xf]
        %v2070 = vld [vmem:[%s1967 + $0x98] sm:$0x1]
        %v2071 = vld [vmem:[%s1967 + $0x9c] sm:$0xf]
        %v2072 = vld [vmem:[%s1967 + $0xa0] sm:$0xf]
        %v2073 = vld [vmem:[%s1967 + $0xa4] sm:$0x1]
        %v2074 = vld [vmem:[%s1967 + $0xa8] sm:$0xf]
        %v2075 = vld [vmem:[%s1967 + $0xac] sm:$0xf]
        %v2076 = vld [vmem:[%s1967 + $0xb0] sm:$0x1]
        %v2077 = vld [vmem:[%s1967 + $0xb4] sm:$0xf]
        %v2078 = vld [vmem:[%s1967 + $0xb8] sm:$0xf]
        %v2079 = vld [vmem:[%s1967 + $0xbc] sm:$0x1]
        %v2081 = vshrl.u32 %v2032, 16
        %v2083 = vrot.slane %v2081, 4
        %v2084 = vshll.u32 %v2032, 16
        %v2086 = vrot.slane %v2084, 5
        %v2087 = vor.u32 %v2083, %v2086
        %v2088 = vrot.slane %v2087, 4
        %v2090 = vshll.u32 %v2033, 16
        %v2092 = vrot.slane %v2090, 5
        %v2093 = vsel %vm410, %v2088, %v2092
        %v2094 = vshrl.u32 %v2033, 16
        %v2096 = vrot.slane %v2094, 4
        %v2097 = vor.u32 %v2096, %v2092
        %v2098 = vrot.slane %v2097, 4
        %v2100 = vshll.u32 %v2034, 16
        %v2102 = vrot.slane %v2100, 5
        %v2103 = vsel %vm410, %v2098, %v2102
        %v2105 = vshrl.u32 %v2035, 16
        %v2107 = vrot.slane %v2105, 4
        %v2108 = vshll.u32 %v2035, 16
        %v2110 = vrot.slane %v2108, 5
        %v2111 = vor.u32 %v2107, %v2110
        %v2112 = vrot.slane %v2111, 4
        %v2114 = vshll.u32 %v2036, 16
        %v2116 = vrot.slane %v2114, 5
        %v2117 = vsel %vm410, %v2112, %v2116
        %v2118 = vshrl.u32 %v2036, 16
        %v2120 = vrot.slane %v2118, 4
        %v2121 = vor.u32 %v2120, %v2116
        %v2122 = vrot.slane %v2121, 4
        %v2124 = vshll.u32 %v2037, 16
        %v2126 = vrot.slane %v2124, 5
        %v2127 = vsel %vm410, %v2122, %v2126
        %v2129 = vshrl.u32 %v2038, 16
        %v2131 = vrot.slane %v2129, 4
        %v2132 = vshll.u32 %v2038, 16
        %v2134 = vrot.slane %v2132, 5
        %v2135 = vor.u32 %v2131, %v2134
        %v2136 = vrot.slane %v2135, 4
        %v2138 = vshll.u32 %v2039, 16
        %v2140 = vrot.slane %v2138, 5
        %v2141 = vsel %vm410, %v2136, %v2140
        %v2142 = vshrl.u32 %v2039, 16
        %v2144 = vrot.slane %v2142, 4
        %v2145 = vor.u32 %v2144, %v2140
        %v2146 = vrot.slane %v2145, 4
        %v2148 = vshll.u32 %v2040, 16
        %v2150 = vrot.slane %v2148, 5
        %v2151 = vsel %vm410, %v2146, %v2150
        %v2153 = vshrl.u32 %v2041, 16
        %v2155 = vrot.slane %v2153, 4
        %v2156 = vshll.u32 %v2041, 16
        %v2158 = vrot.slane %v2156, 5
        %v2159 = vor.u32 %v2155, %v2158
        %v2160 = vrot.slane %v2159, 4
        %v2162 = vshll.u32 %v2042, 16
        %v2164 = vrot.slane %v2162, 5
        %v2165 = vsel %vm410, %v2160, %v2164
        %v2166 = vshrl.u32 %v2042, 16
        %v2168 = vrot.slane %v2166, 4
        %v2169 = vor.u32 %v2168, %v2164
        %v2170 = vrot.slane %v2169, 4
        %v2172 = vshll.u32 %v2043, 16
        %v2174 = vrot.slane %v2172, 5
        %v2175 = vsel %vm410, %v2170, %v2174
        %v2177 = vshrl.u32 %v2044, 16
        %v2179 = vrot.slane %v2177, 4
        %v2180 = vshll.u32 %v2044, 16
        %v2182 = vrot.slane %v2180, 5
        %v2183 = vor.u32 %v2179, %v2182
        %v2184 = vrot.slane %v2183, 4
        %v2186 = vshll.u32 %v2045, 16
        %v2188 = vrot.slane %v2186, 5
        %v2189 = vsel %vm410, %v2184, %v2188
        %v2190 = vshrl.u32 %v2045, 16
        %v2192 = vrot.slane %v2190, 4
        %v2193 = vor.u32 %v2192, %v2188
        %v2194 = vrot.slane %v2193, 4
        %v2196 = vshll.u32 %v2046, 16
        %v2198 = vrot.slane %v2196, 5
        %v2199 = vsel %vm410, %v2194, %v2198
        %v2201 = vshrl.u32 %v2047, 16
        %v2203 = vrot.slane %v2201, 4
        %v2204 = vshll.u32 %v2047, 16
        %v2206 = vrot.slane %v2204, 5
        %v2207 = vor.u32 %v2203, %v2206
        %v2208 = vrot.slane %v2207, 4
        %v2210 = vshll.u32 %v2048, 16
        %v2212 = vrot.slane %v2210, 5
        %v2213 = vsel %vm410, %v2208, %v2212
        %v2214 = vshrl.u32 %v2048, 16
        %v2216 = vrot.slane %v2214, 4
        %v2217 = vor.u32 %v2216, %v2212
        %v2218 = vrot.slane %v2217, 4
        %v2220 = vshll.u32 %v2049, 16
        %v2222 = vrot.slane %v2220, 5
        %v2223 = vsel %vm410, %v2218, %v2222
        %v2225 = vshrl.u32 %v2050, 16
        %v2227 = vrot.slane %v2225, 4
        %v2228 = vshll.u32 %v2050, 16
        %v2230 = vrot.slane %v2228, 5
        %v2231 = vor.u32 %v2227, %v2230
        %v2232 = vrot.slane %v2231, 4
        %v2234 = vshll.u32 %v2051, 16
        %v2236 = vrot.slane %v2234, 5
        %v2237 = vsel %vm410, %v2232, %v2236
        %v2238 = vshrl.u32 %v2051, 16
        %v2240 = vrot.slane %v2238, 4
        %v2241 = vor.u32 %v2240, %v2236
        %v2242 = vrot.slane %v2241, 4
        %v2244 = vshll.u32 %v2052, 16
        %v2246 = vrot.slane %v2244, 5
        %v2247 = vsel %vm410, %v2242, %v2246
        %v2249 = vshrl.u32 %v2053, 16
        %v2251 = vrot.slane %v2249, 4
        %v2252 = vshll.u32 %v2053, 16
        %v2254 = vrot.slane %v2252, 5
        %v2255 = vor.u32 %v2251, %v2254
        %v2256 = vrot.slane %v2255, 4
        %v2258 = vshll.u32 %v2054, 16
        %v2260 = vrot.slane %v2258, 5
        %v2261 = vsel %vm410, %v2256, %v2260
        %v2262 = vshrl.u32 %v2054, 16
        %v2264 = vrot.slane %v2262, 4
        %v2265 = vor.u32 %v2264, %v2260
        %v2266 = vrot.slane %v2265, 4
        %v2268 = vshll.u32 %v2055, 16
        %v2270 = vrot.slane %v2268, 5
        %v2271 = vsel %vm410, %v2266, %v2270
        %v2273 = vshrl.u32 %v2056, 16
        %v2275 = vrot.slane %v2273, 4
        %v2276 = vshll.u32 %v2056, 16
        %v2278 = vrot.slane %v2276, 5
        %v2279 = vor.u32 %v2275, %v2278
        %v2280 = vrot.slane %v2279, 4
        %v2282 = vshll.u32 %v2057, 16
        %v2284 = vrot.slane %v2282, 5
        %v2285 = vsel %vm410, %v2280, %v2284
        %v2286 = vshrl.u32 %v2057, 16
        %v2288 = vrot.slane %v2286, 4
        %v2289 = vor.u32 %v2288, %v2284
        %v2290 = vrot.slane %v2289, 4
        %v2292 = vshll.u32 %v2058, 16
        %v2294 = vrot.slane %v2292, 5
        %v2295 = vsel %vm410, %v2290, %v2294
        %v2297 = vshrl.u32 %v2059, 16
        %v2299 = vrot.slane %v2297, 4
        %v2300 = vshll.u32 %v2059, 16
        %v2302 = vrot.slane %v2300, 5
        %v2303 = vor.u32 %v2299, %v2302
        %v2304 = vrot.slane %v2303, 4
        %v2306 = vshll.u32 %v2060, 16
        %v2308 = vrot.slane %v2306, 5
        %v2309 = vsel %vm410, %v2304, %v2308
        %v2310 = vshrl.u32 %v2060, 16
        %v2312 = vrot.slane %v2310, 4
        %v2313 = vor.u32 %v2312, %v2308
        %v2314 = vrot.slane %v2313, 4
        %v2316 = vshll.u32 %v2061, 16
        %v2318 = vrot.slane %v2316, 5
        %v2319 = vsel %vm410, %v2314, %v2318
        %v2321 = vshrl.u32 %v2062, 16
        %v2323 = vrot.slane %v2321, 4
        %v2324 = vshll.u32 %v2062, 16
        %v2326 = vrot.slane %v2324, 5
        %v2327 = vor.u32 %v2323, %v2326
        %v2328 = vrot.slane %v2327, 4
        %v2330 = vshll.u32 %v2063, 16
        %v2332 = vrot.slane %v2330, 5
        %v2333 = vsel %vm410, %v2328, %v2332
        %v2334 = vshrl.u32 %v2063, 16
        %v2336 = vrot.slane %v2334, 4
        %v2337 = vor.u32 %v2336, %v2332
        %v2338 = vrot.slane %v2337, 4
        %v2340 = vshll.u32 %v2064, 16
        %v2342 = vrot.slane %v2340, 5
        %v2343 = vsel %vm410, %v2338, %v2342
        %v2345 = vshrl.u32 %v2065, 16
        %v2347 = vrot.slane %v2345, 4
        %v2348 = vshll.u32 %v2065, 16
        %v2350 = vrot.slane %v2348, 5
        %v2351 = vor.u32 %v2347, %v2350
        %v2352 = vrot.slane %v2351, 4
        %v2354 = vshll.u32 %v2066, 16
        %v2356 = vrot.slane %v2354, 5
        %v2357 = vsel %vm410, %v2352, %v2356
        %v2358 = vshrl.u32 %v2066, 16
        %v2360 = vrot.slane %v2358, 4
        %v2361 = vor.u32 %v2360, %v2356
        %v2362 = vrot.slane %v2361, 4
        %v2364 = vshll.u32 %v2067, 16
        %v2366 = vrot.slane %v2364, 5
        %v2367 = vsel %vm410, %v2362, %v2366
        %v2369 = vshrl.u32 %v2068, 16
        %v2371 = vrot.slane %v2369, 4
        %v2372 = vshll.u32 %v2068, 16
        %v2374 = vrot.slane %v2372, 5
        %v2375 = vor.u32 %v2371, %v2374
        %v2376 = vrot.slane %v2375, 4
        %v2378 = vshll.u32 %v2069, 16
        %v2380 = vrot.slane %v2378, 5
        %v2381 = vsel %vm410, %v2376, %v2380
        %v2382 = vshrl.u32 %v2069, 16
        %v2384 = vrot.slane %v2382, 4
        %v2385 = vor.u32 %v2384, %v2380
        %v2386 = vrot.slane %v2385, 4
        %v2388 = vshll.u32 %v2070, 16
        %v2390 = vrot.slane %v2388, 5
        %v2391 = vsel %vm410, %v2386, %v2390
        %v2393 = vshrl.u32 %v2071, 16
        %v2395 = vrot.slane %v2393, 4
        %v2396 = vshll.u32 %v2071, 16
        %v2398 = vrot.slane %v2396, 5
        %v2399 = vor.u32 %v2395, %v2398
        %v2400 = vrot.slane %v2399, 4
        %v2402 = vshll.u32 %v2072, 16
        %v2404 = vrot.slane %v2402, 5
        %v2405 = vsel %vm410, %v2400, %v2404
        %v2406 = vshrl.u32 %v2072, 16
        %v2408 = vrot.slane %v2406, 4
        %v2409 = vor.u32 %v2408, %v2404
        %v2410 = vrot.slane %v2409, 4
        %v2412 = vshll.u32 %v2073, 16
        %v2414 = vrot.slane %v2412, 5
        %v2415 = vsel %vm410, %v2410, %v2414
        %v2417 = vshrl.u32 %v2074, 16
        %v2419 = vrot.slane %v2417, 4
        %v2420 = vshll.u32 %v2074, 16
        %v2422 = vrot.slane %v2420, 5
        %v2423 = vor.u32 %v2419, %v2422
        %v2424 = vrot.slane %v2423, 4
        %v2426 = vshll.u32 %v2075, 16
        %v2428 = vrot.slane %v2426, 5
        %v2429 = vsel %vm410, %v2424, %v2428
        %v2430 = vshrl.u32 %v2075, 16
        %v2432 = vrot.slane %v2430, 4
        %v2433 = vor.u32 %v2432, %v2428
        %v2434 = vrot.slane %v2433, 4
        %v2436 = vshll.u32 %v2076, 16
        %v2438 = vrot.slane %v2436, 5
        %v2439 = vsel %vm410, %v2434, %v2438
        %v2441 = vshrl.u32 %v2077, 16
        %v2443 = vrot.slane %v2441, 4
        %v2444 = vshll.u32 %v2077, 16
        %v2446 = vrot.slane %v2444, 5
        %v2447 = vor.u32 %v2443, %v2446
        %v2448 = vrot.slane %v2447, 4
        %v2450 = vshll.u32 %v2078, 16
        %v2452 = vrot.slane %v2450, 5
        %v2453 = vsel %vm410, %v2448, %v2452
        %v2454 = vshrl.u32 %v2078, 16
        %v2456 = vrot.slane %v2454, 4
        %v2457 = vor.u32 %v2456, %v2452
        %v2458 = vrot.slane %v2457, 4
        %v2460 = vshll.u32 %v2079, 16
        %v2462 = vrot.slane %v2460, 5
        %v2463 = vsel %vm410, %v2458, %v2462
        %2496 = vst [vmem:[#allocation2 + $0x1c] sm:$0xf] %v2093
        %2497 = vst [vmem:[#allocation2 + $0x40] sm:$0xf] %v2103
        %2498 = vst [vmem:[#allocation2 + $0x64] sm:$0xf] %v2117
        %2499 = vst [vmem:[#allocation2 + $0x88] sm:$0xf] %v2127
        %2500 = vst [vmem:[#allocation2 + $0xac] sm:$0xf] %v2141
        %2501 = vst [vmem:[#allocation2 + $0xd0] sm:$0xf] %v2151
        %2502 = vst [vmem:[#allocation2 + $0xf4] sm:$0xf] %v2165
        %2503 = vst [vmem:[#allocation2 + $0x118] sm:$0xf] %v2175
        %2504 = vst [vmem:[#allocation2 + $0x13c] sm:$0xf] %v2189
        %2505 = vst [vmem:[#allocation2 + $0x160] sm:$0xf] %v2199
        %2506 = vst [vmem:[#allocation2 + $0x184] sm:$0xf] %v2213
        %2507 = vst [vmem:[#allocation2 + $0x1a8] sm:$0xf] %v2223
        %2508 = vst [vmem:[#allocation2 + $0x1cc] sm:$0xf] %v2237
        %2509 = vst [vmem:[#allocation2 + $0x1f0] sm:$0xf] %v2247
        %2510 = vst [vmem:[#allocation2 + $0x214] sm:$0xf] %v2261
        %2511 = vst [vmem:[#allocation2 + $0x238] sm:$0xf] %v2271
        %2512 = vst [vmem:[#allocation2 + $0x25c] sm:$0xf] %v2285
        %2513 = vst [vmem:[#allocation2 + $0x280] sm:$0xf] %v2295
        %2514 = vst [vmem:[#allocation2 + $0x2a4] sm:$0xf] %v2309
        %2515 = vst [vmem:[#allocation2 + $0x2c8] sm:$0xf] %v2319
        %2516 = vst [vmem:[#allocation2 + $0x2ec] sm:$0xf] %v2333
        %2517 = vst [vmem:[#allocation2 + $0x310] sm:$0xf] %v2343
        %2518 = vst [vmem:[#allocation2 + $0x334] sm:$0xf] %v2357
        %2519 = vst [vmem:[#allocation2 + $0x358] sm:$0xf] %v2367
        %2520 = vst [vmem:[#allocation2 + $0x37c] sm:$0xf] %v2381
        %2521 = vst [vmem:[#allocation2 + $0x3a0] sm:$0xf] %v2391
        %2522 = vst [vmem:[#allocation2 + $0x3c4] sm:$0xf] %v2405
        %2523 = vst [vmem:[#allocation2 + $0x3e8] sm:$0xf] %v2415
        %2524 = vst [vmem:[#allocation2 + $0x40c] sm:$0xf] %v2429
        %2525 = vst [vmem:[#allocation2 + $0x430] sm:$0xf] %v2439
        %2526 = vst [vmem:[#allocation2 + $0x454] sm:$0xf] %v2453
        %2527 = vst [vmem:[#allocation2 + $0x478] sm:$0xf] %v2463
        %v2528 = vld [vmem:[%s1967] sm:$0xe]
        %v2529 = vld [vmem:[%s1967 + $0x4] sm:$0xf]
        %v2530 = vld [vmem:[%s1967 + $0x8] sm:$0x1]
        %v2531 = vld [vmem:[%s1967 + $0xc] sm:$0xe]
        %v2532 = vld [vmem:[%s1967 + $0x10] sm:$0xf]
        %v2533 = vld [vmem:[%s1967 + $0x14] sm:$0x1]
        %v2534 = vld [vmem:[%s1967 + $0x18] sm:$0xe]
        %v2535 = vld [vmem:[%s1967 + $0x1c] sm:$0xf]
        %v2536 = vld [vmem:[%s1967 + $0x20] sm:$0x1]
        %v2537 = vld [vmem:[%s1967 + $0x24] sm:$0xe]
        %v2538 = vld [vmem:[%s1967 + $0x28] sm:$0xf]
        %v2539 = vld [vmem:[%s1967 + $0x2c] sm:$0x1]
        %v2540 = vld [vmem:[%s1967 + $0x30] sm:$0xe]
        %v2541 = vld [vmem:[%s1967 + $0x34] sm:$0xf]
        %v2542 = vld [vmem:[%s1967 + $0x38] sm:$0x1]
        %v2543 = vld [vmem:[%s1967 + $0x3c] sm:$0xe]
        %v2544 = vld [vmem:[%s1967 + $0x40] sm:$0xf]
        %v2545 = vld [vmem:[%s1967 + $0x44] sm:$0x1]
        %v2546 = vld [vmem:[%s1967 + $0x48] sm:$0xe]
        %v2547 = vld [vmem:[%s1967 + $0x4c] sm:$0xf]
        %v2548 = vld [vmem:[%s1967 + $0x50] sm:$0x1]
        %v2549 = vld [vmem:[%s1967 + $0x54] sm:$0xe]
        %v2550 = vld [vmem:[%s1967 + $0x58] sm:$0xf]
        %v2551 = vld [vmem:[%s1967 + $0x5c] sm:$0x1]
        %v2552 = vld [vmem:[%s1967 + $0x60] sm:$0xe]
        %v2553 = vld [vmem:[%s1967 + $0x64] sm:$0xf]
        %v2554 = vld [vmem:[%s1967 + $0x68] sm:$0x1]
        %v2555 = vld [vmem:[%s1967 + $0x6c] sm:$0xe]
        %v2556 = vld [vmem:[%s1967 + $0x70] sm:$0xf]
        %v2557 = vld [vmem:[%s1967 + $0x74] sm:$0x1]
        %v2558 = vld [vmem:[%s1967 + $0x78] sm:$0xe]
        %v2559 = vld [vmem:[%s1967 + $0x7c] sm:$0xf]
        %v2560 = vld [vmem:[%s1967 + $0x80] sm:$0x1]
        %v2561 = vld [vmem:[%s1967 + $0x84] sm:$0xe]
        %v2562 = vld [vmem:[%s1967 + $0x88] sm:$0xf]
        %v2563 = vld [vmem:[%s1967 + $0x8c] sm:$0x1]
        %v2564 = vld [vmem:[%s1967 + $0x90] sm:$0xe]
        %v2565 = vld [vmem:[%s1967 + $0x94] sm:$0xf]
        %v2566 = vld [vmem:[%s1967 + $0x98] sm:$0x1]
        %v2567 = vld [vmem:[%s1967 + $0x9c] sm:$0xe]
        %v2568 = vld [vmem:[%s1967 + $0xa0] sm:$0xf]
        %v2569 = vld [vmem:[%s1967 + $0xa4] sm:$0x1]
        %v2570 = vld [vmem:[%s1967 + $0xa8] sm:$0xe]
        %v2571 = vld [vmem:[%s1967 + $0xac] sm:$0xf]
        %v2572 = vld [vmem:[%s1967 + $0xb0] sm:$0x1]
        %v2573 = vld [vmem:[%s1967 + $0xb4] sm:$0xe]
        %v2574 = vld [vmem:[%s1967 + $0xb8] sm:$0xf]
        %v2575 = vld [vmem:[%s1967 + $0xbc] sm:$0x1]
        %v2624 = vrot.slane %v2528, 5
        %v2625 = vrot.slane %v2624, 4
        %v2626 = vrot.slane %v2529, 5
        %v2627 = vsel %vm957, %v2625, %v2626
        %v2628 = vrot.slane %v2626, 4
        %v2629 = vrot.slane %v2530, 5
        %v2630 = vsel %vm957, %v2628, %v2629
        %v2631 = vrot.slane %v2531, 5
        %v2632 = vrot.slane %v2631, 4
        %v2633 = vrot.slane %v2532, 5
        %v2634 = vsel %vm957, %v2632, %v2633
        %v2635 = vrot.slane %v2633, 4
        %v2636 = vrot.slane %v2533, 5
        %v2637 = vsel %vm957, %v2635, %v2636
        %v2638 = vrot.slane %v2534, 5
        %v2639 = vrot.slane %v2638, 4
        %v2640 = vrot.slane %v2535, 5
        %v2641 = vsel %vm957, %v2639, %v2640
        %v2642 = vrot.slane %v2640, 4
        %v2643 = vrot.slane %v2536, 5
        %v2644 = vsel %vm957, %v2642, %v2643
        %v2645 = vrot.slane %v2537, 5
        %v2646 = vrot.slane %v2645, 4
        %v2647 = vrot.slane %v2538, 5
        %v2648 = vsel %vm957, %v2646, %v2647
        %v2649 = vrot.slane %v2647, 4
        %v2650 = vrot.slane %v2539, 5
        %v2651 = vsel %vm957, %v2649, %v2650
        %v2652 = vrot.slane %v2540, 5
        %v2653 = vrot.slane %v2652, 4
        %v2654 = vrot.slane %v2541, 5
        %v2655 = vsel %vm957, %v2653, %v2654
        %v2656 = vrot.slane %v2654, 4
        %v2657 = vrot.slane %v2542, 5
        %v2658 = vsel %vm957, %v2656, %v2657
        %v2659 = vrot.slane %v2543, 5
        %v2660 = vrot.slane %v2659, 4
        %v2661 = vrot.slane %v2544, 5
        %v2662 = vsel %vm957, %v2660, %v2661
        %v2663 = vrot.slane %v2661, 4
        %v2664 = vrot.slane %v2545, 5
        %v2665 = vsel %vm957, %v2663, %v2664
        %v2666 = vrot.slane %v2546, 5
        %v2667 = vrot.slane %v2666, 4
        %v2668 = vrot.slane %v2547, 5
        %v2669 = vsel %vm957, %v2667, %v2668
        %v2670 = vrot.slane %v2668, 4
        %v2671 = vrot.slane %v2548, 5
        %v2672 = vsel %vm957, %v2670, %v2671
        %v2673 = vrot.slane %v2549, 5
        %v2674 = vrot.slane %v2673, 4
        %v2675 = vrot.slane %v2550, 5
        %v2676 = vsel %vm957, %v2674, %v2675
        %v2677 = vrot.slane %v2675, 4
        %v2678 = vrot.slane %v2551, 5
        %v2679 = vsel %vm957, %v2677, %v2678
        %v2680 = vrot.slane %v2552, 5
        %v2681 = vrot.slane %v2680, 4
        %v2682 = vrot.slane %v2553, 5
        %v2683 = vsel %vm957, %v2681, %v2682
        %v2684 = vrot.slane %v2682, 4
        %v2685 = vrot.slane %v2554, 5
        %v2686 = vsel %vm957, %v2684, %v2685
        %v2687 = vrot.slane %v2555, 5
        %v2688 = vrot.slane %v2687, 4
        %v2689 = vrot.slane %v2556, 5
        %v2690 = vsel %vm957, %v2688, %v2689
        %v2691 = vrot.slane %v2689, 4
        %v2692 = vrot.slane %v2557, 5
        %v2693 = vsel %vm957, %v2691, %v2692
        %v2694 = vrot.slane %v2558, 5
        %v2695 = vrot.slane %v2694, 4
        %v2696 = vrot.slane %v2559, 5
        %v2697 = vsel %vm957, %v2695, %v2696
        %v2698 = vrot.slane %v2696, 4
        %v2699 = vrot.slane %v2560, 5
        %v2700 = vsel %vm957, %v2698, %v2699
        %v2701 = vrot.slane %v2561, 5
        %v2702 = vrot.slane %v2701, 4
        %v2703 = vrot.slane %v2562, 5
        %v2704 = vsel %vm957, %v2702, %v2703
        %v2705 = vrot.slane %v2703, 4
        %v2706 = vrot.slane %v2563, 5
        %v2707 = vsel %vm957, %v2705, %v2706
        %v2708 = vrot.slane %v2564, 5
        %v2709 = vrot.slane %v2708, 4
        %v2710 = vrot.slane %v2565, 5
        %v2711 = vsel %vm957, %v2709, %v2710
        %v2712 = vrot.slane %v2710, 4
        %v2713 = vrot.slane %v2566, 5
        %v2714 = vsel %vm957, %v2712, %v2713
        %v2715 = vrot.slane %v2567, 5
        %v2716 = vrot.slane %v2715, 4
        %v2717 = vrot.slane %v2568, 5
        %v2718 = vsel %vm957, %v2716, %v2717
        %v2719 = vrot.slane %v2717, 4
        %v2720 = vrot.slane %v2569, 5
        %v2721 = vsel %vm957, %v2719, %v2720
        %v2722 = vrot.slane %v2570, 5
        %v2723 = vrot.slane %v2722, 4
        %v2724 = vrot.slane %v2571, 5
        %v2725 = vsel %vm957, %v2723, %v2724
        %v2726 = vrot.slane %v2724, 4
        %v2727 = vrot.slane %v2572, 5
        %v2728 = vsel %vm957, %v2726, %v2727
        %v2729 = vrot.slane %v2573, 5
        %v2730 = vrot.slane %v2729, 4
        %v2731 = vrot.slane %v2574, 5
        %v2732 = vsel %vm957, %v2730, %v2731
        %v2733 = vrot.slane %v2731, 4
        %v2734 = vrot.slane %v2575, 5
        %v2735 = vsel %vm957, %v2733, %v2734
        %2768 = vst [vmem:[#allocation2 + $0x20] sm:$0xf] %v2627
        %2769 = vst [vmem:[#allocation2 + $0x44] sm:$0xf] %v2630
        %2770 = vst [vmem:[#allocation2 + $0x68] sm:$0xf] %v2634
        %2771 = vst [vmem:[#allocation2 + $0x8c] sm:$0xf] %v2637
        %2772 = vst [vmem:[#allocation2 + $0xb0] sm:$0xf] %v2641
        %2773 = vst [vmem:[#allocation2 + $0xd4] sm:$0xf] %v2644
        %2774 = vst [vmem:[#allocation2 + $0xf8] sm:$0xf] %v2648
        %2775 = vst [vmem:[#allocation2 + $0x11c] sm:$0xf] %v2651
        %2776 = vst [vmem:[#allocation2 + $0x140] sm:$0xf] %v2655
        %2777 = vst [vmem:[#allocation2 + $0x164] sm:$0xf] %v2658
        %2778 = vst [vmem:[#allocation2 + $0x188] sm:$0xf] %v2662
        %2779 = vst [vmem:[#allocation2 + $0x1ac] sm:$0xf] %v2665
        %2780 = vst [vmem:[#allocation2 + $0x1d0] sm:$0xf] %v2669
        %2781 = vst [vmem:[#allocation2 + $0x1f4] sm:$0xf] %v2672
        %2782 = vst [vmem:[#allocation2 + $0x218] sm:$0xf] %v2676
        %2783 = vst [vmem:[#allocation2 + $0x23c] sm:$0xf] %v2679
        %2784 = vst [vmem:[#allocation2 + $0x260] sm:$0xf] %v2683
        %2785 = vst [vmem:[#allocation2 + $0x284] sm:$0xf] %v2686
        %2786 = vst [vmem:[#allocation2 + $0x2a8] sm:$0xf] %v2690
        %2787 = vst [vmem:[#allocation2 + $0x2cc] sm:$0xf] %v2693
        %2788 = vst [vmem:[#allocation2 + $0x2f0] sm:$0xf] %v2697
        %2789 = vst [vmem:[#allocation2 + $0x314] sm:$0xf] %v2700
        %2790 = vst [vmem:[#allocation2 + $0x338] sm:$0xf] %v2704
        %2791 = vst [vmem:[#allocation2 + $0x35c] sm:$0xf] %v2707
        %2792 = vst [vmem:[#allocation2 + $0x380] sm:$0xf] %v2711
        %2793 = vst [vmem:[#allocation2 + $0x3a4] sm:$0xf] %v2714
        %2794 = vst [vmem:[#allocation2 + $0x3c8] sm:$0xf] %v2718
        %2795 = vst [vmem:[#allocation2 + $0x3ec] sm:$0xf] %v2721
        %2796 = vst [vmem:[#allocation2 + $0x410] sm:$0xf] %v2725
        %2797 = vst [vmem:[#allocation2 + $0x434] sm:$0xf] %v2728
        %2798 = vst [vmem:[#allocation2 + $0x458] sm:$0xf] %v2732
        %2799 = vst [vmem:[#allocation2 + $0x47c] sm:$0xf] %v2735
        %v2800 = vld [vmem:[#allocation2] sm:$0xff]
        %v2801 = vld [vmem:[#allocation2 + $0x8] sm:$0xff]
        %v2802 = vld [vmem:[#allocation2 + $0x10] sm:$0xff]
        %v2803 = vld [vmem:[#allocation2 + $0x18] sm:$0xff]
        %v2804 = vld [vmem:[#allocation2 + $0x20] sm:$0xf]
        %v2805 = vld [vmem:[#allocation2 + $0x24] sm:$0xff]
        %v2806 = vld [vmem:[#allocation2 + $0x2c] sm:$0xff]
        %v2807 = vld [vmem:[#allocation2 + $0x34] sm:$0xff]
        %v2808 = vld [vmem:[#allocation2 + $0x3c] sm:$0xff]
        %v2809 = vld [vmem:[#allocation2 + $0x44] sm:$0xf]
        %v2810 = vld [vmem:[#allocation2 + $0x48] sm:$0xff]
        %v2811 = vld [vmem:[#allocation2 + $0x50] sm:$0xff]
        %v2812 = vld [vmem:[#allocation2 + $0x58] sm:$0xff]
        %v2813 = vld [vmem:[#allocation2 + $0x60] sm:$0xff]
        %v2814 = vld [vmem:[#allocation2 + $0x68] sm:$0xf]
        %v2815 = vld [vmem:[#allocation2 + $0x6c] sm:$0xff]
        %v2816 = vld [vmem:[#allocation2 + $0x74] sm:$0xff]
        %v2817 = vld [vmem:[#allocation2 + $0x7c] sm:$0xff]
        %v2818 = vld [vmem:[#allocation2 + $0x84] sm:$0xff]
        %v2819 = vld [vmem:[#allocation2 + $0x8c] sm:$0xf]
        %v2820 = vld [vmem:[#allocation2 + $0x90] sm:$0xff]
        %v2821 = vld [vmem:[#allocation2 + $0x98] sm:$0xff]
        %v2822 = vld [vmem:[#allocation2 + $0xa0] sm:$0xff]
        %v2823 = vld [vmem:[#allocation2 + $0xa8] sm:$0xff]
        %v2824 = vld [vmem:[#allocation2 + $0xb0] sm:$0xf]
        %v2825 = vld [vmem:[#allocation2 + $0xb4] sm:$0xff]
        %v2826 = vld [vmem:[#allocation2 + $0xbc] sm:$0xff]
        %v2827 = vld [vmem:[#allocation2 + $0xc4] sm:$0xff]
        %v2828 = vld [vmem:[#allocation2 + $0xcc] sm:$0xff]
        %v2829 = vld [vmem:[#allocation2 + $0xd4] sm:$0xf]
        %v2830 = vld [vmem:[#allocation2 + $0xd8] sm:$0xff]
        %v2831 = vld [vmem:[#allocation2 + $0xe0] sm:$0xff]
        %v2832 = vld [vmem:[#allocation2 + $0xe8] sm:$0xff]
        %v2833 = vld [vmem:[#allocation2 + $0xf0] sm:$0xff]
        %v2834 = vld [vmem:[#allocation2 + $0xf8] sm:$0xf]
        %v2835 = vld [vmem:[#allocation2 + $0xfc] sm:$0xff]
        %v2836 = vld [vmem:[#allocation2 + $0x104] sm:$0xff]
        %v2837 = vld [vmem:[#allocation2 + $0x10c] sm:$0xff]
        %v2838 = vld [vmem:[#allocation2 + $0x114] sm:$0xff]
        %v2839 = vld [vmem:[#allocation2 + $0x11c] sm:$0xf]
        %v2840 = vld [vmem:[#allocation2 + $0x120] sm:$0xff]
        %v2841 = vld [vmem:[#allocation2 + $0x128] sm:$0xff]
        %v2842 = vld [vmem:[#allocation2 + $0x130] sm:$0xff]
        %v2843 = vld [vmem:[#allocation2 + $0x138] sm:$0xff]
        %v2844 = vld [vmem:[#allocation2 + $0x140] sm:$0xf]
        %v2845 = vld [vmem:[#allocation2 + $0x144] sm:$0xff]
        %v2846 = vld [vmem:[#allocation2 + $0x14c] sm:$0xff]
        %v2847 = vld [vmem:[#allocation2 + $0x154] sm:$0xff]
        %v2848 = vld [vmem:[#allocation2 + $0x15c] sm:$0xff]
        %v2849 = vld [vmem:[#allocation2 + $0x164] sm:$0xf]
        %v2850 = vld [vmem:[#allocation2 + $0x168] sm:$0xff]
        %v2851 = vld [vmem:[#allocation2 + $0x170] sm:$0xff]
        %v2852 = vld [vmem:[#allocation2 + $0x178] sm:$0xff]
        %v2853 = vld [vmem:[#allocation2 + $0x180] sm:$0xff]
        %v2854 = vld [vmem:[#allocation2 + $0x188] sm:$0xf]
        %v2855 = vld [vmem:[#allocation2 + $0x18c] sm:$0xff]
        %v2856 = vld [vmem:[#allocation2 + $0x194] sm:$0xff]
        %v2857 = vld [vmem:[#allocation2 + $0x19c] sm:$0xff]
        %v2858 = vld [vmem:[#allocation2 + $0x1a4] sm:$0xff]
        %v2859 = vld [vmem:[#allocation2 + $0x1ac] sm:$0xf]
        %v2860 = vld [vmem:[#allocation2 + $0x1b0] sm:$0xff]
        %v2861 = vld [vmem:[#allocation2 + $0x1b8] sm:$0xff]
        %v2862 = vld [vmem:[#allocation2 + $0x1c0] sm:$0xff]
        %v2863 = vld [vmem:[#allocation2 + $0x1c8] sm:$0xff]
        %v2864 = vld [vmem:[#allocation2 + $0x1d0] sm:$0xf]
        %v2865 = vld [vmem:[#allocation2 + $0x1d4] sm:$0xff]
        %v2866 = vld [vmem:[#allocation2 + $0x1dc] sm:$0xff]
        %v2867 = vld [vmem:[#allocation2 + $0x1e4] sm:$0xff]
        %v2868 = vld [vmem:[#allocation2 + $0x1ec] sm:$0xff]
        %v2869 = vld [vmem:[#allocation2 + $0x1f4] sm:$0xf]
        %v2870 = vld [vmem:[#allocation2 + $0x1f8] sm:$0xff]
        %v2871 = vld [vmem:[#allocation2 + $0x200] sm:$0xff]
        %v2872 = vld [vmem:[#allocation2 + $0x208] sm:$0xff]
        %v2873 = vld [vmem:[#allocation2 + $0x210] sm:$0xff]
        %v2874 = vld [vmem:[#allocation2 + $0x218] sm:$0xf]
        %v2875 = vld [vmem:[#allocation2 + $0x21c] sm:$0xff]
        %v2876 = vld [vmem:[#allocation2 + $0x224] sm:$0xff]
        %v2877 = vld [vmem:[#allocation2 + $0x22c] sm:$0xff]
        %v2878 = vld [vmem:[#allocation2 + $0x234] sm:$0xff]
        %v2879 = vld [vmem:[#allocation2 + $0x23c] sm:$0xf]
        %v2880 = vld [vmem:[#allocation2 + $0x240] sm:$0xff]
        %v2881 = vld [vmem:[#allocation2 + $0x248] sm:$0xff]
        %v2882 = vld [vmem:[#allocation2 + $0x250] sm:$0xff]
        %v2883 = vld [vmem:[#allocation2 + $0x258] sm:$0xff]
        %v2884 = vld [vmem:[#allocation2 + $0x260] sm:$0xf]
        %v2885 = vld [vmem:[#allocation2 + $0x264] sm:$0xff]
        %v2886 = vld [vmem:[#allocation2 + $0x26c] sm:$0xff]
        %v2887 = vld [vmem:[#allocation2 + $0x274] sm:$0xff]
        %v2888 = vld [vmem:[#allocation2 + $0x27c] sm:$0xff]
        %v2889 = vld [vmem:[#allocation2 + $0x284] sm:$0xf]
        %v2890 = vld [vmem:[#allocation2 + $0x288] sm:$0xff]
        %v2891 = vld [vmem:[#allocation2 + $0x290] sm:$0xff]
        %v2892 = vld [vmem:[#allocation2 + $0x298] sm:$0xff]
        %v2893 = vld [vmem:[#allocation2 + $0x2a0] sm:$0xff]
        %v2894 = vld [vmem:[#allocation2 + $0x2a8] sm:$0xf]
        %v2895 = vld [vmem:[#allocation2 + $0x2ac] sm:$0xff]
        %v2896 = vld [vmem:[#allocation2 + $0x2b4] sm:$0xff]
        %v2897 = vld [vmem:[#allocation2 + $0x2bc] sm:$0xff]
        %v2898 = vld [vmem:[#allocation2 + $0x2c4] sm:$0xff]
        %v2899 = vld [vmem:[#allocation2 + $0x2cc] sm:$0xf]
        %v2900 = vld [vmem:[#allocation2 + $0x2d0] sm:$0xff]
        %v2901 = vld [vmem:[#allocation2 + $0x2d8] sm:$0xff]
        %v2902 = vld [vmem:[#allocation2 + $0x2e0] sm:$0xff]
        %v2903 = vld [vmem:[#allocation2 + $0x2e8] sm:$0xff]
        %v2904 = vld [vmem:[#allocation2 + $0x2f0] sm:$0xf]
        %v2905 = vld [vmem:[#allocation2 + $0x2f4] sm:$0xff]
        %v2906 = vld [vmem:[#allocation2 + $0x2fc] sm:$0xff]
        %v2907 = vld [vmem:[#allocation2 + $0x304] sm:$0xff]
        %v2908 = vld [vmem:[#allocation2 + $0x30c] sm:$0xff]
        %v2909 = vld [vmem:[#allocation2 + $0x314] sm:$0xf]
        %v2910 = vld [vmem:[#allocation2 + $0x318] sm:$0xff]
        %v2911 = vld [vmem:[#allocation2 + $0x320] sm:$0xff]
        %v2912 = vld [vmem:[#allocation2 + $0x328] sm:$0xff]
        %v2913 = vld [vmem:[#allocation2 + $0x330] sm:$0xff]
        %v2914 = vld [vmem:[#allocation2 + $0x338] sm:$0xf]
        %v2915 = vld [vmem:[#allocation2 + $0x33c] sm:$0xff]
        %v2916 = vld [vmem:[#allocation2 + $0x344] sm:$0xff]
        %v2917 = vld [vmem:[#allocation2 + $0x34c] sm:$0xff]
        %v2918 = vld [vmem:[#allocation2 + $0x354] sm:$0xff]
        %v2919 = vld [vmem:[#allocation2 + $0x35c] sm:$0xf]
        %v2920 = vld [vmem:[#allocation2 + $0x360] sm:$0xff]
        %v2921 = vld [vmem:[#allocation2 + $0x368] sm:$0xff]
        %v2922 = vld [vmem:[#allocation2 + $0x370] sm:$0xff]
        %v2923 = vld [vmem:[#allocation2 + $0x378] sm:$0xff]
        %v2924 = vld [vmem:[#allocation2 + $0x380] sm:$0xf]
        %v2925 = vld [vmem:[#allocation2 + $0x384] sm:$0xff]
        %v2926 = vld [vmem:[#allocation2 + $0x38c] sm:$0xff]
        %v2927 = vld [vmem:[#allocation2 + $0x394] sm:$0xff]
        %v2928 = vld [vmem:[#allocation2 + $0x39c] sm:$0xff]
        %v2929 = vld [vmem:[#allocation2 + $0x3a4] sm:$0xf]
        %v2930 = vld [vmem:[#allocation2 + $0x3a8] sm:$0xff]
        %v2931 = vld [vmem:[#allocation2 + $0x3b0] sm:$0xff]
        %v2932 = vld [vmem:[#allocation2 + $0x3b8] sm:$0xff]
        %v2933 = vld [vmem:[#allocation2 + $0x3c0] sm:$0xff]
        %v2934 = vld [vmem:[#allocation2 + $0x3c8] sm:$0xf]
        %v2935 = vld [vmem:[#allocation2 + $0x3cc] sm:$0xff]
        %v2936 = vld [vmem:[#allocation2 + $0x3d4] sm:$0xff]
        %v2937 = vld [vmem:[#allocation2 + $0x3dc] sm:$0xff]
        %v2938 = vld [vmem:[#allocation2 + $0x3e4] sm:$0xff]
        %v2939 = vld [vmem:[#allocation2 + $0x3ec] sm:$0xf]
        %v2940 = vld [vmem:[#allocation2 + $0x3f0] sm:$0xff]
        %v2941 = vld [vmem:[#allocation2 + $0x3f8] sm:$0xff]
        %v2942 = vld [vmem:[#allocation2 + $0x400] sm:$0xff]
        %v2943 = vld [vmem:[#allocation2 + $0x408] sm:$0xff]
        %v2944 = vld [vmem:[#allocation2 + $0x410] sm:$0xf]
        %v2945 = vld [vmem:[#allocation2 + $0x414] sm:$0xff]
        %v2946 = vld [vmem:[#allocation2 + $0x41c] sm:$0xff]
        %v2947 = vld [vmem:[#allocation2 + $0x424] sm:$0xff]
        %v2948 = vld [vmem:[#allocation2 + $0x42c] sm:$0xff]
        %v2949 = vld [vmem:[#allocation2 + $0x434] sm:$0xf]
        %v2950 = vld [vmem:[#allocation2 + $0x438] sm:$0xff]
        %v2951 = vld [vmem:[#allocation2 + $0x440] sm:$0xff]
        %v2952 = vld [vmem:[#allocation2 + $0x448] sm:$0xff]
        %v2953 = vld [vmem:[#allocation2 + $0x450] sm:$0xff]
        %v2954 = vld [vmem:[#allocation2 + $0x458] sm:$0xf]
        %v2955 = vld [vmem:[#allocation2 + $0x45c] sm:$0xff]
        %v2956 = vld [vmem:[#allocation2 + $0x464] sm:$0xff]
        %v2957 = vld [vmem:[#allocation2 + $0x46c] sm:$0xff]
        %v2958 = vld [vmem:[#allocation2 + $0x474] sm:$0xff]
        %v2959 = vld [vmem:[#allocation2 + $0x47c] sm:$0xf]
        %v2960 = vld [vmem:[%s1] sm:$0xf]
        %v2961 = vld [vmem:[%s1 + $0x4] sm:$0xf]
        %v2962 = vld [vmem:[%s1 + $0x8] sm:$0xf]
        %v2963 = vld [vmem:[%s1 + $0xc] sm:$0xf]
        %v2964 = vld [vmem:[%s1 + $0x10] sm:$0xf]
        %v2965 = vld [vmem:[%s1 + $0x14] sm:$0xf]
        %v2966 = vld [vmem:[%s1 + $0x18] sm:$0xf]
        %v2967 = vld [vmem:[%s1 + $0x1c] sm:$0xf]
        %v2968 = vld [vmem:[%s1 + $0x20] sm:$0xf]
        %v2969 = vld [vmem:[%s1 + $0x24] sm:$0xf]
        %v2970 = vld [vmem:[%s1 + $0x28] sm:$0xf]
        %v2971 = vld [vmem:[%s1 + $0x2c] sm:$0xf]
        %v2972 = vld [vmem:[%s1 + $0x30] sm:$0xf]
        %v2973 = vld [vmem:[%s1 + $0x34] sm:$0xf]
        %v2974 = vld [vmem:[%s1 + $0x38] sm:$0xf]
        %v2975 = vld [vmem:[%s1 + $0x3c] sm:$0xf]
        %v2976 = vld [vmem:[%s1 + $0x40] sm:$0xf]
        %v2977 = vld [vmem:[%s1 + $0x44] sm:$0xf]
        %v2978 = vld [vmem:[%s1 + $0x48] sm:$0xf]
        %v2979 = vld [vmem:[%s1 + $0x4c] sm:$0xf]
        %v2980 = vld [vmem:[%s1 + $0x50] sm:$0xf]
        %v2981 = vld [vmem:[%s1 + $0x54] sm:$0xf]
        %v2982 = vld [vmem:[%s1 + $0x58] sm:$0xf]
        %v2983 = vld [vmem:[%s1 + $0x5c] sm:$0xf]
        %v2984 = vld [vmem:[%s1 + $0x60] sm:$0xf]
        %v2985 = vld [vmem:[%s1 + $0x64] sm:$0xf]
        %v2986 = vld [vmem:[%s1 + $0x68] sm:$0xf]
        %v2987 = vld [vmem:[%s1 + $0x6c] sm:$0xf]
        %v2988 = vld [vmem:[%s1 + $0x70] sm:$0xf]
        %v2989 = vld [vmem:[%s1 + $0x74] sm:$0xf]
        %v2990 = vld [vmem:[%s1 + $0x78] sm:$0xf]
        %v2991 = vld [vmem:[%s1 + $0x7c] sm:$0xf]
        %v2992 = vld [vmem:[%s1 + $0x80] sm:$0xf]
        %v2993 = vld [vmem:[%s1 + $0x84] sm:$0xf]
        %v2994 = vld [vmem:[%s1 + $0x88] sm:$0xf]
        %v2995 = vld [vmem:[%s1 + $0x8c] sm:$0xf]
        %v2996 = vld [vmem:[%s1 + $0x90] sm:$0xf]
        %v2997 = vld [vmem:[%s1 + $0x94] sm:$0xf]
        %v2998 = vld [vmem:[%s1 + $0x98] sm:$0xf]
        %v2999 = vld [vmem:[%s1 + $0x9c] sm:$0xf]
        %v3000 = vld [vmem:[%s1 + $0xa0] sm:$0xf]
        %v3001 = vld [vmem:[%s1 + $0xa4] sm:$0xf]
        %v3002 = vld [vmem:[%s1 + $0xa8] sm:$0xf]
        %v3003 = vld [vmem:[%s1 + $0xac] sm:$0xf]
        %v3004 = vld [vmem:[%s1 + $0xb0] sm:$0xf]
        %v3005 = vld [vmem:[%s1 + $0xb4] sm:$0xf]
        %v3006 = vld [vmem:[%s1 + $0xb8] sm:$0xf]
        %v3007 = vld [vmem:[%s1 + $0xbc] sm:$0xf]
        %v3008 = vld [vmem:[%s1 + $0xc0] sm:$0xf]
        %v3009 = vld [vmem:[%s1 + $0xc4] sm:$0xf]
        %v3010 = vld [vmem:[%s1 + $0xc8] sm:$0xf]
        %v3011 = vld [vmem:[%s1 + $0xcc] sm:$0xf]
        %v3012 = vld [vmem:[%s1 + $0xd0] sm:$0xf]
        %v3013 = vld [vmem:[%s1 + $0xd4] sm:$0xf]
        %v3014 = vld [vmem:[%s1 + $0xd8] sm:$0xf]
        %v3015 = vld [vmem:[%s1 + $0xdc] sm:$0xf]
        %v3016 = vld [vmem:[%s1 + $0xe0] sm:$0xf]
        %v3017 = vld [vmem:[%s1 + $0xe4] sm:$0xf]
        %v3018 = vld [vmem:[%s1 + $0xe8] sm:$0xf]
        %v3019 = vld [vmem:[%s1 + $0xec] sm:$0xf]
        %v3020 = vld [vmem:[%s1 + $0xf0] sm:$0xf]
        %v3021 = vld [vmem:[%s1 + $0xf4] sm:$0xf]
        %v3022 = vld [vmem:[%s1 + $0xf8] sm:$0xf]
        %v3023 = vld [vmem:[%s1 + $0xfc] sm:$0xf]
        %v3024 = vld [vmem:[%s1 + $0x100] sm:$0xf]
        %v3025 = vld [vmem:[%s1 + $0x104] sm:$0xf]
        %v3026 = vld [vmem:[%s1 + $0x108] sm:$0xf]
        %v3027 = vld [vmem:[%s1 + $0x10c] sm:$0xf]
        %v3028 = vld [vmem:[%s1 + $0x110] sm:$0xf]
        %v3029 = vld [vmem:[%s1 + $0x114] sm:$0xf]
        %v3030 = vld [vmem:[%s1 + $0x118] sm:$0xf]
        %v3031 = vld [vmem:[%s1 + $0x11c] sm:$0xf]
        %v3032 = vld [vmem:[%s1 + $0x120] sm:$0xf]
        %v3033 = vld [vmem:[%s1 + $0x124] sm:$0xf]
        %v3034 = vld [vmem:[%s1 + $0x128] sm:$0xf]
        %v3035 = vld [vmem:[%s1 + $0x12c] sm:$0xf]
        %v3036 = vld [vmem:[%s1 + $0x130] sm:$0xf]
        %v3037 = vld [vmem:[%s1 + $0x134] sm:$0xf]
        %v3038 = vld [vmem:[%s1 + $0x138] sm:$0xf]
        %v3039 = vld [vmem:[%s1 + $0x13c] sm:$0xf]
        %v3040 = vld [vmem:[%s1 + $0x140] sm:$0xf]
        %v3041 = vld [vmem:[%s1 + $0x144] sm:$0xf]
        %v3042 = vld [vmem:[%s1 + $0x148] sm:$0xf]
        %v3043 = vld [vmem:[%s1 + $0x14c] sm:$0xf]
        %v3044 = vld [vmem:[%s1 + $0x150] sm:$0xf]
        %v3045 = vld [vmem:[%s1 + $0x154] sm:$0xf]
        %v3046 = vld [vmem:[%s1 + $0x158] sm:$0xf]
        %v3047 = vld [vmem:[%s1 + $0x15c] sm:$0xf]
        %v3048 = vld [vmem:[%s1 + $0x160] sm:$0xf]
        %v3049 = vld [vmem:[%s1 + $0x164] sm:$0xf]
        %v3050 = vld [vmem:[%s1 + $0x168] sm:$0xf]
        %v3051 = vld [vmem:[%s1 + $0x16c] sm:$0xf]
        %v3052 = vld [vmem:[%s1 + $0x170] sm:$0xf]
        %v3053 = vld [vmem:[%s1 + $0x174] sm:$0xf]
        %v3054 = vld [vmem:[%s1 + $0x178] sm:$0xf]
        %v3055 = vld [vmem:[%s1 + $0x17c] sm:$0xf]
        %v3056 = vld [vmem:[%s1 + $0x180] sm:$0xf]
        %v3057 = vld [vmem:[%s1 + $0x184] sm:$0xf]
        %v3058 = vld [vmem:[%s1 + $0x188] sm:$0xf]
        %v3059 = vld [vmem:[%s1 + $0x18c] sm:$0xf]
        %v3060 = vld [vmem:[%s1 + $0x190] sm:$0xf]
        %v3061 = vld [vmem:[%s1 + $0x194] sm:$0xf]
        %v3062 = vld [vmem:[%s1 + $0x198] sm:$0xf]
        %v3063 = vld [vmem:[%s1 + $0x19c] sm:$0xf]
        %v3064 = vld [vmem:[%s1 + $0x1a0] sm:$0xf]
        %v3065 = vld [vmem:[%s1 + $0x1a4] sm:$0xf]
        %v3066 = vld [vmem:[%s1 + $0x1a8] sm:$0xf]
        %v3067 = vld [vmem:[%s1 + $0x1ac] sm:$0xf]
        %v3068 = vld [vmem:[%s1 + $0x1b0] sm:$0xf]
        %v3069 = vld [vmem:[%s1 + $0x1b4] sm:$0xf]
        %v3070 = vld [vmem:[%s1 + $0x1b8] sm:$0xf]
        %v3071 = vld [vmem:[%s1 + $0x1bc] sm:$0xf]
        %v3072 = vld [vmem:[%s1 + $0x1c0] sm:$0xf]
        %v3073 = vld [vmem:[%s1 + $0x1c4] sm:$0xf]
        %v3074 = vld [vmem:[%s1 + $0x1c8] sm:$0xf]
        %v3075 = vld [vmem:[%s1 + $0x1cc] sm:$0xf]
        %v3076 = vld [vmem:[%s1 + $0x1d0] sm:$0xf]
        %v3077 = vld [vmem:[%s1 + $0x1d4] sm:$0xf]
        %v3078 = vld [vmem:[%s1 + $0x1d8] sm:$0xf]
        %v3079 = vld [vmem:[%s1 + $0x1dc] sm:$0xf]
        %v3080 = vld [vmem:[%s1 + $0x1e0] sm:$0xf]
        %v3081 = vld [vmem:[%s1 + $0x1e4] sm:$0xf]
        %v3082 = vld [vmem:[%s1 + $0x1e8] sm:$0xf]
        %v3083 = vld [vmem:[%s1 + $0x1ec] sm:$0xf]
        %v3084 = vld [vmem:[%s1 + $0x1f0] sm:$0xf]
        %v3085 = vld [vmem:[%s1 + $0x1f4] sm:$0xf]
        %v3086 = vld [vmem:[%s1 + $0x1f8] sm:$0xf]
        %v3087 = vld [vmem:[%s1 + $0x1fc] sm:$0xf]
        %v3088 = vld [vmem:[%s1 + $0x200] sm:$0xf]
        %v3089 = vld [vmem:[%s1 + $0x204] sm:$0xf]
        %v3090 = vld [vmem:[%s1 + $0x208] sm:$0xf]
        %v3091 = vld [vmem:[%s1 + $0x20c] sm:$0xf]
        %v3092 = vld [vmem:[%s1 + $0x210] sm:$0xf]
        %v3093 = vld [vmem:[%s1 + $0x214] sm:$0xf]
        %v3094 = vld [vmem:[%s1 + $0x218] sm:$0xf]
        %v3095 = vld [vmem:[%s1 + $0x21c] sm:$0xf]
        %v3096 = vld [vmem:[%s1 + $0x220] sm:$0xf]
        %v3097 = vld [vmem:[%s1 + $0x224] sm:$0xf]
        %v3098 = vld [vmem:[%s1 + $0x228] sm:$0xf]
        %v3099 = vld [vmem:[%s1 + $0x22c] sm:$0xf]
        %v3100 = vld [vmem:[%s1 + $0x230] sm:$0xf]
        %v3101 = vld [vmem:[%s1 + $0x234] sm:$0xf]
        %v3102 = vld [vmem:[%s1 + $0x238] sm:$0xf]
        %v3103 = vld [vmem:[%s1 + $0x23c] sm:$0xf]
        %v3104 = vld [vmem:[%s2] sm:$0x1]
        %v3106 = vperm.slane %v3104, 0
        %v3268 = vunpack.c.l.b16 %v2800
        %v3269 = vunpack.c.h.b16 %v2800
        %v3270 = vunpack.c.l.b16 %v2801
        %v3271 = vunpack.c.h.b16 %v2801
        %v3272 = vunpack.c.l.b16 %v2802
        %v3273 = vunpack.c.h.b16 %v2802
        %v3274 = vunpack.c.l.b16 %v2803
        %v3275 = vunpack.c.h.b16 %v2803
        %v3276 = vunpack.c.l.b16 %v2804
        %v3277 = vunpack.c.l.b16 %v2805
        %v3278 = vunpack.c.h.b16 %v2805
        %v3279 = vunpack.c.l.b16 %v2806
        %v3280 = vunpack.c.h.b16 %v2806
        %v3281 = vunpack.c.l.b16 %v2807
        %v3282 = vunpack.c.h.b16 %v2807
        %v3283 = vunpack.c.l.b16 %v2808
        %v3284 = vunpack.c.h.b16 %v2808
        %v3285 = vunpack.c.l.b16 %v2809
        %v3286 = vunpack.c.l.b16 %v2810
        %v3287 = vunpack.c.h.b16 %v2810
        %v3288 = vunpack.c.l.b16 %v2811
        %v3289 = vunpack.c.h.b16 %v2811
        %v3290 = vunpack.c.l.b16 %v2812
        %v3291 = vunpack.c.h.b16 %v2812
        %v3292 = vunpack.c.l.b16 %v2813
        %v3293 = vunpack.c.h.b16 %v2813
        %v3294 = vunpack.c.l.b16 %v2814
        %v3295 = vunpack.c.l.b16 %v2815
        %v3296 = vunpack.c.h.b16 %v2815
        %v3297 = vunpack.c.l.b16 %v2816
        %v3298 = vunpack.c.h.b16 %v2816
        %v3299 = vunpack.c.l.b16 %v2817
        %v3300 = vunpack.c.h.b16 %v2817
        %v3301 = vunpack.c.l.b16 %v2818
        %v3302 = vunpack.c.h.b16 %v2818
        %v3303 = vunpack.c.l.b16 %v2819
        %v3304 = vunpack.c.l.b16 %v2820
        %v3305 = vunpack.c.h.b16 %v2820
        %v3306 = vunpack.c.l.b16 %v2821
        %v3307 = vunpack.c.h.b16 %v2821
        %v3308 = vunpack.c.l.b16 %v2822
        %v3309 = vunpack.c.h.b16 %v2822
        %v3310 = vunpack.c.l.b16 %v2823
        %v3311 = vunpack.c.h.b16 %v2823
        %v3312 = vunpack.c.l.b16 %v2824
        %v3313 = vunpack.c.l.b16 %v2825
        %v3314 = vunpack.c.h.b16 %v2825
        %v3315 = vunpack.c.l.b16 %v2826
        %v3316 = vunpack.c.h.b16 %v2826
        %v3317 = vunpack.c.l.b16 %v2827
        %v3318 = vunpack.c.h.b16 %v2827
        %v3319 = vunpack.c.l.b16 %v2828
        %v3320 = vunpack.c.h.b16 %v2828
        %v3321 = vunpack.c.l.b16 %v2829
        %v3322 = vunpack.c.l.b16 %v2830
        %v3323 = vunpack.c.h.b16 %v2830
        %v3324 = vunpack.c.l.b16 %v2831
        %v3325 = vunpack.c.h.b16 %v2831
        %v3326 = vunpack.c.l.b16 %v2832
        %v3327 = vunpack.c.h.b16 %v2832
        %v3328 = vunpack.c.l.b16 %v2833
        %v3329 = vunpack.c.h.b16 %v2833
        %v3330 = vunpack.c.l.b16 %v2834
        %v3331 = vunpack.c.l.b16 %v2835
        %v3332 = vunpack.c.h.b16 %v2835
        %v3333 = vunpack.c.l.b16 %v2836
        %v3334 = vunpack.c.h.b16 %v2836
        %v3335 = vunpack.c.l.b16 %v2837
        %v3336 = vunpack.c.h.b16 %v2837
        %v3337 = vunpack.c.l.b16 %v2838
        %v3338 = vunpack.c.h.b16 %v2838
        %v3339 = vunpack.c.l.b16 %v2839
        %v3340 = vunpack.c.l.b16 %v2840
        %v3341 = vunpack.c.h.b16 %v2840
        %v3342 = vunpack.c.l.b16 %v2841
        %v3343 = vunpack.c.h.b16 %v2841
        %v3344 = vunpack.c.l.b16 %v2842
        %v3345 = vunpack.c.h.b16 %v2842
        %v3346 = vunpack.c.l.b16 %v2843
        %v3347 = vunpack.c.h.b16 %v2843
        %v3348 = vunpack.c.l.b16 %v2844
        %v3349 = vunpack.c.l.b16 %v2845
        %v3350 = vunpack.c.h.b16 %v2845
        %v3351 = vunpack.c.l.b16 %v2846
        %v3352 = vunpack.c.h.b16 %v2846
        %v3353 = vunpack.c.l.b16 %v2847
        %v3354 = vunpack.c.h.b16 %v2847
        %v3355 = vunpack.c.l.b16 %v2848
        %v3356 = vunpack.c.h.b16 %v2848
        %v3357 = vunpack.c.l.b16 %v2849
        %v3358 = vunpack.c.l.b16 %v2850
        %v3359 = vunpack.c.h.b16 %v2850
        %v3360 = vunpack.c.l.b16 %v2851
        %v3361 = vunpack.c.h.b16 %v2851
        %v3362 = vunpack.c.l.b16 %v2852
        %v3363 = vunpack.c.h.b16 %v2852
        %v3364 = vunpack.c.l.b16 %v2853
        %v3365 = vunpack.c.h.b16 %v2853
        %v3366 = vunpack.c.l.b16 %v2854
        %v3367 = vunpack.c.l.b16 %v2855
        %v3368 = vunpack.c.h.b16 %v2855
        %v3369 = vunpack.c.l.b16 %v2856
        %v3370 = vunpack.c.h.b16 %v2856
        %v3371 = vunpack.c.l.b16 %v2857
        %v3372 = vunpack.c.h.b16 %v2857
        %v3373 = vunpack.c.l.b16 %v2858
        %v3374 = vunpack.c.h.b16 %v2858
        %v3375 = vunpack.c.l.b16 %v2859
        %v3376 = vunpack.c.l.b16 %v2860
        %v3377 = vunpack.c.h.b16 %v2860
        %v3378 = vunpack.c.l.b16 %v2861
        %v3379 = vunpack.c.h.b16 %v2861
        %v3380 = vunpack.c.l.b16 %v2862
        %v3381 = vunpack.c.h.b16 %v2862
        %v3382 = vunpack.c.l.b16 %v2863
        %v3383 = vunpack.c.h.b16 %v2863
        %v3384 = vunpack.c.l.b16 %v2864
        %v3385 = vunpack.c.l.b16 %v2865
        %v3386 = vunpack.c.h.b16 %v2865
        %v3387 = vunpack.c.l.b16 %v2866
        %v3388 = vunpack.c.h.b16 %v2866
        %v3389 = vunpack.c.l.b16 %v2867
        %v3390 = vunpack.c.h.b16 %v2867
        %v3391 = vunpack.c.l.b16 %v2868
        %v3392 = vunpack.c.h.b16 %v2868
        %v3393 = vunpack.c.l.b16 %v2869
        %v3394 = vunpack.c.l.b16 %v2870
        %v3395 = vunpack.c.h.b16 %v2870
        %v3396 = vunpack.c.l.b16 %v2871
        %v3397 = vunpack.c.h.b16 %v2871
        %v3398 = vunpack.c.l.b16 %v2872
        %v3399 = vunpack.c.h.b16 %v2872
        %v3400 = vunpack.c.l.b16 %v2873
        %v3401 = vunpack.c.h.b16 %v2873
        %v3402 = vunpack.c.l.b16 %v2874
        %v3403 = vunpack.c.l.b16 %v2875
        %v3404 = vunpack.c.h.b16 %v2875
        %v3405 = vunpack.c.l.b16 %v2876
        %v3406 = vunpack.c.h.b16 %v2876
        %v3407 = vunpack.c.l.b16 %v2877
        %v3408 = vunpack.c.h.b16 %v2877
        %v3409 = vunpack.c.l.b16 %v2878
        %v3410 = vunpack.c.h.b16 %v2878
        %v3411 = vunpack.c.l.b16 %v2879
        %v3412 = vunpack.c.l.b16 %v2880
        %v3413 = vunpack.c.h.b16 %v2880
        %v3414 = vunpack.c.l.b16 %v2881
        %v3415 = vunpack.c.h.b16 %v2881
        %v3416 = vunpack.c.l.b16 %v2882
        %v3417 = vunpack.c.h.b16 %v2882
        %v3418 = vunpack.c.l.b16 %v2883
        %v3419 = vunpack.c.h.b16 %v2883
        %v3420 = vunpack.c.l.b16 %v2884
        %v3421 = vunpack.c.l.b16 %v2885
        %v3422 = vunpack.c.h.b16 %v2885
        %v3423 = vunpack.c.l.b16 %v2886
        %v3424 = vunpack.c.h.b16 %v2886
        %v3425 = vunpack.c.l.b16 %v2887
        %v3426 = vunpack.c.h.b16 %v2887
        %v3427 = vunpack.c.l.b16 %v2888
        %v3428 = vunpack.c.h.b16 %v2888
        %v3429 = vunpack.c.l.b16 %v2889
        %v3430 = vunpack.c.l.b16 %v2890
        %v3431 = vunpack.c.h.b16 %v2890
        %v3432 = vunpack.c.l.b16 %v2891
        %v3433 = vunpack.c.h.b16 %v2891
        %v3434 = vunpack.c.l.b16 %v2892
        %v3435 = vunpack.c.h.b16 %v2892
        %v3436 = vunpack.c.l.b16 %v2893
        %v3437 = vunpack.c.h.b16 %v2893
        %v3438 = vunpack.c.l.b16 %v2894
        %v3439 = vunpack.c.l.b16 %v2895
        %v3440 = vunpack.c.h.b16 %v2895
        %v3441 = vunpack.c.l.b16 %v2896
        %v3442 = vunpack.c.h.b16 %v2896
        %v3443 = vunpack.c.l.b16 %v2897
        %v3444 = vunpack.c.h.b16 %v2897
        %v3445 = vunpack.c.l.b16 %v2898
        %v3446 = vunpack.c.h.b16 %v2898
        %v3447 = vunpack.c.l.b16 %v2899
        %v3448 = vunpack.c.l.b16 %v2900
        %v3449 = vunpack.c.h.b16 %v2900
        %v3450 = vunpack.c.l.b16 %v2901
        %v3451 = vunpack.c.h.b16 %v2901
        %v3452 = vunpack.c.l.b16 %v2902
        %v3453 = vunpack.c.h.b16 %v2902
        %v3454 = vunpack.c.l.b16 %v2903
        %v3455 = vunpack.c.h.b16 %v2903
        %v3456 = vunpack.c.l.b16 %v2904
        %v3457 = vunpack.c.l.b16 %v2905
        %v3458 = vunpack.c.h.b16 %v2905
        %v3459 = vunpack.c.l.b16 %v2906
        %v3460 = vunpack.c.h.b16 %v2906
        %v3461 = vunpack.c.l.b16 %v2907
        %v3462 = vunpack.c.h.b16 %v2907
        %v3463 = vunpack.c.l.b16 %v2908
        %v3464 = vunpack.c.h.b16 %v2908
        %v3465 = vunpack.c.l.b16 %v2909
        %v3466 = vunpack.c.l.b16 %v2910
        %v3467 = vunpack.c.h.b16 %v2910
        %v3468 = vunpack.c.l.b16 %v2911
        %v3469 = vunpack.c.h.b16 %v2911
        %v3470 = vunpack.c.l.b16 %v2912
        %v3471 = vunpack.c.h.b16 %v2912
        %v3472 = vunpack.c.l.b16 %v2913
        %v3473 = vunpack.c.h.b16 %v2913
        %v3474 = vunpack.c.l.b16 %v2914
        %v3475 = vunpack.c.l.b16 %v2915
        %v3476 = vunpack.c.h.b16 %v2915
        %v3477 = vunpack.c.l.b16 %v2916
        %v3478 = vunpack.c.h.b16 %v2916
        %v3479 = vunpack.c.l.b16 %v2917
        %v3480 = vunpack.c.h.b16 %v2917
        %v3481 = vunpack.c.l.b16 %v2918
        %v3482 = vunpack.c.h.b16 %v2918
        %v3483 = vunpack.c.l.b16 %v2919
        %v3484 = vunpack.c.l.b16 %v2920
        %v3485 = vunpack.c.h.b16 %v2920
        %v3486 = vunpack.c.l.b16 %v2921
        %v3487 = vunpack.c.h.b16 %v2921
        %v3488 = vunpack.c.l.b16 %v2922
        %v3489 = vunpack.c.h.b16 %v2922
        %v3490 = vunpack.c.l.b16 %v2923
        %v3491 = vunpack.c.h.b16 %v2923
        %v3492 = vunpack.c.l.b16 %v2924
        %v3493 = vunpack.c.l.b16 %v2925
        %v3494 = vunpack.c.h.b16 %v2925
        %v3495 = vunpack.c.l.b16 %v2926
        %v3496 = vunpack.c.h.b16 %v2926
        %v3497 = vunpack.c.l.b16 %v2927
        %v3498 = vunpack.c.h.b16 %v2927
        %v3499 = vunpack.c.l.b16 %v2928
        %v3500 = vunpack.c.h.b16 %v2928
        %v3501 = vunpack.c.l.b16 %v2929
        %v3502 = vunpack.c.l.b16 %v2930
        %v3503 = vunpack.c.h.b16 %v2930
        %v3504 = vunpack.c.l.b16 %v2931
        %v3505 = vunpack.c.h.b16 %v2931
        %v3506 = vunpack.c.l.b16 %v2932
        %v3507 = vunpack.c.h.b16 %v2932
        %v3508 = vunpack.c.l.b16 %v2933
        %v3509 = vunpack.c.h.b16 %v2933
        %v3510 = vunpack.c.l.b16 %v2934
        %v3511 = vunpack.c.l.b16 %v2935
        %v3512 = vunpack.c.h.b16 %v2935
        %v3513 = vunpack.c.l.b16 %v2936
        %v3514 = vunpack.c.h.b16 %v2936
        %v3515 = vunpack.c.l.b16 %v2937
        %v3516 = vunpack.c.h.b16 %v2937
        %v3517 = vunpack.c.l.b16 %v2938
        %v3518 = vunpack.c.h.b16 %v2938
        %v3519 = vunpack.c.l.b16 %v2939
        %v3520 = vunpack.c.l.b16 %v2940
        %v3521 = vunpack.c.h.b16 %v2940
        %v3522 = vunpack.c.l.b16 %v2941
        %v3523 = vunpack.c.h.b16 %v2941
        %v3524 = vunpack.c.l.b16 %v2942
        %v3525 = vunpack.c.h.b16 %v2942
        %v3526 = vunpack.c.l.b16 %v2943
        %v3527 = vunpack.c.h.b16 %v2943
        %v3528 = vunpack.c.l.b16 %v2944
        %v3529 = vunpack.c.l.b16 %v2945
        %v3530 = vunpack.c.h.b16 %v2945
        %v3531 = vunpack.c.l.b16 %v2946
        %v3532 = vunpack.c.h.b16 %v2946
        %v3533 = vunpack.c.l.b16 %v2947
        %v3534 = vunpack.c.h.b16 %v2947
        %v3535 = vunpack.c.l.b16 %v2948
        %v3536 = vunpack.c.h.b16 %v2948
        %v3537 = vunpack.c.l.b16 %v2949
        %v3538 = vunpack.c.l.b16 %v2950
        %v3539 = vunpack.c.h.b16 %v2950
        %v3540 = vunpack.c.l.b16 %v2951
        %v3541 = vunpack.c.h.b16 %v2951
        %v3542 = vunpack.c.l.b16 %v2952
        %v3543 = vunpack.c.h.b16 %v2952
        %v3544 = vunpack.c.l.b16 %v2953
        %v3545 = vunpack.c.h.b16 %v2953
        %v3546 = vunpack.c.l.b16 %v2954
        %v3547 = vunpack.c.l.b16 %v2955
        %v3548 = vunpack.c.h.b16 %v2955
        %v3549 = vunpack.c.l.b16 %v2956
        %v3550 = vunpack.c.h.b16 %v2956
        %v3551 = vunpack.c.l.b16 %v2957
        %v3552 = vunpack.c.h.b16 %v2957
        %v3553 = vunpack.c.l.b16 %v2958
        %v3554 = vunpack.c.h.b16 %v2958
        %v3555 = vunpack.c.l.b16 %v2959
        %v3556 = vpack.c.b16 %v3277, %v3268
        %v3557 = vpack.c.b16 %v3278, %v3269
        %v3558 = vpack.c.b16 %v3279, %v3270
        %v3559 = vpack.c.b16 %v3280, %v3271
        %v3560 = vpack.c.b16 %v3281, %v3272
        %v3561 = vpack.c.b16 %v3282, %v3273
        %v3562 = vpack.c.b16 %v3283, %v3274
        %v3563 = vpack.c.b16 %v3284, %v3275
        %v3564 = vpack.c.b16 %v3285, %v3276
        %v3565 = vpack.c.b16 %v3295, %v3286
        %v3566 = vpack.c.b16 %v3296, %v3287
        %v3567 = vpack.c.b16 %v3297, %v3288
        %v3568 = vpack.c.b16 %v3298, %v3289
        %v3569 = vpack.c.b16 %v3299, %v3290
        %v3570 = vpack.c.b16 %v3300, %v3291
        %v3571 = vpack.c.b16 %v3301, %v3292
        %v3572 = vpack.c.b16 %v3302, %v3293
        %v3573 = vpack.c.b16 %v3303, %v3294
        %v3574 = vpack.c.b16 %v3313, %v3304
        %v3575 = vpack.c.b16 %v3314, %v3305
        %v3576 = vpack.c.b16 %v3315, %v3306
        %v3577 = vpack.c.b16 %v3316, %v3307
        %v3578 = vpack.c.b16 %v3317, %v3308
        %v3579 = vpack.c.b16 %v3318, %v3309
        %v3580 = vpack.c.b16 %v3319, %v3310
        %v3581 = vpack.c.b16 %v3320, %v3311
        %v3582 = vpack.c.b16 %v3321, %v3312
        %v3583 = vpack.c.b16 %v3331, %v3322
        %v3584 = vpack.c.b16 %v3332, %v3323
        %v3585 = vpack.c.b16 %v3333, %v3324
        %v3586 = vpack.c.b16 %v3334, %v3325
        %v3587 = vpack.c.b16 %v3335, %v3326
        %v3588 = vpack.c.b16 %v3336, %v3327
        %v3589 = vpack.c.b16 %v3337, %v3328
        %v3590 = vpack.c.b16 %v3338, %v3329
        %v3591 = vpack.c.b16 %v3339, %v3330
        %v3592 = vpack.c.b16 %v3349, %v3340
        %v3593 = vpack.c.b16 %v3350, %v3341
        %v3594 = vpack.c.b16 %v3351, %v3342
        %v3595 = vpack.c.b16 %v3352, %v3343
        %v3596 = vpack.c.b16 %v3353, %v3344
        %v3597 = vpack.c.b16 %v3354, %v3345
        %v3598 = vpack.c.b16 %v3355, %v3346
        %v3599 = vpack.c.b16 %v3356, %v3347
        %v3600 = vpack.c.b16 %v3357, %v3348
        %v3601 = vpack.c.b16 %v3367, %v3358
        %v3602 = vpack.c.b16 %v3368, %v3359
        %v3603 = vpack.c.b16 %v3369, %v3360
        %v3604 = vpack.c.b16 %v3370, %v3361
        %v3605 = vpack.c.b16 %v3371, %v3362
        %v3606 = vpack.c.b16 %v3372, %v3363
        %v3607 = vpack.c.b16 %v3373, %v3364
        %v3608 = vpack.c.b16 %v3374, %v3365
        %v3609 = vpack.c.b16 %v3375, %v3366
        %v3610 = vpack.c.b16 %v3385, %v3376
        %v3611 = vpack.c.b16 %v3386, %v3377
        %v3612 = vpack.c.b16 %v3387, %v3378
        %v3613 = vpack.c.b16 %v3388, %v3379
        %v3614 = vpack.c.b16 %v3389, %v3380
        %v3615 = vpack.c.b16 %v3390, %v3381
        %v3616 = vpack.c.b16 %v3391, %v3382
        %v3617 = vpack.c.b16 %v3392, %v3383
        %v3618 = vpack.c.b16 %v3393, %v3384
        %v3619 = vpack.c.b16 %v3403, %v3394
        %v3620 = vpack.c.b16 %v3404, %v3395
        %v3621 = vpack.c.b16 %v3405, %v3396
        %v3622 = vpack.c.b16 %v3406, %v3397
        %v3623 = vpack.c.b16 %v3407, %v3398
        %v3624 = vpack.c.b16 %v3408, %v3399
        %v3625 = vpack.c.b16 %v3409, %v3400
        %v3626 = vpack.c.b16 %v3410, %v3401
        %v3627 = vpack.c.b16 %v3411, %v3402
        %v3628 = vpack.c.b16 %v3421, %v3412
        %v3629 = vpack.c.b16 %v3422, %v3413
        %v3630 = vpack.c.b16 %v3423, %v3414
        %v3631 = vpack.c.b16 %v3424, %v3415
        %v3632 = vpack.c.b16 %v3425, %v3416
        %v3633 = vpack.c.b16 %v3426, %v3417
        %v3634 = vpack.c.b16 %v3427, %v3418
        %v3635 = vpack.c.b16 %v3428, %v3419
        %v3636 = vpack.c.b16 %v3429, %v3420
        %v3637 = vpack.c.b16 %v3439, %v3430
        %v3638 = vpack.c.b16 %v3440, %v3431
        %v3639 = vpack.c.b16 %v3441, %v3432
        %v3640 = vpack.c.b16 %v3442, %v3433
        %v3641 = vpack.c.b16 %v3443, %v3434
        %v3642 = vpack.c.b16 %v3444, %v3435
        %v3643 = vpack.c.b16 %v3445, %v3436
        %v3644 = vpack.c.b16 %v3446, %v3437
        %v3645 = vpack.c.b16 %v3447, %v3438
        %v3646 = vpack.c.b16 %v3457, %v3448
        %v3647 = vpack.c.b16 %v3458, %v3449
        %v3648 = vpack.c.b16 %v3459, %v3450
        %v3649 = vpack.c.b16 %v3460, %v3451
        %v3650 = vpack.c.b16 %v3461, %v3452
        %v3651 = vpack.c.b16 %v3462, %v3453
        %v3652 = vpack.c.b16 %v3463, %v3454
        %v3653 = vpack.c.b16 %v3464, %v3455
        %v3654 = vpack.c.b16 %v3465, %v3456
        %v3655 = vpack.c.b16 %v3475, %v3466
        %v3656 = vpack.c.b16 %v3476, %v3467
        %v3657 = vpack.c.b16 %v3477, %v3468
        %v3658 = vpack.c.b16 %v3478, %v3469
        %v3659 = vpack.c.b16 %v3479, %v3470
        %v3660 = vpack.c.b16 %v3480, %v3471
        %v3661 = vpack.c.b16 %v3481, %v3472
        %v3662 = vpack.c.b16 %v3482, %v3473
        %v3663 = vpack.c.b16 %v3483, %v3474
        %v3664 = vpack.c.b16 %v3493, %v3484
        %v3665 = vpack.c.b16 %v3494, %v3485
        %v3666 = vpack.c.b16 %v3495, %v3486
        %v3667 = vpack.c.b16 %v3496, %v3487
        %v3668 = vpack.c.b16 %v3497, %v3488
        %v3669 = vpack.c.b16 %v3498, %v3489
        %v3670 = vpack.c.b16 %v3499, %v3490
        %v3671 = vpack.c.b16 %v3500, %v3491
        %v3672 = vpack.c.b16 %v3501, %v3492
        %v3673 = vpack.c.b16 %v3511, %v3502
        %v3674 = vpack.c.b16 %v3512, %v3503
        %v3675 = vpack.c.b16 %v3513, %v3504
        %v3676 = vpack.c.b16 %v3514, %v3505
        %v3677 = vpack.c.b16 %v3515, %v3506
        %v3678 = vpack.c.b16 %v3516, %v3507
        %v3679 = vpack.c.b16 %v3517, %v3508
        %v3680 = vpack.c.b16 %v3518, %v3509
        %v3681 = vpack.c.b16 %v3519, %v3510
        %v3682 = vpack.c.b16 %v3529, %v3520
        %v3683 = vpack.c.b16 %v3530, %v3521
        %v3684 = vpack.c.b16 %v3531, %v3522
        %v3685 = vpack.c.b16 %v3532, %v3523
        %v3686 = vpack.c.b16 %v3533, %v3524
        %v3687 = vpack.c.b16 %v3534, %v3525
        %v3688 = vpack.c.b16 %v3535, %v3526
        %v3689 = vpack.c.b16 %v3536, %v3527
        %v3690 = vpack.c.b16 %v3537, %v3528
        %v3691 = vpack.c.b16 %v3547, %v3538
        %v3692 = vpack.c.b16 %v3548, %v3539
        %v3693 = vpack.c.b16 %v3549, %v3540
        %v3694 = vpack.c.b16 %v3550, %v3541
        %v3695 = vpack.c.b16 %v3551, %v3542
        %v3696 = vpack.c.b16 %v3552, %v3543
        %v3697 = vpack.c.b16 %v3553, %v3544
        %v3698 = vpack.c.b16 %v3554, %v3545
        %v3699 = vpack.c.b16 %v3555, %v3546
        %v3988 = vunpack.c.l.b16 %v2960
        %v3989 = vunpack.c.l.b16 %v2961
        %v3990 = vunpack.c.l.b16 %v2962
        %v3991 = vunpack.c.l.b16 %v2963
        %v3992 = vunpack.c.l.b16 %v2964
        %v3993 = vunpack.c.l.b16 %v2965
        %v3994 = vunpack.c.l.b16 %v2966
        %v3995 = vunpack.c.l.b16 %v2967
        %v3996 = vunpack.c.l.b16 %v2968
        %v3997 = vunpack.c.l.b16 %v2969
        %v3998 = vunpack.c.l.b16 %v2970
        %v3999 = vunpack.c.l.b16 %v2971
        %v4000 = vunpack.c.l.b16 %v2972
        %v4001 = vunpack.c.l.b16 %v2973
        %v4002 = vunpack.c.l.b16 %v2974
        %v4003 = vunpack.c.l.b16 %v2975
        %v4004 = vunpack.c.l.b16 %v2976
        %v4005 = vunpack.c.l.b16 %v2977
        %v4006 = vunpack.c.l.b16 %v2978
        %v4007 = vunpack.c.l.b16 %v2979
        %v4008 = vunpack.c.l.b16 %v2980
        %v4009 = vunpack.c.l.b16 %v2981
        %v4010 = vunpack.c.l.b16 %v2982
        %v4011 = vunpack.c.l.b16 %v2983
        %v4012 = vunpack.c.l.b16 %v2984
        %v4013 = vunpack.c.l.b16 %v2985
        %v4014 = vunpack.c.l.b16 %v2986
        %v4015 = vunpack.c.l.b16 %v2987
        %v4016 = vunpack.c.l.b16 %v2988
        %v4017 = vunpack.c.l.b16 %v2989
        %v4018 = vunpack.c.l.b16 %v2990
        %v4019 = vunpack.c.l.b16 %v2991
        %v4020 = vunpack.c.l.b16 %v2992
        %v4021 = vunpack.c.l.b16 %v2993
        %v4022 = vunpack.c.l.b16 %v2994
        %v4023 = vunpack.c.l.b16 %v2995
        %v4024 = vunpack.c.l.b16 %v2996
        %v4025 = vunpack.c.l.b16 %v2997
        %v4026 = vunpack.c.l.b16 %v2998
        %v4027 = vunpack.c.l.b16 %v2999
        %v4028 = vunpack.c.l.b16 %v3000
        %v4029 = vunpack.c.l.b16 %v3001
        %v4030 = vunpack.c.l.b16 %v3002
        %v4031 = vunpack.c.l.b16 %v3003
        %v4032 = vunpack.c.l.b16 %v3004
        %v4033 = vunpack.c.l.b16 %v3005
        %v4034 = vunpack.c.l.b16 %v3006
        %v4035 = vunpack.c.l.b16 %v3007
        %v4036 = vunpack.c.l.b16 %v3008
        %v4037 = vunpack.c.l.b16 %v3009
        %v4038 = vunpack.c.l.b16 %v3010
        %v4039 = vunpack.c.l.b16 %v3011
        %v4040 = vunpack.c.l.b16 %v3012
        %v4041 = vunpack.c.l.b16 %v3013
        %v4042 = vunpack.c.l.b16 %v3014
        %v4043 = vunpack.c.l.b16 %v3015
        %v4044 = vunpack.c.l.b16 %v3016
        %v4045 = vunpack.c.l.b16 %v3017
        %v4046 = vunpack.c.l.b16 %v3018
        %v4047 = vunpack.c.l.b16 %v3019
        %v4048 = vunpack.c.l.b16 %v3020
        %v4049 = vunpack.c.l.b16 %v3021
        %v4050 = vunpack.c.l.b16 %v3022
        %v4051 = vunpack.c.l.b16 %v3023
        %v4052 = vunpack.c.l.b16 %v3024
        %v4053 = vunpack.c.l.b16 %v3025
        %v4054 = vunpack.c.l.b16 %v3026
        %v4055 = vunpack.c.l.b16 %v3027
        %v4056 = vunpack.c.l.b16 %v3028
        %v4057 = vunpack.c.l.b16 %v3029
        %v4058 = vunpack.c.l.b16 %v3030
        %v4059 = vunpack.c.l.b16 %v3031
        %v4060 = vunpack.c.l.b16 %v3032
        %v4061 = vunpack.c.l.b16 %v3033
        %v4062 = vunpack.c.l.b16 %v3034
        %v4063 = vunpack.c.l.b16 %v3035
        %v4064 = vunpack.c.l.b16 %v3036
        %v4065 = vunpack.c.l.b16 %v3037
        %v4066 = vunpack.c.l.b16 %v3038
        %v4067 = vunpack.c.l.b16 %v3039
        %v4068 = vunpack.c.l.b16 %v3040
        %v4069 = vunpack.c.l.b16 %v3041
        %v4070 = vunpack.c.l.b16 %v3042
        %v4071 = vunpack.c.l.b16 %v3043
        %v4072 = vunpack.c.l.b16 %v3044
        %v4073 = vunpack.c.l.b16 %v3045
        %v4074 = vunpack.c.l.b16 %v3046
        %v4075 = vunpack.c.l.b16 %v3047
        %v4076 = vunpack.c.l.b16 %v3048
        %v4077 = vunpack.c.l.b16 %v3049
        %v4078 = vunpack.c.l.b16 %v3050
        %v4079 = vunpack.c.l.b16 %v3051
        %v4080 = vunpack.c.l.b16 %v3052
        %v4081 = vunpack.c.l.b16 %v3053
        %v4082 = vunpack.c.l.b16 %v3054
        %v4083 = vunpack.c.l.b16 %v3055
        %v4084 = vunpack.c.l.b16 %v3056
        %v4085 = vunpack.c.l.b16 %v3057
        %v4086 = vunpack.c.l.b16 %v3058
        %v4087 = vunpack.c.l.b16 %v3059
        %v4088 = vunpack.c.l.b16 %v3060
        %v4089 = vunpack.c.l.b16 %v3061
        %v4090 = vunpack.c.l.b16 %v3062
        %v4091 = vunpack.c.l.b16 %v3063
        %v4092 = vunpack.c.l.b16 %v3064
        %v4093 = vunpack.c.l.b16 %v3065
        %v4094 = vunpack.c.l.b16 %v3066
        %v4095 = vunpack.c.l.b16 %v3067
        %v4096 = vunpack.c.l.b16 %v3068
        %v4097 = vunpack.c.l.b16 %v3069
        %v4098 = vunpack.c.l.b16 %v3070
        %v4099 = vunpack.c.l.b16 %v3071
        %v4100 = vunpack.c.l.b16 %v3072
        %v4101 = vunpack.c.l.b16 %v3073
        %v4102 = vunpack.c.l.b16 %v3074
        %v4103 = vunpack.c.l.b16 %v3075
        %v4104 = vunpack.c.l.b16 %v3076
        %v4105 = vunpack.c.l.b16 %v3077
        %v4106 = vunpack.c.l.b16 %v3078
        %v4107 = vunpack.c.l.b16 %v3079
        %v4108 = vunpack.c.l.b16 %v3080
        %v4109 = vunpack.c.l.b16 %v3081
        %v4110 = vunpack.c.l.b16 %v3082
        %v4111 = vunpack.c.l.b16 %v3083
        %v4112 = vunpack.c.l.b16 %v3084
        %v4113 = vunpack.c.l.b16 %v3085
        %v4114 = vunpack.c.l.b16 %v3086
        %v4115 = vunpack.c.l.b16 %v3087
        %v4116 = vunpack.c.l.b16 %v3088
        %v4117 = vunpack.c.l.b16 %v3089
        %v4118 = vunpack.c.l.b16 %v3090
        %v4119 = vunpack.c.l.b16 %v3091
        %v4120 = vunpack.c.l.b16 %v3092
        %v4121 = vunpack.c.l.b16 %v3093
        %v4122 = vunpack.c.l.b16 %v3094
        %v4123 = vunpack.c.l.b16 %v3095
        %v4124 = vunpack.c.l.b16 %v3096
        %v4125 = vunpack.c.l.b16 %v3097
        %v4126 = vunpack.c.l.b16 %v3098
        %v4127 = vunpack.c.l.b16 %v3099
        %v4128 = vunpack.c.l.b16 %v3100
        %v4129 = vunpack.c.l.b16 %v3101
        %v4130 = vunpack.c.l.b16 %v3102
        %v4131 = vunpack.c.l.b16 %v3103
        %v4132 = vpack.c.b16 %v3989, %v3988
        %v4133 = vpack.c.b16 %v3991, %v3990
        %v4134 = vpack.c.b16 %v3993, %v3992
        %v4135 = vpack.c.b16 %v3995, %v3994
        %v4136 = vpack.c.b16 %v3997, %v3996
        %v4137 = vpack.c.b16 %v3999, %v3998
        %v4138 = vpack.c.b16 %v4001, %v4000
        %v4139 = vpack.c.b16 %v4003, %v4002
        %v4140 = vpack.c.b16 %v4005, %v4004
        %v4141 = vpack.c.b16 %v4007, %v4006
        %v4142 = vpack.c.b16 %v4009, %v4008
        %v4143 = vpack.c.b16 %v4011, %v4010
        %v4144 = vpack.c.b16 %v4013, %v4012
        %v4145 = vpack.c.b16 %v4015, %v4014
        %v4146 = vpack.c.b16 %v4017, %v4016
        %v4147 = vpack.c.b16 %v4019, %v4018
        %v4148 = vpack.c.b16 %v4021, %v4020
        %v4149 = vpack.c.b16 %v4023, %v4022
        %v4150 = vpack.c.b16 %v4025, %v4024
        %v4151 = vpack.c.b16 %v4027, %v4026
        %v4152 = vpack.c.b16 %v4029, %v4028
        %v4153 = vpack.c.b16 %v4031, %v4030
        %v4154 = vpack.c.b16 %v4033, %v4032
        %v4155 = vpack.c.b16 %v4035, %v4034
        %v4156 = vpack.c.b16 %v4037, %v4036
        %v4157 = vpack.c.b16 %v4039, %v4038
        %v4158 = vpack.c.b16 %v4041, %v4040
        %v4159 = vpack.c.b16 %v4043, %v4042
        %v4160 = vpack.c.b16 %v4045, %v4044
        %v4161 = vpack.c.b16 %v4047, %v4046
        %v4162 = vpack.c.b16 %v4049, %v4048
        %v4163 = vpack.c.b16 %v4051, %v4050
        %v4164 = vpack.c.b16 %v4053, %v4052
        %v4165 = vpack.c.b16 %v4055, %v4054
        %v4166 = vpack.c.b16 %v4057, %v4056
        %v4167 = vpack.c.b16 %v4059, %v4058
        %v4168 = vpack.c.b16 %v4061, %v4060
        %v4169 = vpack.c.b16 %v4063, %v4062
        %v4170 = vpack.c.b16 %v4065, %v4064
        %v4171 = vpack.c.b16 %v4067, %v4066
        %v4172 = vpack.c.b16 %v4069, %v4068
        %v4173 = vpack.c.b16 %v4071, %v4070
        %v4174 = vpack.c.b16 %v4073, %v4072
        %v4175 = vpack.c.b16 %v4075, %v4074
        %v4176 = vpack.c.b16 %v4077, %v4076
        %v4177 = vpack.c.b16 %v4079, %v4078
        %v4178 = vpack.c.b16 %v4081, %v4080
        %v4179 = vpack.c.b16 %v4083, %v4082
        %v4180 = vpack.c.b16 %v4085, %v4084
        %v4181 = vpack.c.b16 %v4087, %v4086
        %v4182 = vpack.c.b16 %v4089, %v4088
        %v4183 = vpack.c.b16 %v4091, %v4090
        %v4184 = vpack.c.b16 %v4093, %v4092
        %v4185 = vpack.c.b16 %v4095, %v4094
        %v4186 = vpack.c.b16 %v4097, %v4096
        %v4187 = vpack.c.b16 %v4099, %v4098
        %v4188 = vpack.c.b16 %v4101, %v4100
        %v4189 = vpack.c.b16 %v4103, %v4102
        %v4190 = vpack.c.b16 %v4105, %v4104
        %v4191 = vpack.c.b16 %v4107, %v4106
        %v4192 = vpack.c.b16 %v4109, %v4108
        %v4193 = vpack.c.b16 %v4111, %v4110
        %v4194 = vpack.c.b16 %v4113, %v4112
        %v4195 = vpack.c.b16 %v4115, %v4114
        %v4196 = vpack.c.b16 %v4117, %v4116
        %v4197 = vpack.c.b16 %v4119, %v4118
        %v4198 = vpack.c.b16 %v4121, %v4120
        %v4199 = vpack.c.b16 %v4123, %v4122
        %v4200 = vpack.c.b16 %v4125, %v4124
        %v4201 = vpack.c.b16 %v4127, %v4126
        %v4202 = vpack.c.b16 %v4129, %v4128
        %v4203 = vpack.c.b16 %v4131, %v4130
        %4276 = vmatpush.bf16.msra.mxu0 %v4139
        %4277 = vmatpush.bf16.msra.mxu0 %v4138
        %4278 = vmatpush.bf16.msra.mxu0 %v4137
        %4279 = vmatpush.bf16.msra.mxu0 %v4136
        %4280 = vmatpush.bf16.msra.mxu0 %v4135
        %4281 = vmatpush.bf16.msra.mxu0 %v4134
        %4282 = vmatpush.bf16.msra.mxu0 %v4133
        %4283 = vmatpush.bf16.msra.mxu0 %v4132
        %4284 = vmatmul.bf16.gmra.mxu0 %v3556
        %v4285 = vpop.f32.mrf.mxu0
        %v4286 = vadd.f32 %v3106, %v4285
        %v4287 = vpop.f32.mrf.mxu0
        %v4288 = vadd.f32 %v3106, %v4287
        %4289 = vmatmul.bf16.gmra.mxu0 %v3565
        %v4290 = vpop.f32.mrf.mxu0
        %v4291 = vadd.f32 %v3106, %v4290
        %v4292 = vpop.f32.mrf.mxu0
        %v4293 = vadd.f32 %v3106, %v4292
        %4294 = vmatmul.bf16.gmra.mxu0 %v3574
        %v4295 = vpop.f32.mrf.mxu0
        %v4296 = vadd.f32 %v3106, %v4295
        %v4297 = vpop.f32.mrf.mxu0
        %v4298 = vadd.f32 %v3106, %v4297
        %4299 = vmatmul.bf16.gmra.mxu0 %v3583
        %v4300 = vpop.f32.mrf.mxu0
        %v4301 = vadd.f32 %v3106, %v4300
        %v4302 = vpop.f32.mrf.mxu0
        %v4303 = vadd.f32 %v3106, %v4302
        %4304 = vmatmul.bf16.gmra.mxu0 %v3592
        %v4305 = vpop.f32.mrf.mxu0
        %v4306 = vadd.f32 %v3106, %v4305
        %v4307 = vpop.f32.mrf.mxu0
        %v4308 = vadd.f32 %v3106, %v4307
        %4309 = vmatmul.bf16.gmra.mxu0 %v3601
        %v4310 = vpop.f32.mrf.mxu0
        %v4311 = vadd.f32 %v3106, %v4310
        %v4312 = vpop.f32.mrf.mxu0
        %v4313 = vadd.f32 %v3106, %v4312
        %4314 = vmatmul.bf16.gmra.mxu0 %v3610
        %v4315 = vpop.f32.mrf.mxu0
        %v4316 = vadd.f32 %v3106, %v4315
        %v4317 = vpop.f32.mrf.mxu0
        %v4318 = vadd.f32 %v3106, %v4317
        %4319 = vmatmul.bf16.gmra.mxu0 %v3619
        %v4320 = vpop.f32.mrf.mxu0
        %v4321 = vadd.f32 %v3106, %v4320
        %v4322 = vpop.f32.mrf.mxu0
        %v4323 = vadd.f32 %v3106, %v4322
        %4324 = vmatmul.bf16.gmra.mxu0 %v3628
        %v4325 = vpop.f32.mrf.mxu0
        %v4326 = vadd.f32 %v3106, %v4325
        %v4327 = vpop.f32.mrf.mxu0
        %v4328 = vadd.f32 %v3106, %v4327
        %4329 = vmatmul.bf16.gmra.mxu0 %v3637
        %v4330 = vpop.f32.mrf.mxu0
        %v4331 = vadd.f32 %v3106, %v4330
        %v4332 = vpop.f32.mrf.mxu0
        %v4333 = vadd.f32 %v3106, %v4332
        %4334 = vmatmul.bf16.gmra.mxu0 %v3646
        %v4335 = vpop.f32.mrf.mxu0
        %v4336 = vadd.f32 %v3106, %v4335
        %v4337 = vpop.f32.mrf.mxu0
        %v4338 = vadd.f32 %v3106, %v4337
        %4339 = vmatmul.bf16.gmra.mxu0 %v3655
        %v4340 = vpop.f32.mrf.mxu0
        %v4341 = vadd.f32 %v3106, %v4340
        %v4342 = vpop.f32.mrf.mxu0
        %v4343 = vadd.f32 %v3106, %v4342
        %4344 = vmatmul.bf16.gmra.mxu0 %v3664
        %v4345 = vpop.f32.mrf.mxu0
        %v4346 = vadd.f32 %v3106, %v4345
        %v4347 = vpop.f32.mrf.mxu0
        %v4348 = vadd.f32 %v3106, %v4347
        %4349 = vmatmul.bf16.gmra.mxu0 %v3673
        %v4350 = vpop.f32.mrf.mxu0
        %v4351 = vadd.f32 %v3106, %v4350
        %v4352 = vpop.f32.mrf.mxu0
        %v4353 = vadd.f32 %v3106, %v4352
        %4354 = vmatmul.bf16.gmra.mxu0 %v3682
        %v4355 = vpop.f32.mrf.mxu0
        %v4356 = vadd.f32 %v3106, %v4355
        %v4357 = vpop.f32.mrf.mxu0
        %v4358 = vadd.f32 %v3106, %v4357
        %4359 = vmatmul.bf16.gmra.mxu0 %v3691
        %v4360 = vpop.f32.mrf.mxu0
        %v4361 = vadd.f32 %v3106, %v4360
        %v4362 = vpop.f32.mrf.mxu0
        %v4363 = vadd.f32 %v3106, %v4362
        %4364 = vdwg.mxu0
        %4365 = vmatpush.bf16.msra.mxu0 %v4147
        %4366 = vmatpush.bf16.msra.mxu0 %v4146
        %4367 = vmatpush.bf16.msra.mxu0 %v4145
        %4368 = vmatpush.bf16.msra.mxu0 %v4144
        %4369 = vmatpush.bf16.msra.mxu0 %v4143
        %4370 = vmatpush.bf16.msra.mxu0 %v4142
        %4371 = vmatpush.bf16.msra.mxu0 %v4141
        %4372 = vmatpush.bf16.msra.mxu0 %v4140
        %4373 = vmatmul.bf16.gmra.mxu0 %v3557
        %v4374 = vpop.f32.mrf.mxu0
        %v4375 = vadd.f32 %v4286, %v4374
        %v4376 = vpop.f32.mrf.mxu0
        %v4377 = vadd.f32 %v4288, %v4376
        %4378 = vmatmul.bf16.gmra.mxu0 %v3566
        %v4379 = vpop.f32.mrf.mxu0
        %v4380 = vadd.f32 %v4291, %v4379
        %v4381 = vpop.f32.mrf.mxu0
        %v4382 = vadd.f32 %v4293, %v4381
        %4383 = vmatmul.bf16.gmra.mxu0 %v3575
        %v4384 = vpop.f32.mrf.mxu0
        %v4385 = vadd.f32 %v4296, %v4384
        %v4386 = vpop.f32.mrf.mxu0
        %v4387 = vadd.f32 %v4298, %v4386
        %4388 = vmatmul.bf16.gmra.mxu0 %v3584
        %v4389 = vpop.f32.mrf.mxu0
        %v4390 = vadd.f32 %v4301, %v4389
        %v4391 = vpop.f32.mrf.mxu0
        %v4392 = vadd.f32 %v4303, %v4391
        %4393 = vmatmul.bf16.gmra.mxu0 %v3593
        %v4394 = vpop.f32.mrf.mxu0
        %v4395 = vadd.f32 %v4306, %v4394
        %v4396 = vpop.f32.mrf.mxu0
        %v4397 = vadd.f32 %v4308, %v4396
        %4398 = vmatmul.bf16.gmra.mxu0 %v3602
        %v4399 = vpop.f32.mrf.mxu0
        %v4400 = vadd.f32 %v4311, %v4399
        %v4401 = vpop.f32.mrf.mxu0
        %v4402 = vadd.f32 %v4313, %v4401
        %4403 = vmatmul.bf16.gmra.mxu0 %v3611
        %v4404 = vpop.f32.mrf.mxu0
        %v4405 = vadd.f32 %v4316, %v4404
        %v4406 = vpop.f32.mrf.mxu0
        %v4407 = vadd.f32 %v4318, %v4406
        %4408 = vmatmul.bf16.gmra.mxu0 %v3620
        %v4409 = vpop.f32.mrf.mxu0
        %v4410 = vadd.f32 %v4321, %v4409
        %v4411 = vpop.f32.mrf.mxu0
        %v4412 = vadd.f32 %v4323, %v4411
        %4413 = vmatmul.bf16.gmra.mxu0 %v3629
        %v4414 = vpop.f32.mrf.mxu0
        %v4415 = vadd.f32 %v4326, %v4414
        %v4416 = vpop.f32.mrf.mxu0
        %v4417 = vadd.f32 %v4328, %v4416
        %4418 = vmatmul.bf16.gmra.mxu0 %v3638
        %v4419 = vpop.f32.mrf.mxu0
        %v4420 = vadd.f32 %v4331, %v4419
        %v4421 = vpop.f32.mrf.mxu0
        %v4422 = vadd.f32 %v4333, %v4421
        %4423 = vmatmul.bf16.gmra.mxu0 %v3647
        %v4424 = vpop.f32.mrf.mxu0
        %v4425 = vadd.f32 %v4336, %v4424
        %v4426 = vpop.f32.mrf.mxu0
        %v4427 = vadd.f32 %v4338, %v4426
        %4428 = vmatmul.bf16.gmra.mxu0 %v3656
        %v4429 = vpop.f32.mrf.mxu0
        %v4430 = vadd.f32 %v4341, %v4429
        %v4431 = vpop.f32.mrf.mxu0
        %v4432 = vadd.f32 %v4343, %v4431
        %4433 = vmatmul.bf16.gmra.mxu0 %v3665
        %v4434 = vpop.f32.mrf.mxu0
        %v4435 = vadd.f32 %v4346, %v4434
        %v4436 = vpop.f32.mrf.mxu0
        %v4437 = vadd.f32 %v4348, %v4436
        %4438 = vmatmul.bf16.gmra.mxu0 %v3674
        %v4439 = vpop.f32.mrf.mxu0
        %v4440 = vadd.f32 %v4351, %v4439
        %v4441 = vpop.f32.mrf.mxu0
        %v4442 = vadd.f32 %v4353, %v4441
        %4443 = vmatmul.bf16.gmra.mxu0 %v3683
        %v4444 = vpop.f32.mrf.mxu0
        %v4445 = vadd.f32 %v4356, %v4444
        %v4446 = vpop.f32.mrf.mxu0
        %v4447 = vadd.f32 %v4358, %v4446
        %4448 = vmatmul.bf16.gmra.mxu0 %v3692
        %v4449 = vpop.f32.mrf.mxu0
        %v4450 = vadd.f32 %v4361, %v4449
        %v4451 = vpop.f32.mrf.mxu0
        %v4452 = vadd.f32 %v4363, %v4451
        %4453 = vdwg.mxu0
        %4454 = vmatpush.bf16.msra.mxu0 %v4155
        %4455 = vmatpush.bf16.msra.mxu0 %v4154
        %4456 = vmatpush.bf16.msra.mxu0 %v4153
        %4457 = vmatpush.bf16.msra.mxu0 %v4152
        %4458 = vmatpush.bf16.msra.mxu0 %v4151
        %4459 = vmatpush.bf16.msra.mxu0 %v4150
        %4460 = vmatpush.bf16.msra.mxu0 %v4149
        %4461 = vmatpush.bf16.msra.mxu0 %v4148
        %4462 = vmatmul.bf16.gmra.mxu0 %v3558
        %v4463 = vpop.f32.mrf.mxu0
        %v4464 = vadd.f32 %v4375, %v4463
        %v4465 = vpop.f32.mrf.mxu0
        %v4466 = vadd.f32 %v4377, %v4465
        %4467 = vmatmul.bf16.gmra.mxu0 %v3567
        %v4468 = vpop.f32.mrf.mxu0
        %v4469 = vadd.f32 %v4380, %v4468
        %v4470 = vpop.f32.mrf.mxu0
        %v4471 = vadd.f32 %v4382, %v4470
        %4472 = vmatmul.bf16.gmra.mxu0 %v3576
        %v4473 = vpop.f32.mrf.mxu0
        %v4474 = vadd.f32 %v4385, %v4473
        %v4475 = vpop.f32.mrf.mxu0
        %v4476 = vadd.f32 %v4387, %v4475
        %4477 = vmatmul.bf16.gmra.mxu0 %v3585
        %v4478 = vpop.f32.mrf.mxu0
        %v4479 = vadd.f32 %v4390, %v4478
        %v4480 = vpop.f32.mrf.mxu0
        %v4481 = vadd.f32 %v4392, %v4480
        %4482 = vmatmul.bf16.gmra.mxu0 %v3594
        %v4483 = vpop.f32.mrf.mxu0
        %v4484 = vadd.f32 %v4395, %v4483
        %v4485 = vpop.f32.mrf.mxu0
        %v4486 = vadd.f32 %v4397, %v4485
        %4487 = vmatmul.bf16.gmra.mxu0 %v3603
        %v4488 = vpop.f32.mrf.mxu0
        %v4489 = vadd.f32 %v4400, %v4488
        %v4490 = vpop.f32.mrf.mxu0
        %v4491 = vadd.f32 %v4402, %v4490
        %4492 = vmatmul.bf16.gmra.mxu0 %v3612
        %v4493 = vpop.f32.mrf.mxu0
        %v4494 = vadd.f32 %v4405, %v4493
        %v4495 = vpop.f32.mrf.mxu0
        %v4496 = vadd.f32 %v4407, %v4495
        %4497 = vmatmul.bf16.gmra.mxu0 %v3621
        %v4498 = vpop.f32.mrf.mxu0
        %v4499 = vadd.f32 %v4410, %v4498
        %v4500 = vpop.f32.mrf.mxu0
        %v4501 = vadd.f32 %v4412, %v4500
        %4502 = vmatmul.bf16.gmra.mxu0 %v3630
        %v4503 = vpop.f32.mrf.mxu0
        %v4504 = vadd.f32 %v4415, %v4503
        %v4505 = vpop.f32.mrf.mxu0
        %v4506 = vadd.f32 %v4417, %v4505
        %4507 = vmatmul.bf16.gmra.mxu0 %v3639
        %v4508 = vpop.f32.mrf.mxu0
        %v4509 = vadd.f32 %v4420, %v4508
        %v4510 = vpop.f32.mrf.mxu0
        %v4511 = vadd.f32 %v4422, %v4510
        %4512 = vmatmul.bf16.gmra.mxu0 %v3648
        %v4513 = vpop.f32.mrf.mxu0
        %v4514 = vadd.f32 %v4425, %v4513
        %v4515 = vpop.f32.mrf.mxu0
        %v4516 = vadd.f32 %v4427, %v4515
        %4517 = vmatmul.bf16.gmra.mxu0 %v3657
        %v4518 = vpop.f32.mrf.mxu0
        %v4519 = vadd.f32 %v4430, %v4518
        %v4520 = vpop.f32.mrf.mxu0
        %v4521 = vadd.f32 %v4432, %v4520
        %4522 = vmatmul.bf16.gmra.mxu0 %v3666
        %v4523 = vpop.f32.mrf.mxu0
        %v4524 = vadd.f32 %v4435, %v4523
        %v4525 = vpop.f32.mrf.mxu0
        %v4526 = vadd.f32 %v4437, %v4525
        %4527 = vmatmul.bf16.gmra.mxu0 %v3675
        %v4528 = vpop.f32.mrf.mxu0
        %v4529 = vadd.f32 %v4440, %v4528
        %v4530 = vpop.f32.mrf.mxu0
        %v4531 = vadd.f32 %v4442, %v4530
        %4532 = vmatmul.bf16.gmra.mxu0 %v3684
        %v4533 = vpop.f32.mrf.mxu0
        %v4534 = vadd.f32 %v4445, %v4533
        %v4535 = vpop.f32.mrf.mxu0
        %v4536 = vadd.f32 %v4447, %v4535
        %4537 = vmatmul.bf16.gmra.mxu0 %v3693
        %v4538 = vpop.f32.mrf.mxu0
        %v4539 = vadd.f32 %v4450, %v4538
        %v4540 = vpop.f32.mrf.mxu0
        %v4541 = vadd.f32 %v4452, %v4540
        %4542 = vdwg.mxu0
        %4543 = vmatpush.bf16.msra.mxu0 %v4163
        %4544 = vmatpush.bf16.msra.mxu0 %v4162
        %4545 = vmatpush.bf16.msra.mxu0 %v4161
        %4546 = vmatpush.bf16.msra.mxu0 %v4160
        %4547 = vmatpush.bf16.msra.mxu0 %v4159
        %4548 = vmatpush.bf16.msra.mxu0 %v4158
        %4549 = vmatpush.bf16.msra.mxu0 %v4157
        %4550 = vmatpush.bf16.msra.mxu0 %v4156
        %4551 = vmatmul.bf16.gmra.mxu0 %v3559
        %v4552 = vpop.f32.mrf.mxu0
        %v4553 = vadd.f32 %v4464, %v4552
        %v4554 = vpop.f32.mrf.mxu0
        %v4555 = vadd.f32 %v4466, %v4554
        %4556 = vmatmul.bf16.gmra.mxu0 %v3568
        %v4557 = vpop.f32.mrf.mxu0
        %v4558 = vadd.f32 %v4469, %v4557
        %v4559 = vpop.f32.mrf.mxu0
        %v4560 = vadd.f32 %v4471, %v4559
        %4561 = vmatmul.bf16.gmra.mxu0 %v3577
        %v4562 = vpop.f32.mrf.mxu0
        %v4563 = vadd.f32 %v4474, %v4562
        %v4564 = vpop.f32.mrf.mxu0
        %v4565 = vadd.f32 %v4476, %v4564
        %4566 = vmatmul.bf16.gmra.mxu0 %v3586
        %v4567 = vpop.f32.mrf.mxu0
        %v4568 = vadd.f32 %v4479, %v4567
        %v4569 = vpop.f32.mrf.mxu0
        %v4570 = vadd.f32 %v4481, %v4569
        %4571 = vmatmul.bf16.gmra.mxu0 %v3595
        %v4572 = vpop.f32.mrf.mxu0
        %v4573 = vadd.f32 %v4484, %v4572
        %v4574 = vpop.f32.mrf.mxu0
        %v4575 = vadd.f32 %v4486, %v4574
        %4576 = vmatmul.bf16.gmra.mxu0 %v3604
        %v4577 = vpop.f32.mrf.mxu0
        %v4578 = vadd.f32 %v4489, %v4577
        %v4579 = vpop.f32.mrf.mxu0
        %v4580 = vadd.f32 %v4491, %v4579
        %4581 = vmatmul.bf16.gmra.mxu0 %v3613
        %v4582 = vpop.f32.mrf.mxu0
        %v4583 = vadd.f32 %v4494, %v4582
        %v4584 = vpop.f32.mrf.mxu0
        %v4585 = vadd.f32 %v4496, %v4584
        %4586 = vmatmul.bf16.gmra.mxu0 %v3622
        %v4587 = vpop.f32.mrf.mxu0
        %v4588 = vadd.f32 %v4499, %v4587
        %v4589 = vpop.f32.mrf.mxu0
        %v4590 = vadd.f32 %v4501, %v4589
        %4591 = vmatmul.bf16.gmra.mxu0 %v3631
        %v4592 = vpop.f32.mrf.mxu0
        %v4593 = vadd.f32 %v4504, %v4592
        %v4594 = vpop.f32.mrf.mxu0
        %v4595 = vadd.f32 %v4506, %v4594
        %4596 = vmatmul.bf16.gmra.mxu0 %v3640
        %v4597 = vpop.f32.mrf.mxu0
        %v4598 = vadd.f32 %v4509, %v4597
        %v4599 = vpop.f32.mrf.mxu0
        %v4600 = vadd.f32 %v4511, %v4599
        %4601 = vmatmul.bf16.gmra.mxu0 %v3649
        %v4602 = vpop.f32.mrf.mxu0
        %v4603 = vadd.f32 %v4514, %v4602
        %v4604 = vpop.f32.mrf.mxu0
        %v4605 = vadd.f32 %v4516, %v4604
        %4606 = vmatmul.bf16.gmra.mxu0 %v3658
        %v4607 = vpop.f32.mrf.mxu0
        %v4608 = vadd.f32 %v4519, %v4607
        %v4609 = vpop.f32.mrf.mxu0
        %v4610 = vadd.f32 %v4521, %v4609
        %4611 = vmatmul.bf16.gmra.mxu0 %v3667
        %v4612 = vpop.f32.mrf.mxu0
        %v4613 = vadd.f32 %v4524, %v4612
        %v4614 = vpop.f32.mrf.mxu0
        %v4615 = vadd.f32 %v4526, %v4614
        %4616 = vmatmul.bf16.gmra.mxu0 %v3676
        %v4617 = vpop.f32.mrf.mxu0
        %v4618 = vadd.f32 %v4529, %v4617
        %v4619 = vpop.f32.mrf.mxu0
        %v4620 = vadd.f32 %v4531, %v4619
        %4621 = vmatmul.bf16.gmra.mxu0 %v3685
        %v4622 = vpop.f32.mrf.mxu0
        %v4623 = vadd.f32 %v4534, %v4622
        %v4624 = vpop.f32.mrf.mxu0
        %v4625 = vadd.f32 %v4536, %v4624
        %4626 = vmatmul.bf16.gmra.mxu0 %v3694
        %v4627 = vpop.f32.mrf.mxu0
        %v4628 = vadd.f32 %v4539, %v4627
        %v4629 = vpop.f32.mrf.mxu0
        %v4630 = vadd.f32 %v4541, %v4629
        %4631 = vdwg.mxu0
        %4632 = vmatpush.bf16.msra.mxu0 %v4171
        %4633 = vmatpush.bf16.msra.mxu0 %v4170
        %4634 = vmatpush.bf16.msra.mxu0 %v4169
        %4635 = vmatpush.bf16.msra.mxu0 %v4168
        %4636 = vmatpush.bf16.msra.mxu0 %v4167
        %4637 = vmatpush.bf16.msra.mxu0 %v4166
        %4638 = vmatpush.bf16.msra.mxu0 %v4165
        %4639 = vmatpush.bf16.msra.mxu0 %v4164
        %4640 = vmatmul.bf16.gmra.mxu0 %v3560
        %v4641 = vpop.f32.mrf.mxu0
        %v4642 = vadd.f32 %v4553, %v4641
        %v4643 = vpop.f32.mrf.mxu0
        %v4644 = vadd.f32 %v4555, %v4643
        %4645 = vmatmul.bf16.gmra.mxu0 %v3569
        %v4646 = vpop.f32.mrf.mxu0
        %v4647 = vadd.f32 %v4558, %v4646
        %v4648 = vpop.f32.mrf.mxu0
        %v4649 = vadd.f32 %v4560, %v4648
        %4650 = vmatmul.bf16.gmra.mxu0 %v3578
        %v4651 = vpop.f32.mrf.mxu0
        %v4652 = vadd.f32 %v4563, %v4651
        %v4653 = vpop.f32.mrf.mxu0
        %v4654 = vadd.f32 %v4565, %v4653
        %4655 = vmatmul.bf16.gmra.mxu0 %v3587
        %v4656 = vpop.f32.mrf.mxu0
        %v4657 = vadd.f32 %v4568, %v4656
        %v4658 = vpop.f32.mrf.mxu0
        %v4659 = vadd.f32 %v4570, %v4658
        %4660 = vmatmul.bf16.gmra.mxu0 %v3596
        %v4661 = vpop.f32.mrf.mxu0
        %v4662 = vadd.f32 %v4573, %v4661
        %v4663 = vpop.f32.mrf.mxu0
        %v4664 = vadd.f32 %v4575, %v4663
        %4665 = vmatmul.bf16.gmra.mxu0 %v3605
        %v4666 = vpop.f32.mrf.mxu0
        %v4667 = vadd.f32 %v4578, %v4666
        %v4668 = vpop.f32.mrf.mxu0
        %v4669 = vadd.f32 %v4580, %v4668
        %4670 = vmatmul.bf16.gmra.mxu0 %v3614
        %v4671 = vpop.f32.mrf.mxu0
        %v4672 = vadd.f32 %v4583, %v4671
        %v4673 = vpop.f32.mrf.mxu0
        %v4674 = vadd.f32 %v4585, %v4673
        %4675 = vmatmul.bf16.gmra.mxu0 %v3623
        %v4676 = vpop.f32.mrf.mxu0
        %v4677 = vadd.f32 %v4588, %v4676
        %v4678 = vpop.f32.mrf.mxu0
        %v4679 = vadd.f32 %v4590, %v4678
        %4680 = vmatmul.bf16.gmra.mxu0 %v3632
        %v4681 = vpop.f32.mrf.mxu0
        %v4682 = vadd.f32 %v4593, %v4681
        %v4683 = vpop.f32.mrf.mxu0
        %v4684 = vadd.f32 %v4595, %v4683
        %4685 = vmatmul.bf16.gmra.mxu0 %v3641
        %v4686 = vpop.f32.mrf.mxu0
        %v4687 = vadd.f32 %v4598, %v4686
        %v4688 = vpop.f32.mrf.mxu0
        %v4689 = vadd.f32 %v4600, %v4688
        %4690 = vmatmul.bf16.gmra.mxu0 %v3650
        %v4691 = vpop.f32.mrf.mxu0
        %v4692 = vadd.f32 %v4603, %v4691
        %v4693 = vpop.f32.mrf.mxu0
        %v4694 = vadd.f32 %v4605, %v4693
        %4695 = vmatmul.bf16.gmra.mxu0 %v3659
        %v4696 = vpop.f32.mrf.mxu0
        %v4697 = vadd.f32 %v4608, %v4696
        %v4698 = vpop.f32.mrf.mxu0
        %v4699 = vadd.f32 %v4610, %v4698
        %4700 = vmatmul.bf16.gmra.mxu0 %v3668
        %v4701 = vpop.f32.mrf.mxu0
        %v4702 = vadd.f32 %v4613, %v4701
        %v4703 = vpop.f32.mrf.mxu0
        %v4704 = vadd.f32 %v4615, %v4703
        %4705 = vmatmul.bf16.gmra.mxu0 %v3677
        %v4706 = vpop.f32.mrf.mxu0
        %v4707 = vadd.f32 %v4618, %v4706
        %v4708 = vpop.f32.mrf.mxu0
        %v4709 = vadd.f32 %v4620, %v4708
        %4710 = vmatmul.bf16.gmra.mxu0 %v3686
        %v4711 = vpop.f32.mrf.mxu0
        %v4712 = vadd.f32 %v4623, %v4711
        %v4713 = vpop.f32.mrf.mxu0
        %v4714 = vadd.f32 %v4625, %v4713
        %4715 = vmatmul.bf16.gmra.mxu0 %v3695
        %v4716 = vpop.f32.mrf.mxu0
        %v4717 = vadd.f32 %v4628, %v4716
        %v4718 = vpop.f32.mrf.mxu0
        %v4719 = vadd.f32 %v4630, %v4718
        %4720 = vdwg.mxu0
        %4721 = vmatpush.bf16.msra.mxu0 %v4179
        %4722 = vmatpush.bf16.msra.mxu0 %v4178
        %4723 = vmatpush.bf16.msra.mxu0 %v4177
        %4724 = vmatpush.bf16.msra.mxu0 %v4176
        %4725 = vmatpush.bf16.msra.mxu0 %v4175
        %4726 = vmatpush.bf16.msra.mxu0 %v4174
        %4727 = vmatpush.bf16.msra.mxu0 %v4173
        %4728 = vmatpush.bf16.msra.mxu0 %v4172
        %4729 = vmatmul.bf16.gmra.mxu0 %v3561
        %v4730 = vpop.f32.mrf.mxu0
        %v4731 = vadd.f32 %v4642, %v4730
        %v4732 = vpop.f32.mrf.mxu0
        %v4733 = vadd.f32 %v4644, %v4732
        %4734 = vmatmul.bf16.gmra.mxu0 %v3570
        %v4735 = vpop.f32.mrf.mxu0
        %v4736 = vadd.f32 %v4647, %v4735
        %v4737 = vpop.f32.mrf.mxu0
        %v4738 = vadd.f32 %v4649, %v4737
        %4739 = vmatmul.bf16.gmra.mxu0 %v3579
        %v4740 = vpop.f32.mrf.mxu0
        %v4741 = vadd.f32 %v4652, %v4740
        %v4742 = vpop.f32.mrf.mxu0
        %v4743 = vadd.f32 %v4654, %v4742
        %4744 = vmatmul.bf16.gmra.mxu0 %v3588
        %v4745 = vpop.f32.mrf.mxu0
        %v4746 = vadd.f32 %v4657, %v4745
        %v4747 = vpop.f32.mrf.mxu0
        %v4748 = vadd.f32 %v4659, %v4747
        %4749 = vmatmul.bf16.gmra.mxu0 %v3597
        %v4750 = vpop.f32.mrf.mxu0
        %v4751 = vadd.f32 %v4662, %v4750
        %v4752 = vpop.f32.mrf.mxu0
        %v4753 = vadd.f32 %v4664, %v4752
        %4754 = vmatmul.bf16.gmra.mxu0 %v3606
        %v4755 = vpop.f32.mrf.mxu0
        %v4756 = vadd.f32 %v4667, %v4755
        %v4757 = vpop.f32.mrf.mxu0
        %v4758 = vadd.f32 %v4669, %v4757
        %4759 = vmatmul.bf16.gmra.mxu0 %v3615
        %v4760 = vpop.f32.mrf.mxu0
        %v4761 = vadd.f32 %v4672, %v4760
        %v4762 = vpop.f32.mrf.mxu0
        %v4763 = vadd.f32 %v4674, %v4762
        %4764 = vmatmul.bf16.gmra.mxu0 %v3624
        %v4765 = vpop.f32.mrf.mxu0
        %v4766 = vadd.f32 %v4677, %v4765
        %v4767 = vpop.f32.mrf.mxu0
        %v4768 = vadd.f32 %v4679, %v4767
        %4769 = vmatmul.bf16.gmra.mxu0 %v3633
        %v4770 = vpop.f32.mrf.mxu0
        %v4771 = vadd.f32 %v4682, %v4770
        %v4772 = vpop.f32.mrf.mxu0
        %v4773 = vadd.f32 %v4684, %v4772
        %4774 = vmatmul.bf16.gmra.mxu0 %v3642
        %v4775 = vpop.f32.mrf.mxu0
        %v4776 = vadd.f32 %v4687, %v4775
        %v4777 = vpop.f32.mrf.mxu0
        %v4778 = vadd.f32 %v4689, %v4777
        %4779 = vmatmul.bf16.gmra.mxu0 %v3651
        %v4780 = vpop.f32.mrf.mxu0
        %v4781 = vadd.f32 %v4692, %v4780
        %v4782 = vpop.f32.mrf.mxu0
        %v4783 = vadd.f32 %v4694, %v4782
        %4784 = vmatmul.bf16.gmra.mxu0 %v3660
        %v4785 = vpop.f32.mrf.mxu0
        %v4786 = vadd.f32 %v4697, %v4785
        %v4787 = vpop.f32.mrf.mxu0
        %v4788 = vadd.f32 %v4699, %v4787
        %4789 = vmatmul.bf16.gmra.mxu0 %v3669
        %v4790 = vpop.f32.mrf.mxu0
        %v4791 = vadd.f32 %v4702, %v4790
        %v4792 = vpop.f32.mrf.mxu0
        %v4793 = vadd.f32 %v4704, %v4792
        %4794 = vmatmul.bf16.gmra.mxu0 %v3678
        %v4795 = vpop.f32.mrf.mxu0
        %v4796 = vadd.f32 %v4707, %v4795
        %v4797 = vpop.f32.mrf.mxu0
        %v4798 = vadd.f32 %v4709, %v4797
        %4799 = vmatmul.bf16.gmra.mxu0 %v3687
        %v4800 = vpop.f32.mrf.mxu0
        %v4801 = vadd.f32 %v4712, %v4800
        %v4802 = vpop.f32.mrf.mxu0
        %v4803 = vadd.f32 %v4714, %v4802
        %4804 = vmatmul.bf16.gmra.mxu0 %v3696
        %v4805 = vpop.f32.mrf.mxu0
        %v4806 = vadd.f32 %v4717, %v4805
        %v4807 = vpop.f32.mrf.mxu0
        %v4808 = vadd.f32 %v4719, %v4807
        %4809 = vdwg.mxu0
        %4810 = vmatpush.bf16.msra.mxu0 %v4187
        %4811 = vmatpush.bf16.msra.mxu0 %v4186
        %4812 = vmatpush.bf16.msra.mxu0 %v4185
        %4813 = vmatpush.bf16.msra.mxu0 %v4184
        %4814 = vmatpush.bf16.msra.mxu0 %v4183
        %4815 = vmatpush.bf16.msra.mxu0 %v4182
        %4816 = vmatpush.bf16.msra.mxu0 %v4181
        %4817 = vmatpush.bf16.msra.mxu0 %v4180
        %4818 = vmatmul.bf16.gmra.mxu0 %v3562
        %v4819 = vpop.f32.mrf.mxu0
        %v4820 = vadd.f32 %v4731, %v4819
        %v4821 = vpop.f32.mrf.mxu0
        %v4822 = vadd.f32 %v4733, %v4821
        %4823 = vmatmul.bf16.gmra.mxu0 %v3571
        %v4824 = vpop.f32.mrf.mxu0
        %v4825 = vadd.f32 %v4736, %v4824
        %v4826 = vpop.f32.mrf.mxu0
        %v4827 = vadd.f32 %v4738, %v4826
        %4828 = vmatmul.bf16.gmra.mxu0 %v3580
        %v4829 = vpop.f32.mrf.mxu0
        %v4830 = vadd.f32 %v4741, %v4829
        %v4831 = vpop.f32.mrf.mxu0
        %v4832 = vadd.f32 %v4743, %v4831
        %4833 = vmatmul.bf16.gmra.mxu0 %v3589
        %v4834 = vpop.f32.mrf.mxu0
        %v4835 = vadd.f32 %v4746, %v4834
        %v4836 = vpop.f32.mrf.mxu0
        %v4837 = vadd.f32 %v4748, %v4836
        %4838 = vmatmul.bf16.gmra.mxu0 %v3598
        %v4839 = vpop.f32.mrf.mxu0
        %v4840 = vadd.f32 %v4751, %v4839
        %v4841 = vpop.f32.mrf.mxu0
        %v4842 = vadd.f32 %v4753, %v4841
        %4843 = vmatmul.bf16.gmra.mxu0 %v3607
        %v4844 = vpop.f32.mrf.mxu0
        %v4845 = vadd.f32 %v4756, %v4844
        %v4846 = vpop.f32.mrf.mxu0
        %v4847 = vadd.f32 %v4758, %v4846
        %4848 = vmatmul.bf16.gmra.mxu0 %v3616
        %v4849 = vpop.f32.mrf.mxu0
        %v4850 = vadd.f32 %v4761, %v4849
        %v4851 = vpop.f32.mrf.mxu0
        %v4852 = vadd.f32 %v4763, %v4851
        %4853 = vmatmul.bf16.gmra.mxu0 %v3625
        %v4854 = vpop.f32.mrf.mxu0
        %v4855 = vadd.f32 %v4766, %v4854
        %v4856 = vpop.f32.mrf.mxu0
        %v4857 = vadd.f32 %v4768, %v4856
        %4858 = vmatmul.bf16.gmra.mxu0 %v3634
        %v4859 = vpop.f32.mrf.mxu0
        %v4860 = vadd.f32 %v4771, %v4859
        %v4861 = vpop.f32.mrf.mxu0
        %v4862 = vadd.f32 %v4773, %v4861
        %4863 = vmatmul.bf16.gmra.mxu0 %v3643
        %v4864 = vpop.f32.mrf.mxu0
        %v4865 = vadd.f32 %v4776, %v4864
        %v4866 = vpop.f32.mrf.mxu0
        %v4867 = vadd.f32 %v4778, %v4866
        %4868 = vmatmul.bf16.gmra.mxu0 %v3652
        %v4869 = vpop.f32.mrf.mxu0
        %v4870 = vadd.f32 %v4781, %v4869
        %v4871 = vpop.f32.mrf.mxu0
        %v4872 = vadd.f32 %v4783, %v4871
        %4873 = vmatmul.bf16.gmra.mxu0 %v3661
        %v4874 = vpop.f32.mrf.mxu0
        %v4875 = vadd.f32 %v4786, %v4874
        %v4876 = vpop.f32.mrf.mxu0
        %v4877 = vadd.f32 %v4788, %v4876
        %4878 = vmatmul.bf16.gmra.mxu0 %v3670
        %v4879 = vpop.f32.mrf.mxu0
        %v4880 = vadd.f32 %v4791, %v4879
        %v4881 = vpop.f32.mrf.mxu0
        %v4882 = vadd.f32 %v4793, %v4881
        %4883 = vmatmul.bf16.gmra.mxu0 %v3679
        %v4884 = vpop.f32.mrf.mxu0
        %v4885 = vadd.f32 %v4796, %v4884
        %v4886 = vpop.f32.mrf.mxu0
        %v4887 = vadd.f32 %v4798, %v4886
        %4888 = vmatmul.bf16.gmra.mxu0 %v3688
        %v4889 = vpop.f32.mrf.mxu0
        %v4890 = vadd.f32 %v4801, %v4889
        %v4891 = vpop.f32.mrf.mxu0
        %v4892 = vadd.f32 %v4803, %v4891
        %4893 = vmatmul.bf16.gmra.mxu0 %v3697
        %v4894 = vpop.f32.mrf.mxu0
        %v4895 = vadd.f32 %v4806, %v4894
        %v4896 = vpop.f32.mrf.mxu0
        %v4897 = vadd.f32 %v4808, %v4896
        %4898 = vdwg.mxu0
        %4899 = vmatpush.bf16.msra.mxu0 %v4195
        %4900 = vmatpush.bf16.msra.mxu0 %v4194
        %4901 = vmatpush.bf16.msra.mxu0 %v4193
        %4902 = vmatpush.bf16.msra.mxu0 %v4192
        %4903 = vmatpush.bf16.msra.mxu0 %v4191
        %4904 = vmatpush.bf16.msra.mxu0 %v4190
        %4905 = vmatpush.bf16.msra.mxu0 %v4189
        %4906 = vmatpush.bf16.msra.mxu0 %v4188
        %4907 = vmatmul.bf16.gmra.mxu0 %v3563
        %v4908 = vpop.f32.mrf.mxu0
        %v4909 = vadd.f32 %v4820, %v4908
        %v4910 = vpop.f32.mrf.mxu0
        %v4911 = vadd.f32 %v4822, %v4910
        %4912 = vmatmul.bf16.gmra.mxu0 %v3572
        %v4913 = vpop.f32.mrf.mxu0
        %v4914 = vadd.f32 %v4825, %v4913
        %v4915 = vpop.f32.mrf.mxu0
        %v4916 = vadd.f32 %v4827, %v4915
        %4917 = vmatmul.bf16.gmra.mxu0 %v3581
        %v4918 = vpop.f32.mrf.mxu0
        %v4919 = vadd.f32 %v4830, %v4918
        %v4920 = vpop.f32.mrf.mxu0
        %v4921 = vadd.f32 %v4832, %v4920
        %4922 = vmatmul.bf16.gmra.mxu0 %v3590
        %v4923 = vpop.f32.mrf.mxu0
        %v4924 = vadd.f32 %v4835, %v4923
        %v4925 = vpop.f32.mrf.mxu0
        %v4926 = vadd.f32 %v4837, %v4925
        %4927 = vmatmul.bf16.gmra.mxu0 %v3599
        %v4928 = vpop.f32.mrf.mxu0
        %v4929 = vadd.f32 %v4840, %v4928
        %v4930 = vpop.f32.mrf.mxu0
        %v4931 = vadd.f32 %v4842, %v4930
        %4932 = vmatmul.bf16.gmra.mxu0 %v3608
        %v4933 = vpop.f32.mrf.mxu0
        %v4934 = vadd.f32 %v4845, %v4933
        %v4935 = vpop.f32.mrf.mxu0
        %v4936 = vadd.f32 %v4847, %v4935
        %4937 = vmatmul.bf16.gmra.mxu0 %v3617
        %v4938 = vpop.f32.mrf.mxu0
        %v4939 = vadd.f32 %v4850, %v4938
        %v4940 = vpop.f32.mrf.mxu0
        %v4941 = vadd.f32 %v4852, %v4940
        %4942 = vmatmul.bf16.gmra.mxu0 %v3626
        %v4943 = vpop.f32.mrf.mxu0
        %v4944 = vadd.f32 %v4855, %v4943
        %v4945 = vpop.f32.mrf.mxu0
        %v4946 = vadd.f32 %v4857, %v4945
        %4947 = vmatmul.bf16.gmra.mxu0 %v3635
        %v4948 = vpop.f32.mrf.mxu0
        %v4949 = vadd.f32 %v4860, %v4948
        %v4950 = vpop.f32.mrf.mxu0
        %v4951 = vadd.f32 %v4862, %v4950
        %4952 = vmatmul.bf16.gmra.mxu0 %v3644
        %v4953 = vpop.f32.mrf.mxu0
        %v4954 = vadd.f32 %v4865, %v4953
        %v4955 = vpop.f32.mrf.mxu0
        %v4956 = vadd.f32 %v4867, %v4955
        %4957 = vmatmul.bf16.gmra.mxu0 %v3653
        %v4958 = vpop.f32.mrf.mxu0
        %v4959 = vadd.f32 %v4870, %v4958
        %v4960 = vpop.f32.mrf.mxu0
        %v4961 = vadd.f32 %v4872, %v4960
        %4962 = vmatmul.bf16.gmra.mxu0 %v3662
        %v4963 = vpop.f32.mrf.mxu0
        %v4964 = vadd.f32 %v4875, %v4963
        %v4965 = vpop.f32.mrf.mxu0
        %v4966 = vadd.f32 %v4877, %v4965
        %4967 = vmatmul.bf16.gmra.mxu0 %v3671
        %v4968 = vpop.f32.mrf.mxu0
        %v4969 = vadd.f32 %v4880, %v4968
        %v4970 = vpop.f32.mrf.mxu0
        %v4971 = vadd.f32 %v4882, %v4970
        %4972 = vmatmul.bf16.gmra.mxu0 %v3680
        %v4973 = vpop.f32.mrf.mxu0
        %v4974 = vadd.f32 %v4885, %v4973
        %v4975 = vpop.f32.mrf.mxu0
        %v4976 = vadd.f32 %v4887, %v4975
        %4977 = vmatmul.bf16.gmra.mxu0 %v3689
        %v4978 = vpop.f32.mrf.mxu0
        %v4979 = vadd.f32 %v4890, %v4978
        %v4980 = vpop.f32.mrf.mxu0
        %v4981 = vadd.f32 %v4892, %v4980
        %4982 = vmatmul.bf16.gmra.mxu0 %v3698
        %v4983 = vpop.f32.mrf.mxu0
        %v4984 = vadd.f32 %v4895, %v4983
        %v4985 = vpop.f32.mrf.mxu0
        %v4986 = vadd.f32 %v4897, %v4985
        %4987 = vdwg.mxu0
        %4988 = vmatpush.bf16.msra.mxu0 %v4203
        %4989 = vmatpush.bf16.msra.mxu0 %v4202
        %4990 = vmatpush.bf16.msra.mxu0 %v4201
        %4991 = vmatpush.bf16.msra.mxu0 %v4200
        %4992 = vmatpush.bf16.msra.mxu0 %v4199
        %4993 = vmatpush.bf16.msra.mxu0 %v4198
        %4994 = vmatpush.bf16.msra.mxu0 %v4197
        %4995 = vmatpush.bf16.msra.mxu0 %v4196
        %4996 = vmatmul.bf16.gmra.mxu0 %v3564
        %v4997 = vpop.f32.mrf.mxu0
        %v4998 = vadd.f32 %v4909, %v4997
        %v4999 = vpop.f32.mrf.mxu0
        %v5000 = vadd.f32 %v4911, %v4999
        %5001 = vmatmul.bf16.gmra.mxu0 %v3573
        %v5002 = vpop.f32.mrf.mxu0
        %v5003 = vadd.f32 %v4914, %v5002
        %v5004 = vpop.f32.mrf.mxu0
        %v5005 = vadd.f32 %v4916, %v5004
        %5006 = vmatmul.bf16.gmra.mxu0 %v3582
        %v5007 = vpop.f32.mrf.mxu0
        %v5008 = vadd.f32 %v4919, %v5007
        %v5009 = vpop.f32.mrf.mxu0
        %v5010 = vadd.f32 %v4921, %v5009
        %5011 = vmatmul.bf16.gmra.mxu0 %v3591
        %v5012 = vpop.f32.mrf.mxu0
        %v5013 = vadd.f32 %v4924, %v5012
        %v5014 = vpop.f32.mrf.mxu0
        %v5015 = vadd.f32 %v4926, %v5014
        %5016 = vmatmul.bf16.gmra.mxu0 %v3600
        %v5017 = vpop.f32.mrf.mxu0
        %v5018 = vadd.f32 %v4929, %v5017
        %v5019 = vpop.f32.mrf.mxu0
        %v5020 = vadd.f32 %v4931, %v5019
        %5021 = vmatmul.bf16.gmra.mxu0 %v3609
        %v5022 = vpop.f32.mrf.mxu0
        %v5023 = vadd.f32 %v4934, %v5022
        %v5024 = vpop.f32.mrf.mxu0
        %v5025 = vadd.f32 %v4936, %v5024
        %5026 = vmatmul.bf16.gmra.mxu0 %v3618
        %v5027 = vpop.f32.mrf.mxu0
        %v5028 = vadd.f32 %v4939, %v5027
        %v5029 = vpop.f32.mrf.mxu0
        %v5030 = vadd.f32 %v4941, %v5029
        %5031 = vmatmul.bf16.gmra.mxu0 %v3627
        %v5032 = vpop.f32.mrf.mxu0
        %v5033 = vadd.f32 %v4944, %v5032
        %v5034 = vpop.f32.mrf.mxu0
        %v5035 = vadd.f32 %v4946, %v5034
        %5036 = vmatmul.bf16.gmra.mxu0 %v3636
        %v5037 = vpop.f32.mrf.mxu0
        %v5038 = vadd.f32 %v4949, %v5037
        %v5039 = vpop.f32.mrf.mxu0
        %v5040 = vadd.f32 %v4951, %v5039
        %5041 = vmatmul.bf16.gmra.mxu0 %v3645
        %v5042 = vpop.f32.mrf.mxu0
        %v5043 = vadd.f32 %v4954, %v5042
        %v5044 = vpop.f32.mrf.mxu0
        %v5045 = vadd.f32 %v4956, %v5044
        %5046 = vmatmul.bf16.gmra.mxu0 %v3654
        %v5047 = vpop.f32.mrf.mxu0
        %v5048 = vadd.f32 %v4959, %v5047
        %v5049 = vpop.f32.mrf.mxu0
        %v5050 = vadd.f32 %v4961, %v5049
        %5051 = vmatmul.bf16.gmra.mxu0 %v3663
        %v5052 = vpop.f32.mrf.mxu0
        %v5053 = vadd.f32 %v4964, %v5052
        %v5054 = vpop.f32.mrf.mxu0
        %v5055 = vadd.f32 %v4966, %v5054
        %5056 = vmatmul.bf16.gmra.mxu0 %v3672
        %v5057 = vpop.f32.mrf.mxu0
        %v5058 = vadd.f32 %v4969, %v5057
        %v5059 = vpop.f32.mrf.mxu0
        %v5060 = vadd.f32 %v4971, %v5059
        %5061 = vmatmul.bf16.gmra.mxu0 %v3681
        %v5062 = vpop.f32.mrf.mxu0
        %v5063 = vadd.f32 %v4974, %v5062
        %v5064 = vpop.f32.mrf.mxu0
        %v5065 = vadd.f32 %v4976, %v5064
        %5066 = vmatmul.bf16.gmra.mxu0 %v3690
        %v5067 = vpop.f32.mrf.mxu0
        %v5068 = vadd.f32 %v4979, %v5067
        %v5069 = vpop.f32.mrf.mxu0
        %v5070 = vadd.f32 %v4981, %v5069
        %5071 = vmatmul.bf16.gmra.mxu0 %v3699
        %v5072 = vpop.f32.mrf.mxu0
        %v5073 = vadd.f32 %v4984, %v5072
        %v5074 = vpop.f32.mrf.mxu0
        %v5075 = vadd.f32 %v4986, %v5074
        %5076 = vdwg.mxu0
        %v5077 = vmax.f32 %v4998, 0.0
        %v5078 = vmax.f32 %v5000, 0.0
        %v5079 = vmax.f32 %v5003, 0.0
        %v5080 = vmax.f32 %v5005, 0.0
        %v5081 = vmax.f32 %v5008, 0.0
        %v5082 = vmax.f32 %v5010, 0.0
        %v5083 = vmax.f32 %v5013, 0.0
        %v5084 = vmax.f32 %v5015, 0.0
        %v5085 = vmax.f32 %v5018, 0.0
        %v5086 = vmax.f32 %v5020, 0.0
        %v5087 = vmax.f32 %v5023, 0.0
        %v5088 = vmax.f32 %v5025, 0.0
        %v5089 = vmax.f32 %v5028, 0.0
        %v5090 = vmax.f32 %v5030, 0.0
        %v5091 = vmax.f32 %v5033, 0.0
        %v5092 = vmax.f32 %v5035, 0.0
        %v5093 = vmax.f32 %v5038, 0.0
        %v5094 = vmax.f32 %v5040, 0.0
        %v5095 = vmax.f32 %v5043, 0.0
        %v5096 = vmax.f32 %v5045, 0.0
        %v5097 = vmax.f32 %v5048, 0.0
        %v5098 = vmax.f32 %v5050, 0.0
        %v5099 = vmax.f32 %v5053, 0.0
        %v5100 = vmax.f32 %v5055, 0.0
        %v5101 = vmax.f32 %v5058, 0.0
        %v5102 = vmax.f32 %v5060, 0.0
        %v5103 = vmax.f32 %v5063, 0.0
        %v5104 = vmax.f32 %v5065, 0.0
        %v5105 = vmax.f32 %v5068, 0.0
        %v5106 = vmax.f32 %v5070, 0.0
        %v5107 = vmax.f32 %v5073, 0.0
        %v5108 = vmax.f32 %v5075, 0.0
        %5109 = vst [vmem:[#allocation3] sm:$0xf] 0
        %5110 = vst [vmem:[#allocation3 + $0x4] sm:$0xf] 0
        %5111 = vst [vmem:[#allocation3 + $0x8] sm:$0x1] 0
        %s5112 = scalar_lea.vmem [#allocation3], 204
        %5113 = vst [vmem:[%s5112] sm:$0xf] 0
        %5114 = vst [vmem:[%s5112 + $0x4] sm:$0xf] 0
        %5115 = vst [vmem:[%s5112 + $0x8] sm:$0x1] 0
        %vm5116 = vcmask 1040384
        %vm5117 = vsmask.f32 256
        %vm5118 = vmand %vm5116, %vm5117
        %v5119 = vld [vmem:[#allocation3] sm:$0x1]
        %v5120 = vsel %vm5118, 0, %v5119
        %5121 = vst [vmem:[#allocation3] sm:$0x1] %v5120
        %v5122 = vld [vmem:[#allocation3 + $0xc] sm:$0x1]
        %v5123 = vsel %vm5118, 0, %v5122
        %5124 = vst [vmem:[#allocation3 + $0xc] sm:$0x1] %v5123
        %v5125 = vld [vmem:[#allocation3 + $0x18] sm:$0x1]
        %v5126 = vsel %vm5118, 0, %v5125
        %5127 = vst [vmem:[#allocation3 + $0x18] sm:$0x1] %v5126
        %v5128 = vld [vmem:[#allocation3 + $0x24] sm:$0x1]
        %v5129 = vsel %vm5118, 0, %v5128
        %5130 = vst [vmem:[#allocation3 + $0x24] sm:$0x1] %v5129
        %v5131 = vld [vmem:[#allocation3 + $0x30] sm:$0x1]
        %v5132 = vsel %vm5118, 0, %v5131
        %5133 = vst [vmem:[#allocation3 + $0x30] sm:$0x1] %v5132
        %v5134 = vld [vmem:[#allocation3 + $0x3c] sm:$0x1]
        %v5135 = vsel %vm5118, 0, %v5134
        %5136 = vst [vmem:[#allocation3 + $0x3c] sm:$0x1] %v5135
        %v5137 = vld [vmem:[#allocation3 + $0x48] sm:$0x1]
        %v5138 = vsel %vm5118, 0, %v5137
        %5139 = vst [vmem:[#allocation3 + $0x48] sm:$0x1] %v5138
        %v5140 = vld [vmem:[#allocation3 + $0x54] sm:$0x1]
        %v5141 = vsel %vm5118, 0, %v5140
        %5142 = vst [vmem:[#allocation3 + $0x54] sm:$0x1] %v5141
        %v5143 = vld [vmem:[#allocation3 + $0x60] sm:$0x1]
        %v5144 = vsel %vm5118, 0, %v5143
        %5145 = vst [vmem:[#allocation3 + $0x60] sm:$0x1] %v5144
        %v5146 = vld [vmem:[#allocation3 + $0x6c] sm:$0x1]
        %v5147 = vsel %vm5118, 0, %v5146
        %5148 = vst [vmem:[#allocation3 + $0x6c] sm:$0x1] %v5147
        %v5149 = vld [vmem:[#allocation3 + $0x78] sm:$0x1]
        %v5150 = vsel %vm5118, 0, %v5149
        %5151 = vst [vmem:[#allocation3 + $0x78] sm:$0x1] %v5150
        %v5152 = vld [vmem:[#allocation3 + $0x84] sm:$0x1]
        %v5153 = vsel %vm5118, 0, %v5152
        %5154 = vst [vmem:[#allocation3 + $0x84] sm:$0x1] %v5153
        %v5155 = vld [vmem:[#allocation3 + $0x90] sm:$0x1]
        %v5156 = vsel %vm5118, 0, %v5155
        %5157 = vst [vmem:[#allocation3 + $0x90] sm:$0x1] %v5156
        %v5158 = vld [vmem:[#allocation3 + $0x9c] sm:$0x1]
        %v5159 = vsel %vm5118, 0, %v5158
        %5160 = vst [vmem:[#allocation3 + $0x9c] sm:$0x1] %v5159
        %v5161 = vld [vmem:[#allocation3 + $0xa8] sm:$0x1]
        %v5162 = vsel %vm5118, 0, %v5161
        %5163 = vst [vmem:[#allocation3 + $0xa8] sm:$0x1] %v5162
        %v5164 = vld [vmem:[#allocation3 + $0xb4] sm:$0x1]
        %v5165 = vsel %vm5118, 0, %v5164
        %5166 = vst [vmem:[#allocation3 + $0xb4] sm:$0x1] %v5165
        %v5167 = vld [vmem:[#allocation3 + $0xc0] sm:$0x1]
        %v5168 = vsel %vm5118, 0, %v5167
        %5169 = vst [vmem:[#allocation3 + $0xc0] sm:$0x1] %v5168
        %v5170 = vld [vmem:[#allocation3 + $0xcc] sm:$0x1]
        %v5171 = vsel %vm5118, 0, %v5170
        %5172 = vst [vmem:[#allocation3 + $0xcc] sm:$0x1] %v5171
        %vm5173 = vsmask.f32 7938
        %vm5174 = vmand %vm5116, %vm5173
        %v5175 = vld [vmem:[#allocation3 + $0x8] sm:$0x1]
        %v5176 = vsel %vm5174, 0, %v5175
        %5177 = vst [vmem:[#allocation3 + $0x8] sm:$0x1] %v5176
        %v5178 = vld [vmem:[#allocation3 + $0x14] sm:$0x1]
        %v5179 = vsel %vm5174, 0, %v5178
        %5180 = vst [vmem:[#allocation3 + $0x14] sm:$0x1] %v5179
        %v5181 = vld [vmem:[#allocation3 + $0x20] sm:$0x1]
        %v5182 = vsel %vm5174, 0, %v5181
        %5183 = vst [vmem:[#allocation3 + $0x20] sm:$0x1] %v5182
        %v5184 = vld [vmem:[#allocation3 + $0x2c] sm:$0x1]
        %v5185 = vsel %vm5174, 0, %v5184
        %5186 = vst [vmem:[#allocation3 + $0x2c] sm:$0x1] %v5185
        %v5187 = vld [vmem:[#allocation3 + $0x38] sm:$0x1]
        %v5188 = vsel %vm5174, 0, %v5187
        %5189 = vst [vmem:[#allocation3 + $0x38] sm:$0x1] %v5188
        %v5190 = vld [vmem:[#allocation3 + $0x44] sm:$0x1]
        %v5191 = vsel %vm5174, 0, %v5190
        %5192 = vst [vmem:[#allocation3 + $0x44] sm:$0x1] %v5191
        %v5193 = vld [vmem:[#allocation3 + $0x50] sm:$0x1]
        %v5194 = vsel %vm5174, 0, %v5193
        %5195 = vst [vmem:[#allocation3 + $0x50] sm:$0x1] %v5194
        %v5196 = vld [vmem:[#allocation3 + $0x5c] sm:$0x1]
        %v5197 = vsel %vm5174, 0, %v5196
        %5198 = vst [vmem:[#allocation3 + $0x5c] sm:$0x1] %v5197
        %v5199 = vld [vmem:[#allocation3 + $0x68] sm:$0x1]
        %v5200 = vsel %vm5174, 0, %v5199
        %5201 = vst [vmem:[#allocation3 + $0x68] sm:$0x1] %v5200
        %v5202 = vld [vmem:[#allocation3 + $0x74] sm:$0x1]
        %v5203 = vsel %vm5174, 0, %v5202
        %5204 = vst [vmem:[#allocation3 + $0x74] sm:$0x1] %v5203
        %v5205 = vld [vmem:[#allocation3 + $0x80] sm:$0x1]
        %v5206 = vsel %vm5174, 0, %v5205
        %5207 = vst [vmem:[#allocation3 + $0x80] sm:$0x1] %v5206
        %v5208 = vld [vmem:[#allocation3 + $0x8c] sm:$0x1]
        %v5209 = vsel %vm5174, 0, %v5208
        %5210 = vst [vmem:[#allocation3 + $0x8c] sm:$0x1] %v5209
        %v5211 = vld [vmem:[#allocation3 + $0x98] sm:$0x1]
        %v5212 = vsel %vm5174, 0, %v5211
        %5213 = vst [vmem:[#allocation3 + $0x98] sm:$0x1] %v5212
        %v5214 = vld [vmem:[#allocation3 + $0xa4] sm:$0x1]
        %v5215 = vsel %vm5174, 0, %v5214
        %5216 = vst [vmem:[#allocation3 + $0xa4] sm:$0x1] %v5215
        %v5217 = vld [vmem:[#allocation3 + $0xb0] sm:$0x1]
        %v5218 = vsel %vm5174, 0, %v5217
        %5219 = vst [vmem:[#allocation3 + $0xb0] sm:$0x1] %v5218
        %v5220 = vld [vmem:[#allocation3 + $0xbc] sm:$0x1]
        %v5221 = vsel %vm5174, 0, %v5220
        %5222 = vst [vmem:[#allocation3 + $0xbc] sm:$0x1] %v5221
        %v5223 = vld [vmem:[#allocation3 + $0xc8] sm:$0x1]
        %v5224 = vsel %vm5174, 0, %v5223
        %5225 = vst [vmem:[#allocation3 + $0xc8] sm:$0x1] %v5224
        %v5226 = vld [vmem:[#allocation3 + $0xd4] sm:$0x1]
        %v5227 = vsel %vm5174, 0, %v5226
        %5228 = vst [vmem:[#allocation3 + $0xd4] sm:$0x1] %v5227
        %v5229 = vpack.c.bf16 %v5077, %v5077
        %v5230 = vpack.c.bf16 %v5078, %v5078
        %v5231 = vpack.c.bf16 %v5079, %v5079
        %v5232 = vpack.c.bf16 %v5080, %v5080
        %v5233 = vpack.c.bf16 %v5081, %v5081
        %v5234 = vpack.c.bf16 %v5082, %v5082
        %v5235 = vpack.c.bf16 %v5083, %v5083
        %v5236 = vpack.c.bf16 %v5084, %v5084
        %v5237 = vpack.c.bf16 %v5085, %v5085
        %v5238 = vpack.c.bf16 %v5086, %v5086
        %v5239 = vpack.c.bf16 %v5087, %v5087
        %v5240 = vpack.c.bf16 %v5088, %v5088
        %v5241 = vpack.c.bf16 %v5089, %v5089
        %v5242 = vpack.c.bf16 %v5090, %v5090
        %v5243 = vpack.c.bf16 %v5091, %v5091
        %v5244 = vpack.c.bf16 %v5092, %v5092
        %v5245 = vpack.c.bf16 %v5093, %v5093
        %v5246 = vpack.c.bf16 %v5094, %v5094
        %v5247 = vpack.c.bf16 %v5095, %v5095
        %v5248 = vpack.c.bf16 %v5096, %v5096
        %v5249 = vpack.c.bf16 %v5097, %v5097
        %v5250 = vpack.c.bf16 %v5098, %v5098
        %v5251 = vpack.c.bf16 %v5099, %v5099
        %v5252 = vpack.c.bf16 %v5100, %v5100
        %v5253 = vpack.c.bf16 %v5101, %v5101
        %v5254 = vpack.c.bf16 %v5102, %v5102
        %v5255 = vpack.c.bf16 %v5103, %v5103
        %v5256 = vpack.c.bf16 %v5104, %v5104
        %v5257 = vpack.c.bf16 %v5105, %v5105
        %v5258 = vpack.c.bf16 %v5106, %v5106
        %v5259 = vpack.c.bf16 %v5107, %v5107
        %v5260 = vpack.c.bf16 %v5108, %v5108
        %vm5261 = vsmask.f32 4368
        %vm5262 = vmor %vm5117, %vm5261
        %v5264 = vshrl.u32 %v5229, 16
        %v5266 = vrot.slane %v5264, 7
        %v5267 = vshll.u32 %v5229, 16
        %v5269 = vor.u32 %v5266, %v5267
        %v5270 = vrot.slane %v5266, 4
        %v5272 = vshrl.u32 %v5230, 16
        %v5274 = vrot.slane %v5272, 7
        %v5275 = vshll.u32 %v5230, 16
        %v5277 = vor.u32 %v5274, %v5275
        %v5278 = vsel %vm5262, %v5270, %v5277
        %v5279 = vrot.slane %v5274, 4
        %v5281 = vshrl.u32 %v5231, 16
        %v5283 = vrot.slane %v5281, 7
        %v5284 = vshll.u32 %v5231, 16
        %v5286 = vor.u32 %v5283, %v5284
        %v5287 = vrot.slane %v5283, 4
        %v5289 = vshrl.u32 %v5232, 16
        %v5291 = vrot.slane %v5289, 7
        %v5292 = vshll.u32 %v5232, 16
        %v5294 = vor.u32 %v5291, %v5292
        %v5295 = vsel %vm5262, %v5287, %v5294
        %v5296 = vrot.slane %v5291, 4
        %v5298 = vshrl.u32 %v5233, 16
        %v5300 = vrot.slane %v5298, 7
        %v5301 = vshll.u32 %v5233, 16
        %v5303 = vor.u32 %v5300, %v5301
        %v5304 = vrot.slane %v5300, 4
        %v5306 = vshrl.u32 %v5234, 16
        %v5308 = vrot.slane %v5306, 7
        %v5309 = vshll.u32 %v5234, 16
        %v5311 = vor.u32 %v5308, %v5309
        %v5312 = vsel %vm5262, %v5304, %v5311
        %v5313 = vrot.slane %v5308, 4
        %v5315 = vshrl.u32 %v5235, 16
        %v5317 = vrot.slane %v5315, 7
        %v5318 = vshll.u32 %v5235, 16
        %v5320 = vor.u32 %v5317, %v5318
        %v5321 = vrot.slane %v5317, 4
        %v5323 = vshrl.u32 %v5236, 16
        %v5325 = vrot.slane %v5323, 7
        %v5326 = vshll.u32 %v5236, 16
        %v5328 = vor.u32 %v5325, %v5326
        %v5329 = vsel %vm5262, %v5321, %v5328
        %v5330 = vrot.slane %v5325, 4
        %v5332 = vshrl.u32 %v5237, 16
        %v5334 = vrot.slane %v5332, 7
        %v5335 = vshll.u32 %v5237, 16
        %v5337 = vor.u32 %v5334, %v5335
        %v5338 = vrot.slane %v5334, 4
        %v5340 = vshrl.u32 %v5238, 16
        %v5342 = vrot.slane %v5340, 7
        %v5343 = vshll.u32 %v5238, 16
        %v5345 = vor.u32 %v5342, %v5343
        %v5346 = vsel %vm5262, %v5338, %v5345
        %v5347 = vrot.slane %v5342, 4
        %v5349 = vshrl.u32 %v5239, 16
        %v5351 = vrot.slane %v5349, 7
        %v5352 = vshll.u32 %v5239, 16
        %v5354 = vor.u32 %v5351, %v5352
        %v5355 = vrot.slane %v5351, 4
        %v5357 = vshrl.u32 %v5240, 16
        %v5359 = vrot.slane %v5357, 7
        %v5360 = vshll.u32 %v5240, 16
        %v5362 = vor.u32 %v5359, %v5360
        %v5363 = vsel %vm5262, %v5355, %v5362
        %v5364 = vrot.slane %v5359, 4
        %v5366 = vshrl.u32 %v5241, 16
        %v5368 = vrot.slane %v5366, 7
        %v5369 = vshll.u32 %v5241, 16
        %v5371 = vor.u32 %v5368, %v5369
        %v5372 = vrot.slane %v5368, 4
        %v5374 = vshrl.u32 %v5242, 16
        %v5376 = vrot.slane %v5374, 7
        %v5377 = vshll.u32 %v5242, 16
        %v5379 = vor.u32 %v5376, %v5377
        %v5380 = vsel %vm5262, %v5372, %v5379
        %v5381 = vrot.slane %v5376, 4
        %v5383 = vshrl.u32 %v5243, 16
        %v5385 = vrot.slane %v5383, 7
        %v5386 = vshll.u32 %v5243, 16
        %v5388 = vor.u32 %v5385, %v5386
        %v5389 = vrot.slane %v5385, 4
        %v5391 = vshrl.u32 %v5244, 16
        %v5393 = vrot.slane %v5391, 7
        %v5394 = vshll.u32 %v5244, 16
        %v5396 = vor.u32 %v5393, %v5394
        %v5397 = vsel %vm5262, %v5389, %v5396
        %v5398 = vrot.slane %v5393, 4
        %v5400 = vshrl.u32 %v5245, 16
        %v5402 = vrot.slane %v5400, 7
        %v5403 = vshll.u32 %v5245, 16
        %v5405 = vor.u32 %v5402, %v5403
        %v5406 = vrot.slane %v5402, 4
        %v5408 = vshrl.u32 %v5246, 16
        %v5410 = vrot.slane %v5408, 7
        %v5411 = vshll.u32 %v5246, 16
        %v5413 = vor.u32 %v5410, %v5411
        %v5414 = vsel %vm5262, %v5406, %v5413
        %v5415 = vrot.slane %v5410, 4
        %v5417 = vshrl.u32 %v5247, 16
        %v5419 = vrot.slane %v5417, 7
        %v5420 = vshll.u32 %v5247, 16
        %v5422 = vor.u32 %v5419, %v5420
        %v5423 = vrot.slane %v5419, 4
        %v5425 = vshrl.u32 %v5248, 16
        %v5427 = vrot.slane %v5425, 7
        %v5428 = vshll.u32 %v5248, 16
        %v5430 = vor.u32 %v5427, %v5428
        %v5431 = vsel %vm5262, %v5423, %v5430
        %v5432 = vrot.slane %v5427, 4
        %v5434 = vshrl.u32 %v5249, 16
        %v5436 = vrot.slane %v5434, 7
        %v5437 = vshll.u32 %v5249, 16
        %v5439 = vor.u32 %v5436, %v5437
        %v5440 = vrot.slane %v5436, 4
        %v5442 = vshrl.u32 %v5250, 16
        %v5444 = vrot.slane %v5442, 7
        %v5445 = vshll.u32 %v5250, 16
        %v5447 = vor.u32 %v5444, %v5445
        %v5448 = vsel %vm5262, %v5440, %v5447
        %v5449 = vrot.slane %v5444, 4
        %v5451 = vshrl.u32 %v5251, 16
        %v5453 = vrot.slane %v5451, 7
        %v5454 = vshll.u32 %v5251, 16
        %v5456 = vor.u32 %v5453, %v5454
        %v5457 = vrot.slane %v5453, 4
        %v5459 = vshrl.u32 %v5252, 16
        %v5461 = vrot.slane %v5459, 7
        %v5462 = vshll.u32 %v5252, 16
        %v5464 = vor.u32 %v5461, %v5462
        %v5465 = vsel %vm5262, %v5457, %v5464
        %v5466 = vrot.slane %v5461, 4
        %v5468 = vshrl.u32 %v5253, 16
        %v5470 = vrot.slane %v5468, 7
        %v5471 = vshll.u32 %v5253, 16
        %v5473 = vor.u32 %v5470, %v5471
        %v5474 = vrot.slane %v5470, 4
        %v5476 = vshrl.u32 %v5254, 16
        %v5478 = vrot.slane %v5476, 7
        %v5479 = vshll.u32 %v5254, 16
        %v5481 = vor.u32 %v5478, %v5479
        %v5482 = vsel %vm5262, %v5474, %v5481
        %v5483 = vrot.slane %v5478, 4
        %v5485 = vshrl.u32 %v5255, 16
        %v5487 = vrot.slane %v5485, 7
        %v5488 = vshll.u32 %v5255, 16
        %v5490 = vor.u32 %v5487, %v5488
        %v5491 = vrot.slane %v5487, 4
        %v5493 = vshrl.u32 %v5256, 16
        %v5495 = vrot.slane %v5493, 7
        %v5496 = vshll.u32 %v5256, 16
        %v5498 = vor.u32 %v5495, %v5496
        %v5499 = vsel %vm5262, %v5491, %v5498
        %v5500 = vrot.slane %v5495, 4
        %v5502 = vshrl.u32 %v5257, 16
        %v5504 = vrot.slane %v5502, 7
        %v5505 = vshll.u32 %v5257, 16
        %v5507 = vor.u32 %v5504, %v5505
        %v5508 = vrot.slane %v5504, 4
        %v5510 = vshrl.u32 %v5258, 16
        %v5512 = vrot.slane %v5510, 7
        %v5513 = vshll.u32 %v5258, 16
        %v5515 = vor.u32 %v5512, %v5513
        %v5516 = vsel %vm5262, %v5508, %v5515
        %v5517 = vrot.slane %v5512, 4
        %v5519 = vshrl.u32 %v5259, 16
        %v5521 = vrot.slane %v5519, 7
        %v5522 = vshll.u32 %v5259, 16
        %v5524 = vor.u32 %v5521, %v5522
        %v5525 = vrot.slane %v5521, 4
        %v5527 = vshrl.u32 %v5260, 16
        %v5529 = vrot.slane %v5527, 7
        %v5530 = vshll.u32 %v5260, 16
        %v5532 = vor.u32 %v5529, %v5530
        %v5533 = vsel %vm5262, %v5525, %v5532
        %v5534 = vrot.slane %v5529, 4
        %s5583 = scalar_lea.vmem [#allocation3], 12
        %vm5584 = vcmask 1043456
        %vm5585 = vmand %vm5584, %vm5173
        %v5586 = vld [vmem:[%s5583] sm:$0xf]
        %v5587 = vsel %vm5585, %v5269, %v5586
        %5588 = vst [vmem:[%s5583] sm:$0xf] %v5587
        %5589 = vst [vmem:[%s5583 + $0x4] sm:$0xf] %v5278
        %v5590 = vld [vmem:[%s5583 + $0x8] sm:$0x1]
        %v5591 = vsel %vm5118, %v5279, %v5590
        %5592 = vst [vmem:[%s5583 + $0x8] sm:$0x1] %v5591
        %v5593 = vld [vmem:[%s5583 + $0xc] sm:$0xf]
        %v5594 = vsel %vm5585, %v5286, %v5593
        %5595 = vst [vmem:[%s5583 + $0xc] sm:$0xf] %v5594
        %5596 = vst [vmem:[%s5583 + $0x10] sm:$0xf] %v5295
        %v5597 = vld [vmem:[%s5583 + $0x14] sm:$0x1]
        %v5598 = vsel %vm5118, %v5296, %v5597
        %5599 = vst [vmem:[%s5583 + $0x14] sm:$0x1] %v5598
        %v5600 = vld [vmem:[%s5583 + $0x18] sm:$0xf]
        %v5601 = vsel %vm5585, %v5303, %v5600
        %5602 = vst [vmem:[%s5583 + $0x18] sm:$0xf] %v5601
        %5603 = vst [vmem:[%s5583 + $0x1c] sm:$0xf] %v5312
        %v5604 = vld [vmem:[%s5583 + $0x20] sm:$0x1]
        %v5605 = vsel %vm5118, %v5313, %v5604
        %5606 = vst [vmem:[%s5583 + $0x20] sm:$0x1] %v5605
        %v5607 = vld [vmem:[%s5583 + $0x24] sm:$0xf]
        %v5608 = vsel %vm5585, %v5320, %v5607
        %5609 = vst [vmem:[%s5583 + $0x24] sm:$0xf] %v5608
        %5610 = vst [vmem:[%s5583 + $0x28] sm:$0xf] %v5329
        %v5611 = vld [vmem:[%s5583 + $0x2c] sm:$0x1]
        %v5612 = vsel %vm5118, %v5330, %v5611
        %5613 = vst [vmem:[%s5583 + $0x2c] sm:$0x1] %v5612
        %v5614 = vld [vmem:[%s5583 + $0x30] sm:$0xf]
        %v5615 = vsel %vm5585, %v5337, %v5614
        %5616 = vst [vmem:[%s5583 + $0x30] sm:$0xf] %v5615
        %5617 = vst [vmem:[%s5583 + $0x34] sm:$0xf] %v5346
        %v5618 = vld [vmem:[%s5583 + $0x38] sm:$0x1]
        %v5619 = vsel %vm5118, %v5347, %v5618
        %5620 = vst [vmem:[%s5583 + $0x38] sm:$0x1] %v5619
        %v5621 = vld [vmem:[%s5583 + $0x3c] sm:$0xf]
        %v5622 = vsel %vm5585, %v5354, %v5621
        %5623 = vst [vmem:[%s5583 + $0x3c] sm:$0xf] %v5622
        %5624 = vst [vmem:[%s5583 + $0x40] sm:$0xf] %v5363
        %v5625 = vld [vmem:[%s5583 + $0x44] sm:$0x1]
        %v5626 = vsel %vm5118, %v5364, %v5625
        %5627 = vst [vmem:[%s5583 + $0x44] sm:$0x1] %v5626
        %v5628 = vld [vmem:[%s5583 + $0x48] sm:$0xf]
        %v5629 = vsel %vm5585, %v5371, %v5628
        %5630 = vst [vmem:[%s5583 + $0x48] sm:$0xf] %v5629
        %5631 = vst [vmem:[%s5583 + $0x4c] sm:$0xf] %v5380
        %v5632 = vld [vmem:[%s5583 + $0x50] sm:$0x1]
        %v5633 = vsel %vm5118, %v5381, %v5632
        %5634 = vst [vmem:[%s5583 + $0x50] sm:$0x1] %v5633
        %v5635 = vld [vmem:[%s5583 + $0x54] sm:$0xf]
        %v5636 = vsel %vm5585, %v5388, %v5635
        %5637 = vst [vmem:[%s5583 + $0x54] sm:$0xf] %v5636
        %5638 = vst [vmem:[%s5583 + $0x58] sm:$0xf] %v5397
        %v5639 = vld [vmem:[%s5583 + $0x5c] sm:$0x1]
        %v5640 = vsel %vm5118, %v5398, %v5639
        %5641 = vst [vmem:[%s5583 + $0x5c] sm:$0x1] %v5640
        %v5642 = vld [vmem:[%s5583 + $0x60] sm:$0xf]
        %v5643 = vsel %vm5585, %v5405, %v5642
        %5644 = vst [vmem:[%s5583 + $0x60] sm:$0xf] %v5643
        %5645 = vst [vmem:[%s5583 + $0x64] sm:$0xf] %v5414
        %v5646 = vld [vmem:[%s5583 + $0x68] sm:$0x1]
        %v5647 = vsel %vm5118, %v5415, %v5646
        %5648 = vst [vmem:[%s5583 + $0x68] sm:$0x1] %v5647
        %v5649 = vld [vmem:[%s5583 + $0x6c] sm:$0xf]
        %v5650 = vsel %vm5585, %v5422, %v5649
        %5651 = vst [vmem:[%s5583 + $0x6c] sm:$0xf] %v5650
        %5652 = vst [vmem:[%s5583 + $0x70] sm:$0xf] %v5431
        %v5653 = vld [vmem:[%s5583 + $0x74] sm:$0x1]
        %v5654 = vsel %vm5118, %v5432, %v5653
        %5655 = vst [vmem:[%s5583 + $0x74] sm:$0x1] %v5654
        %v5656 = vld [vmem:[%s5583 + $0x78] sm:$0xf]
        %v5657 = vsel %vm5585, %v5439, %v5656
        %5658 = vst [vmem:[%s5583 + $0x78] sm:$0xf] %v5657
        %5659 = vst [vmem:[%s5583 + $0x7c] sm:$0xf] %v5448
        %v5660 = vld [vmem:[%s5583 + $0x80] sm:$0x1]
        %v5661 = vsel %vm5118, %v5449, %v5660
        %5662 = vst [vmem:[%s5583 + $0x80] sm:$0x1] %v5661
        %v5663 = vld [vmem:[%s5583 + $0x84] sm:$0xf]
        %v5664 = vsel %vm5585, %v5456, %v5663
        %5665 = vst [vmem:[%s5583 + $0x84] sm:$0xf] %v5664
        %5666 = vst [vmem:[%s5583 + $0x88] sm:$0xf] %v5465
        %v5667 = vld [vmem:[%s5583 + $0x8c] sm:$0x1]
        %v5668 = vsel %vm5118, %v5466, %v5667
        %5669 = vst [vmem:[%s5583 + $0x8c] sm:$0x1] %v5668
        %v5670 = vld [vmem:[%s5583 + $0x90] sm:$0xf]
        %v5671 = vsel %vm5585, %v5473, %v5670
        %5672 = vst [vmem:[%s5583 + $0x90] sm:$0xf] %v5671
        %5673 = vst [vmem:[%s5583 + $0x94] sm:$0xf] %v5482
        %v5674 = vld [vmem:[%s5583 + $0x98] sm:$0x1]
        %v5675 = vsel %vm5118, %v5483, %v5674
        %5676 = vst [vmem:[%s5583 + $0x98] sm:$0x1] %v5675
        %v5677 = vld [vmem:[%s5583 + $0x9c] sm:$0xf]
        %v5678 = vsel %vm5585, %v5490, %v5677
        %5679 = vst [vmem:[%s5583 + $0x9c] sm:$0xf] %v5678
        %5680 = vst [vmem:[%s5583 + $0xa0] sm:$0xf] %v5499
        %v5681 = vld [vmem:[%s5583 + $0xa4] sm:$0x1]
        %v5682 = vsel %vm5118, %v5500, %v5681
        %5683 = vst [vmem:[%s5583 + $0xa4] sm:$0x1] %v5682
        %v5684 = vld [vmem:[%s5583 + $0xa8] sm:$0xf]
        %v5685 = vsel %vm5585, %v5507, %v5684
        %5686 = vst [vmem:[%s5583 + $0xa8] sm:$0xf] %v5685
        %5687 = vst [vmem:[%s5583 + $0xac] sm:$0xf] %v5516
        %v5688 = vld [vmem:[%s5583 + $0xb0] sm:$0x1]
        %v5689 = vsel %vm5118, %v5517, %v5688
        %5690 = vst [vmem:[%s5583 + $0xb0] sm:$0x1] %v5689
        %v5691 = vld [vmem:[%s5583 + $0xb4] sm:$0xf]
        %v5692 = vsel %vm5585, %v5524, %v5691
        %5693 = vst [vmem:[%s5583 + $0xb4] sm:$0xf] %v5692
        %5694 = vst [vmem:[%s5583 + $0xb8] sm:$0xf] %v5533
        %v5695 = vld [vmem:[%s5583 + $0xbc] sm:$0x1]
        %v5696 = vsel %vm5118, %v5534, %v5695
        %5697 = vst [vmem:[%s5583 + $0xbc] sm:$0x1] %v5696
        %v5698 = vld [vmem:[#allocation3] sm:$0xf]
        %v5699 = vld [vmem:[#allocation3 + $0x4] sm:$0xf]
        %v5700 = vld [vmem:[#allocation3 + $0xc] sm:$0xf]
        %v5701 = vld [vmem:[#allocation3 + $0x10] sm:$0xf]
        %v5702 = vld [vmem:[#allocation3 + $0x18] sm:$0xf]
        %v5703 = vld [vmem:[#allocation3 + $0x1c] sm:$0xf]
        %v5704 = vld [vmem:[#allocation3 + $0x24] sm:$0xf]
        %v5705 = vld [vmem:[#allocation3 + $0x28] sm:$0xf]
        %v5706 = vld [vmem:[#allocation3 + $0x30] sm:$0xf]
        %v5707 = vld [vmem:[#allocation3 + $0x34] sm:$0xf]
        %v5708 = vld [vmem:[#allocation3 + $0x3c] sm:$0xf]
        %v5709 = vld [vmem:[#allocation3 + $0x40] sm:$0xf]
        %v5710 = vld [vmem:[#allocation3 + $0x48] sm:$0xf]
        %v5711 = vld [vmem:[#allocation3 + $0x4c] sm:$0xf]
        %v5712 = vld [vmem:[#allocation3 + $0x54] sm:$0xf]
        %v5713 = vld [vmem:[#allocation3 + $0x58] sm:$0xf]
        %v5714 = vld [vmem:[#allocation3 + $0x60] sm:$0xf]
        %v5715 = vld [vmem:[#allocation3 + $0x64] sm:$0xf]
        %v5716 = vld [vmem:[#allocation3 + $0x6c] sm:$0xf]
        %v5717 = vld [vmem:[#allocation3 + $0x70] sm:$0xf]
        %v5718 = vld [vmem:[#allocation3 + $0x78] sm:$0xf]
        %v5719 = vld [vmem:[#allocation3 + $0x7c] sm:$0xf]
        %v5720 = vld [vmem:[#allocation3 + $0x84] sm:$0xf]
        %v5721 = vld [vmem:[#allocation3 + $0x88] sm:$0xf]
        %v5722 = vld [vmem:[#allocation3 + $0x90] sm:$0xf]
        %v5723 = vld [vmem:[#allocation3 + $0x94] sm:$0xf]
        %v5724 = vld [vmem:[#allocation3 + $0x9c] sm:$0xf]
        %v5725 = vld [vmem:[#allocation3 + $0xa0] sm:$0xf]
        %v5726 = vld [vmem:[#allocation3 + $0xa8] sm:$0xf]
        %v5727 = vld [vmem:[#allocation3 + $0xac] sm:$0xf]
        %v5728 = vld [vmem:[#allocation3 + $0xb4] sm:$0xf]
        %v5729 = vld [vmem:[#allocation3 + $0xb8] sm:$0xf]
        %5730 = vst [vmem:[#allocation2] sm:$0xf] %v5698
        %5731 = vst [vmem:[#allocation2 + $0x24] sm:$0xf] %v5699
        %5732 = vst [vmem:[#allocation2 + $0x48] sm:$0xf] %v5700
        %5733 = vst [vmem:[#allocation2 + $0x6c] sm:$0xf] %v5701
        %5734 = vst [vmem:[#allocation2 + $0x90] sm:$0xf] %v5702
        %5735 = vst [vmem:[#allocation2 + $0xb4] sm:$0xf] %v5703
        %5736 = vst [vmem:[#allocation2 + $0xd8] sm:$0xf] %v5704
        %5737 = vst [vmem:[#allocation2 + $0xfc] sm:$0xf] %v5705
        %5738 = vst [vmem:[#allocation2 + $0x120] sm:$0xf] %v5706
        %5739 = vst [vmem:[#allocation2 + $0x144] sm:$0xf] %v5707
        %5740 = vst [vmem:[#allocation2 + $0x168] sm:$0xf] %v5708
        %5741 = vst [vmem:[#allocation2 + $0x18c] sm:$0xf] %v5709
        %5742 = vst [vmem:[#allocation2 + $0x1b0] sm:$0xf] %v5710
        %5743 = vst [vmem:[#allocation2 + $0x1d4] sm:$0xf] %v5711
        %5744 = vst [vmem:[#allocation2 + $0x1f8] sm:$0xf] %v5712
        %5745 = vst [vmem:[#allocation2 + $0x21c] sm:$0xf] %v5713
        %5746 = vst [vmem:[#allocation2 + $0x240] sm:$0xf] %v5714
        %5747 = vst [vmem:[#allocation2 + $0x264] sm:$0xf] %v5715
        %5748 = vst [vmem:[#allocation2 + $0x288] sm:$0xf] %v5716
        %5749 = vst [vmem:[#allocation2 + $0x2ac] sm:$0xf] %v5717
        %5750 = vst [vmem:[#allocation2 + $0x2d0] sm:$0xf] %v5718
        %5751 = vst [vmem:[#allocation2 + $0x2f4] sm:$0xf] %v5719
        %5752 = vst [vmem:[#allocation2 + $0x318] sm:$0xf] %v5720
        %5753 = vst [vmem:[#allocation2 + $0x33c] sm:$0xf] %v5721
        %5754 = vst [vmem:[#allocation2 + $0x360] sm:$0xf] %v5722
        %5755 = vst [vmem:[#allocation2 + $0x384] sm:$0xf] %v5723
        %5756 = vst [vmem:[#allocation2 + $0x3a8] sm:$0xf] %v5724
        %5757 = vst [vmem:[#allocation2 + $0x3cc] sm:$0xf] %v5725
        %5758 = vst [vmem:[#allocation2 + $0x3f0] sm:$0xf] %v5726
        %5759 = vst [vmem:[#allocation2 + $0x414] sm:$0xf] %v5727
        %5760 = vst [vmem:[#allocation2 + $0x438] sm:$0xf] %v5728
        %5761 = vst [vmem:[#allocation2 + $0x45c] sm:$0xf] %v5729
        %v5762 = vld [vmem:[#allocation3] sm:$0xf]
        %v5763 = vld [vmem:[#allocation3 + $0x4] sm:$0xf]
        %v5764 = vld [vmem:[#allocation3 + $0x8] sm:$0x1]
        %v5765 = vld [vmem:[#allocation3 + $0xc] sm:$0xf]
        %v5766 = vld [vmem:[#allocation3 + $0x10] sm:$0xf]
        %v5767 = vld [vmem:[#allocation3 + $0x14] sm:$0x1]
        %v5768 = vld [vmem:[#allocation3 + $0x18] sm:$0xf]
        %v5769 = vld [vmem:[#allocation3 + $0x1c] sm:$0xf]
        %v5770 = vld [vmem:[#allocation3 + $0x20] sm:$0x1]
        %v5771 = vld [vmem:[#allocation3 + $0x24] sm:$0xf]
        %v5772 = vld [vmem:[#allocation3 + $0x28] sm:$0xf]
        %v5773 = vld [vmem:[#allocation3 + $0x2c] sm:$0x1]
        %v5774 = vld [vmem:[#allocation3 + $0x30] sm:$0xf]
        %v5775 = vld [vmem:[#allocation3 + $0x34] sm:$0xf]
        %v5776 = vld [vmem:[#allocation3 + $0x38] sm:$0x1]
        %v5777 = vld [vmem:[#allocation3 + $0x3c] sm:$0xf]
        %v5778 = vld [vmem:[#allocation3 + $0x40] sm:$0xf]
        %v5779 = vld [vmem:[#allocation3 + $0x44] sm:$0x1]
        %v5780 = vld [vmem:[#allocation3 + $0x48] sm:$0xf]
        %v5781 = vld [vmem:[#allocation3 + $0x4c] sm:$0xf]
        %v5782 = vld [vmem:[#allocation3 + $0x50] sm:$0x1]
        %v5783 = vld [vmem:[#allocation3 + $0x54] sm:$0xf]
        %v5784 = vld [vmem:[#allocation3 + $0x58] sm:$0xf]
        %v5785 = vld [vmem:[#allocation3 + $0x5c] sm:$0x1]
        %v5786 = vld [vmem:[#allocation3 + $0x60] sm:$0xf]
        %v5787 = vld [vmem:[#allocation3 + $0x64] sm:$0xf]
        %v5788 = vld [vmem:[#allocation3 + $0x68] sm:$0x1]
        %v5789 = vld [vmem:[#allocation3 + $0x6c] sm:$0xf]
        %v5790 = vld [vmem:[#allocation3 + $0x70] sm:$0xf]
        %v5791 = vld [vmem:[#allocation3 + $0x74] sm:$0x1]
        %v5792 = vld [vmem:[#allocation3 + $0x78] sm:$0xf]
        %v5793 = vld [vmem:[#allocation3 + $0x7c] sm:$0xf]
        %v5794 = vld [vmem:[#allocation3 + $0x80] sm:$0x1]
        %v5795 = vld [vmem:[#allocation3 + $0x84] sm:$0xf]
        %v5796 = vld [vmem:[#allocation3 + $0x88] sm:$0xf]
        %v5797 = vld [vmem:[#allocation3 + $0x8c] sm:$0x1]
        %v5798 = vld [vmem:[#allocation3 + $0x90] sm:$0xf]
        %v5799 = vld [vmem:[#allocation3 + $0x94] sm:$0xf]
        %v5800 = vld [vmem:[#allocation3 + $0x98] sm:$0x1]
        %v5801 = vld [vmem:[#allocation3 + $0x9c] sm:$0xf]
        %v5802 = vld [vmem:[#allocation3 + $0xa0] sm:$0xf]
        %v5803 = vld [vmem:[#allocation3 + $0xa4] sm:$0x1]
        %v5804 = vld [vmem:[#allocation3 + $0xa8] sm:$0xf]
        %v5805 = vld [vmem:[#allocation3 + $0xac] sm:$0xf]
        %v5806 = vld [vmem:[#allocation3 + $0xb0] sm:$0x1]
        %v5807 = vld [vmem:[#allocation3 + $0xb4] sm:$0xf]
        %v5808 = vld [vmem:[#allocation3 + $0xb8] sm:$0xf]
        %v5809 = vld [vmem:[#allocation3 + $0xbc] sm:$0x1]
        %v5811 = vshrl.u32 %v5762, 16
        %v5813 = vrot.slane %v5811, 4
        %v5814 = vshll.u32 %v5762, 16
        %v5816 = vrot.slane %v5814, 5
        %v5817 = vor.u32 %v5813, %v5816
        %v5818 = vrot.slane %v5817, 4
        %v5820 = vshll.u32 %v5763, 16
        %v5822 = vrot.slane %v5820, 5
        %v5823 = vsel %vm410, %v5818, %v5822
        %v5824 = vshrl.u32 %v5763, 16
        %v5826 = vrot.slane %v5824, 4
        %v5827 = vor.u32 %v5826, %v5822
        %v5828 = vrot.slane %v5827, 4
        %v5830 = vshll.u32 %v5764, 16
        %v5832 = vrot.slane %v5830, 5
        %v5833 = vsel %vm410, %v5828, %v5832
        %v5835 = vshrl.u32 %v5765, 16
        %v5837 = vrot.slane %v5835, 4
        %v5838 = vshll.u32 %v5765, 16
        %v5840 = vrot.slane %v5838, 5
        %v5841 = vor.u32 %v5837, %v5840
        %v5842 = vrot.slane %v5841, 4
        %v5844 = vshll.u32 %v5766, 16
        %v5846 = vrot.slane %v5844, 5
        %v5847 = vsel %vm410, %v5842, %v5846
        %v5848 = vshrl.u32 %v5766, 16
        %v5850 = vrot.slane %v5848, 4
        %v5851 = vor.u32 %v5850, %v5846
        %v5852 = vrot.slane %v5851, 4
        %v5854 = vshll.u32 %v5767, 16
        %v5856 = vrot.slane %v5854, 5
        %v5857 = vsel %vm410, %v5852, %v5856
        %v5859 = vshrl.u32 %v5768, 16
        %v5861 = vrot.slane %v5859, 4
        %v5862 = vshll.u32 %v5768, 16
        %v5864 = vrot.slane %v5862, 5
        %v5865 = vor.u32 %v5861, %v5864
        %v5866 = vrot.slane %v5865, 4
        %v5868 = vshll.u32 %v5769, 16
        %v5870 = vrot.slane %v5868, 5
        %v5871 = vsel %vm410, %v5866, %v5870
        %v5872 = vshrl.u32 %v5769, 16
        %v5874 = vrot.slane %v5872, 4
        %v5875 = vor.u32 %v5874, %v5870
        %v5876 = vrot.slane %v5875, 4
        %v5878 = vshll.u32 %v5770, 16
        %v5880 = vrot.slane %v5878, 5
        %v5881 = vsel %vm410, %v5876, %v5880
        %v5883 = vshrl.u32 %v5771, 16
        %v5885 = vrot.slane %v5883, 4
        %v5886 = vshll.u32 %v5771, 16
        %v5888 = vrot.slane %v5886, 5
        %v5889 = vor.u32 %v5885, %v5888
        %v5890 = vrot.slane %v5889, 4
        %v5892 = vshll.u32 %v5772, 16
        %v5894 = vrot.slane %v5892, 5
        %v5895 = vsel %vm410, %v5890, %v5894
        %v5896 = vshrl.u32 %v5772, 16
        %v5898 = vrot.slane %v5896, 4
        %v5899 = vor.u32 %v5898, %v5894
        %v5900 = vrot.slane %v5899, 4
        %v5902 = vshll.u32 %v5773, 16
        %v5904 = vrot.slane %v5902, 5
        %v5905 = vsel %vm410, %v5900, %v5904
        %v5907 = vshrl.u32 %v5774, 16
        %v5909 = vrot.slane %v5907, 4
        %v5910 = vshll.u32 %v5774, 16
        %v5912 = vrot.slane %v5910, 5
        %v5913 = vor.u32 %v5909, %v5912
        %v5914 = vrot.slane %v5913, 4
        %v5916 = vshll.u32 %v5775, 16
        %v5918 = vrot.slane %v5916, 5
        %v5919 = vsel %vm410, %v5914, %v5918
        %v5920 = vshrl.u32 %v5775, 16
        %v5922 = vrot.slane %v5920, 4
        %v5923 = vor.u32 %v5922, %v5918
        %v5924 = vrot.slane %v5923, 4
        %v5926 = vshll.u32 %v5776, 16
        %v5928 = vrot.slane %v5926, 5
        %v5929 = vsel %vm410, %v5924, %v5928
        %v5931 = vshrl.u32 %v5777, 16
        %v5933 = vrot.slane %v5931, 4
        %v5934 = vshll.u32 %v5777, 16
        %v5936 = vrot.slane %v5934, 5
        %v5937 = vor.u32 %v5933, %v5936
        %v5938 = vrot.slane %v5937, 4
        %v5940 = vshll.u32 %v5778, 16
        %v5942 = vrot.slane %v5940, 5
        %v5943 = vsel %vm410, %v5938, %v5942
        %v5944 = vshrl.u32 %v5778, 16
        %v5946 = vrot.slane %v5944, 4
        %v5947 = vor.u32 %v5946, %v5942
        %v5948 = vrot.slane %v5947, 4
        %v5950 = vshll.u32 %v5779, 16
        %v5952 = vrot.slane %v5950, 5
        %v5953 = vsel %vm410, %v5948, %v5952
        %v5955 = vshrl.u32 %v5780, 16
        %v5957 = vrot.slane %v5955, 4
        %v5958 = vshll.u32 %v5780, 16
        %v5960 = vrot.slane %v5958, 5
        %v5961 = vor.u32 %v5957, %v5960
        %v5962 = vrot.slane %v5961, 4
        %v5964 = vshll.u32 %v5781, 16
        %v5966 = vrot.slane %v5964, 5
        %v5967 = vsel %vm410, %v5962, %v5966
        %v5968 = vshrl.u32 %v5781, 16
        %v5970 = vrot.slane %v5968, 4
        %v5971 = vor.u32 %v5970, %v5966
        %v5972 = vrot.slane %v5971, 4
        %v5974 = vshll.u32 %v5782, 16
        %v5976 = vrot.slane %v5974, 5
        %v5977 = vsel %vm410, %v5972, %v5976
        %v5979 = vshrl.u32 %v5783, 16
        %v5981 = vrot.slane %v5979, 4
        %v5982 = vshll.u32 %v5783, 16
        %v5984 = vrot.slane %v5982, 5
        %v5985 = vor.u32 %v5981, %v5984
        %v5986 = vrot.slane %v5985, 4
        %v5988 = vshll.u32 %v5784, 16
        %v5990 = vrot.slane %v5988, 5
        %v5991 = vsel %vm410, %v5986, %v5990
        %v5992 = vshrl.u32 %v5784, 16
        %v5994 = vrot.slane %v5992, 4
        %v5995 = vor.u32 %v5994, %v5990
        %v5996 = vrot.slane %v5995, 4
        %v5998 = vshll.u32 %v5785, 16
        %v6000 = vrot.slane %v5998, 5
        %v6001 = vsel %vm410, %v5996, %v6000
        %v6003 = vshrl.u32 %v5786, 16
        %v6005 = vrot.slane %v6003, 4
        %v6006 = vshll.u32 %v5786, 16
        %v6008 = vrot.slane %v6006, 5
        %v6009 = vor.u32 %v6005, %v6008
        %v6010 = vrot.slane %v6009, 4
        %v6012 = vshll.u32 %v5787, 16
        %v6014 = vrot.slane %v6012, 5
        %v6015 = vsel %vm410, %v6010, %v6014
        %v6016 = vshrl.u32 %v5787, 16
        %v6018 = vrot.slane %v6016, 4
        %v6019 = vor.u32 %v6018, %v6014
        %v6020 = vrot.slane %v6019, 4
        %v6022 = vshll.u32 %v5788, 16
        %v6024 = vrot.slane %v6022, 5
        %v6025 = vsel %vm410, %v6020, %v6024
        %v6027 = vshrl.u32 %v5789, 16
        %v6029 = vrot.slane %v6027, 4
        %v6030 = vshll.u32 %v5789, 16
        %v6032 = vrot.slane %v6030, 5
        %v6033 = vor.u32 %v6029, %v6032
        %v6034 = vrot.slane %v6033, 4
        %v6036 = vshll.u32 %v5790, 16
        %v6038 = vrot.slane %v6036, 5
        %v6039 = vsel %vm410, %v6034, %v6038
        %v6040 = vshrl.u32 %v5790, 16
        %v6042 = vrot.slane %v6040, 4
        %v6043 = vor.u32 %v6042, %v6038
        %v6044 = vrot.slane %v6043, 4
        %v6046 = vshll.u32 %v5791, 16
        %v6048 = vrot.slane %v6046, 5
        %v6049 = vsel %vm410, %v6044, %v6048
        %v6051 = vshrl.u32 %v5792, 16
        %v6053 = vrot.slane %v6051, 4
        %v6054 = vshll.u32 %v5792, 16
        %v6056 = vrot.slane %v6054, 5
        %v6057 = vor.u32 %v6053, %v6056
        %v6058 = vrot.slane %v6057, 4
        %v6060 = vshll.u32 %v5793, 16
        %v6062 = vrot.slane %v6060, 5
        %v6063 = vsel %vm410, %v6058, %v6062
        %v6064 = vshrl.u32 %v5793, 16
        %v6066 = vrot.slane %v6064, 4
        %v6067 = vor.u32 %v6066, %v6062
        %v6068 = vrot.slane %v6067, 4
        %v6070 = vshll.u32 %v5794, 16
        %v6072 = vrot.slane %v6070, 5
        %v6073 = vsel %vm410, %v6068, %v6072
        %v6075 = vshrl.u32 %v5795, 16
        %v6077 = vrot.slane %v6075, 4
        %v6078 = vshll.u32 %v5795, 16
        %v6080 = vrot.slane %v6078, 5
        %v6081 = vor.u32 %v6077, %v6080
        %v6082 = vrot.slane %v6081, 4
        %v6084 = vshll.u32 %v5796, 16
        %v6086 = vrot.slane %v6084, 5
        %v6087 = vsel %vm410, %v6082, %v6086
        %v6088 = vshrl.u32 %v5796, 16
        %v6090 = vrot.slane %v6088, 4
        %v6091 = vor.u32 %v6090, %v6086
        %v6092 = vrot.slane %v6091, 4
        %v6094 = vshll.u32 %v5797, 16
        %v6096 = vrot.slane %v6094, 5
        %v6097 = vsel %vm410, %v6092, %v6096
        %v6099 = vshrl.u32 %v5798, 16
        %v6101 = vrot.slane %v6099, 4
        %v6102 = vshll.u32 %v5798, 16
        %v6104 = vrot.slane %v6102, 5
        %v6105 = vor.u32 %v6101, %v6104
        %v6106 = vrot.slane %v6105, 4
        %v6108 = vshll.u32 %v5799, 16
        %v6110 = vrot.slane %v6108, 5
        %v6111 = vsel %vm410, %v6106, %v6110
        %v6112 = vshrl.u32 %v5799, 16
        %v6114 = vrot.slane %v6112, 4
        %v6115 = vor.u32 %v6114, %v6110
        %v6116 = vrot.slane %v6115, 4
        %v6118 = vshll.u32 %v5800, 16
        %v6120 = vrot.slane %v6118, 5
        %v6121 = vsel %vm410, %v6116, %v6120
        %v6123 = vshrl.u32 %v5801, 16
        %v6125 = vrot.slane %v6123, 4
        %v6126 = vshll.u32 %v5801, 16
        %v6128 = vrot.slane %v6126, 5
        %v6129 = vor.u32 %v6125, %v6128
        %v6130 = vrot.slane %v6129, 4
        %v6132 = vshll.u32 %v5802, 16
        %v6134 = vrot.slane %v6132, 5
        %v6135 = vsel %vm410, %v6130, %v6134
        %v6136 = vshrl.u32 %v5802, 16
        %v6138 = vrot.slane %v6136, 4
        %v6139 = vor.u32 %v6138, %v6134
        %v6140 = vrot.slane %v6139, 4
        %v6142 = vshll.u32 %v5803, 16
        %v6144 = vrot.slane %v6142, 5
        %v6145 = vsel %vm410, %v6140, %v6144
        %v6147 = vshrl.u32 %v5804, 16
        %v6149 = vrot.slane %v6147, 4
        %v6150 = vshll.u32 %v5804, 16
        %v6152 = vrot.slane %v6150, 5
        %v6153 = vor.u32 %v6149, %v6152
        %v6154 = vrot.slane %v6153, 4
        %v6156 = vshll.u32 %v5805, 16
        %v6158 = vrot.slane %v6156, 5
        %v6159 = vsel %vm410, %v6154, %v6158
        %v6160 = vshrl.u32 %v5805, 16
        %v6162 = vrot.slane %v6160, 4
        %v6163 = vor.u32 %v6162, %v6158
        %v6164 = vrot.slane %v6163, 4
        %v6166 = vshll.u32 %v5806, 16
        %v6168 = vrot.slane %v6166, 5
        %v6169 = vsel %vm410, %v6164, %v6168
        %v6171 = vshrl.u32 %v5807, 16
        %v6173 = vrot.slane %v6171, 4
        %v6174 = vshll.u32 %v5807, 16
        %v6176 = vrot.slane %v6174, 5
        %v6177 = vor.u32 %v6173, %v6176
        %v6178 = vrot.slane %v6177, 4
        %v6180 = vshll.u32 %v5808, 16
        %v6182 = vrot.slane %v6180, 5
        %v6183 = vsel %vm410, %v6178, %v6182
        %v6184 = vshrl.u32 %v5808, 16
        %v6186 = vrot.slane %v6184, 4
        %v6187 = vor.u32 %v6186, %v6182
        %v6188 = vrot.slane %v6187, 4
        %v6190 = vshll.u32 %v5809, 16
        %v6192 = vrot.slane %v6190, 5
        %v6193 = vsel %vm410, %v6188, %v6192
        %6226 = vst [vmem:[#allocation2 + $0x4] sm:$0xf] %v5823
        %6227 = vst [vmem:[#allocation2 + $0x28] sm:$0xf] %v5833
        %6228 = vst [vmem:[#allocation2 + $0x4c] sm:$0xf] %v5847
        %6229 = vst [vmem:[#allocation2 + $0x70] sm:$0xf] %v5857
        %6230 = vst [vmem:[#allocation2 + $0x94] sm:$0xf] %v5871
        %6231 = vst [vmem:[#allocation2 + $0xb8] sm:$0xf] %v5881
        %6232 = vst [vmem:[#allocation2 + $0xdc] sm:$0xf] %v5895
        %6233 = vst [vmem:[#allocation2 + $0x100] sm:$0xf] %v5905
        %6234 = vst [vmem:[#allocation2 + $0x124] sm:$0xf] %v5919
        %6235 = vst [vmem:[#allocation2 + $0x148] sm:$0xf] %v5929
        %6236 = vst [vmem:[#allocation2 + $0x16c] sm:$0xf] %v5943
        %6237 = vst [vmem:[#allocation2 + $0x190] sm:$0xf] %v5953
        %6238 = vst [vmem:[#allocation2 + $0x1b4] sm:$0xf] %v5967
        %6239 = vst [vmem:[#allocation2 + $0x1d8] sm:$0xf] %v5977
        %6240 = vst [vmem:[#allocation2 + $0x1fc] sm:$0xf] %v5991
        %6241 = vst [vmem:[#allocation2 + $0x220] sm:$0xf] %v6001
        %6242 = vst [vmem:[#allocation2 + $0x244] sm:$0xf] %v6015
        %6243 = vst [vmem:[#allocation2 + $0x268] sm:$0xf] %v6025
        %6244 = vst [vmem:[#allocation2 + $0x28c] sm:$0xf] %v6039
        %6245 = vst [vmem:[#allocation2 + $0x2b0] sm:$0xf] %v6049
        %6246 = vst [vmem:[#allocation2 + $0x2d4] sm:$0xf] %v6063
        %6247 = vst [vmem:[#allocation2 + $0x2f8] sm:$0xf] %v6073
        %6248 = vst [vmem:[#allocation2 + $0x31c] sm:$0xf] %v6087
        %6249 = vst [vmem:[#allocation2 + $0x340] sm:$0xf] %v6097
        %6250 = vst [vmem:[#allocation2 + $0x364] sm:$0xf] %v6111
        %6251 = vst [vmem:[#allocation2 + $0x388] sm:$0xf] %v6121
        %6252 = vst [vmem:[#allocation2 + $0x3ac] sm:$0xf] %v6135
        %6253 = vst [vmem:[#allocation2 + $0x3d0] sm:$0xf] %v6145
        %6254 = vst [vmem:[#allocation2 + $0x3f4] sm:$0xf] %v6159
        %6255 = vst [vmem:[#allocation2 + $0x418] sm:$0xf] %v6169
        %6256 = vst [vmem:[#allocation2 + $0x43c] sm:$0xf] %v6183
        %6257 = vst [vmem:[#allocation2 + $0x460] sm:$0xf] %v6193
        %v6258 = vld [vmem:[#allocation3] sm:$0xe]
        %v6259 = vld [vmem:[#allocation3 + $0x4] sm:$0xf]
        %v6260 = vld [vmem:[#allocation3 + $0x8] sm:$0x1]
        %v6261 = vld [vmem:[#allocation3 + $0xc] sm:$0xe]
        %v6262 = vld [vmem:[#allocation3 + $0x10] sm:$0xf]
        %v6263 = vld [vmem:[#allocation3 + $0x14] sm:$0x1]
        %v6264 = vld [vmem:[#allocation3 + $0x18] sm:$0xe]
        %v6265 = vld [vmem:[#allocation3 + $0x1c] sm:$0xf]
        %v6266 = vld [vmem:[#allocation3 + $0x20] sm:$0x1]
        %v6267 = vld [vmem:[#allocation3 + $0x24] sm:$0xe]
        %v6268 = vld [vmem:[#allocation3 + $0x28] sm:$0xf]
        %v6269 = vld [vmem:[#allocation3 + $0x2c] sm:$0x1]
        %v6270 = vld [vmem:[#allocation3 + $0x30] sm:$0xe]
        %v6271 = vld [vmem:[#allocation3 + $0x34] sm:$0xf]
        %v6272 = vld [vmem:[#allocation3 + $0x38] sm:$0x1]
        %v6273 = vld [vmem:[#allocation3 + $0x3c] sm:$0xe]
        %v6274 = vld [vmem:[#allocation3 + $0x40] sm:$0xf]
        %v6275 = vld [vmem:[#allocation3 + $0x44] sm:$0x1]
        %v6276 = vld [vmem:[#allocation3 + $0x48] sm:$0xe]
        %v6277 = vld [vmem:[#allocation3 + $0x4c] sm:$0xf]
        %v6278 = vld [vmem:[#allocation3 + $0x50] sm:$0x1]
        %v6279 = vld [vmem:[#allocation3 + $0x54] sm:$0xe]
        %v6280 = vld [vmem:[#allocation3 + $0x58] sm:$0xf]
        %v6281 = vld [vmem:[#allocation3 + $0x5c] sm:$0x1]
        %v6282 = vld [vmem:[#allocation3 + $0x60] sm:$0xe]
        %v6283 = vld [vmem:[#allocation3 + $0x64] sm:$0xf]
        %v6284 = vld [vmem:[#allocation3 + $0x68] sm:$0x1]
        %v6285 = vld [vmem:[#allocation3 + $0x6c] sm:$0xe]
        %v6286 = vld [vmem:[#allocation3 + $0x70] sm:$0xf]
        %v6287 = vld [vmem:[#allocation3 + $0x74] sm:$0x1]
        %v6288 = vld [vmem:[#allocation3 + $0x78] sm:$0xe]
        %v6289 = vld [vmem:[#allocation3 + $0x7c] sm:$0xf]
        %v6290 = vld [vmem:[#allocation3 + $0x80] sm:$0x1]
        %v6291 = vld [vmem:[#allocation3 + $0x84] sm:$0xe]
        %v6292 = vld [vmem:[#allocation3 + $0x88] sm:$0xf]
        %v6293 = vld [vmem:[#allocation3 + $0x8c] sm:$0x1]
        %v6294 = vld [vmem:[#allocation3 + $0x90] sm:$0xe]
        %v6295 = vld [vmem:[#allocation3 + $0x94] sm:$0xf]
        %v6296 = vld [vmem:[#allocation3 + $0x98] sm:$0x1]
        %v6297 = vld [vmem:[#allocation3 + $0x9c] sm:$0xe]
        %v6298 = vld [vmem:[#allocation3 + $0xa0] sm:$0xf]
        %v6299 = vld [vmem:[#allocation3 + $0xa4] sm:$0x1]
        %v6300 = vld [vmem:[#allocation3 + $0xa8] sm:$0xe]
        %v6301 = vld [vmem:[#allocation3 + $0xac] sm:$0xf]
        %v6302 = vld [vmem:[#allocation3 + $0xb0] sm:$0x1]
        %v6303 = vld [vmem:[#allocation3 + $0xb4] sm:$0xe]
        %v6304 = vld [vmem:[#allocation3 + $0xb8] sm:$0xf]
        %v6305 = vld [vmem:[#allocation3 + $0xbc] sm:$0x1]
        %v6354 = vrot.slane %v6258, 5
        %v6355 = vrot.slane %v6354, 4
        %v6356 = vrot.slane %v6259, 5
        %v6357 = vsel %vm957, %v6355, %v6356
        %v6358 = vrot.slane %v6356, 4
        %v6359 = vrot.slane %v6260, 5
        %v6360 = vsel %vm957, %v6358, %v6359
        %v6361 = vrot.slane %v6261, 5
        %v6362 = vrot.slane %v6361, 4
        %v6363 = vrot.slane %v6262, 5
        %v6364 = vsel %vm957, %v6362, %v6363
        %v6365 = vrot.slane %v6363, 4
        %v6366 = vrot.slane %v6263, 5
        %v6367 = vsel %vm957, %v6365, %v6366
        %v6368 = vrot.slane %v6264, 5
        %v6369 = vrot.slane %v6368, 4
        %v6370 = vrot.slane %v6265, 5
        %v6371 = vsel %vm957, %v6369, %v6370
        %v6372 = vrot.slane %v6370, 4
        %v6373 = vrot.slane %v6266, 5
        %v6374 = vsel %vm957, %v6372, %v6373
        %v6375 = vrot.slane %v6267, 5
        %v6376 = vrot.slane %v6375, 4
        %v6377 = vrot.slane %v6268, 5
        %v6378 = vsel %vm957, %v6376, %v6377
        %v6379 = vrot.slane %v6377, 4
        %v6380 = vrot.slane %v6269, 5
        %v6381 = vsel %vm957, %v6379, %v6380
        %v6382 = vrot.slane %v6270, 5
        %v6383 = vrot.slane %v6382, 4
        %v6384 = vrot.slane %v6271, 5
        %v6385 = vsel %vm957, %v6383, %v6384
        %v6386 = vrot.slane %v6384, 4
        %v6387 = vrot.slane %v6272, 5
        %v6388 = vsel %vm957, %v6386, %v6387
        %v6389 = vrot.slane %v6273, 5
        %v6390 = vrot.slane %v6389, 4
        %v6391 = vrot.slane %v6274, 5
        %v6392 = vsel %vm957, %v6390, %v6391
        %v6393 = vrot.slane %v6391, 4
        %v6394 = vrot.slane %v6275, 5
        %v6395 = vsel %vm957, %v6393, %v6394
        %v6396 = vrot.slane %v6276, 5
        %v6397 = vrot.slane %v6396, 4
        %v6398 = vrot.slane %v6277, 5
        %v6399 = vsel %vm957, %v6397, %v6398
        %v6400 = vrot.slane %v6398, 4
        %v6401 = vrot.slane %v6278, 5
        %v6402 = vsel %vm957, %v6400, %v6401
        %v6403 = vrot.slane %v6279, 5
        %v6404 = vrot.slane %v6403, 4
        %v6405 = vrot.slane %v6280, 5
        %v6406 = vsel %vm957, %v6404, %v6405
        %v6407 = vrot.slane %v6405, 4
        %v6408 = vrot.slane %v6281, 5
        %v6409 = vsel %vm957, %v6407, %v6408
        %v6410 = vrot.slane %v6282, 5
        %v6411 = vrot.slane %v6410, 4
        %v6412 = vrot.slane %v6283, 5
        %v6413 = vsel %vm957, %v6411, %v6412
        %v6414 = vrot.slane %v6412, 4
        %v6415 = vrot.slane %v6284, 5
        %v6416 = vsel %vm957, %v6414, %v6415
        %v6417 = vrot.slane %v6285, 5
        %v6418 = vrot.slane %v6417, 4
        %v6419 = vrot.slane %v6286, 5
        %v6420 = vsel %vm957, %v6418, %v6419
        %v6421 = vrot.slane %v6419, 4
        %v6422 = vrot.slane %v6287, 5
        %v6423 = vsel %vm957, %v6421, %v6422
        %v6424 = vrot.slane %v6288, 5
        %v6425 = vrot.slane %v6424, 4
        %v6426 = vrot.slane %v6289, 5
        %v6427 = vsel %vm957, %v6425, %v6426
        %v6428 = vrot.slane %v6426, 4
        %v6429 = vrot.slane %v6290, 5
        %v6430 = vsel %vm957, %v6428, %v6429
        %v6431 = vrot.slane %v6291, 5
        %v6432 = vrot.slane %v6431, 4
        %v6433 = vrot.slane %v6292, 5
        %v6434 = vsel %vm957, %v6432, %v6433
        %v6435 = vrot.slane %v6433, 4
        %v6436 = vrot.slane %v6293, 5
        %v6437 = vsel %vm957, %v6435, %v6436
        %v6438 = vrot.slane %v6294, 5
        %v6439 = vrot.slane %v6438, 4
        %v6440 = vrot.slane %v6295, 5
        %v6441 = vsel %vm957, %v6439, %v6440
        %v6442 = vrot.slane %v6440, 4
        %v6443 = vrot.slane %v6296, 5
        %v6444 = vsel %vm957, %v6442, %v6443
        %v6445 = vrot.slane %v6297, 5
        %v6446 = vrot.slane %v6445, 4
        %v6447 = vrot.slane %v6298, 5
        %v6448 = vsel %vm957, %v6446, %v6447
        %v6449 = vrot.slane %v6447, 4
        %v6450 = vrot.slane %v6299, 5
        %v6451 = vsel %vm957, %v6449, %v6450
        %v6452 = vrot.slane %v6300, 5
        %v6453 = vrot.slane %v6452, 4
        %v6454 = vrot.slane %v6301, 5
        %v6455 = vsel %vm957, %v6453, %v6454
        %v6456 = vrot.slane %v6454, 4
        %v6457 = vrot.slane %v6302, 5
        %v6458 = vsel %vm957, %v6456, %v6457
        %v6459 = vrot.slane %v6303, 5
        %v6460 = vrot.slane %v6459, 4
        %v6461 = vrot.slane %v6304, 5
        %v6462 = vsel %vm957, %v6460, %v6461
        %v6463 = vrot.slane %v6461, 4
        %v6464 = vrot.slane %v6305, 5
        %v6465 = vsel %vm957, %v6463, %v6464
        %6498 = vst [vmem:[#allocation2 + $0x8] sm:$0xf] %v6357
        %6499 = vst [vmem:[#allocation2 + $0x2c] sm:$0xf] %v6360
        %6500 = vst [vmem:[#allocation2 + $0x50] sm:$0xf] %v6364
        %6501 = vst [vmem:[#allocation2 + $0x74] sm:$0xf] %v6367
        %6502 = vst [vmem:[#allocation2 + $0x98] sm:$0xf] %v6371
        %6503 = vst [vmem:[#allocation2 + $0xbc] sm:$0xf] %v6374
        %6504 = vst [vmem:[#allocation2 + $0xe0] sm:$0xf] %v6378
        %6505 = vst [vmem:[#allocation2 + $0x104] sm:$0xf] %v6381
        %6506 = vst [vmem:[#allocation2 + $0x128] sm:$0xf] %v6385
        %6507 = vst [vmem:[#allocation2 + $0x14c] sm:$0xf] %v6388
        %6508 = vst [vmem:[#allocation2 + $0x170] sm:$0xf] %v6392
        %6509 = vst [vmem:[#allocation2 + $0x194] sm:$0xf] %v6395
        %6510 = vst [vmem:[#allocation2 + $0x1b8] sm:$0xf] %v6399
        %6511 = vst [vmem:[#allocation2 + $0x1dc] sm:$0xf] %v6402
        %6512 = vst [vmem:[#allocation2 + $0x200] sm:$0xf] %v6406
        %6513 = vst [vmem:[#allocation2 + $0x224] sm:$0xf] %v6409
        %6514 = vst [vmem:[#allocation2 + $0x248] sm:$0xf] %v6413
        %6515 = vst [vmem:[#allocation2 + $0x26c] sm:$0xf] %v6416
        %6516 = vst [vmem:[#allocation2 + $0x290] sm:$0xf] %v6420
        %6517 = vst [vmem:[#allocation2 + $0x2b4] sm:$0xf] %v6423
        %6518 = vst [vmem:[#allocation2 + $0x2d8] sm:$0xf] %v6427
        %6519 = vst [vmem:[#allocation2 + $0x2fc] sm:$0xf] %v6430
        %6520 = vst [vmem:[#allocation2 + $0x320] sm:$0xf] %v6434
        %6521 = vst [vmem:[#allocation2 + $0x344] sm:$0xf] %v6437
        %6522 = vst [vmem:[#allocation2 + $0x368] sm:$0xf] %v6441
        %6523 = vst [vmem:[#allocation2 + $0x38c] sm:$0xf] %v6444
        %6524 = vst [vmem:[#allocation2 + $0x3b0] sm:$0xf] %v6448
        %6525 = vst [vmem:[#allocation2 + $0x3d4] sm:$0xf] %v6451
        %6526 = vst [vmem:[#allocation2 + $0x3f8] sm:$0xf] %v6455
        %6527 = vst [vmem:[#allocation2 + $0x41c] sm:$0xf] %v6458
        %6528 = vst [vmem:[#allocation2 + $0x440] sm:$0xf] %v6462
        %6529 = vst [vmem:[#allocation2 + $0x464] sm:$0xf] %v6465
        %v6530 = vld [vmem:[%s5583] sm:$0xf]
        %v6531 = vld [vmem:[%s5583 + $0x4] sm:$0xf]
        %v6532 = vld [vmem:[%s5583 + $0xc] sm:$0xf]
        %v6533 = vld [vmem:[%s5583 + $0x10] sm:$0xf]
        %v6534 = vld [vmem:[%s5583 + $0x18] sm:$0xf]
        %v6535 = vld [vmem:[%s5583 + $0x1c] sm:$0xf]
        %v6536 = vld [vmem:[%s5583 + $0x24] sm:$0xf]
        %v6537 = vld [vmem:[%s5583 + $0x28] sm:$0xf]
        %v6538 = vld [vmem:[%s5583 + $0x30] sm:$0xf]
        %v6539 = vld [vmem:[%s5583 + $0x34] sm:$0xf]
        %v6540 = vld [vmem:[%s5583 + $0x3c] sm:$0xf]
        %v6541 = vld [vmem:[%s5583 + $0x40] sm:$0xf]
        %v6542 = vld [vmem:[%s5583 + $0x48] sm:$0xf]
        %v6543 = vld [vmem:[%s5583 + $0x4c] sm:$0xf]
        %v6544 = vld [vmem:[%s5583 + $0x54] sm:$0xf]
        %v6545 = vld [vmem:[%s5583 + $0x58] sm:$0xf]
        %v6546 = vld [vmem:[%s5583 + $0x60] sm:$0xf]
        %v6547 = vld [vmem:[%s5583 + $0x64] sm:$0xf]
        %v6548 = vld [vmem:[%s5583 + $0x6c] sm:$0xf]
        %v6549 = vld [vmem:[%s5583 + $0x70] sm:$0xf]
        %v6550 = vld [vmem:[%s5583 + $0x78] sm:$0xf]
        %v6551 = vld [vmem:[%s5583 + $0x7c] sm:$0xf]
        %v6552 = vld [vmem:[%s5583 + $0x84] sm:$0xf]
        %v6553 = vld [vmem:[%s5583 + $0x88] sm:$0xf]
        %v6554 = vld [vmem:[%s5583 + $0x90] sm:$0xf]
        %v6555 = vld [vmem:[%s5583 + $0x94] sm:$0xf]
        %v6556 = vld [vmem:[%s5583 + $0x9c] sm:$0xf]
        %v6557 = vld [vmem:[%s5583 + $0xa0] sm:$0xf]
        %v6558 = vld [vmem:[%s5583 + $0xa8] sm:$0xf]
        %v6559 = vld [vmem:[%s5583 + $0xac] sm:$0xf]
        %v6560 = vld [vmem:[%s5583 + $0xb4] sm:$0xf]
        %v6561 = vld [vmem:[%s5583 + $0xb8] sm:$0xf]
        %6562 = vst [vmem:[#allocation2 + $0xc] sm:$0xf] %v6530
        %6563 = vst [vmem:[#allocation2 + $0x30] sm:$0xf] %v6531
        %6564 = vst [vmem:[#allocation2 + $0x54] sm:$0xf] %v6532
        %6565 = vst [vmem:[#allocation2 + $0x78] sm:$0xf] %v6533
        %6566 = vst [vmem:[#allocation2 + $0x9c] sm:$0xf] %v6534
        %6567 = vst [vmem:[#allocation2 + $0xc0] sm:$0xf] %v6535
        %6568 = vst [vmem:[#allocation2 + $0xe4] sm:$0xf] %v6536
        %6569 = vst [vmem:[#allocation2 + $0x108] sm:$0xf] %v6537
        %6570 = vst [vmem:[#allocation2 + $0x12c] sm:$0xf] %v6538
        %6571 = vst [vmem:[#allocation2 + $0x150] sm:$0xf] %v6539
        %6572 = vst [vmem:[#allocation2 + $0x174] sm:$0xf] %v6540
        %6573 = vst [vmem:[#allocation2 + $0x198] sm:$0xf] %v6541
        %6574 = vst [vmem:[#allocation2 + $0x1bc] sm:$0xf] %v6542
        %6575 = vst [vmem:[#allocation2 + $0x1e0] sm:$0xf] %v6543
        %6576 = vst [vmem:[#allocation2 + $0x204] sm:$0xf] %v6544
        %6577 = vst [vmem:[#allocation2 + $0x228] sm:$0xf] %v6545
        %6578 = vst [vmem:[#allocation2 + $0x24c] sm:$0xf] %v6546
        %6579 = vst [vmem:[#allocation2 + $0x270] sm:$0xf] %v6547
        %6580 = vst [vmem:[#allocation2 + $0x294] sm:$0xf] %v6548
        %6581 = vst [vmem:[#allocation2 + $0x2b8] sm:$0xf] %v6549
        %6582 = vst [vmem:[#allocation2 + $0x2dc] sm:$0xf] %v6550
        %6583 = vst [vmem:[#allocation2 + $0x300] sm:$0xf] %v6551
        %6584 = vst [vmem:[#allocation2 + $0x324] sm:$0xf] %v6552
        %6585 = vst [vmem:[#allocation2 + $0x348] sm:$0xf] %v6553
        %6586 = vst [vmem:[#allocation2 + $0x36c] sm:$0xf] %v6554
        %6587 = vst [vmem:[#allocation2 + $0x390] sm:$0xf] %v6555
        %6588 = vst [vmem:[#allocation2 + $0x3b4] sm:$0xf] %v6556
        %6589 = vst [vmem:[#allocation2 + $0x3d8] sm:$0xf] %v6557
        %6590 = vst [vmem:[#allocation2 + $0x3fc] sm:$0xf] %v6558
        %6591 = vst [vmem:[#allocation2 + $0x420] sm:$0xf] %v6559
        %6592 = vst [vmem:[#allocation2 + $0x444] sm:$0xf] %v6560
        %6593 = vst [vmem:[#allocation2 + $0x468] sm:$0xf] %v6561
        %v6594 = vld [vmem:[%s5583] sm:$0xf]
        %v6595 = vld [vmem:[%s5583 + $0x4] sm:$0xf]
        %v6596 = vld [vmem:[%s5583 + $0x8] sm:$0x1]
        %v6597 = vld [vmem:[%s5583 + $0xc] sm:$0xf]
        %v6598 = vld [vmem:[%s5583 + $0x10] sm:$0xf]
        %v6599 = vld [vmem:[%s5583 + $0x14] sm:$0x1]
        %v6600 = vld [vmem:[%s5583 + $0x18] sm:$0xf]
        %v6601 = vld [vmem:[%s5583 + $0x1c] sm:$0xf]
        %v6602 = vld [vmem:[%s5583 + $0x20] sm:$0x1]
        %v6603 = vld [vmem:[%s5583 + $0x24] sm:$0xf]
        %v6604 = vld [vmem:[%s5583 + $0x28] sm:$0xf]
        %v6605 = vld [vmem:[%s5583 + $0x2c] sm:$0x1]
        %v6606 = vld [vmem:[%s5583 + $0x30] sm:$0xf]
        %v6607 = vld [vmem:[%s5583 + $0x34] sm:$0xf]
        %v6608 = vld [vmem:[%s5583 + $0x38] sm:$0x1]
        %v6609 = vld [vmem:[%s5583 + $0x3c] sm:$0xf]
        %v6610 = vld [vmem:[%s5583 + $0x40] sm:$0xf]
        %v6611 = vld [vmem:[%s5583 + $0x44] sm:$0x1]
        %v6612 = vld [vmem:[%s5583 + $0x48] sm:$0xf]
        %v6613 = vld [vmem:[%s5583 + $0x4c] sm:$0xf]
        %v6614 = vld [vmem:[%s5583 + $0x50] sm:$0x1]
        %v6615 = vld [vmem:[%s5583 + $0x54] sm:$0xf]
        %v6616 = vld [vmem:[%s5583 + $0x58] sm:$0xf]
        %v6617 = vld [vmem:[%s5583 + $0x5c] sm:$0x1]
        %v6618 = vld [vmem:[%s5583 + $0x60] sm:$0xf]
        %v6619 = vld [vmem:[%s5583 + $0x64] sm:$0xf]
        %v6620 = vld [vmem:[%s5583 + $0x68] sm:$0x1]
        %v6621 = vld [vmem:[%s5583 + $0x6c] sm:$0xf]
        %v6622 = vld [vmem:[%s5583 + $0x70] sm:$0xf]
        %v6623 = vld [vmem:[%s5583 + $0x74] sm:$0x1]
        %v6624 = vld [vmem:[%s5583 + $0x78] sm:$0xf]
        %v6625 = vld [vmem:[%s5583 + $0x7c] sm:$0xf]
        %v6626 = vld [vmem:[%s5583 + $0x80] sm:$0x1]
        %v6627 = vld [vmem:[%s5583 + $0x84] sm:$0xf]
        %v6628 = vld [vmem:[%s5583 + $0x88] sm:$0xf]
        %v6629 = vld [vmem:[%s5583 + $0x8c] sm:$0x1]
        %v6630 = vld [vmem:[%s5583 + $0x90] sm:$0xf]
        %v6631 = vld [vmem:[%s5583 + $0x94] sm:$0xf]
        %v6632 = vld [vmem:[%s5583 + $0x98] sm:$0x1]
        %v6633 = vld [vmem:[%s5583 + $0x9c] sm:$0xf]
        %v6634 = vld [vmem:[%s5583 + $0xa0] sm:$0xf]
        %v6635 = vld [vmem:[%s5583 + $0xa4] sm:$0x1]
        %v6636 = vld [vmem:[%s5583 + $0xa8] sm:$0xf]
        %v6637 = vld [vmem:[%s5583 + $0xac] sm:$0xf]
        %v6638 = vld [vmem:[%s5583 + $0xb0] sm:$0x1]
        %v6639 = vld [vmem:[%s5583 + $0xb4] sm:$0xf]
        %v6640 = vld [vmem:[%s5583 + $0xb8] sm:$0xf]
        %v6641 = vld [vmem:[%s5583 + $0xbc] sm:$0x1]
        %v6643 = vshrl.u32 %v6594, 16
        %v6645 = vrot.slane %v6643, 4
        %v6646 = vshll.u32 %v6594, 16
        %v6648 = vrot.slane %v6646, 5
        %v6649 = vor.u32 %v6645, %v6648
        %v6650 = vrot.slane %v6649, 4
        %v6652 = vshll.u32 %v6595, 16
        %v6654 = vrot.slane %v6652, 5
        %v6655 = vsel %vm410, %v6650, %v6654
        %v6656 = vshrl.u32 %v6595, 16
        %v6658 = vrot.slane %v6656, 4
        %v6659 = vor.u32 %v6658, %v6654
        %v6660 = vrot.slane %v6659, 4
        %v6662 = vshll.u32 %v6596, 16
        %v6664 = vrot.slane %v6662, 5
        %v6665 = vsel %vm410, %v6660, %v6664
        %v6667 = vshrl.u32 %v6597, 16
        %v6669 = vrot.slane %v6667, 4
        %v6670 = vshll.u32 %v6597, 16
        %v6672 = vrot.slane %v6670, 5
        %v6673 = vor.u32 %v6669, %v6672
        %v6674 = vrot.slane %v6673, 4
        %v6676 = vshll.u32 %v6598, 16
        %v6678 = vrot.slane %v6676, 5
        %v6679 = vsel %vm410, %v6674, %v6678
        %v6680 = vshrl.u32 %v6598, 16
        %v6682 = vrot.slane %v6680, 4
        %v6683 = vor.u32 %v6682, %v6678
        %v6684 = vrot.slane %v6683, 4
        %v6686 = vshll.u32 %v6599, 16
        %v6688 = vrot.slane %v6686, 5
        %v6689 = vsel %vm410, %v6684, %v6688
        %v6691 = vshrl.u32 %v6600, 16
        %v6693 = vrot.slane %v6691, 4
        %v6694 = vshll.u32 %v6600, 16
        %v6696 = vrot.slane %v6694, 5
        %v6697 = vor.u32 %v6693, %v6696
        %v6698 = vrot.slane %v6697, 4
        %v6700 = vshll.u32 %v6601, 16
        %v6702 = vrot.slane %v6700, 5
        %v6703 = vsel %vm410, %v6698, %v6702
        %v6704 = vshrl.u32 %v6601, 16
        %v6706 = vrot.slane %v6704, 4
        %v6707 = vor.u32 %v6706, %v6702
        %v6708 = vrot.slane %v6707, 4
        %v6710 = vshll.u32 %v6602, 16
        %v6712 = vrot.slane %v6710, 5
        %v6713 = vsel %vm410, %v6708, %v6712
        %v6715 = vshrl.u32 %v6603, 16
        %v6717 = vrot.slane %v6715, 4
        %v6718 = vshll.u32 %v6603, 16
        %v6720 = vrot.slane %v6718, 5
        %v6721 = vor.u32 %v6717, %v6720
        %v6722 = vrot.slane %v6721, 4
        %v6724 = vshll.u32 %v6604, 16
        %v6726 = vrot.slane %v6724, 5
        %v6727 = vsel %vm410, %v6722, %v6726
        %v6728 = vshrl.u32 %v6604, 16
        %v6730 = vrot.slane %v6728, 4
        %v6731 = vor.u32 %v6730, %v6726
        %v6732 = vrot.slane %v6731, 4
        %v6734 = vshll.u32 %v6605, 16
        %v6736 = vrot.slane %v6734, 5
        %v6737 = vsel %vm410, %v6732, %v6736
        %v6739 = vshrl.u32 %v6606, 16
        %v6741 = vrot.slane %v6739, 4
        %v6742 = vshll.u32 %v6606, 16
        %v6744 = vrot.slane %v6742, 5
        %v6745 = vor.u32 %v6741, %v6744
        %v6746 = vrot.slane %v6745, 4
        %v6748 = vshll.u32 %v6607, 16
        %v6750 = vrot.slane %v6748, 5
        %v6751 = vsel %vm410, %v6746, %v6750
        %v6752 = vshrl.u32 %v6607, 16
        %v6754 = vrot.slane %v6752, 4
        %v6755 = vor.u32 %v6754, %v6750
        %v6756 = vrot.slane %v6755, 4
        %v6758 = vshll.u32 %v6608, 16
        %v6760 = vrot.slane %v6758, 5
        %v6761 = vsel %vm410, %v6756, %v6760
        %v6763 = vshrl.u32 %v6609, 16
        %v6765 = vrot.slane %v6763, 4
        %v6766 = vshll.u32 %v6609, 16
        %v6768 = vrot.slane %v6766, 5
        %v6769 = vor.u32 %v6765, %v6768
        %v6770 = vrot.slane %v6769, 4
        %v6772 = vshll.u32 %v6610, 16
        %v6774 = vrot.slane %v6772, 5
        %v6775 = vsel %vm410, %v6770, %v6774
        %v6776 = vshrl.u32 %v6610, 16
        %v6778 = vrot.slane %v6776, 4
        %v6779 = vor.u32 %v6778, %v6774
        %v6780 = vrot.slane %v6779, 4
        %v6782 = vshll.u32 %v6611, 16
        %v6784 = vrot.slane %v6782, 5
        %v6785 = vsel %vm410, %v6780, %v6784
        %v6787 = vshrl.u32 %v6612, 16
        %v6789 = vrot.slane %v6787, 4
        %v6790 = vshll.u32 %v6612, 16
        %v6792 = vrot.slane %v6790, 5
        %v6793 = vor.u32 %v6789, %v6792
        %v6794 = vrot.slane %v6793, 4
        %v6796 = vshll.u32 %v6613, 16
        %v6798 = vrot.slane %v6796, 5
        %v6799 = vsel %vm410, %v6794, %v6798
        %v6800 = vshrl.u32 %v6613, 16
        %v6802 = vrot.slane %v6800, 4
        %v6803 = vor.u32 %v6802, %v6798
        %v6804 = vrot.slane %v6803, 4
        %v6806 = vshll.u32 %v6614, 16
        %v6808 = vrot.slane %v6806, 5
        %v6809 = vsel %vm410, %v6804, %v6808
        %v6811 = vshrl.u32 %v6615, 16
        %v6813 = vrot.slane %v6811, 4
        %v6814 = vshll.u32 %v6615, 16
        %v6816 = vrot.slane %v6814, 5
        %v6817 = vor.u32 %v6813, %v6816
        %v6818 = vrot.slane %v6817, 4
        %v6820 = vshll.u32 %v6616, 16
        %v6822 = vrot.slane %v6820, 5
        %v6823 = vsel %vm410, %v6818, %v6822
        %v6824 = vshrl.u32 %v6616, 16
        %v6826 = vrot.slane %v6824, 4
        %v6827 = vor.u32 %v6826, %v6822
        %v6828 = vrot.slane %v6827, 4
        %v6830 = vshll.u32 %v6617, 16
        %v6832 = vrot.slane %v6830, 5
        %v6833 = vsel %vm410, %v6828, %v6832
        %v6835 = vshrl.u32 %v6618, 16
        %v6837 = vrot.slane %v6835, 4
        %v6838 = vshll.u32 %v6618, 16
        %v6840 = vrot.slane %v6838, 5
        %v6841 = vor.u32 %v6837, %v6840
        %v6842 = vrot.slane %v6841, 4
        %v6844 = vshll.u32 %v6619, 16
        %v6846 = vrot.slane %v6844, 5
        %v6847 = vsel %vm410, %v6842, %v6846
        %v6848 = vshrl.u32 %v6619, 16
        %v6850 = vrot.slane %v6848, 4
        %v6851 = vor.u32 %v6850, %v6846
        %v6852 = vrot.slane %v6851, 4
        %v6854 = vshll.u32 %v6620, 16
        %v6856 = vrot.slane %v6854, 5
        %v6857 = vsel %vm410, %v6852, %v6856
        %v6859 = vshrl.u32 %v6621, 16
        %v6861 = vrot.slane %v6859, 4
        %v6862 = vshll.u32 %v6621, 16
        %v6864 = vrot.slane %v6862, 5
        %v6865 = vor.u32 %v6861, %v6864
        %v6866 = vrot.slane %v6865, 4
        %v6868 = vshll.u32 %v6622, 16
        %v6870 = vrot.slane %v6868, 5
        %v6871 = vsel %vm410, %v6866, %v6870
        %v6872 = vshrl.u32 %v6622, 16
        %v6874 = vrot.slane %v6872, 4
        %v6875 = vor.u32 %v6874, %v6870
        %v6876 = vrot.slane %v6875, 4
        %v6878 = vshll.u32 %v6623, 16
        %v6880 = vrot.slane %v6878, 5
        %v6881 = vsel %vm410, %v6876, %v6880
        %v6883 = vshrl.u32 %v6624, 16
        %v6885 = vrot.slane %v6883, 4
        %v6886 = vshll.u32 %v6624, 16
        %v6888 = vrot.slane %v6886, 5
        %v6889 = vor.u32 %v6885, %v6888
        %v6890 = vrot.slane %v6889, 4
        %v6892 = vshll.u32 %v6625, 16
        %v6894 = vrot.slane %v6892, 5
        %v6895 = vsel %vm410, %v6890, %v6894
        %v6896 = vshrl.u32 %v6625, 16
        %v6898 = vrot.slane %v6896, 4
        %v6899 = vor.u32 %v6898, %v6894
        %v6900 = vrot.slane %v6899, 4
        %v6902 = vshll.u32 %v6626, 16
        %v6904 = vrot.slane %v6902, 5
        %v6905 = vsel %vm410, %v6900, %v6904
        %v6907 = vshrl.u32 %v6627, 16
        %v6909 = vrot.slane %v6907, 4
        %v6910 = vshll.u32 %v6627, 16
        %v6912 = vrot.slane %v6910, 5
        %v6913 = vor.u32 %v6909, %v6912
        %v6914 = vrot.slane %v6913, 4
        %v6916 = vshll.u32 %v6628, 16
        %v6918 = vrot.slane %v6916, 5
        %v6919 = vsel %vm410, %v6914, %v6918
        %v6920 = vshrl.u32 %v6628, 16
        %v6922 = vrot.slane %v6920, 4
        %v6923 = vor.u32 %v6922, %v6918
        %v6924 = vrot.slane %v6923, 4
        %v6926 = vshll.u32 %v6629, 16
        %v6928 = vrot.slane %v6926, 5
        %v6929 = vsel %vm410, %v6924, %v6928
        %v6931 = vshrl.u32 %v6630, 16
        %v6933 = vrot.slane %v6931, 4
        %v6934 = vshll.u32 %v6630, 16
        %v6936 = vrot.slane %v6934, 5
        %v6937 = vor.u32 %v6933, %v6936
        %v6938 = vrot.slane %v6937, 4
        %v6940 = vshll.u32 %v6631, 16
        %v6942 = vrot.slane %v6940, 5
        %v6943 = vsel %vm410, %v6938, %v6942
        %v6944 = vshrl.u32 %v6631, 16
        %v6946 = vrot.slane %v6944, 4
        %v6947 = vor.u32 %v6946, %v6942
        %v6948 = vrot.slane %v6947, 4
        %v6950 = vshll.u32 %v6632, 16
        %v6952 = vrot.slane %v6950, 5
        %v6953 = vsel %vm410, %v6948, %v6952
        %v6955 = vshrl.u32 %v6633, 16
        %v6957 = vrot.slane %v6955, 4
        %v6958 = vshll.u32 %v6633, 16
        %v6960 = vrot.slane %v6958, 5
        %v6961 = vor.u32 %v6957, %v6960
        %v6962 = vrot.slane %v6961, 4
        %v6964 = vshll.u32 %v6634, 16
        %v6966 = vrot.slane %v6964, 5
        %v6967 = vsel %vm410, %v6962, %v6966
        %v6968 = vshrl.u32 %v6634, 16
        %v6970 = vrot.slane %v6968, 4
        %v6971 = vor.u32 %v6970, %v6966
        %v6972 = vrot.slane %v6971, 4
        %v6974 = vshll.u32 %v6635, 16
        %v6976 = vrot.slane %v6974, 5
        %v6977 = vsel %vm410, %v6972, %v6976
        %v6979 = vshrl.u32 %v6636, 16
        %v6981 = vrot.slane %v6979, 4
        %v6982 = vshll.u32 %v6636, 16
        %v6984 = vrot.slane %v6982, 5
        %v6985 = vor.u32 %v6981, %v6984
        %v6986 = vrot.slane %v6985, 4
        %v6988 = vshll.u32 %v6637, 16
        %v6990 = vrot.slane %v6988, 5
        %v6991 = vsel %vm410, %v6986, %v6990
        %v6992 = vshrl.u32 %v6637, 16
        %v6994 = vrot.slane %v6992, 4
        %v6995 = vor.u32 %v6994, %v6990
        %v6996 = vrot.slane %v6995, 4
        %v6998 = vshll.u32 %v6638, 16
        %v7000 = vrot.slane %v6998, 5
        %v7001 = vsel %vm410, %v6996, %v7000
        %v7003 = vshrl.u32 %v6639, 16
        %v7005 = vrot.slane %v7003, 4
        %v7006 = vshll.u32 %v6639, 16
        %v7008 = vrot.slane %v7006, 5
        %v7009 = vor.u32 %v7005, %v7008
        %v7010 = vrot.slane %v7009, 4
        %v7012 = vshll.u32 %v6640, 16
        %v7014 = vrot.slane %v7012, 5
        %v7015 = vsel %vm410, %v7010, %v7014
        %v7016 = vshrl.u32 %v6640, 16
        %v7018 = vrot.slane %v7016, 4
        %v7019 = vor.u32 %v7018, %v7014
        %v7020 = vrot.slane %v7019, 4
        %v7022 = vshll.u32 %v6641, 16
        %v7024 = vrot.slane %v7022, 5
        %v7025 = vsel %vm410, %v7020, %v7024
        %7058 = vst [vmem:[#allocation2 + $0x10] sm:$0xf] %v6655
        %7059 = vst [vmem:[#allocation2 + $0x34] sm:$0xf] %v6665
        %7060 = vst [vmem:[#allocation2 + $0x58] sm:$0xf] %v6679
        %7061 = vst [vmem:[#allocation2 + $0x7c] sm:$0xf] %v6689
        %7062 = vst [vmem:[#allocation2 + $0xa0] sm:$0xf] %v6703
        %7063 = vst [vmem:[#allocation2 + $0xc4] sm:$0xf] %v6713
        %7064 = vst [vmem:[#allocation2 + $0xe8] sm:$0xf] %v6727
        %7065 = vst [vmem:[#allocation2 + $0x10c] sm:$0xf] %v6737
        %7066 = vst [vmem:[#allocation2 + $0x130] sm:$0xf] %v6751
        %7067 = vst [vmem:[#allocation2 + $0x154] sm:$0xf] %v6761
        %7068 = vst [vmem:[#allocation2 + $0x178] sm:$0xf] %v6775
        %7069 = vst [vmem:[#allocation2 + $0x19c] sm:$0xf] %v6785
        %7070 = vst [vmem:[#allocation2 + $0x1c0] sm:$0xf] %v6799
        %7071 = vst [vmem:[#allocation2 + $0x1e4] sm:$0xf] %v6809
        %7072 = vst [vmem:[#allocation2 + $0x208] sm:$0xf] %v6823
        %7073 = vst [vmem:[#allocation2 + $0x22c] sm:$0xf] %v6833
        %7074 = vst [vmem:[#allocation2 + $0x250] sm:$0xf] %v6847
        %7075 = vst [vmem:[#allocation2 + $0x274] sm:$0xf] %v6857
        %7076 = vst [vmem:[#allocation2 + $0x298] sm:$0xf] %v6871
        %7077 = vst [vmem:[#allocation2 + $0x2bc] sm:$0xf] %v6881
        %7078 = vst [vmem:[#allocation2 + $0x2e0] sm:$0xf] %v6895
        %7079 = vst [vmem:[#allocation2 + $0x304] sm:$0xf] %v6905
        %7080 = vst [vmem:[#allocation2 + $0x328] sm:$0xf] %v6919
        %7081 = vst [vmem:[#allocation2 + $0x34c] sm:$0xf] %v6929
        %7082 = vst [vmem:[#allocation2 + $0x370] sm:$0xf] %v6943
        %7083 = vst [vmem:[#allocation2 + $0x394] sm:$0xf] %v6953
        %7084 = vst [vmem:[#allocation2 + $0x3b8] sm:$0xf] %v6967
        %7085 = vst [vmem:[#allocation2 + $0x3dc] sm:$0xf] %v6977
        %7086 = vst [vmem:[#allocation2 + $0x400] sm:$0xf] %v6991
        %7087 = vst [vmem:[#allocation2 + $0x424] sm:$0xf] %v7001
        %7088 = vst [vmem:[#allocation2 + $0x448] sm:$0xf] %v7015
        %7089 = vst [vmem:[#allocation2 + $0x46c] sm:$0xf] %v7025
        %v7090 = vld [vmem:[%s5583] sm:$0xe]
        %v7091 = vld [vmem:[%s5583 + $0x4] sm:$0xf]
        %v7092 = vld [vmem:[%s5583 + $0x8] sm:$0x1]
        %v7093 = vld [vmem:[%s5583 + $0xc] sm:$0xe]
        %v7094 = vld [vmem:[%s5583 + $0x10] sm:$0xf]
        %v7095 = vld [vmem:[%s5583 + $0x14] sm:$0x1]
        %v7096 = vld [vmem:[%s5583 + $0x18] sm:$0xe]
        %v7097 = vld [vmem:[%s5583 + $0x1c] sm:$0xf]
        %v7098 = vld [vmem:[%s5583 + $0x20] sm:$0x1]
        %v7099 = vld [vmem:[%s5583 + $0x24] sm:$0xe]
        %v7100 = vld [vmem:[%s5583 + $0x28] sm:$0xf]
        %v7101 = vld [vmem:[%s5583 + $0x2c] sm:$0x1]
        %v7102 = vld [vmem:[%s5583 + $0x30] sm:$0xe]
        %v7103 = vld [vmem:[%s5583 + $0x34] sm:$0xf]
        %v7104 = vld [vmem:[%s5583 + $0x38] sm:$0x1]
        %v7105 = vld [vmem:[%s5583 + $0x3c] sm:$0xe]
        %v7106 = vld [vmem:[%s5583 + $0x40] sm:$0xf]
        %v7107 = vld [vmem:[%s5583 + $0x44] sm:$0x1]
        %v7108 = vld [vmem:[%s5583 + $0x48] sm:$0xe]
        %v7109 = vld [vmem:[%s5583 + $0x4c] sm:$0xf]
        %v7110 = vld [vmem:[%s5583 + $0x50] sm:$0x1]
        %v7111 = vld [vmem:[%s5583 + $0x54] sm:$0xe]
        %v7112 = vld [vmem:[%s5583 + $0x58] sm:$0xf]
        %v7113 = vld [vmem:[%s5583 + $0x5c] sm:$0x1]
        %v7114 = vld [vmem:[%s5583 + $0x60] sm:$0xe]
        %v7115 = vld [vmem:[%s5583 + $0x64] sm:$0xf]
        %v7116 = vld [vmem:[%s5583 + $0x68] sm:$0x1]
        %v7117 = vld [vmem:[%s5583 + $0x6c] sm:$0xe]
        %v7118 = vld [vmem:[%s5583 + $0x70] sm:$0xf]
        %v7119 = vld [vmem:[%s5583 + $0x74] sm:$0x1]
        %v7120 = vld [vmem:[%s5583 + $0x78] sm:$0xe]
        %v7121 = vld [vmem:[%s5583 + $0x7c] sm:$0xf]
        %v7122 = vld [vmem:[%s5583 + $0x80] sm:$0x1]
        %v7123 = vld [vmem:[%s5583 + $0x84] sm:$0xe]
        %v7124 = vld [vmem:[%s5583 + $0x88] sm:$0xf]
        %v7125 = vld [vmem:[%s5583 + $0x8c] sm:$0x1]
        %v7126 = vld [vmem:[%s5583 + $0x90] sm:$0xe]
        %v7127 = vld [vmem:[%s5583 + $0x94] sm:$0xf]
        %v7128 = vld [vmem:[%s5583 + $0x98] sm:$0x1]
        %v7129 = vld [vmem:[%s5583 + $0x9c] sm:$0xe]
        %v7130 = vld [vmem:[%s5583 + $0xa0] sm:$0xf]
        %v7131 = vld [vmem:[%s5583 + $0xa4] sm:$0x1]
        %v7132 = vld [vmem:[%s5583 + $0xa8] sm:$0xe]
        %v7133 = vld [vmem:[%s5583 + $0xac] sm:$0xf]
        %v7134 = vld [vmem:[%s5583 + $0xb0] sm:$0x1]
        %v7135 = vld [vmem:[%s5583 + $0xb4] sm:$0xe]
        %v7136 = vld [vmem:[%s5583 + $0xb8] sm:$0xf]
        %v7137 = vld [vmem:[%s5583 + $0xbc] sm:$0x1]
        %v7186 = vrot.slane %v7090, 5
        %v7187 = vrot.slane %v7186, 4
        %v7188 = vrot.slane %v7091, 5
        %v7189 = vsel %vm957, %v7187, %v7188
        %v7190 = vrot.slane %v7188, 4
        %v7191 = vrot.slane %v7092, 5
        %v7192 = vsel %vm957, %v7190, %v7191
        %v7193 = vrot.slane %v7093, 5
        %v7194 = vrot.slane %v7193, 4
        %v7195 = vrot.slane %v7094, 5
        %v7196 = vsel %vm957, %v7194, %v7195
        %v7197 = vrot.slane %v7195, 4
        %v7198 = vrot.slane %v7095, 5
        %v7199 = vsel %vm957, %v7197, %v7198
        %v7200 = vrot.slane %v7096, 5
        %v7201 = vrot.slane %v7200, 4
        %v7202 = vrot.slane %v7097, 5
        %v7203 = vsel %vm957, %v7201, %v7202
        %v7204 = vrot.slane %v7202, 4
        %v7205 = vrot.slane %v7098, 5
        %v7206 = vsel %vm957, %v7204, %v7205
        %v7207 = vrot.slane %v7099, 5
        %v7208 = vrot.slane %v7207, 4
        %v7209 = vrot.slane %v7100, 5
        %v7210 = vsel %vm957, %v7208, %v7209
        %v7211 = vrot.slane %v7209, 4
        %v7212 = vrot.slane %v7101, 5
        %v7213 = vsel %vm957, %v7211, %v7212
        %v7214 = vrot.slane %v7102, 5
        %v7215 = vrot.slane %v7214, 4
        %v7216 = vrot.slane %v7103, 5
        %v7217 = vsel %vm957, %v7215, %v7216
        %v7218 = vrot.slane %v7216, 4
        %v7219 = vrot.slane %v7104, 5
        %v7220 = vsel %vm957, %v7218, %v7219
        %v7221 = vrot.slane %v7105, 5
        %v7222 = vrot.slane %v7221, 4
        %v7223 = vrot.slane %v7106, 5
        %v7224 = vsel %vm957, %v7222, %v7223
        %v7225 = vrot.slane %v7223, 4
        %v7226 = vrot.slane %v7107, 5
        %v7227 = vsel %vm957, %v7225, %v7226
        %v7228 = vrot.slane %v7108, 5
        %v7229 = vrot.slane %v7228, 4
        %v7230 = vrot.slane %v7109, 5
        %v7231 = vsel %vm957, %v7229, %v7230
        %v7232 = vrot.slane %v7230, 4
        %v7233 = vrot.slane %v7110, 5
        %v7234 = vsel %vm957, %v7232, %v7233
        %v7235 = vrot.slane %v7111, 5
        %v7236 = vrot.slane %v7235, 4
        %v7237 = vrot.slane %v7112, 5
        %v7238 = vsel %vm957, %v7236, %v7237
        %v7239 = vrot.slane %v7237, 4
        %v7240 = vrot.slane %v7113, 5
        %v7241 = vsel %vm957, %v7239, %v7240
        %v7242 = vrot.slane %v7114, 5
        %v7243 = vrot.slane %v7242, 4
        %v7244 = vrot.slane %v7115, 5
        %v7245 = vsel %vm957, %v7243, %v7244
        %v7246 = vrot.slane %v7244, 4
        %v7247 = vrot.slane %v7116, 5
        %v7248 = vsel %vm957, %v7246, %v7247
        %v7249 = vrot.slane %v7117, 5
        %v7250 = vrot.slane %v7249, 4
        %v7251 = vrot.slane %v7118, 5
        %v7252 = vsel %vm957, %v7250, %v7251
        %v7253 = vrot.slane %v7251, 4
        %v7254 = vrot.slane %v7119, 5
        %v7255 = vsel %vm957, %v7253, %v7254
        %v7256 = vrot.slane %v7120, 5
        %v7257 = vrot.slane %v7256, 4
        %v7258 = vrot.slane %v7121, 5
        %v7259 = vsel %vm957, %v7257, %v7258
        %v7260 = vrot.slane %v7258, 4
        %v7261 = vrot.slane %v7122, 5
        %v7262 = vsel %vm957, %v7260, %v7261
        %v7263 = vrot.slane %v7123, 5
        %v7264 = vrot.slane %v7263, 4
        %v7265 = vrot.slane %v7124, 5
        %v7266 = vsel %vm957, %v7264, %v7265
        %v7267 = vrot.slane %v7265, 4
        %v7268 = vrot.slane %v7125, 5
        %v7269 = vsel %vm957, %v7267, %v7268
        %v7270 = vrot.slane %v7126, 5
        %v7271 = vrot.slane %v7270, 4
        %v7272 = vrot.slane %v7127, 5
        %v7273 = vsel %vm957, %v7271, %v7272
        %v7274 = vrot.slane %v7272, 4
        %v7275 = vrot.slane %v7128, 5
        %v7276 = vsel %vm957, %v7274, %v7275
        %v7277 = vrot.slane %v7129, 5
        %v7278 = vrot.slane %v7277, 4
        %v7279 = vrot.slane %v7130, 5
        %v7280 = vsel %vm957, %v7278, %v7279
        %v7281 = vrot.slane %v7279, 4
        %v7282 = vrot.slane %v7131, 5
        %v7283 = vsel %vm957, %v7281, %v7282
        %v7284 = vrot.slane %v7132, 5
        %v7285 = vrot.slane %v7284, 4
        %v7286 = vrot.slane %v7133, 5
        %v7287 = vsel %vm957, %v7285, %v7286
        %v7288 = vrot.slane %v7286, 4
        %v7289 = vrot.slane %v7134, 5
        %v7290 = vsel %vm957, %v7288, %v7289
        %v7291 = vrot.slane %v7135, 5
        %v7292 = vrot.slane %v7291, 4
        %v7293 = vrot.slane %v7136, 5
        %v7294 = vsel %vm957, %v7292, %v7293
        %v7295 = vrot.slane %v7293, 4
        %v7296 = vrot.slane %v7137, 5
        %v7297 = vsel %vm957, %v7295, %v7296
        %7330 = vst [vmem:[#allocation2 + $0x14] sm:$0xf] %v7189
        %7331 = vst [vmem:[#allocation2 + $0x38] sm:$0xf] %v7192
        %7332 = vst [vmem:[#allocation2 + $0x5c] sm:$0xf] %v7196
        %7333 = vst [vmem:[#allocation2 + $0x80] sm:$0xf] %v7199
        %7334 = vst [vmem:[#allocation2 + $0xa4] sm:$0xf] %v7203
        %7335 = vst [vmem:[#allocation2 + $0xc8] sm:$0xf] %v7206
        %7336 = vst [vmem:[#allocation2 + $0xec] sm:$0xf] %v7210
        %7337 = vst [vmem:[#allocation2 + $0x110] sm:$0xf] %v7213
        %7338 = vst [vmem:[#allocation2 + $0x134] sm:$0xf] %v7217
        %7339 = vst [vmem:[#allocation2 + $0x158] sm:$0xf] %v7220
        %7340 = vst [vmem:[#allocation2 + $0x17c] sm:$0xf] %v7224
        %7341 = vst [vmem:[#allocation2 + $0x1a0] sm:$0xf] %v7227
        %7342 = vst [vmem:[#allocation2 + $0x1c4] sm:$0xf] %v7231
        %7343 = vst [vmem:[#allocation2 + $0x1e8] sm:$0xf] %v7234
        %7344 = vst [vmem:[#allocation2 + $0x20c] sm:$0xf] %v7238
        %7345 = vst [vmem:[#allocation2 + $0x230] sm:$0xf] %v7241
        %7346 = vst [vmem:[#allocation2 + $0x254] sm:$0xf] %v7245
        %7347 = vst [vmem:[#allocation2 + $0x278] sm:$0xf] %v7248
        %7348 = vst [vmem:[#allocation2 + $0x29c] sm:$0xf] %v7252
        %7349 = vst [vmem:[#allocation2 + $0x2c0] sm:$0xf] %v7255
        %7350 = vst [vmem:[#allocation2 + $0x2e4] sm:$0xf] %v7259
        %7351 = vst [vmem:[#allocation2 + $0x308] sm:$0xf] %v7262
        %7352 = vst [vmem:[#allocation2 + $0x32c] sm:$0xf] %v7266
        %7353 = vst [vmem:[#allocation2 + $0x350] sm:$0xf] %v7269
        %7354 = vst [vmem:[#allocation2 + $0x374] sm:$0xf] %v7273
        %7355 = vst [vmem:[#allocation2 + $0x398] sm:$0xf] %v7276
        %7356 = vst [vmem:[#allocation2 + $0x3bc] sm:$0xf] %v7280
        %7357 = vst [vmem:[#allocation2 + $0x3e0] sm:$0xf] %v7283
        %7358 = vst [vmem:[#allocation2 + $0x404] sm:$0xf] %v7287
        %7359 = vst [vmem:[#allocation2 + $0x428] sm:$0xf] %v7290
        %7360 = vst [vmem:[#allocation2 + $0x44c] sm:$0xf] %v7294
        %7361 = vst [vmem:[#allocation2 + $0x470] sm:$0xf] %v7297
        %s7362 = scalar_lea.vmem [#allocation3], 24
        %v7363 = vld [vmem:[%s7362] sm:$0xf]
        %v7364 = vld [vmem:[%s7362 + $0x4] sm:$0xf]
        %v7365 = vld [vmem:[%s7362 + $0xc] sm:$0xf]
        %v7366 = vld [vmem:[%s7362 + $0x10] sm:$0xf]
        %v7367 = vld [vmem:[%s7362 + $0x18] sm:$0xf]
        %v7368 = vld [vmem:[%s7362 + $0x1c] sm:$0xf]
        %v7369 = vld [vmem:[%s7362 + $0x24] sm:$0xf]
        %v7370 = vld [vmem:[%s7362 + $0x28] sm:$0xf]
        %v7371 = vld [vmem:[%s7362 + $0x30] sm:$0xf]
        %v7372 = vld [vmem:[%s7362 + $0x34] sm:$0xf]
        %v7373 = vld [vmem:[%s7362 + $0x3c] sm:$0xf]
        %v7374 = vld [vmem:[%s7362 + $0x40] sm:$0xf]
        %v7375 = vld [vmem:[%s7362 + $0x48] sm:$0xf]
        %v7376 = vld [vmem:[%s7362 + $0x4c] sm:$0xf]
        %v7377 = vld [vmem:[%s7362 + $0x54] sm:$0xf]
        %v7378 = vld [vmem:[%s7362 + $0x58] sm:$0xf]
        %v7379 = vld [vmem:[%s7362 + $0x60] sm:$0xf]
        %v7380 = vld [vmem:[%s7362 + $0x64] sm:$0xf]
        %v7381 = vld [vmem:[%s7362 + $0x6c] sm:$0xf]
        %v7382 = vld [vmem:[%s7362 + $0x70] sm:$0xf]
        %v7383 = vld [vmem:[%s7362 + $0x78] sm:$0xf]
        %v7384 = vld [vmem:[%s7362 + $0x7c] sm:$0xf]
        %v7385 = vld [vmem:[%s7362 + $0x84] sm:$0xf]
        %v7386 = vld [vmem:[%s7362 + $0x88] sm:$0xf]
        %v7387 = vld [vmem:[%s7362 + $0x90] sm:$0xf]
        %v7388 = vld [vmem:[%s7362 + $0x94] sm:$0xf]
        %v7389 = vld [vmem:[%s7362 + $0x9c] sm:$0xf]
        %v7390 = vld [vmem:[%s7362 + $0xa0] sm:$0xf]
        %v7391 = vld [vmem:[%s7362 + $0xa8] sm:$0xf]
        %v7392 = vld [vmem:[%s7362 + $0xac] sm:$0xf]
        %v7393 = vld [vmem:[%s7362 + $0xb4] sm:$0xf]
        %v7394 = vld [vmem:[%s7362 + $0xb8] sm:$0xf]
        %7395 = vst [vmem:[#allocation2 + $0x18] sm:$0xf] %v7363
        %7396 = vst [vmem:[#allocation2 + $0x3c] sm:$0xf] %v7364
        %7397 = vst [vmem:[#allocation2 + $0x60] sm:$0xf] %v7365
        %7398 = vst [vmem:[#allocation2 + $0x84] sm:$0xf] %v7366
        %7399 = vst [vmem:[#allocation2 + $0xa8] sm:$0xf] %v7367
        %7400 = vst [vmem:[#allocation2 + $0xcc] sm:$0xf] %v7368
        %7401 = vst [vmem:[#allocation2 + $0xf0] sm:$0xf] %v7369
        %7402 = vst [vmem:[#allocation2 + $0x114] sm:$0xf] %v7370
        %7403 = vst [vmem:[#allocation2 + $0x138] sm:$0xf] %v7371
        %7404 = vst [vmem:[#allocation2 + $0x15c] sm:$0xf] %v7372
        %7405 = vst [vmem:[#allocation2 + $0x180] sm:$0xf] %v7373
        %7406 = vst [vmem:[#allocation2 + $0x1a4] sm:$0xf] %v7374
        %7407 = vst [vmem:[#allocation2 + $0x1c8] sm:$0xf] %v7375
        %7408 = vst [vmem:[#allocation2 + $0x1ec] sm:$0xf] %v7376
        %7409 = vst [vmem:[#allocation2 + $0x210] sm:$0xf] %v7377
        %7410 = vst [vmem:[#allocation2 + $0x234] sm:$0xf] %v7378
        %7411 = vst [vmem:[#allocation2 + $0x258] sm:$0xf] %v7379
        %7412 = vst [vmem:[#allocation2 + $0x27c] sm:$0xf] %v7380
        %7413 = vst [vmem:[#allocation2 + $0x2a0] sm:$0xf] %v7381
        %7414 = vst [vmem:[#allocation2 + $0x2c4] sm:$0xf] %v7382
        %7415 = vst [vmem:[#allocation2 + $0x2e8] sm:$0xf] %v7383
        %7416 = vst [vmem:[#allocation2 + $0x30c] sm:$0xf] %v7384
        %7417 = vst [vmem:[#allocation2 + $0x330] sm:$0xf] %v7385
        %7418 = vst [vmem:[#allocation2 + $0x354] sm:$0xf] %v7386
        %7419 = vst [vmem:[#allocation2 + $0x378] sm:$0xf] %v7387
        %7420 = vst [vmem:[#allocation2 + $0x39c] sm:$0xf] %v7388
        %7421 = vst [vmem:[#allocation2 + $0x3c0] sm:$0xf] %v7389
        %7422 = vst [vmem:[#allocation2 + $0x3e4] sm:$0xf] %v7390
        %7423 = vst [vmem:[#allocation2 + $0x408] sm:$0xf] %v7391
        %7424 = vst [vmem:[#allocation2 + $0x42c] sm:$0xf] %v7392
        %7425 = vst [vmem:[#allocation2 + $0x450] sm:$0xf] %v7393
        %7426 = vst [vmem:[#allocation2 + $0x474] sm:$0xf] %v7394
        %v7427 = vld [vmem:[%s7362] sm:$0xf]
        %v7428 = vld [vmem:[%s7362 + $0x4] sm:$0xf]
        %v7429 = vld [vmem:[%s7362 + $0x8] sm:$0x1]
        %v7430 = vld [vmem:[%s7362 + $0xc] sm:$0xf]
        %v7431 = vld [vmem:[%s7362 + $0x10] sm:$0xf]
        %v7432 = vld [vmem:[%s7362 + $0x14] sm:$0x1]
        %v7433 = vld [vmem:[%s7362 + $0x18] sm:$0xf]
        %v7434 = vld [vmem:[%s7362 + $0x1c] sm:$0xf]
        %v7435 = vld [vmem:[%s7362 + $0x20] sm:$0x1]
        %v7436 = vld [vmem:[%s7362 + $0x24] sm:$0xf]
        %v7437 = vld [vmem:[%s7362 + $0x28] sm:$0xf]
        %v7438 = vld [vmem:[%s7362 + $0x2c] sm:$0x1]
        %v7439 = vld [vmem:[%s7362 + $0x30] sm:$0xf]
        %v7440 = vld [vmem:[%s7362 + $0x34] sm:$0xf]
        %v7441 = vld [vmem:[%s7362 + $0x38] sm:$0x1]
        %v7442 = vld [vmem:[%s7362 + $0x3c] sm:$0xf]
        %v7443 = vld [vmem:[%s7362 + $0x40] sm:$0xf]
        %v7444 = vld [vmem:[%s7362 + $0x44] sm:$0x1]
        %v7445 = vld [vmem:[%s7362 + $0x48] sm:$0xf]
        %v7446 = vld [vmem:[%s7362 + $0x4c] sm:$0xf]
        %v7447 = vld [vmem:[%s7362 + $0x50] sm:$0x1]
        %v7448 = vld [vmem:[%s7362 + $0x54] sm:$0xf]
        %v7449 = vld [vmem:[%s7362 + $0x58] sm:$0xf]
        %v7450 = vld [vmem:[%s7362 + $0x5c] sm:$0x1]
        %v7451 = vld [vmem:[%s7362 + $0x60] sm:$0xf]
        %v7452 = vld [vmem:[%s7362 + $0x64] sm:$0xf]
        %v7453 = vld [vmem:[%s7362 + $0x68] sm:$0x1]
        %v7454 = vld [vmem:[%s7362 + $0x6c] sm:$0xf]
        %v7455 = vld [vmem:[%s7362 + $0x70] sm:$0xf]
        %v7456 = vld [vmem:[%s7362 + $0x74] sm:$0x1]
        %v7457 = vld [vmem:[%s7362 + $0x78] sm:$0xf]
        %v7458 = vld [vmem:[%s7362 + $0x7c] sm:$0xf]
        %v7459 = vld [vmem:[%s7362 + $0x80] sm:$0x1]
        %v7460 = vld [vmem:[%s7362 + $0x84] sm:$0xf]
        %v7461 = vld [vmem:[%s7362 + $0x88] sm:$0xf]
        %v7462 = vld [vmem:[%s7362 + $0x8c] sm:$0x1]
        %v7463 = vld [vmem:[%s7362 + $0x90] sm:$0xf]
        %v7464 = vld [vmem:[%s7362 + $0x94] sm:$0xf]
        %v7465 = vld [vmem:[%s7362 + $0x98] sm:$0x1]
        %v7466 = vld [vmem:[%s7362 + $0x9c] sm:$0xf]
        %v7467 = vld [vmem:[%s7362 + $0xa0] sm:$0xf]
        %v7468 = vld [vmem:[%s7362 + $0xa4] sm:$0x1]
        %v7469 = vld [vmem:[%s7362 + $0xa8] sm:$0xf]
        %v7470 = vld [vmem:[%s7362 + $0xac] sm:$0xf]
        %v7471 = vld [vmem:[%s7362 + $0xb0] sm:$0x1]
        %v7472 = vld [vmem:[%s7362 + $0xb4] sm:$0xf]
        %v7473 = vld [vmem:[%s7362 + $0xb8] sm:$0xf]
        %v7474 = vld [vmem:[%s7362 + $0xbc] sm:$0x1]
        %v7476 = vshrl.u32 %v7427, 16
        %v7478 = vrot.slane %v7476, 4
        %v7479 = vshll.u32 %v7427, 16
        %v7481 = vrot.slane %v7479, 5
        %v7482 = vor.u32 %v7478, %v7481
        %v7483 = vrot.slane %v7482, 4
        %v7485 = vshll.u32 %v7428, 16
        %v7487 = vrot.slane %v7485, 5
        %v7488 = vsel %vm410, %v7483, %v7487
        %v7489 = vshrl.u32 %v7428, 16
        %v7491 = vrot.slane %v7489, 4
        %v7492 = vor.u32 %v7491, %v7487
        %v7493 = vrot.slane %v7492, 4
        %v7495 = vshll.u32 %v7429, 16
        %v7497 = vrot.slane %v7495, 5
        %v7498 = vsel %vm410, %v7493, %v7497
        %v7500 = vshrl.u32 %v7430, 16
        %v7502 = vrot.slane %v7500, 4
        %v7503 = vshll.u32 %v7430, 16
        %v7505 = vrot.slane %v7503, 5
        %v7506 = vor.u32 %v7502, %v7505
        %v7507 = vrot.slane %v7506, 4
        %v7509 = vshll.u32 %v7431, 16
        %v7511 = vrot.slane %v7509, 5
        %v7512 = vsel %vm410, %v7507, %v7511
        %v7513 = vshrl.u32 %v7431, 16
        %v7515 = vrot.slane %v7513, 4
        %v7516 = vor.u32 %v7515, %v7511
        %v7517 = vrot.slane %v7516, 4
        %v7519 = vshll.u32 %v7432, 16
        %v7521 = vrot.slane %v7519, 5
        %v7522 = vsel %vm410, %v7517, %v7521
        %v7524 = vshrl.u32 %v7433, 16
        %v7526 = vrot.slane %v7524, 4
        %v7527 = vshll.u32 %v7433, 16
        %v7529 = vrot.slane %v7527, 5
        %v7530 = vor.u32 %v7526, %v7529
        %v7531 = vrot.slane %v7530, 4
        %v7533 = vshll.u32 %v7434, 16
        %v7535 = vrot.slane %v7533, 5
        %v7536 = vsel %vm410, %v7531, %v7535
        %v7537 = vshrl.u32 %v7434, 16
        %v7539 = vrot.slane %v7537, 4
        %v7540 = vor.u32 %v7539, %v7535
        %v7541 = vrot.slane %v7540, 4
        %v7543 = vshll.u32 %v7435, 16
        %v7545 = vrot.slane %v7543, 5
        %v7546 = vsel %vm410, %v7541, %v7545
        %v7548 = vshrl.u32 %v7436, 16
        %v7550 = vrot.slane %v7548, 4
        %v7551 = vshll.u32 %v7436, 16
        %v7553 = vrot.slane %v7551, 5
        %v7554 = vor.u32 %v7550, %v7553
        %v7555 = vrot.slane %v7554, 4
        %v7557 = vshll.u32 %v7437, 16
        %v7559 = vrot.slane %v7557, 5
        %v7560 = vsel %vm410, %v7555, %v7559
        %v7561 = vshrl.u32 %v7437, 16
        %v7563 = vrot.slane %v7561, 4
        %v7564 = vor.u32 %v7563, %v7559
        %v7565 = vrot.slane %v7564, 4
        %v7567 = vshll.u32 %v7438, 16
        %v7569 = vrot.slane %v7567, 5
        %v7570 = vsel %vm410, %v7565, %v7569
        %v7572 = vshrl.u32 %v7439, 16
        %v7574 = vrot.slane %v7572, 4
        %v7575 = vshll.u32 %v7439, 16
        %v7577 = vrot.slane %v7575, 5
        %v7578 = vor.u32 %v7574, %v7577
        %v7579 = vrot.slane %v7578, 4
        %v7581 = vshll.u32 %v7440, 16
        %v7583 = vrot.slane %v7581, 5
        %v7584 = vsel %vm410, %v7579, %v7583
        %v7585 = vshrl.u32 %v7440, 16
        %v7587 = vrot.slane %v7585, 4
        %v7588 = vor.u32 %v7587, %v7583
        %v7589 = vrot.slane %v7588, 4
        %v7591 = vshll.u32 %v7441, 16
        %v7593 = vrot.slane %v7591, 5
        %v7594 = vsel %vm410, %v7589, %v7593
        %v7596 = vshrl.u32 %v7442, 16
        %v7598 = vrot.slane %v7596, 4
        %v7599 = vshll.u32 %v7442, 16
        %v7601 = vrot.slane %v7599, 5
        %v7602 = vor.u32 %v7598, %v7601
        %v7603 = vrot.slane %v7602, 4
        %v7605 = vshll.u32 %v7443, 16
        %v7607 = vrot.slane %v7605, 5
        %v7608 = vsel %vm410, %v7603, %v7607
        %v7609 = vshrl.u32 %v7443, 16
        %v7611 = vrot.slane %v7609, 4
        %v7612 = vor.u32 %v7611, %v7607
        %v7613 = vrot.slane %v7612, 4
        %v7615 = vshll.u32 %v7444, 16
        %v7617 = vrot.slane %v7615, 5
        %v7618 = vsel %vm410, %v7613, %v7617
        %v7620 = vshrl.u32 %v7445, 16
        %v7622 = vrot.slane %v7620, 4
        %v7623 = vshll.u32 %v7445, 16
        %v7625 = vrot.slane %v7623, 5
        %v7626 = vor.u32 %v7622, %v7625
        %v7627 = vrot.slane %v7626, 4
        %v7629 = vshll.u32 %v7446, 16
        %v7631 = vrot.slane %v7629, 5
        %v7632 = vsel %vm410, %v7627, %v7631
        %v7633 = vshrl.u32 %v7446, 16
        %v7635 = vrot.slane %v7633, 4
        %v7636 = vor.u32 %v7635, %v7631
        %v7637 = vrot.slane %v7636, 4
        %v7639 = vshll.u32 %v7447, 16
        %v7641 = vrot.slane %v7639, 5
        %v7642 = vsel %vm410, %v7637, %v7641
        %v7644 = vshrl.u32 %v7448, 16
        %v7646 = vrot.slane %v7644, 4
        %v7647 = vshll.u32 %v7448, 16
        %v7649 = vrot.slane %v7647, 5
        %v7650 = vor.u32 %v7646, %v7649
        %v7651 = vrot.slane %v7650, 4
        %v7653 = vshll.u32 %v7449, 16
        %v7655 = vrot.slane %v7653, 5
        %v7656 = vsel %vm410, %v7651, %v7655
        %v7657 = vshrl.u32 %v7449, 16
        %v7659 = vrot.slane %v7657, 4
        %v7660 = vor.u32 %v7659, %v7655
        %v7661 = vrot.slane %v7660, 4
        %v7663 = vshll.u32 %v7450, 16
        %v7665 = vrot.slane %v7663, 5
        %v7666 = vsel %vm410, %v7661, %v7665
        %v7668 = vshrl.u32 %v7451, 16
        %v7670 = vrot.slane %v7668, 4
        %v7671 = vshll.u32 %v7451, 16
        %v7673 = vrot.slane %v7671, 5
        %v7674 = vor.u32 %v7670, %v7673
        %v7675 = vrot.slane %v7674, 4
        %v7677 = vshll.u32 %v7452, 16
        %v7679 = vrot.slane %v7677, 5
        %v7680 = vsel %vm410, %v7675, %v7679
        %v7681 = vshrl.u32 %v7452, 16
        %v7683 = vrot.slane %v7681, 4
        %v7684 = vor.u32 %v7683, %v7679
        %v7685 = vrot.slane %v7684, 4
        %v7687 = vshll.u32 %v7453, 16
        %v7689 = vrot.slane %v7687, 5
        %v7690 = vsel %vm410, %v7685, %v7689
        %v7692 = vshrl.u32 %v7454, 16
        %v7694 = vrot.slane %v7692, 4
        %v7695 = vshll.u32 %v7454, 16
        %v7697 = vrot.slane %v7695, 5
        %v7698 = vor.u32 %v7694, %v7697
        %v7699 = vrot.slane %v7698, 4
        %v7701 = vshll.u32 %v7455, 16
        %v7703 = vrot.slane %v7701, 5
        %v7704 = vsel %vm410, %v7699, %v7703
        %v7705 = vshrl.u32 %v7455, 16
        %v7707 = vrot.slane %v7705, 4
        %v7708 = vor.u32 %v7707, %v7703
        %v7709 = vrot.slane %v7708, 4
        %v7711 = vshll.u32 %v7456, 16
        %v7713 = vrot.slane %v7711, 5
        %v7714 = vsel %vm410, %v7709, %v7713
        %v7716 = vshrl.u32 %v7457, 16
        %v7718 = vrot.slane %v7716, 4
        %v7719 = vshll.u32 %v7457, 16
        %v7721 = vrot.slane %v7719, 5
        %v7722 = vor.u32 %v7718, %v7721
        %v7723 = vrot.slane %v7722, 4
        %v7725 = vshll.u32 %v7458, 16
        %v7727 = vrot.slane %v7725, 5
        %v7728 = vsel %vm410, %v7723, %v7727
        %v7729 = vshrl.u32 %v7458, 16
        %v7731 = vrot.slane %v7729, 4
        %v7732 = vor.u32 %v7731, %v7727
        %v7733 = vrot.slane %v7732, 4
        %v7735 = vshll.u32 %v7459, 16
        %v7737 = vrot.slane %v7735, 5
        %v7738 = vsel %vm410, %v7733, %v7737
        %v7740 = vshrl.u32 %v7460, 16
        %v7742 = vrot.slane %v7740, 4
        %v7743 = vshll.u32 %v7460, 16
        %v7745 = vrot.slane %v7743, 5
        %v7746 = vor.u32 %v7742, %v7745
        %v7747 = vrot.slane %v7746, 4
        %v7749 = vshll.u32 %v7461, 16
        %v7751 = vrot.slane %v7749, 5
        %v7752 = vsel %vm410, %v7747, %v7751
        %v7753 = vshrl.u32 %v7461, 16
        %v7755 = vrot.slane %v7753, 4
        %v7756 = vor.u32 %v7755, %v7751
        %v7757 = vrot.slane %v7756, 4
        %v7759 = vshll.u32 %v7462, 16
        %v7761 = vrot.slane %v7759, 5
        %v7762 = vsel %vm410, %v7757, %v7761
        %v7764 = vshrl.u32 %v7463, 16
        %v7766 = vrot.slane %v7764, 4
        %v7767 = vshll.u32 %v7463, 16
        %v7769 = vrot.slane %v7767, 5
        %v7770 = vor.u32 %v7766, %v7769
        %v7771 = vrot.slane %v7770, 4
        %v7773 = vshll.u32 %v7464, 16
        %v7775 = vrot.slane %v7773, 5
        %v7776 = vsel %vm410, %v7771, %v7775
        %v7777 = vshrl.u32 %v7464, 16
        %v7779 = vrot.slane %v7777, 4
        %v7780 = vor.u32 %v7779, %v7775
        %v7781 = vrot.slane %v7780, 4
        %v7783 = vshll.u32 %v7465, 16
        %v7785 = vrot.slane %v7783, 5
        %v7786 = vsel %vm410, %v7781, %v7785
        %v7788 = vshrl.u32 %v7466, 16
        %v7790 = vrot.slane %v7788, 4
        %v7791 = vshll.u32 %v7466, 16
        %v7793 = vrot.slane %v7791, 5
        %v7794 = vor.u32 %v7790, %v7793
        %v7795 = vrot.slane %v7794, 4
        %v7797 = vshll.u32 %v7467, 16
        %v7799 = vrot.slane %v7797, 5
        %v7800 = vsel %vm410, %v7795, %v7799
        %v7801 = vshrl.u32 %v7467, 16
        %v7803 = vrot.slane %v7801, 4
        %v7804 = vor.u32 %v7803, %v7799
        %v7805 = vrot.slane %v7804, 4
        %v7807 = vshll.u32 %v7468, 16
        %v7809 = vrot.slane %v7807, 5
        %v7810 = vsel %vm410, %v7805, %v7809
        %v7812 = vshrl.u32 %v7469, 16
        %v7814 = vrot.slane %v7812, 4
        %v7815 = vshll.u32 %v7469, 16
        %v7817 = vrot.slane %v7815, 5
        %v7818 = vor.u32 %v7814, %v7817
        %v7819 = vrot.slane %v7818, 4
        %v7821 = vshll.u32 %v7470, 16
        %v7823 = vrot.slane %v7821, 5
        %v7824 = vsel %vm410, %v7819, %v7823
        %v7825 = vshrl.u32 %v7470, 16
        %v7827 = vrot.slane %v7825, 4
        %v7828 = vor.u32 %v7827, %v7823
        %v7829 = vrot.slane %v7828, 4
        %v7831 = vshll.u32 %v7471, 16
        %v7833 = vrot.slane %v7831, 5
        %v7834 = vsel %vm410, %v7829, %v7833
        %v7836 = vshrl.u32 %v7472, 16
        %v7838 = vrot.slane %v7836, 4
        %v7839 = vshll.u32 %v7472, 16
        %v7841 = vrot.slane %v7839, 5
        %v7842 = vor.u32 %v7838, %v7841
        %v7843 = vrot.slane %v7842, 4
        %v7845 = vshll.u32 %v7473, 16
        %v7847 = vrot.slane %v7845, 5
        %v7848 = vsel %vm410, %v7843, %v7847
        %v7849 = vshrl.u32 %v7473, 16
        %v7851 = vrot.slane %v7849, 4
        %v7852 = vor.u32 %v7851, %v7847
        %v7853 = vrot.slane %v7852, 4
        %v7855 = vshll.u32 %v7474, 16
        %v7857 = vrot.slane %v7855, 5
        %v7858 = vsel %vm410, %v7853, %v7857
        %7891 = vst [vmem:[#allocation2 + $0x1c] sm:$0xf] %v7488
        %7892 = vst [vmem:[#allocation2 + $0x40] sm:$0xf] %v7498
        %7893 = vst [vmem:[#allocation2 + $0x64] sm:$0xf] %v7512
        %7894 = vst [vmem:[#allocation2 + $0x88] sm:$0xf] %v7522
        %7895 = vst [vmem:[#allocation2 + $0xac] sm:$0xf] %v7536
        %7896 = vst [vmem:[#allocation2 + $0xd0] sm:$0xf] %v7546
        %7897 = vst [vmem:[#allocation2 + $0xf4] sm:$0xf] %v7560
        %7898 = vst [vmem:[#allocation2 + $0x118] sm:$0xf] %v7570
        %7899 = vst [vmem:[#allocation2 + $0x13c] sm:$0xf] %v7584
        %7900 = vst [vmem:[#allocation2 + $0x160] sm:$0xf] %v7594
        %7901 = vst [vmem:[#allocation2 + $0x184] sm:$0xf] %v7608
        %7902 = vst [vmem:[#allocation2 + $0x1a8] sm:$0xf] %v7618
        %7903 = vst [vmem:[#allocation2 + $0x1cc] sm:$0xf] %v7632
        %7904 = vst [vmem:[#allocation2 + $0x1f0] sm:$0xf] %v7642
        %7905 = vst [vmem:[#allocation2 + $0x214] sm:$0xf] %v7656
        %7906 = vst [vmem:[#allocation2 + $0x238] sm:$0xf] %v7666
        %7907 = vst [vmem:[#allocation2 + $0x25c] sm:$0xf] %v7680
        %7908 = vst [vmem:[#allocation2 + $0x280] sm:$0xf] %v7690
        %7909 = vst [vmem:[#allocation2 + $0x2a4] sm:$0xf] %v7704
        %7910 = vst [vmem:[#allocation2 + $0x2c8] sm:$0xf] %v7714
        %7911 = vst [vmem:[#allocation2 + $0x2ec] sm:$0xf] %v7728
        %7912 = vst [vmem:[#allocation2 + $0x310] sm:$0xf] %v7738
        %7913 = vst [vmem:[#allocation2 + $0x334] sm:$0xf] %v7752
        %7914 = vst [vmem:[#allocation2 + $0x358] sm:$0xf] %v7762
        %7915 = vst [vmem:[#allocation2 + $0x37c] sm:$0xf] %v7776
        %7916 = vst [vmem:[#allocation2 + $0x3a0] sm:$0xf] %v7786
        %7917 = vst [vmem:[#allocation2 + $0x3c4] sm:$0xf] %v7800
        %7918 = vst [vmem:[#allocation2 + $0x3e8] sm:$0xf] %v7810
        %7919 = vst [vmem:[#allocation2 + $0x40c] sm:$0xf] %v7824
        %7920 = vst [vmem:[#allocation2 + $0x430] sm:$0xf] %v7834
        %7921 = vst [vmem:[#allocation2 + $0x454] sm:$0xf] %v7848
        %7922 = vst [vmem:[#allocation2 + $0x478] sm:$0xf] %v7858
        %v7923 = vld [vmem:[%s7362] sm:$0xe]
        %v7924 = vld [vmem:[%s7362 + $0x4] sm:$0xf]
        %v7925 = vld [vmem:[%s7362 + $0x8] sm:$0x1]
        %v7926 = vld [vmem:[%s7362 + $0xc] sm:$0xe]
        %v7927 = vld [vmem:[%s7362 + $0x10] sm:$0xf]
        %v7928 = vld [vmem:[%s7362 + $0x14] sm:$0x1]
        %v7929 = vld [vmem:[%s7362 + $0x18] sm:$0xe]
        %v7930 = vld [vmem:[%s7362 + $0x1c] sm:$0xf]
        %v7931 = vld [vmem:[%s7362 + $0x20] sm:$0x1]
        %v7932 = vld [vmem:[%s7362 + $0x24] sm:$0xe]
        %v7933 = vld [vmem:[%s7362 + $0x28] sm:$0xf]
        %v7934 = vld [vmem:[%s7362 + $0x2c] sm:$0x1]
        %v7935 = vld [vmem:[%s7362 + $0x30] sm:$0xe]
        %v7936 = vld [vmem:[%s7362 + $0x34] sm:$0xf]
        %v7937 = vld [vmem:[%s7362 + $0x38] sm:$0x1]
        %v7938 = vld [vmem:[%s7362 + $0x3c] sm:$0xe]
        %v7939 = vld [vmem:[%s7362 + $0x40] sm:$0xf]
        %v7940 = vld [vmem:[%s7362 + $0x44] sm:$0x1]
        %v7941 = vld [vmem:[%s7362 + $0x48] sm:$0xe]
        %v7942 = vld [vmem:[%s7362 + $0x4c] sm:$0xf]
        %v7943 = vld [vmem:[%s7362 + $0x50] sm:$0x1]
        %v7944 = vld [vmem:[%s7362 + $0x54] sm:$0xe]
        %v7945 = vld [vmem:[%s7362 + $0x58] sm:$0xf]
        %v7946 = vld [vmem:[%s7362 + $0x5c] sm:$0x1]
        %v7947 = vld [vmem:[%s7362 + $0x60] sm:$0xe]
        %v7948 = vld [vmem:[%s7362 + $0x64] sm:$0xf]
        %v7949 = vld [vmem:[%s7362 + $0x68] sm:$0x1]
        %v7950 = vld [vmem:[%s7362 + $0x6c] sm:$0xe]
        %v7951 = vld [vmem:[%s7362 + $0x70] sm:$0xf]
        %v7952 = vld [vmem:[%s7362 + $0x74] sm:$0x1]
        %v7953 = vld [vmem:[%s7362 + $0x78] sm:$0xe]
        %v7954 = vld [vmem:[%s7362 + $0x7c] sm:$0xf]
        %v7955 = vld [vmem:[%s7362 + $0x80] sm:$0x1]
        %v7956 = vld [vmem:[%s7362 + $0x84] sm:$0xe]
        %v7957 = vld [vmem:[%s7362 + $0x88] sm:$0xf]
        %v7958 = vld [vmem:[%s7362 + $0x8c] sm:$0x1]
        %v7959 = vld [vmem:[%s7362 + $0x90] sm:$0xe]
        %v7960 = vld [vmem:[%s7362 + $0x94] sm:$0xf]
        %v7961 = vld [vmem:[%s7362 + $0x98] sm:$0x1]
        %v7962 = vld [vmem:[%s7362 + $0x9c] sm:$0xe]
        %v7963 = vld [vmem:[%s7362 + $0xa0] sm:$0xf]
        %v7964 = vld [vmem:[%s7362 + $0xa4] sm:$0x1]
        %v7965 = vld [vmem:[%s7362 + $0xa8] sm:$0xe]
        %v7966 = vld [vmem:[%s7362 + $0xac] sm:$0xf]
        %v7967 = vld [vmem:[%s7362 + $0xb0] sm:$0x1]
        %v7968 = vld [vmem:[%s7362 + $0xb4] sm:$0xe]
        %v7969 = vld [vmem:[%s7362 + $0xb8] sm:$0xf]
        %v7970 = vld [vmem:[%s7362 + $0xbc] sm:$0x1]
        %v8019 = vrot.slane %v7923, 5
        %v8020 = vrot.slane %v8019, 4
        %v8021 = vrot.slane %v7924, 5
        %v8022 = vsel %vm957, %v8020, %v8021
        %v8023 = vrot.slane %v8021, 4
        %v8024 = vrot.slane %v7925, 5
        %v8025 = vsel %vm957, %v8023, %v8024
        %v8026 = vrot.slane %v7926, 5
        %v8027 = vrot.slane %v8026, 4
        %v8028 = vrot.slane %v7927, 5
        %v8029 = vsel %vm957, %v8027, %v8028
        %v8030 = vrot.slane %v8028, 4
        %v8031 = vrot.slane %v7928, 5
        %v8032 = vsel %vm957, %v8030, %v8031
        %v8033 = vrot.slane %v7929, 5
        %v8034 = vrot.slane %v8033, 4
        %v8035 = vrot.slane %v7930, 5
        %v8036 = vsel %vm957, %v8034, %v8035
        %v8037 = vrot.slane %v8035, 4
        %v8038 = vrot.slane %v7931, 5
        %v8039 = vsel %vm957, %v8037, %v8038
        %v8040 = vrot.slane %v7932, 5
        %v8041 = vrot.slane %v8040, 4
        %v8042 = vrot.slane %v7933, 5
        %v8043 = vsel %vm957, %v8041, %v8042
        %v8044 = vrot.slane %v8042, 4
        %v8045 = vrot.slane %v7934, 5
        %v8046 = vsel %vm957, %v8044, %v8045
        %v8047 = vrot.slane %v7935, 5
        %v8048 = vrot.slane %v8047, 4
        %v8049 = vrot.slane %v7936, 5
        %v8050 = vsel %vm957, %v8048, %v8049
        %v8051 = vrot.slane %v8049, 4
        %v8052 = vrot.slane %v7937, 5
        %v8053 = vsel %vm957, %v8051, %v8052
        %v8054 = vrot.slane %v7938, 5
        %v8055 = vrot.slane %v8054, 4
        %v8056 = vrot.slane %v7939, 5
        %v8057 = vsel %vm957, %v8055, %v8056
        %v8058 = vrot.slane %v8056, 4
        %v8059 = vrot.slane %v7940, 5
        %v8060 = vsel %vm957, %v8058, %v8059
        %v8061 = vrot.slane %v7941, 5
        %v8062 = vrot.slane %v8061, 4
        %v8063 = vrot.slane %v7942, 5
        %v8064 = vsel %vm957, %v8062, %v8063
        %v8065 = vrot.slane %v8063, 4
        %v8066 = vrot.slane %v7943, 5
        %v8067 = vsel %vm957, %v8065, %v8066
        %v8068 = vrot.slane %v7944, 5
        %v8069 = vrot.slane %v8068, 4
        %v8070 = vrot.slane %v7945, 5
        %v8071 = vsel %vm957, %v8069, %v8070
        %v8072 = vrot.slane %v8070, 4
        %v8073 = vrot.slane %v7946, 5
        %v8074 = vsel %vm957, %v8072, %v8073
        %v8075 = vrot.slane %v7947, 5
        %v8076 = vrot.slane %v8075, 4
        %v8077 = vrot.slane %v7948, 5
        %v8078 = vsel %vm957, %v8076, %v8077
        %v8079 = vrot.slane %v8077, 4
        %v8080 = vrot.slane %v7949, 5
        %v8081 = vsel %vm957, %v8079, %v8080
        %v8082 = vrot.slane %v7950, 5
        %v8083 = vrot.slane %v8082, 4
        %v8084 = vrot.slane %v7951, 5
        %v8085 = vsel %vm957, %v8083, %v8084
        %v8086 = vrot.slane %v8084, 4
        %v8087 = vrot.slane %v7952, 5
        %v8088 = vsel %vm957, %v8086, %v8087
        %v8089 = vrot.slane %v7953, 5
        %v8090 = vrot.slane %v8089, 4
        %v8091 = vrot.slane %v7954, 5
        %v8092 = vsel %vm957, %v8090, %v8091
        %v8093 = vrot.slane %v8091, 4
        %v8094 = vrot.slane %v7955, 5
        %v8095 = vsel %vm957, %v8093, %v8094
        %v8096 = vrot.slane %v7956, 5
        %v8097 = vrot.slane %v8096, 4
        %v8098 = vrot.slane %v7957, 5
        %v8099 = vsel %vm957, %v8097, %v8098
        %v8100 = vrot.slane %v8098, 4
        %v8101 = vrot.slane %v7958, 5
        %v8102 = vsel %vm957, %v8100, %v8101
        %v8103 = vrot.slane %v7959, 5
        %v8104 = vrot.slane %v8103, 4
        %v8105 = vrot.slane %v7960, 5
        %v8106 = vsel %vm957, %v8104, %v8105
        %v8107 = vrot.slane %v8105, 4
        %v8108 = vrot.slane %v7961, 5
        %v8109 = vsel %vm957, %v8107, %v8108
        %v8110 = vrot.slane %v7962, 5
        %v8111 = vrot.slane %v8110, 4
        %v8112 = vrot.slane %v7963, 5
        %v8113 = vsel %vm957, %v8111, %v8112
        %v8114 = vrot.slane %v8112, 4
        %v8115 = vrot.slane %v7964, 5
        %v8116 = vsel %vm957, %v8114, %v8115
        %v8117 = vrot.slane %v7965, 5
        %v8118 = vrot.slane %v8117, 4
        %v8119 = vrot.slane %v7966, 5
        %v8120 = vsel %vm957, %v8118, %v8119
        %v8121 = vrot.slane %v8119, 4
        %v8122 = vrot.slane %v7967, 5
        %v8123 = vsel %vm957, %v8121, %v8122
        %v8124 = vrot.slane %v7968, 5
        %v8125 = vrot.slane %v8124, 4
        %v8126 = vrot.slane %v7969, 5
        %v8127 = vsel %vm957, %v8125, %v8126
        %v8128 = vrot.slane %v8126, 4
        %v8129 = vrot.slane %v7970, 5
        %v8130 = vsel %vm957, %v8128, %v8129
        %8163 = vst [vmem:[#allocation2 + $0x20] sm:$0xf] %v8022
        %8164 = vst [vmem:[#allocation2 + $0x44] sm:$0xf] %v8025
        %8165 = vst [vmem:[#allocation2 + $0x68] sm:$0xf] %v8029
        %8166 = vst [vmem:[#allocation2 + $0x8c] sm:$0xf] %v8032
        %8167 = vst [vmem:[#allocation2 + $0xb0] sm:$0xf] %v8036
        %8168 = vst [vmem:[#allocation2 + $0xd4] sm:$0xf] %v8039
        %8169 = vst [vmem:[#allocation2 + $0xf8] sm:$0xf] %v8043
        %8170 = vst [vmem:[#allocation2 + $0x11c] sm:$0xf] %v8046
        %8171 = vst [vmem:[#allocation2 + $0x140] sm:$0xf] %v8050
        %8172 = vst [vmem:[#allocation2 + $0x164] sm:$0xf] %v8053
        %8173 = vst [vmem:[#allocation2 + $0x188] sm:$0xf] %v8057
        %8174 = vst [vmem:[#allocation2 + $0x1ac] sm:$0xf] %v8060
        %8175 = vst [vmem:[#allocation2 + $0x1d0] sm:$0xf] %v8064
        %8176 = vst [vmem:[#allocation2 + $0x1f4] sm:$0xf] %v8067
        %8177 = vst [vmem:[#allocation2 + $0x218] sm:$0xf] %v8071
        %8178 = vst [vmem:[#allocation2 + $0x23c] sm:$0xf] %v8074
        %8179 = vst [vmem:[#allocation2 + $0x260] sm:$0xf] %v8078
        %8180 = vst [vmem:[#allocation2 + $0x284] sm:$0xf] %v8081
        %8181 = vst [vmem:[#allocation2 + $0x2a8] sm:$0xf] %v8085
        %8182 = vst [vmem:[#allocation2 + $0x2cc] sm:$0xf] %v8088
        %8183 = vst [vmem:[#allocation2 + $0x2f0] sm:$0xf] %v8092
        %8184 = vst [vmem:[#allocation2 + $0x314] sm:$0xf] %v8095
        %8185 = vst [vmem:[#allocation2 + $0x338] sm:$0xf] %v8099
        %8186 = vst [vmem:[#allocation2 + $0x35c] sm:$0xf] %v8102
        %8187 = vst [vmem:[#allocation2 + $0x380] sm:$0xf] %v8106
        %8188 = vst [vmem:[#allocation2 + $0x3a4] sm:$0xf] %v8109
        %8189 = vst [vmem:[#allocation2 + $0x3c8] sm:$0xf] %v8113
        %8190 = vst [vmem:[#allocation2 + $0x3ec] sm:$0xf] %v8116
        %8191 = vst [vmem:[#allocation2 + $0x410] sm:$0xf] %v8120
        %8192 = vst [vmem:[#allocation2 + $0x434] sm:$0xf] %v8123
        %8193 = vst [vmem:[#allocation2 + $0x458] sm:$0xf] %v8127
        %8194 = vst [vmem:[#allocation2 + $0x47c] sm:$0xf] %v8130
        %v8195 = vld [vmem:[#allocation2] sm:$0xff]
        %v8196 = vld [vmem:[#allocation2 + $0x8] sm:$0xff]
        %v8197 = vld [vmem:[#allocation2 + $0x10] sm:$0xff]
        %v8198 = vld [vmem:[#allocation2 + $0x18] sm:$0xff]
        %v8199 = vld [vmem:[#allocation2 + $0x20] sm:$0xf]
        %v8200 = vld [vmem:[#allocation2 + $0x24] sm:$0xff]
        %v8201 = vld [vmem:[#allocation2 + $0x2c] sm:$0xff]
        %v8202 = vld [vmem:[#allocation2 + $0x34] sm:$0xff]
        %v8203 = vld [vmem:[#allocation2 + $0x3c] sm:$0xff]
        %v8204 = vld [vmem:[#allocation2 + $0x44] sm:$0xf]
        %v8205 = vld [vmem:[#allocation2 + $0x48] sm:$0xff]
        %v8206 = vld [vmem:[#allocation2 + $0x50] sm:$0xff]
        %v8207 = vld [vmem:[#allocation2 + $0x58] sm:$0xff]
        %v8208 = vld [vmem:[#allocation2 + $0x60] sm:$0xff]
        %v8209 = vld [vmem:[#allocation2 + $0x68] sm:$0xf]
        %v8210 = vld [vmem:[#allocation2 + $0x6c] sm:$0xff]
        %v8211 = vld [vmem:[#allocation2 + $0x74] sm:$0xff]
        %v8212 = vld [vmem:[#allocation2 + $0x7c] sm:$0xff]
        %v8213 = vld [vmem:[#allocation2 + $0x84] sm:$0xff]
        %v8214 = vld [vmem:[#allocation2 + $0x8c] sm:$0xf]
        %v8215 = vld [vmem:[#allocation2 + $0x90] sm:$0xff]
        %v8216 = vld [vmem:[#allocation2 + $0x98] sm:$0xff]
        %v8217 = vld [vmem:[#allocation2 + $0xa0] sm:$0xff]
        %v8218 = vld [vmem:[#allocation2 + $0xa8] sm:$0xff]
        %v8219 = vld [vmem:[#allocation2 + $0xb0] sm:$0xf]
        %v8220 = vld [vmem:[#allocation2 + $0xb4] sm:$0xff]
        %v8221 = vld [vmem:[#allocation2 + $0xbc] sm:$0xff]
        %v8222 = vld [vmem:[#allocation2 + $0xc4] sm:$0xff]
        %v8223 = vld [vmem:[#allocation2 + $0xcc] sm:$0xff]
        %v8224 = vld [vmem:[#allocation2 + $0xd4] sm:$0xf]
        %v8225 = vld [vmem:[#allocation2 + $0xd8] sm:$0xff]
        %v8226 = vld [vmem:[#allocation2 + $0xe0] sm:$0xff]
        %v8227 = vld [vmem:[#allocation2 + $0xe8] sm:$0xff]
        %v8228 = vld [vmem:[#allocation2 + $0xf0] sm:$0xff]
        %v8229 = vld [vmem:[#allocation2 + $0xf8] sm:$0xf]
        %v8230 = vld [vmem:[#allocation2 + $0xfc] sm:$0xff]
        %v8231 = vld [vmem:[#allocation2 + $0x104] sm:$0xff]
        %v8232 = vld [vmem:[#allocation2 + $0x10c] sm:$0xff]
        %v8233 = vld [vmem:[#allocation2 + $0x114] sm:$0xff]
        %v8234 = vld [vmem:[#allocation2 + $0x11c] sm:$0xf]
        %v8235 = vld [vmem:[#allocation2 + $0x120] sm:$0xff]
        %v8236 = vld [vmem:[#allocation2 + $0x128] sm:$0xff]
        %v8237 = vld [vmem:[#allocation2 + $0x130] sm:$0xff]
        %v8238 = vld [vmem:[#allocation2 + $0x138] sm:$0xff]
        %v8239 = vld [vmem:[#allocation2 + $0x140] sm:$0xf]
        %v8240 = vld [vmem:[#allocation2 + $0x144] sm:$0xff]
        %v8241 = vld [vmem:[#allocation2 + $0x14c] sm:$0xff]
        %v8242 = vld [vmem:[#allocation2 + $0x154] sm:$0xff]
        %v8243 = vld [vmem:[#allocation2 + $0x15c] sm:$0xff]
        %v8244 = vld [vmem:[#allocation2 + $0x164] sm:$0xf]
        %v8245 = vld [vmem:[#allocation2 + $0x168] sm:$0xff]
        %v8246 = vld [vmem:[#allocation2 + $0x170] sm:$0xff]
        %v8247 = vld [vmem:[#allocation2 + $0x178] sm:$0xff]
        %v8248 = vld [vmem:[#allocation2 + $0x180] sm:$0xff]
        %v8249 = vld [vmem:[#allocation2 + $0x188] sm:$0xf]
        %v8250 = vld [vmem:[#allocation2 + $0x18c] sm:$0xff]
        %v8251 = vld [vmem:[#allocation2 + $0x194] sm:$0xff]
        %v8252 = vld [vmem:[#allocation2 + $0x19c] sm:$0xff]
        %v8253 = vld [vmem:[#allocation2 + $0x1a4] sm:$0xff]
        %v8254 = vld [vmem:[#allocation2 + $0x1ac] sm:$0xf]
        %v8255 = vld [vmem:[#allocation2 + $0x1b0] sm:$0xff]
        %v8256 = vld [vmem:[#allocation2 + $0x1b8] sm:$0xff]
        %v8257 = vld [vmem:[#allocation2 + $0x1c0] sm:$0xff]
        %v8258 = vld [vmem:[#allocation2 + $0x1c8] sm:$0xff]
        %v8259 = vld [vmem:[#allocation2 + $0x1d0] sm:$0xf]
        %v8260 = vld [vmem:[#allocation2 + $0x1d4] sm:$0xff]
        %v8261 = vld [vmem:[#allocation2 + $0x1dc] sm:$0xff]
        %v8262 = vld [vmem:[#allocation2 + $0x1e4] sm:$0xff]
        %v8263 = vld [vmem:[#allocation2 + $0x1ec] sm:$0xff]
        %v8264 = vld [vmem:[#allocation2 + $0x1f4] sm:$0xf]
        %v8265 = vld [vmem:[#allocation2 + $0x1f8] sm:$0xff]
        %v8266 = vld [vmem:[#allocation2 + $0x200] sm:$0xff]
        %v8267 = vld [vmem:[#allocation2 + $0x208] sm:$0xff]
        %v8268 = vld [vmem:[#allocation2 + $0x210] sm:$0xff]
        %v8269 = vld [vmem:[#allocation2 + $0x218] sm:$0xf]
        %v8270 = vld [vmem:[#allocation2 + $0x21c] sm:$0xff]
        %v8271 = vld [vmem:[#allocation2 + $0x224] sm:$0xff]
        %v8272 = vld [vmem:[#allocation2 + $0x22c] sm:$0xff]
        %v8273 = vld [vmem:[#allocation2 + $0x234] sm:$0xff]
        %v8274 = vld [vmem:[#allocation2 + $0x23c] sm:$0xf]
        %v8275 = vld [vmem:[#allocation2 + $0x240] sm:$0xff]
        %v8276 = vld [vmem:[#allocation2 + $0x248] sm:$0xff]
        %v8277 = vld [vmem:[#allocation2 + $0x250] sm:$0xff]
        %v8278 = vld [vmem:[#allocation2 + $0x258] sm:$0xff]
        %v8279 = vld [vmem:[#allocation2 + $0x260] sm:$0xf]
        %v8280 = vld [vmem:[#allocation2 + $0x264] sm:$0xff]
        %v8281 = vld [vmem:[#allocation2 + $0x26c] sm:$0xff]
        %v8282 = vld [vmem:[#allocation2 + $0x274] sm:$0xff]
        %v8283 = vld [vmem:[#allocation2 + $0x27c] sm:$0xff]
        %v8284 = vld [vmem:[#allocation2 + $0x284] sm:$0xf]
        %v8285 = vld [vmem:[#allocation2 + $0x288] sm:$0xff]
        %v8286 = vld [vmem:[#allocation2 + $0x290] sm:$0xff]
        %v8287 = vld [vmem:[#allocation2 + $0x298] sm:$0xff]
        %v8288 = vld [vmem:[#allocation2 + $0x2a0] sm:$0xff]
        %v8289 = vld [vmem:[#allocation2 + $0x2a8] sm:$0xf]
        %v8290 = vld [vmem:[#allocation2 + $0x2ac] sm:$0xff]
        %v8291 = vld [vmem:[#allocation2 + $0x2b4] sm:$0xff]
        %v8292 = vld [vmem:[#allocation2 + $0x2bc] sm:$0xff]
        %v8293 = vld [vmem:[#allocation2 + $0x2c4] sm:$0xff]
        %v8294 = vld [vmem:[#allocation2 + $0x2cc] sm:$0xf]
        %v8295 = vld [vmem:[#allocation2 + $0x2d0] sm:$0xff]
        %v8296 = vld [vmem:[#allocation2 + $0x2d8] sm:$0xff]
        %v8297 = vld [vmem:[#allocation2 + $0x2e0] sm:$0xff]
        %v8298 = vld [vmem:[#allocation2 + $0x2e8] sm:$0xff]
        %v8299 = vld [vmem:[#allocation2 + $0x2f0] sm:$0xf]
        %v8300 = vld [vmem:[#allocation2 + $0x2f4] sm:$0xff]
        %v8301 = vld [vmem:[#allocation2 + $0x2fc] sm:$0xff]
        %v8302 = vld [vmem:[#allocation2 + $0x304] sm:$0xff]
        %v8303 = vld [vmem:[#allocation2 + $0x30c] sm:$0xff]
        %v8304 = vld [vmem:[#allocation2 + $0x314] sm:$0xf]
        %v8305 = vld [vmem:[#allocation2 + $0x318] sm:$0xff]
        %v8306 = vld [vmem:[#allocation2 + $0x320] sm:$0xff]
        %v8307 = vld [vmem:[#allocation2 + $0x328] sm:$0xff]
        %v8308 = vld [vmem:[#allocation2 + $0x330] sm:$0xff]
        %v8309 = vld [vmem:[#allocation2 + $0x338] sm:$0xf]
        %v8310 = vld [vmem:[#allocation2 + $0x33c] sm:$0xff]
        %v8311 = vld [vmem:[#allocation2 + $0x344] sm:$0xff]
        %v8312 = vld [vmem:[#allocation2 + $0x34c] sm:$0xff]
        %v8313 = vld [vmem:[#allocation2 + $0x354] sm:$0xff]
        %v8314 = vld [vmem:[#allocation2 + $0x35c] sm:$0xf]
        %v8315 = vld [vmem:[#allocation2 + $0x360] sm:$0xff]
        %v8316 = vld [vmem:[#allocation2 + $0x368] sm:$0xff]
        %v8317 = vld [vmem:[#allocation2 + $0x370] sm:$0xff]
        %v8318 = vld [vmem:[#allocation2 + $0x378] sm:$0xff]
        %v8319 = vld [vmem:[#allocation2 + $0x380] sm:$0xf]
        %v8320 = vld [vmem:[#allocation2 + $0x384] sm:$0xff]
        %v8321 = vld [vmem:[#allocation2 + $0x38c] sm:$0xff]
        %v8322 = vld [vmem:[#allocation2 + $0x394] sm:$0xff]
        %v8323 = vld [vmem:[#allocation2 + $0x39c] sm:$0xff]
        %v8324 = vld [vmem:[#allocation2 + $0x3a4] sm:$0xf]
        %v8325 = vld [vmem:[#allocation2 + $0x3a8] sm:$0xff]
        %v8326 = vld [vmem:[#allocation2 + $0x3b0] sm:$0xff]
        %v8327 = vld [vmem:[#allocation2 + $0x3b8] sm:$0xff]
        %v8328 = vld [vmem:[#allocation2 + $0x3c0] sm:$0xff]
        %v8329 = vld [vmem:[#allocation2 + $0x3c8] sm:$0xf]
        %v8330 = vld [vmem:[#allocation2 + $0x3cc] sm:$0xff]
        %v8331 = vld [vmem:[#allocation2 + $0x3d4] sm:$0xff]
        %v8332 = vld [vmem:[#allocation2 + $0x3dc] sm:$0xff]
        %v8333 = vld [vmem:[#allocation2 + $0x3e4] sm:$0xff]
        %v8334 = vld [vmem:[#allocation2 + $0x3ec] sm:$0xf]
        %v8335 = vld [vmem:[#allocation2 + $0x3f0] sm:$0xff]
        %v8336 = vld [vmem:[#allocation2 + $0x3f8] sm:$0xff]
        %v8337 = vld [vmem:[#allocation2 + $0x400] sm:$0xff]
        %v8338 = vld [vmem:[#allocation2 + $0x408] sm:$0xff]
        %v8339 = vld [vmem:[#allocation2 + $0x410] sm:$0xf]
        %v8340 = vld [vmem:[#allocation2 + $0x414] sm:$0xff]
        %v8341 = vld [vmem:[#allocation2 + $0x41c] sm:$0xff]
        %v8342 = vld [vmem:[#allocation2 + $0x424] sm:$0xff]
        %v8343 = vld [vmem:[#allocation2 + $0x42c] sm:$0xff]
        %v8344 = vld [vmem:[#allocation2 + $0x434] sm:$0xf]
        %v8345 = vld [vmem:[#allocation2 + $0x438] sm:$0xff]
        %v8346 = vld [vmem:[#allocation2 + $0x440] sm:$0xff]
        %v8347 = vld [vmem:[#allocation2 + $0x448] sm:$0xff]
        %v8348 = vld [vmem:[#allocation2 + $0x450] sm:$0xff]
        %v8349 = vld [vmem:[#allocation2 + $0x458] sm:$0xf]
        %v8350 = vld [vmem:[#allocation2 + $0x45c] sm:$0xff]
        %v8351 = vld [vmem:[#allocation2 + $0x464] sm:$0xff]
        %v8352 = vld [vmem:[#allocation2 + $0x46c] sm:$0xff]
        %v8353 = vld [vmem:[#allocation2 + $0x474] sm:$0xff]
        %v8354 = vld [vmem:[#allocation2 + $0x47c] sm:$0xf]
        %v8355 = vld [vmem:[#allocation4] sm:$0xf]
        %v8356 = vld [vmem:[#allocation4 + $0x4] sm:$0xf]
        %v8357 = vld [vmem:[#allocation4 + $0x8] sm:$0xf]
        %v8358 = vld [vmem:[#allocation4 + $0xc] sm:$0xf]
        %v8359 = vld [vmem:[#allocation4 + $0x10] sm:$0xf]
        %v8360 = vld [vmem:[#allocation4 + $0x14] sm:$0xf]
        %v8361 = vld [vmem:[#allocation4 + $0x18] sm:$0xf]
        %v8362 = vld [vmem:[#allocation4 + $0x1c] sm:$0xf]
        %v8363 = vld [vmem:[#allocation4 + $0x20] sm:$0xf]
        %v8364 = vld [vmem:[#allocation4 + $0x24] sm:$0xf]
        %v8365 = vld [vmem:[#allocation4 + $0x28] sm:$0xf]
        %v8366 = vld [vmem:[#allocation4 + $0x2c] sm:$0xf]
        %v8367 = vld [vmem:[#allocation4 + $0x30] sm:$0xf]
        %v8368 = vld [vmem:[#allocation4 + $0x34] sm:$0xf]
        %v8369 = vld [vmem:[#allocation4 + $0x38] sm:$0xf]
        %v8370 = vld [vmem:[#allocation4 + $0x3c] sm:$0xf]
        %v8371 = vld [vmem:[#allocation4 + $0x40] sm:$0xf]
        %v8372 = vld [vmem:[#allocation4 + $0x44] sm:$0xf]
        %v8373 = vld [vmem:[#allocation4 + $0x48] sm:$0xf]
        %v8374 = vld [vmem:[#allocation4 + $0x4c] sm:$0xf]
        %v8375 = vld [vmem:[#allocation4 + $0x50] sm:$0xf]
        %v8376 = vld [vmem:[#allocation4 + $0x54] sm:$0xf]
        %v8377 = vld [vmem:[#allocation4 + $0x58] sm:$0xf]
        %v8378 = vld [vmem:[#allocation4 + $0x5c] sm:$0xf]
        %v8379 = vld [vmem:[#allocation4 + $0x60] sm:$0xf]
        %v8380 = vld [vmem:[#allocation4 + $0x64] sm:$0xf]
        %v8381 = vld [vmem:[#allocation4 + $0x68] sm:$0xf]
        %v8382 = vld [vmem:[#allocation4 + $0x6c] sm:$0xf]
        %v8383 = vld [vmem:[#allocation4 + $0x70] sm:$0xf]
        %v8384 = vld [vmem:[#allocation4 + $0x74] sm:$0xf]
        %v8385 = vld [vmem:[#allocation4 + $0x78] sm:$0xf]
        %v8386 = vld [vmem:[#allocation4 + $0x7c] sm:$0xf]
        %v8387 = vld [vmem:[#allocation4 + $0x80] sm:$0xf]
        %v8388 = vld [vmem:[#allocation4 + $0x84] sm:$0xf]
        %v8389 = vld [vmem:[#allocation4 + $0x88] sm:$0xf]
        %v8390 = vld [vmem:[#allocation4 + $0x8c] sm:$0xf]
        %v8391 = vld [vmem:[#allocation4 + $0x90] sm:$0xf]
        %v8392 = vld [vmem:[#allocation4 + $0x94] sm:$0xf]
        %v8393 = vld [vmem:[#allocation4 + $0x98] sm:$0xf]
        %v8394 = vld [vmem:[#allocation4 + $0x9c] sm:$0xf]
        %v8395 = vld [vmem:[#allocation4 + $0xa0] sm:$0xf]
        %v8396 = vld [vmem:[#allocation4 + $0xa4] sm:$0xf]
        %v8397 = vld [vmem:[#allocation4 + $0xa8] sm:$0xf]
        %v8398 = vld [vmem:[#allocation4 + $0xac] sm:$0xf]
        %v8399 = vld [vmem:[#allocation4 + $0xb0] sm:$0xf]
        %v8400 = vld [vmem:[#allocation4 + $0xb4] sm:$0xf]
        %v8401 = vld [vmem:[#allocation4 + $0xb8] sm:$0xf]
        %v8402 = vld [vmem:[#allocation4 + $0xbc] sm:$0xf]
        %v8403 = vld [vmem:[#allocation4 + $0xc0] sm:$0xf]
        %v8404 = vld [vmem:[#allocation4 + $0xc4] sm:$0xf]
        %v8405 = vld [vmem:[#allocation4 + $0xc8] sm:$0xf]
        %v8406 = vld [vmem:[#allocation4 + $0xcc] sm:$0xf]
        %v8407 = vld [vmem:[#allocation4 + $0xd0] sm:$0xf]
        %v8408 = vld [vmem:[#allocation4 + $0xd4] sm:$0xf]
        %v8409 = vld [vmem:[#allocation4 + $0xd8] sm:$0xf]
        %v8410 = vld [vmem:[#allocation4 + $0xdc] sm:$0xf]
        %v8411 = vld [vmem:[#allocation4 + $0xe0] sm:$0xf]
        %v8412 = vld [vmem:[#allocation4 + $0xe4] sm:$0xf]
        %v8413 = vld [vmem:[#allocation4 + $0xe8] sm:$0xf]
        %v8414 = vld [vmem:[#allocation4 + $0xec] sm:$0xf]
        %v8415 = vld [vmem:[#allocation4 + $0xf0] sm:$0xf]
        %v8416 = vld [vmem:[#allocation4 + $0xf4] sm:$0xf]
        %v8417 = vld [vmem:[#allocation4 + $0xf8] sm:$0xf]
        %v8418 = vld [vmem:[#allocation4 + $0xfc] sm:$0xf]
        %v8419 = vld [vmem:[#allocation4 + $0x100] sm:$0xf]
        %v8420 = vld [vmem:[#allocation4 + $0x104] sm:$0xf]
        %v8421 = vld [vmem:[#allocation4 + $0x108] sm:$0xf]
        %v8422 = vld [vmem:[#allocation4 + $0x10c] sm:$0xf]
        %v8423 = vld [vmem:[#allocation4 + $0x110] sm:$0xf]
        %v8424 = vld [vmem:[#allocation4 + $0x114] sm:$0xf]
        %v8425 = vld [vmem:[#allocation4 + $0x118] sm:$0xf]
        %v8426 = vld [vmem:[#allocation4 + $0x11c] sm:$0xf]
        %v8427 = vld [vmem:[#allocation4 + $0x120] sm:$0xf]
        %v8428 = vld [vmem:[#allocation4 + $0x124] sm:$0xf]
        %v8429 = vld [vmem:[#allocation4 + $0x128] sm:$0xf]
        %v8430 = vld [vmem:[#allocation4 + $0x12c] sm:$0xf]
        %v8431 = vld [vmem:[#allocation4 + $0x130] sm:$0xf]
        %v8432 = vld [vmem:[#allocation4 + $0x134] sm:$0xf]
        %v8433 = vld [vmem:[#allocation4 + $0x138] sm:$0xf]
        %v8434 = vld [vmem:[#allocation4 + $0x13c] sm:$0xf]
        %v8435 = vld [vmem:[#allocation4 + $0x140] sm:$0xf]
        %v8436 = vld [vmem:[#allocation4 + $0x144] sm:$0xf]
        %v8437 = vld [vmem:[#allocation4 + $0x148] sm:$0xf]
        %v8438 = vld [vmem:[#allocation4 + $0x14c] sm:$0xf]
        %v8439 = vld [vmem:[#allocation4 + $0x150] sm:$0xf]
        %v8440 = vld [vmem:[#allocation4 + $0x154] sm:$0xf]
        %v8441 = vld [vmem:[#allocation4 + $0x158] sm:$0xf]
        %v8442 = vld [vmem:[#allocation4 + $0x15c] sm:$0xf]
        %v8443 = vld [vmem:[#allocation4 + $0x160] sm:$0xf]
        %v8444 = vld [vmem:[#allocation4 + $0x164] sm:$0xf]
        %v8445 = vld [vmem:[#allocation4 + $0x168] sm:$0xf]
        %v8446 = vld [vmem:[#allocation4 + $0x16c] sm:$0xf]
        %v8447 = vld [vmem:[#allocation4 + $0x170] sm:$0xf]
        %v8448 = vld [vmem:[#allocation4 + $0x174] sm:$0xf]
        %v8449 = vld [vmem:[#allocation4 + $0x178] sm:$0xf]
        %v8450 = vld [vmem:[#allocation4 + $0x17c] sm:$0xf]
        %v8451 = vld [vmem:[#allocation4 + $0x180] sm:$0xf]
        %v8452 = vld [vmem:[#allocation4 + $0x184] sm:$0xf]
        %v8453 = vld [vmem:[#allocation4 + $0x188] sm:$0xf]
        %v8454 = vld [vmem:[#allocation4 + $0x18c] sm:$0xf]
        %v8455 = vld [vmem:[#allocation4 + $0x190] sm:$0xf]
        %v8456 = vld [vmem:[#allocation4 + $0x194] sm:$0xf]
        %v8457 = vld [vmem:[#allocation4 + $0x198] sm:$0xf]
        %v8458 = vld [vmem:[#allocation4 + $0x19c] sm:$0xf]
        %v8459 = vld [vmem:[#allocation4 + $0x1a0] sm:$0xf]
        %v8460 = vld [vmem:[#allocation4 + $0x1a4] sm:$0xf]
        %v8461 = vld [vmem:[#allocation4 + $0x1a8] sm:$0xf]
        %v8462 = vld [vmem:[#allocation4 + $0x1ac] sm:$0xf]
        %v8463 = vld [vmem:[#allocation4 + $0x1b0] sm:$0xf]
        %v8464 = vld [vmem:[#allocation4 + $0x1b4] sm:$0xf]
        %v8465 = vld [vmem:[#allocation4 + $0x1b8] sm:$0xf]
        %v8466 = vld [vmem:[#allocation4 + $0x1bc] sm:$0xf]
        %v8467 = vld [vmem:[#allocation4 + $0x1c0] sm:$0xf]
        %v8468 = vld [vmem:[#allocation4 + $0x1c4] sm:$0xf]
        %v8469 = vld [vmem:[#allocation4 + $0x1c8] sm:$0xf]
        %v8470 = vld [vmem:[#allocation4 + $0x1cc] sm:$0xf]
        %v8471 = vld [vmem:[#allocation4 + $0x1d0] sm:$0xf]
        %v8472 = vld [vmem:[#allocation4 + $0x1d4] sm:$0xf]
        %v8473 = vld [vmem:[#allocation4 + $0x1d8] sm:$0xf]
        %v8474 = vld [vmem:[#allocation4 + $0x1dc] sm:$0xf]
        %v8475 = vld [vmem:[#allocation4 + $0x1e0] sm:$0xf]
        %v8476 = vld [vmem:[#allocation4 + $0x1e4] sm:$0xf]
        %v8477 = vld [vmem:[#allocation4 + $0x1e8] sm:$0xf]
        %v8478 = vld [vmem:[#allocation4 + $0x1ec] sm:$0xf]
        %v8479 = vld [vmem:[#allocation4 + $0x1f0] sm:$0xf]
        %v8480 = vld [vmem:[#allocation4 + $0x1f4] sm:$0xf]
        %v8481 = vld [vmem:[#allocation4 + $0x1f8] sm:$0xf]
        %v8482 = vld [vmem:[#allocation4 + $0x1fc] sm:$0xf]
        %v8483 = vld [vmem:[#allocation4 + $0x200] sm:$0xf]
        %v8484 = vld [vmem:[#allocation4 + $0x204] sm:$0xf]
        %v8485 = vld [vmem:[#allocation4 + $0x208] sm:$0xf]
        %v8486 = vld [vmem:[#allocation4 + $0x20c] sm:$0xf]
        %v8487 = vld [vmem:[#allocation4 + $0x210] sm:$0xf]
        %v8488 = vld [vmem:[#allocation4 + $0x214] sm:$0xf]
        %v8489 = vld [vmem:[#allocation4 + $0x218] sm:$0xf]
        %v8490 = vld [vmem:[#allocation4 + $0x21c] sm:$0xf]
        %v8491 = vld [vmem:[#allocation4 + $0x220] sm:$0xf]
        %v8492 = vld [vmem:[#allocation4 + $0x224] sm:$0xf]
        %v8493 = vld [vmem:[#allocation4 + $0x228] sm:$0xf]
        %v8494 = vld [vmem:[#allocation4 + $0x22c] sm:$0xf]
        %v8495 = vld [vmem:[#allocation4 + $0x230] sm:$0xf]
        %v8496 = vld [vmem:[#allocation4 + $0x234] sm:$0xf]
        %v8497 = vld [vmem:[#allocation4 + $0x238] sm:$0xf]
        %v8498 = vld [vmem:[#allocation4 + $0x23c] sm:$0xf]
        %v8499 = vld [vmem:[%s4] sm:$0x1]
        %v8501 = vperm.slane %v8499, 0
        %v8663 = vunpack.c.l.b16 %v8195
        %v8664 = vunpack.c.h.b16 %v8195
        %v8665 = vunpack.c.l.b16 %v8196
        %v8666 = vunpack.c.h.b16 %v8196
        %v8667 = vunpack.c.l.b16 %v8197
        %v8668 = vunpack.c.h.b16 %v8197
        %v8669 = vunpack.c.l.b16 %v8198
        %v8670 = vunpack.c.h.b16 %v8198
        %v8671 = vunpack.c.l.b16 %v8199
        %v8672 = vunpack.c.l.b16 %v8200
        %v8673 = vunpack.c.h.b16 %v8200
        %v8674 = vunpack.c.l.b16 %v8201
        %v8675 = vunpack.c.h.b16 %v8201
        %v8676 = vunpack.c.l.b16 %v8202
        %v8677 = vunpack.c.h.b16 %v8202
        %v8678 = vunpack.c.l.b16 %v8203
        %v8679 = vunpack.c.h.b16 %v8203
        %v8680 = vunpack.c.l.b16 %v8204
        %v8681 = vunpack.c.l.b16 %v8205
        %v8682 = vunpack.c.h.b16 %v8205
        %v8683 = vunpack.c.l.b16 %v8206
        %v8684 = vunpack.c.h.b16 %v8206
        %v8685 = vunpack.c.l.b16 %v8207
        %v8686 = vunpack.c.h.b16 %v8207
        %v8687 = vunpack.c.l.b16 %v8208
        %v8688 = vunpack.c.h.b16 %v8208
        %v8689 = vunpack.c.l.b16 %v8209
        %v8690 = vunpack.c.l.b16 %v8210
        %v8691 = vunpack.c.h.b16 %v8210
        %v8692 = vunpack.c.l.b16 %v8211
        %v8693 = vunpack.c.h.b16 %v8211
        %v8694 = vunpack.c.l.b16 %v8212
        %v8695 = vunpack.c.h.b16 %v8212
        %v8696 = vunpack.c.l.b16 %v8213
        %v8697 = vunpack.c.h.b16 %v8213
        %v8698 = vunpack.c.l.b16 %v8214
        %v8699 = vunpack.c.l.b16 %v8215
        %v8700 = vunpack.c.h.b16 %v8215
        %v8701 = vunpack.c.l.b16 %v8216
        %v8702 = vunpack.c.h.b16 %v8216
        %v8703 = vunpack.c.l.b16 %v8217
        %v8704 = vunpack.c.h.b16 %v8217
        %v8705 = vunpack.c.l.b16 %v8218
        %v8706 = vunpack.c.h.b16 %v8218
        %v8707 = vunpack.c.l.b16 %v8219
        %v8708 = vunpack.c.l.b16 %v8220
        %v8709 = vunpack.c.h.b16 %v8220
        %v8710 = vunpack.c.l.b16 %v8221
        %v8711 = vunpack.c.h.b16 %v8221
        %v8712 = vunpack.c.l.b16 %v8222
        %v8713 = vunpack.c.h.b16 %v8222
        %v8714 = vunpack.c.l.b16 %v8223
        %v8715 = vunpack.c.h.b16 %v8223
        %v8716 = vunpack.c.l.b16 %v8224
        %v8717 = vunpack.c.l.b16 %v8225
        %v8718 = vunpack.c.h.b16 %v8225
        %v8719 = vunpack.c.l.b16 %v8226
        %v8720 = vunpack.c.h.b16 %v8226
        %v8721 = vunpack.c.l.b16 %v8227
        %v8722 = vunpack.c.h.b16 %v8227
        %v8723 = vunpack.c.l.b16 %v8228
        %v8724 = vunpack.c.h.b16 %v8228
        %v8725 = vunpack.c.l.b16 %v8229
        %v8726 = vunpack.c.l.b16 %v8230
        %v8727 = vunpack.c.h.b16 %v8230
        %v8728 = vunpack.c.l.b16 %v8231
        %v8729 = vunpack.c.h.b16 %v8231
        %v8730 = vunpack.c.l.b16 %v8232
        %v8731 = vunpack.c.h.b16 %v8232
        %v8732 = vunpack.c.l.b16 %v8233
        %v8733 = vunpack.c.h.b16 %v8233
        %v8734 = vunpack.c.l.b16 %v8234
        %v8735 = vunpack.c.l.b16 %v8235
        %v8736 = vunpack.c.h.b16 %v8235
        %v8737 = vunpack.c.l.b16 %v8236
        %v8738 = vunpack.c.h.b16 %v8236
        %v8739 = vunpack.c.l.b16 %v8237
        %v8740 = vunpack.c.h.b16 %v8237
        %v8741 = vunpack.c.l.b16 %v8238
        %v8742 = vunpack.c.h.b16 %v8238
        %v8743 = vunpack.c.l.b16 %v8239
        %v8744 = vunpack.c.l.b16 %v8240
        %v8745 = vunpack.c.h.b16 %v8240
        %v8746 = vunpack.c.l.b16 %v8241
        %v8747 = vunpack.c.h.b16 %v8241
        %v8748 = vunpack.c.l.b16 %v8242
        %v8749 = vunpack.c.h.b16 %v8242
        %v8750 = vunpack.c.l.b16 %v8243
        %v8751 = vunpack.c.h.b16 %v8243
        %v8752 = vunpack.c.l.b16 %v8244
        %v8753 = vunpack.c.l.b16 %v8245
        %v8754 = vunpack.c.h.b16 %v8245
        %v8755 = vunpack.c.l.b16 %v8246
        %v8756 = vunpack.c.h.b16 %v8246
        %v8757 = vunpack.c.l.b16 %v8247
        %v8758 = vunpack.c.h.b16 %v8247
        %v8759 = vunpack.c.l.b16 %v8248
        %v8760 = vunpack.c.h.b16 %v8248
        %v8761 = vunpack.c.l.b16 %v8249
        %v8762 = vunpack.c.l.b16 %v8250
        %v8763 = vunpack.c.h.b16 %v8250
        %v8764 = vunpack.c.l.b16 %v8251
        %v8765 = vunpack.c.h.b16 %v8251
        %v8766 = vunpack.c.l.b16 %v8252
        %v8767 = vunpack.c.h.b16 %v8252
        %v8768 = vunpack.c.l.b16 %v8253
        %v8769 = vunpack.c.h.b16 %v8253
        %v8770 = vunpack.c.l.b16 %v8254
        %v8771 = vunpack.c.l.b16 %v8255
        %v8772 = vunpack.c.h.b16 %v8255
        %v8773 = vunpack.c.l.b16 %v8256
        %v8774 = vunpack.c.h.b16 %v8256
        %v8775 = vunpack.c.l.b16 %v8257
        %v8776 = vunpack.c.h.b16 %v8257
        %v8777 = vunpack.c.l.b16 %v8258
        %v8778 = vunpack.c.h.b16 %v8258
        %v8779 = vunpack.c.l.b16 %v8259
        %v8780 = vunpack.c.l.b16 %v8260
        %v8781 = vunpack.c.h.b16 %v8260
        %v8782 = vunpack.c.l.b16 %v8261
        %v8783 = vunpack.c.h.b16 %v8261
        %v8784 = vunpack.c.l.b16 %v8262
        %v8785 = vunpack.c.h.b16 %v8262
        %v8786 = vunpack.c.l.b16 %v8263
        %v8787 = vunpack.c.h.b16 %v8263
        %v8788 = vunpack.c.l.b16 %v8264
        %v8789 = vunpack.c.l.b16 %v8265
        %v8790 = vunpack.c.h.b16 %v8265
        %v8791 = vunpack.c.l.b16 %v8266
        %v8792 = vunpack.c.h.b16 %v8266
        %v8793 = vunpack.c.l.b16 %v8267
        %v8794 = vunpack.c.h.b16 %v8267
        %v8795 = vunpack.c.l.b16 %v8268
        %v8796 = vunpack.c.h.b16 %v8268
        %v8797 = vunpack.c.l.b16 %v8269
        %v8798 = vunpack.c.l.b16 %v8270
        %v8799 = vunpack.c.h.b16 %v8270
        %v8800 = vunpack.c.l.b16 %v8271
        %v8801 = vunpack.c.h.b16 %v8271
        %v8802 = vunpack.c.l.b16 %v8272
        %v8803 = vunpack.c.h.b16 %v8272
        %v8804 = vunpack.c.l.b16 %v8273
        %v8805 = vunpack.c.h.b16 %v8273
        %v8806 = vunpack.c.l.b16 %v8274
        %v8807 = vunpack.c.l.b16 %v8275
        %v8808 = vunpack.c.h.b16 %v8275
        %v8809 = vunpack.c.l.b16 %v8276
        %v8810 = vunpack.c.h.b16 %v8276
        %v8811 = vunpack.c.l.b16 %v8277
        %v8812 = vunpack.c.h.b16 %v8277
        %v8813 = vunpack.c.l.b16 %v8278
        %v8814 = vunpack.c.h.b16 %v8278
        %v8815 = vunpack.c.l.b16 %v8279
        %v8816 = vunpack.c.l.b16 %v8280
        %v8817 = vunpack.c.h.b16 %v8280
        %v8818 = vunpack.c.l.b16 %v8281
        %v8819 = vunpack.c.h.b16 %v8281
        %v8820 = vunpack.c.l.b16 %v8282
        %v8821 = vunpack.c.h.b16 %v8282
        %v8822 = vunpack.c.l.b16 %v8283
        %v8823 = vunpack.c.h.b16 %v8283
        %v8824 = vunpack.c.l.b16 %v8284
        %v8825 = vunpack.c.l.b16 %v8285
        %v8826 = vunpack.c.h.b16 %v8285
        %v8827 = vunpack.c.l.b16 %v8286
        %v8828 = vunpack.c.h.b16 %v8286
        %v8829 = vunpack.c.l.b16 %v8287
        %v8830 = vunpack.c.h.b16 %v8287
        %v8831 = vunpack.c.l.b16 %v8288
        %v8832 = vunpack.c.h.b16 %v8288
        %v8833 = vunpack.c.l.b16 %v8289
        %v8834 = vunpack.c.l.b16 %v8290
        %v8835 = vunpack.c.h.b16 %v8290
        %v8836 = vunpack.c.l.b16 %v8291
        %v8837 = vunpack.c.h.b16 %v8291
        %v8838 = vunpack.c.l.b16 %v8292
        %v8839 = vunpack.c.h.b16 %v8292
        %v8840 = vunpack.c.l.b16 %v8293
        %v8841 = vunpack.c.h.b16 %v8293
        %v8842 = vunpack.c.l.b16 %v8294
        %v8843 = vunpack.c.l.b16 %v8295
        %v8844 = vunpack.c.h.b16 %v8295
        %v8845 = vunpack.c.l.b16 %v8296
        %v8846 = vunpack.c.h.b16 %v8296
        %v8847 = vunpack.c.l.b16 %v8297
        %v8848 = vunpack.c.h.b16 %v8297
        %v8849 = vunpack.c.l.b16 %v8298
        %v8850 = vunpack.c.h.b16 %v8298
        %v8851 = vunpack.c.l.b16 %v8299
        %v8852 = vunpack.c.l.b16 %v8300
        %v8853 = vunpack.c.h.b16 %v8300
        %v8854 = vunpack.c.l.b16 %v8301
        %v8855 = vunpack.c.h.b16 %v8301
        %v8856 = vunpack.c.l.b16 %v8302
        %v8857 = vunpack.c.h.b16 %v8302
        %v8858 = vunpack.c.l.b16 %v8303
        %v8859 = vunpack.c.h.b16 %v8303
        %v8860 = vunpack.c.l.b16 %v8304
        %v8861 = vunpack.c.l.b16 %v8305
        %v8862 = vunpack.c.h.b16 %v8305
        %v8863 = vunpack.c.l.b16 %v8306
        %v8864 = vunpack.c.h.b16 %v8306
        %v8865 = vunpack.c.l.b16 %v8307
        %v8866 = vunpack.c.h.b16 %v8307
        %v8867 = vunpack.c.l.b16 %v8308
        %v8868 = vunpack.c.h.b16 %v8308
        %v8869 = vunpack.c.l.b16 %v8309
        %v8870 = vunpack.c.l.b16 %v8310
        %v8871 = vunpack.c.h.b16 %v8310
        %v8872 = vunpack.c.l.b16 %v8311
        %v8873 = vunpack.c.h.b16 %v8311
        %v8874 = vunpack.c.l.b16 %v8312
        %v8875 = vunpack.c.h.b16 %v8312
        %v8876 = vunpack.c.l.b16 %v8313
        %v8877 = vunpack.c.h.b16 %v8313
        %v8878 = vunpack.c.l.b16 %v8314
        %v8879 = vunpack.c.l.b16 %v8315
        %v8880 = vunpack.c.h.b16 %v8315
        %v8881 = vunpack.c.l.b16 %v8316
        %v8882 = vunpack.c.h.b16 %v8316
        %v8883 = vunpack.c.l.b16 %v8317
        %v8884 = vunpack.c.h.b16 %v8317
        %v8885 = vunpack.c.l.b16 %v8318
        %v8886 = vunpack.c.h.b16 %v8318
        %v8887 = vunpack.c.l.b16 %v8319
        %v8888 = vunpack.c.l.b16 %v8320
        %v8889 = vunpack.c.h.b16 %v8320
        %v8890 = vunpack.c.l.b16 %v8321
        %v8891 = vunpack.c.h.b16 %v8321
        %v8892 = vunpack.c.l.b16 %v8322
        %v8893 = vunpack.c.h.b16 %v8322
        %v8894 = vunpack.c.l.b16 %v8323
        %v8895 = vunpack.c.h.b16 %v8323
        %v8896 = vunpack.c.l.b16 %v8324
        %v8897 = vunpack.c.l.b16 %v8325
        %v8898 = vunpack.c.h.b16 %v8325
        %v8899 = vunpack.c.l.b16 %v8326
        %v8900 = vunpack.c.h.b16 %v8326
        %v8901 = vunpack.c.l.b16 %v8327
        %v8902 = vunpack.c.h.b16 %v8327
        %v8903 = vunpack.c.l.b16 %v8328
        %v8904 = vunpack.c.h.b16 %v8328
        %v8905 = vunpack.c.l.b16 %v8329
        %v8906 = vunpack.c.l.b16 %v8330
        %v8907 = vunpack.c.h.b16 %v8330
        %v8908 = vunpack.c.l.b16 %v8331
        %v8909 = vunpack.c.h.b16 %v8331
        %v8910 = vunpack.c.l.b16 %v8332
        %v8911 = vunpack.c.h.b16 %v8332
        %v8912 = vunpack.c.l.b16 %v8333
        %v8913 = vunpack.c.h.b16 %v8333
        %v8914 = vunpack.c.l.b16 %v8334
        %v8915 = vunpack.c.l.b16 %v8335
        %v8916 = vunpack.c.h.b16 %v8335
        %v8917 = vunpack.c.l.b16 %v8336
        %v8918 = vunpack.c.h.b16 %v8336
        %v8919 = vunpack.c.l.b16 %v8337
        %v8920 = vunpack.c.h.b16 %v8337
        %v8921 = vunpack.c.l.b16 %v8338
        %v8922 = vunpack.c.h.b16 %v8338
        %v8923 = vunpack.c.l.b16 %v8339
        %v8924 = vunpack.c.l.b16 %v8340
        %v8925 = vunpack.c.h.b16 %v8340
        %v8926 = vunpack.c.l.b16 %v8341
        %v8927 = vunpack.c.h.b16 %v8341
        %v8928 = vunpack.c.l.b16 %v8342
        %v8929 = vunpack.c.h.b16 %v8342
        %v8930 = vunpack.c.l.b16 %v8343
        %v8931 = vunpack.c.h.b16 %v8343
        %v8932 = vunpack.c.l.b16 %v8344
        %v8933 = vunpack.c.l.b16 %v8345
        %v8934 = vunpack.c.h.b16 %v8345
        %v8935 = vunpack.c.l.b16 %v8346
        %v8936 = vunpack.c.h.b16 %v8346
        %v8937 = vunpack.c.l.b16 %v8347
        %v8938 = vunpack.c.h.b16 %v8347
        %v8939 = vunpack.c.l.b16 %v8348
        %v8940 = vunpack.c.h.b16 %v8348
        %v8941 = vunpack.c.l.b16 %v8349
        %v8942 = vunpack.c.l.b16 %v8350
        %v8943 = vunpack.c.h.b16 %v8350
        %v8944 = vunpack.c.l.b16 %v8351
        %v8945 = vunpack.c.h.b16 %v8351
        %v8946 = vunpack.c.l.b16 %v8352
        %v8947 = vunpack.c.h.b16 %v8352
        %v8948 = vunpack.c.l.b16 %v8353
        %v8949 = vunpack.c.h.b16 %v8353
        %v8950 = vunpack.c.l.b16 %v8354
        %v8951 = vpack.c.b16 %v8672, %v8663
        %v8952 = vpack.c.b16 %v8673, %v8664
        %v8953 = vpack.c.b16 %v8674, %v8665
        %v8954 = vpack.c.b16 %v8675, %v8666
        %v8955 = vpack.c.b16 %v8676, %v8667
        %v8956 = vpack.c.b16 %v8677, %v8668
        %v8957 = vpack.c.b16 %v8678, %v8669
        %v8958 = vpack.c.b16 %v8679, %v8670
        %v8959 = vpack.c.b16 %v8680, %v8671
        %v8960 = vpack.c.b16 %v8690, %v8681
        %v8961 = vpack.c.b16 %v8691, %v8682
        %v8962 = vpack.c.b16 %v8692, %v8683
        %v8963 = vpack.c.b16 %v8693, %v8684
        %v8964 = vpack.c.b16 %v8694, %v8685
        %v8965 = vpack.c.b16 %v8695, %v8686
        %v8966 = vpack.c.b16 %v8696, %v8687
        %v8967 = vpack.c.b16 %v8697, %v8688
        %v8968 = vpack.c.b16 %v8698, %v8689
        %v8969 = vpack.c.b16 %v8708, %v8699
        %v8970 = vpack.c.b16 %v8709, %v8700
        %v8971 = vpack.c.b16 %v8710, %v8701
        %v8972 = vpack.c.b16 %v8711, %v8702
        %v8973 = vpack.c.b16 %v8712, %v8703
        %v8974 = vpack.c.b16 %v8713, %v8704
        %v8975 = vpack.c.b16 %v8714, %v8705
        %v8976 = vpack.c.b16 %v8715, %v8706
        %v8977 = vpack.c.b16 %v8716, %v8707
        %v8978 = vpack.c.b16 %v8726, %v8717
        %v8979 = vpack.c.b16 %v8727, %v8718
        %v8980 = vpack.c.b16 %v8728, %v8719
        %v8981 = vpack.c.b16 %v8729, %v8720
        %v8982 = vpack.c.b16 %v8730, %v8721
        %v8983 = vpack.c.b16 %v8731, %v8722
        %v8984 = vpack.c.b16 %v8732, %v8723
        %v8985 = vpack.c.b16 %v8733, %v8724
        %v8986 = vpack.c.b16 %v8734, %v8725
        %v8987 = vpack.c.b16 %v8744, %v8735
        %v8988 = vpack.c.b16 %v8745, %v8736
        %v8989 = vpack.c.b16 %v8746, %v8737
        %v8990 = vpack.c.b16 %v8747, %v8738
        %v8991 = vpack.c.b16 %v8748, %v8739
        %v8992 = vpack.c.b16 %v8749, %v8740
        %v8993 = vpack.c.b16 %v8750, %v8741
        %v8994 = vpack.c.b16 %v8751, %v8742
        %v8995 = vpack.c.b16 %v8752, %v8743
        %v8996 = vpack.c.b16 %v8762, %v8753
        %v8997 = vpack.c.b16 %v8763, %v8754
        %v8998 = vpack.c.b16 %v8764, %v8755
        %v8999 = vpack.c.b16 %v8765, %v8756
        %v9000 = vpack.c.b16 %v8766, %v8757
        %v9001 = vpack.c.b16 %v8767, %v8758
        %v9002 = vpack.c.b16 %v8768, %v8759
        %v9003 = vpack.c.b16 %v8769, %v8760
        %v9004 = vpack.c.b16 %v8770, %v8761
        %v9005 = vpack.c.b16 %v8780, %v8771
        %v9006 = vpack.c.b16 %v8781, %v8772
        %v9007 = vpack.c.b16 %v8782, %v8773
        %v9008 = vpack.c.b16 %v8783, %v8774
        %v9009 = vpack.c.b16 %v8784, %v8775
        %v9010 = vpack.c.b16 %v8785, %v8776
        %v9011 = vpack.c.b16 %v8786, %v8777
        %v9012 = vpack.c.b16 %v8787, %v8778
        %v9013 = vpack.c.b16 %v8788, %v8779
        %v9014 = vpack.c.b16 %v8798, %v8789
        %v9015 = vpack.c.b16 %v8799, %v8790
        %v9016 = vpack.c.b16 %v8800, %v8791
        %v9017 = vpack.c.b16 %v8801, %v8792
        %v9018 = vpack.c.b16 %v8802, %v8793
        %v9019 = vpack.c.b16 %v8803, %v8794
        %v9020 = vpack.c.b16 %v8804, %v8795
        %v9021 = vpack.c.b16 %v8805, %v8796
        %v9022 = vpack.c.b16 %v8806, %v8797
        %v9023 = vpack.c.b16 %v8816, %v8807
        %v9024 = vpack.c.b16 %v8817, %v8808
        %v9025 = vpack.c.b16 %v8818, %v8809
        %v9026 = vpack.c.b16 %v8819, %v8810
        %v9027 = vpack.c.b16 %v8820, %v8811
        %v9028 = vpack.c.b16 %v8821, %v8812
        %v9029 = vpack.c.b16 %v8822, %v8813
        %v9030 = vpack.c.b16 %v8823, %v8814
        %v9031 = vpack.c.b16 %v8824, %v8815
        %v9032 = vpack.c.b16 %v8834, %v8825
        %v9033 = vpack.c.b16 %v8835, %v8826
        %v9034 = vpack.c.b16 %v8836, %v8827
        %v9035 = vpack.c.b16 %v8837, %v8828
        %v9036 = vpack.c.b16 %v8838, %v8829
        %v9037 = vpack.c.b16 %v8839, %v8830
        %v9038 = vpack.c.b16 %v8840, %v8831
        %v9039 = vpack.c.b16 %v8841, %v8832
        %v9040 = vpack.c.b16 %v8842, %v8833
        %v9041 = vpack.c.b16 %v8852, %v8843
        %v9042 = vpack.c.b16 %v8853, %v8844
        %v9043 = vpack.c.b16 %v8854, %v8845
        %v9044 = vpack.c.b16 %v8855, %v8846
        %v9045 = vpack.c.b16 %v8856, %v8847
        %v9046 = vpack.c.b16 %v8857, %v8848
        %v9047 = vpack.c.b16 %v8858, %v8849
        %v9048 = vpack.c.b16 %v8859, %v8850
        %v9049 = vpack.c.b16 %v8860, %v8851
        %v9050 = vpack.c.b16 %v8870, %v8861
        %v9051 = vpack.c.b16 %v8871, %v8862
        %v9052 = vpack.c.b16 %v8872, %v8863
        %v9053 = vpack.c.b16 %v8873, %v8864
        %v9054 = vpack.c.b16 %v8874, %v8865
        %v9055 = vpack.c.b16 %v8875, %v8866
        %v9056 = vpack.c.b16 %v8876, %v8867
        %v9057 = vpack.c.b16 %v8877, %v8868
        %v9058 = vpack.c.b16 %v8878, %v8869
        %v9059 = vpack.c.b16 %v8888, %v8879
        %v9060 = vpack.c.b16 %v8889, %v8880
        %v9061 = vpack.c.b16 %v8890, %v8881
        %v9062 = vpack.c.b16 %v8891, %v8882
        %v9063 = vpack.c.b16 %v8892, %v8883
        %v9064 = vpack.c.b16 %v8893, %v8884
        %v9065 = vpack.c.b16 %v8894, %v8885
        %v9066 = vpack.c.b16 %v8895, %v8886
        %v9067 = vpack.c.b16 %v8896, %v8887
        %v9068 = vpack.c.b16 %v8906, %v8897
        %v9069 = vpack.c.b16 %v8907, %v8898
        %v9070 = vpack.c.b16 %v8908, %v8899
        %v9071 = vpack.c.b16 %v8909, %v8900
        %v9072 = vpack.c.b16 %v8910, %v8901
        %v9073 = vpack.c.b16 %v8911, %v8902
        %v9074 = vpack.c.b16 %v8912, %v8903
        %v9075 = vpack.c.b16 %v8913, %v8904
        %v9076 = vpack.c.b16 %v8914, %v8905
        %v9077 = vpack.c.b16 %v8924, %v8915
        %v9078 = vpack.c.b16 %v8925, %v8916
        %v9079 = vpack.c.b16 %v8926, %v8917
        %v9080 = vpack.c.b16 %v8927, %v8918
        %v9081 = vpack.c.b16 %v8928, %v8919
        %v9082 = vpack.c.b16 %v8929, %v8920
        %v9083 = vpack.c.b16 %v8930, %v8921
        %v9084 = vpack.c.b16 %v8931, %v8922
        %v9085 = vpack.c.b16 %v8932, %v8923
        %v9086 = vpack.c.b16 %v8942, %v8933
        %v9087 = vpack.c.b16 %v8943, %v8934
        %v9088 = vpack.c.b16 %v8944, %v8935
        %v9089 = vpack.c.b16 %v8945, %v8936
        %v9090 = vpack.c.b16 %v8946, %v8937
        %v9091 = vpack.c.b16 %v8947, %v8938
        %v9092 = vpack.c.b16 %v8948, %v8939
        %v9093 = vpack.c.b16 %v8949, %v8940
        %v9094 = vpack.c.b16 %v8950, %v8941
        %v9383 = vunpack.c.l.b16 %v8355
        %v9384 = vunpack.c.l.b16 %v8356
        %v9385 = vunpack.c.l.b16 %v8357
        %v9386 = vunpack.c.l.b16 %v8358
        %v9387 = vunpack.c.l.b16 %v8359
        %v9388 = vunpack.c.l.b16 %v8360
        %v9389 = vunpack.c.l.b16 %v8361
        %v9390 = vunpack.c.l.b16 %v8362
        %v9391 = vunpack.c.l.b16 %v8363
        %v9392 = vunpack.c.l.b16 %v8364
        %v9393 = vunpack.c.l.b16 %v8365
        %v9394 = vunpack.c.l.b16 %v8366
        %v9395 = vunpack.c.l.b16 %v8367
        %v9396 = vunpack.c.l.b16 %v8368
        %v9397 = vunpack.c.l.b16 %v8369
        %v9398 = vunpack.c.l.b16 %v8370
        %v9399 = vunpack.c.l.b16 %v8371
        %v9400 = vunpack.c.l.b16 %v8372
        %v9401 = vunpack.c.l.b16 %v8373
        %v9402 = vunpack.c.l.b16 %v8374
        %v9403 = vunpack.c.l.b16 %v8375
        %v9404 = vunpack.c.l.b16 %v8376
        %v9405 = vunpack.c.l.b16 %v8377
        %v9406 = vunpack.c.l.b16 %v8378
        %v9407 = vunpack.c.l.b16 %v8379
        %v9408 = vunpack.c.l.b16 %v8380
        %v9409 = vunpack.c.l.b16 %v8381
        %v9410 = vunpack.c.l.b16 %v8382
        %v9411 = vunpack.c.l.b16 %v8383
        %v9412 = vunpack.c.l.b16 %v8384
        %v9413 = vunpack.c.l.b16 %v8385
        %v9414 = vunpack.c.l.b16 %v8386
        %v9415 = vunpack.c.l.b16 %v8387
        %v9416 = vunpack.c.l.b16 %v8388
        %v9417 = vunpack.c.l.b16 %v8389
        %v9418 = vunpack.c.l.b16 %v8390
        %v9419 = vunpack.c.l.b16 %v8391
        %v9420 = vunpack.c.l.b16 %v8392
        %v9421 = vunpack.c.l.b16 %v8393
        %v9422 = vunpack.c.l.b16 %v8394
        %v9423 = vunpack.c.l.b16 %v8395
        %v9424 = vunpack.c.l.b16 %v8396
        %v9425 = vunpack.c.l.b16 %v8397
        %v9426 = vunpack.c.l.b16 %v8398
        %v9427 = vunpack.c.l.b16 %v8399
        %v9428 = vunpack.c.l.b16 %v8400
        %v9429 = vunpack.c.l.b16 %v8401
        %v9430 = vunpack.c.l.b16 %v8402
        %v9431 = vunpack.c.l.b16 %v8403
        %v9432 = vunpack.c.l.b16 %v8404
        %v9433 = vunpack.c.l.b16 %v8405
        %v9434 = vunpack.c.l.b16 %v8406
        %v9435 = vunpack.c.l.b16 %v8407
        %v9436 = vunpack.c.l.b16 %v8408
        %v9437 = vunpack.c.l.b16 %v8409
        %v9438 = vunpack.c.l.b16 %v8410
        %v9439 = vunpack.c.l.b16 %v8411
        %v9440 = vunpack.c.l.b16 %v8412
        %v9441 = vunpack.c.l.b16 %v8413
        %v9442 = vunpack.c.l.b16 %v8414
        %v9443 = vunpack.c.l.b16 %v8415
        %v9444 = vunpack.c.l.b16 %v8416
        %v9445 = vunpack.c.l.b16 %v8417
        %v9446 = vunpack.c.l.b16 %v8418
        %v9447 = vunpack.c.l.b16 %v8419
        %v9448 = vunpack.c.l.b16 %v8420
        %v9449 = vunpack.c.l.b16 %v8421
        %v9450 = vunpack.c.l.b16 %v8422
        %v9451 = vunpack.c.l.b16 %v8423
        %v9452 = vunpack.c.l.b16 %v8424
        %v9453 = vunpack.c.l.b16 %v8425
        %v9454 = vunpack.c.l.b16 %v8426
        %v9455 = vunpack.c.l.b16 %v8427
        %v9456 = vunpack.c.l.b16 %v8428
        %v9457 = vunpack.c.l.b16 %v8429
        %v9458 = vunpack.c.l.b16 %v8430
        %v9459 = vunpack.c.l.b16 %v8431
        %v9460 = vunpack.c.l.b16 %v8432
        %v9461 = vunpack.c.l.b16 %v8433
        %v9462 = vunpack.c.l.b16 %v8434
        %v9463 = vunpack.c.l.b16 %v8435
        %v9464 = vunpack.c.l.b16 %v8436
        %v9465 = vunpack.c.l.b16 %v8437
        %v9466 = vunpack.c.l.b16 %v8438
        %v9467 = vunpack.c.l.b16 %v8439
        %v9468 = vunpack.c.l.b16 %v8440
        %v9469 = vunpack.c.l.b16 %v8441
        %v9470 = vunpack.c.l.b16 %v8442
        %v9471 = vunpack.c.l.b16 %v8443
        %v9472 = vunpack.c.l.b16 %v8444
        %v9473 = vunpack.c.l.b16 %v8445
        %v9474 = vunpack.c.l.b16 %v8446
        %v9475 = vunpack.c.l.b16 %v8447
        %v9476 = vunpack.c.l.b16 %v8448
        %v9477 = vunpack.c.l.b16 %v8449
        %v9478 = vunpack.c.l.b16 %v8450
        %v9479 = vunpack.c.l.b16 %v8451
        %v9480 = vunpack.c.l.b16 %v8452
        %v9481 = vunpack.c.l.b16 %v8453
        %v9482 = vunpack.c.l.b16 %v8454
        %v9483 = vunpack.c.l.b16 %v8455
        %v9484 = vunpack.c.l.b16 %v8456
        %v9485 = vunpack.c.l.b16 %v8457
        %v9486 = vunpack.c.l.b16 %v8458
        %v9487 = vunpack.c.l.b16 %v8459
        %v9488 = vunpack.c.l.b16 %v8460
        %v9489 = vunpack.c.l.b16 %v8461
        %v9490 = vunpack.c.l.b16 %v8462
        %v9491 = vunpack.c.l.b16 %v8463
        %v9492 = vunpack.c.l.b16 %v8464
        %v9493 = vunpack.c.l.b16 %v8465
        %v9494 = vunpack.c.l.b16 %v8466
        %v9495 = vunpack.c.l.b16 %v8467
        %v9496 = vunpack.c.l.b16 %v8468
        %v9497 = vunpack.c.l.b16 %v8469
        %v9498 = vunpack.c.l.b16 %v8470
        %v9499 = vunpack.c.l.b16 %v8471
        %v9500 = vunpack.c.l.b16 %v8472
        %v9501 = vunpack.c.l.b16 %v8473
        %v9502 = vunpack.c.l.b16 %v8474
        %v9503 = vunpack.c.l.b16 %v8475
        %v9504 = vunpack.c.l.b16 %v8476
        %v9505 = vunpack.c.l.b16 %v8477
        %v9506 = vunpack.c.l.b16 %v8478
        %v9507 = vunpack.c.l.b16 %v8479
        %v9508 = vunpack.c.l.b16 %v8480
        %v9509 = vunpack.c.l.b16 %v8481
        %v9510 = vunpack.c.l.b16 %v8482
        %v9511 = vunpack.c.l.b16 %v8483
        %v9512 = vunpack.c.l.b16 %v8484
        %v9513 = vunpack.c.l.b16 %v8485
        %v9514 = vunpack.c.l.b16 %v8486
        %v9515 = vunpack.c.l.b16 %v8487
        %v9516 = vunpack.c.l.b16 %v8488
        %v9517 = vunpack.c.l.b16 %v8489
        %v9518 = vunpack.c.l.b16 %v8490
        %v9519 = vunpack.c.l.b16 %v8491
        %v9520 = vunpack.c.l.b16 %v8492
        %v9521 = vunpack.c.l.b16 %v8493
        %v9522 = vunpack.c.l.b16 %v8494
        %v9523 = vunpack.c.l.b16 %v8495
        %v9524 = vunpack.c.l.b16 %v8496
        %v9525 = vunpack.c.l.b16 %v8497
        %v9526 = vunpack.c.l.b16 %v8498
        %v9527 = vpack.c.b16 %v9384, %v9383
        %v9528 = vpack.c.b16 %v9386, %v9385
        %v9529 = vpack.c.b16 %v9388, %v9387
        %v9530 = vpack.c.b16 %v9390, %v9389
        %v9531 = vpack.c.b16 %v9392, %v9391
        %v9532 = vpack.c.b16 %v9394, %v9393
        %v9533 = vpack.c.b16 %v9396, %v9395
        %v9534 = vpack.c.b16 %v9398, %v9397
        %v9535 = vpack.c.b16 %v9400, %v9399
        %v9536 = vpack.c.b16 %v9402, %v9401
        %v9537 = vpack.c.b16 %v9404, %v9403
        %v9538 = vpack.c.b16 %v9406, %v9405
        %v9539 = vpack.c.b16 %v9408, %v9407
        %v9540 = vpack.c.b16 %v9410, %v9409
        %v9541 = vpack.c.b16 %v9412, %v9411
        %v9542 = vpack.c.b16 %v9414, %v9413
        %v9543 = vpack.c.b16 %v9416, %v9415
        %v9544 = vpack.c.b16 %v9418, %v9417
        %v9545 = vpack.c.b16 %v9420, %v9419
        %v9546 = vpack.c.b16 %v9422, %v9421
        %v9547 = vpack.c.b16 %v9424, %v9423
        %v9548 = vpack.c.b16 %v9426, %v9425
        %v9549 = vpack.c.b16 %v9428, %v9427
        %v9550 = vpack.c.b16 %v9430, %v9429
        %v9551 = vpack.c.b16 %v9432, %v9431
        %v9552 = vpack.c.b16 %v9434, %v9433
        %v9553 = vpack.c.b16 %v9436, %v9435
        %v9554 = vpack.c.b16 %v9438, %v9437
        %v9555 = vpack.c.b16 %v9440, %v9439
        %v9556 = vpack.c.b16 %v9442, %v9441
        %v9557 = vpack.c.b16 %v9444, %v9443
        %v9558 = vpack.c.b16 %v9446, %v9445
        %v9559 = vpack.c.b16 %v9448, %v9447
        %v9560 = vpack.c.b16 %v9450, %v9449
        %v9561 = vpack.c.b16 %v9452, %v9451
        %v9562 = vpack.c.b16 %v9454, %v9453
        %v9563 = vpack.c.b16 %v9456, %v9455
        %v9564 = vpack.c.b16 %v9458, %v9457
        %v9565 = vpack.c.b16 %v9460, %v9459
        %v9566 = vpack.c.b16 %v9462, %v9461
        %v9567 = vpack.c.b16 %v9464, %v9463
        %v9568 = vpack.c.b16 %v9466, %v9465
        %v9569 = vpack.c.b16 %v9468, %v9467
        %v9570 = vpack.c.b16 %v9470, %v9469
        %v9571 = vpack.c.b16 %v9472, %v9471
        %v9572 = vpack.c.b16 %v9474, %v9473
        %v9573 = vpack.c.b16 %v9476, %v9475
        %v9574 = vpack.c.b16 %v9478, %v9477
        %v9575 = vpack.c.b16 %v9480, %v9479
        %v9576 = vpack.c.b16 %v9482, %v9481
        %v9577 = vpack.c.b16 %v9484, %v9483
        %v9578 = vpack.c.b16 %v9486, %v9485
        %v9579 = vpack.c.b16 %v9488, %v9487
        %v9580 = vpack.c.b16 %v9490, %v9489
        %v9581 = vpack.c.b16 %v9492, %v9491
        %v9582 = vpack.c.b16 %v9494, %v9493
        %v9583 = vpack.c.b16 %v9496, %v9495
        %v9584 = vpack.c.b16 %v9498, %v9497
        %v9585 = vpack.c.b16 %v9500, %v9499
        %v9586 = vpack.c.b16 %v9502, %v9501
        %v9587 = vpack.c.b16 %v9504, %v9503
        %v9588 = vpack.c.b16 %v9506, %v9505
        %v9589 = vpack.c.b16 %v9508, %v9507
        %v9590 = vpack.c.b16 %v9510, %v9509
        %v9591 = vpack.c.b16 %v9512, %v9511
        %v9592 = vpack.c.b16 %v9514, %v9513
        %v9593 = vpack.c.b16 %v9516, %v9515
        %v9594 = vpack.c.b16 %v9518, %v9517
        %v9595 = vpack.c.b16 %v9520, %v9519
        %v9596 = vpack.c.b16 %v9522, %v9521
        %v9597 = vpack.c.b16 %v9524, %v9523
        %v9598 = vpack.c.b16 %v9526, %v9525
        %9671 = vmatpush.bf16.msra.mxu0 %v9534
        %9672 = vmatpush.bf16.msra.mxu0 %v9533
        %9673 = vmatpush.bf16.msra.mxu0 %v9532
        %9674 = vmatpush.bf16.msra.mxu0 %v9531
        %9675 = vmatpush.bf16.msra.mxu0 %v9530
        %9676 = vmatpush.bf16.msra.mxu0 %v9529
        %9677 = vmatpush.bf16.msra.mxu0 %v9528
        %9678 = vmatpush.bf16.msra.mxu0 %v9527
        %9679 = vmatmul.bf16.gmra.mxu0 %v8951
        %v9680 = vpop.f32.mrf.mxu0
        %v9681 = vadd.f32 %v8501, %v9680
        %v9682 = vpop.f32.mrf.mxu0
        %v9683 = vadd.f32 %v8501, %v9682
        %9684 = vmatmul.bf16.gmra.mxu0 %v8960
        %v9685 = vpop.f32.mrf.mxu0
        %v9686 = vadd.f32 %v8501, %v9685
        %v9687 = vpop.f32.mrf.mxu0
        %v9688 = vadd.f32 %v8501, %v9687
        %9689 = vmatmul.bf16.gmra.mxu0 %v8969
        %v9690 = vpop.f32.mrf.mxu0
        %v9691 = vadd.f32 %v8501, %v9690
        %v9692 = vpop.f32.mrf.mxu0
        %v9693 = vadd.f32 %v8501, %v9692
        %9694 = vmatmul.bf16.gmra.mxu0 %v8978
        %v9695 = vpop.f32.mrf.mxu0
        %v9696 = vadd.f32 %v8501, %v9695
        %v9697 = vpop.f32.mrf.mxu0
        %v9698 = vadd.f32 %v8501, %v9697
        %9699 = vmatmul.bf16.gmra.mxu0 %v8987
        %v9700 = vpop.f32.mrf.mxu0
        %v9701 = vadd.f32 %v8501, %v9700
        %v9702 = vpop.f32.mrf.mxu0
        %v9703 = vadd.f32 %v8501, %v9702
        %9704 = vmatmul.bf16.gmra.mxu0 %v8996
        %v9705 = vpop.f32.mrf.mxu0
        %v9706 = vadd.f32 %v8501, %v9705
        %v9707 = vpop.f32.mrf.mxu0
        %v9708 = vadd.f32 %v8501, %v9707
        %9709 = vmatmul.bf16.gmra.mxu0 %v9005
        %v9710 = vpop.f32.mrf.mxu0
        %v9711 = vadd.f32 %v8501, %v9710
        %v9712 = vpop.f32.mrf.mxu0
        %v9713 = vadd.f32 %v8501, %v9712
        %9714 = vmatmul.bf16.gmra.mxu0 %v9014
        %v9715 = vpop.f32.mrf.mxu0
        %v9716 = vadd.f32 %v8501, %v9715
        %v9717 = vpop.f32.mrf.mxu0
        %v9718 = vadd.f32 %v8501, %v9717
        %9719 = vmatmul.bf16.gmra.mxu0 %v9023
        %v9720 = vpop.f32.mrf.mxu0
        %v9721 = vadd.f32 %v8501, %v9720
        %v9722 = vpop.f32.mrf.mxu0
        %v9723 = vadd.f32 %v8501, %v9722
        %9724 = vmatmul.bf16.gmra.mxu0 %v9032
        %v9725 = vpop.f32.mrf.mxu0
        %v9726 = vadd.f32 %v8501, %v9725
        %v9727 = vpop.f32.mrf.mxu0
        %v9728 = vadd.f32 %v8501, %v9727
        %9729 = vmatmul.bf16.gmra.mxu0 %v9041
        %v9730 = vpop.f32.mrf.mxu0
        %v9731 = vadd.f32 %v8501, %v9730
        %v9732 = vpop.f32.mrf.mxu0
        %v9733 = vadd.f32 %v8501, %v9732
        %9734 = vmatmul.bf16.gmra.mxu0 %v9050
        %v9735 = vpop.f32.mrf.mxu0
        %v9736 = vadd.f32 %v8501, %v9735
        %v9737 = vpop.f32.mrf.mxu0
        %v9738 = vadd.f32 %v8501, %v9737
        %9739 = vmatmul.bf16.gmra.mxu0 %v9059
        %v9740 = vpop.f32.mrf.mxu0
        %v9741 = vadd.f32 %v8501, %v9740
        %v9742 = vpop.f32.mrf.mxu0
        %v9743 = vadd.f32 %v8501, %v9742
        %9744 = vmatmul.bf16.gmra.mxu0 %v9068
        %v9745 = vpop.f32.mrf.mxu0
        %v9746 = vadd.f32 %v8501, %v9745
        %v9747 = vpop.f32.mrf.mxu0
        %v9748 = vadd.f32 %v8501, %v9747
        %9749 = vmatmul.bf16.gmra.mxu0 %v9077
        %v9750 = vpop.f32.mrf.mxu0
        %v9751 = vadd.f32 %v8501, %v9750
        %v9752 = vpop.f32.mrf.mxu0
        %v9753 = vadd.f32 %v8501, %v9752
        %9754 = vmatmul.bf16.gmra.mxu0 %v9086
        %v9755 = vpop.f32.mrf.mxu0
        %v9756 = vadd.f32 %v8501, %v9755
        %v9757 = vpop.f32.mrf.mxu0
        %v9758 = vadd.f32 %v8501, %v9757
        %9759 = vdwg.mxu0
        %9760 = vmatpush.bf16.msra.mxu0 %v9542
        %9761 = vmatpush.bf16.msra.mxu0 %v9541
        %9762 = vmatpush.bf16.msra.mxu0 %v9540
        %9763 = vmatpush.bf16.msra.mxu0 %v9539
        %9764 = vmatpush.bf16.msra.mxu0 %v9538
        %9765 = vmatpush.bf16.msra.mxu0 %v9537
        %9766 = vmatpush.bf16.msra.mxu0 %v9536
        %9767 = vmatpush.bf16.msra.mxu0 %v9535
        %9768 = vmatmul.bf16.gmra.mxu0 %v8952
        %v9769 = vpop.f32.mrf.mxu0
        %v9770 = vadd.f32 %v9681, %v9769
        %v9771 = vpop.f32.mrf.mxu0
        %v9772 = vadd.f32 %v9683, %v9771
        %9773 = vmatmul.bf16.gmra.mxu0 %v8961
        %v9774 = vpop.f32.mrf.mxu0
        %v9775 = vadd.f32 %v9686, %v9774
        %v9776 = vpop.f32.mrf.mxu0
        %v9777 = vadd.f32 %v9688, %v9776
        %9778 = vmatmul.bf16.gmra.mxu0 %v8970
        %v9779 = vpop.f32.mrf.mxu0
        %v9780 = vadd.f32 %v9691, %v9779
        %v9781 = vpop.f32.mrf.mxu0
        %v9782 = vadd.f32 %v9693, %v9781
        %9783 = vmatmul.bf16.gmra.mxu0 %v8979
        %v9784 = vpop.f32.mrf.mxu0
        %v9785 = vadd.f32 %v9696, %v9784
        %v9786 = vpop.f32.mrf.mxu0
        %v9787 = vadd.f32 %v9698, %v9786
        %9788 = vmatmul.bf16.gmra.mxu0 %v8988
        %v9789 = vpop.f32.mrf.mxu0
        %v9790 = vadd.f32 %v9701, %v9789
        %v9791 = vpop.f32.mrf.mxu0
        %v9792 = vadd.f32 %v9703, %v9791
        %9793 = vmatmul.bf16.gmra.mxu0 %v8997
        %v9794 = vpop.f32.mrf.mxu0
        %v9795 = vadd.f32 %v9706, %v9794
        %v9796 = vpop.f32.mrf.mxu0
        %v9797 = vadd.f32 %v9708, %v9796
        %9798 = vmatmul.bf16.gmra.mxu0 %v9006
        %v9799 = vpop.f32.mrf.mxu0
        %v9800 = vadd.f32 %v9711, %v9799
        %v9801 = vpop.f32.mrf.mxu0
        %v9802 = vadd.f32 %v9713, %v9801
        %9803 = vmatmul.bf16.gmra.mxu0 %v9015
        %v9804 = vpop.f32.mrf.mxu0
        %v9805 = vadd.f32 %v9716, %v9804
        %v9806 = vpop.f32.mrf.mxu0
        %v9807 = vadd.f32 %v9718, %v9806
        %9808 = vmatmul.bf16.gmra.mxu0 %v9024
        %v9809 = vpop.f32.mrf.mxu0
        %v9810 = vadd.f32 %v9721, %v9809
        %v9811 = vpop.f32.mrf.mxu0
        %v9812 = vadd.f32 %v9723, %v9811
        %9813 = vmatmul.bf16.gmra.mxu0 %v9033
        %v9814 = vpop.f32.mrf.mxu0
        %v9815 = vadd.f32 %v9726, %v9814
        %v9816 = vpop.f32.mrf.mxu0
        %v9817 = vadd.f32 %v9728, %v9816
        %9818 = vmatmul.bf16.gmra.mxu0 %v9042
        %v9819 = vpop.f32.mrf.mxu0
        %v9820 = vadd.f32 %v9731, %v9819
        %v9821 = vpop.f32.mrf.mxu0
        %v9822 = vadd.f32 %v9733, %v9821
        %9823 = vmatmul.bf16.gmra.mxu0 %v9051
        %v9824 = vpop.f32.mrf.mxu0
        %v9825 = vadd.f32 %v9736, %v9824
        %v9826 = vpop.f32.mrf.mxu0
        %v9827 = vadd.f32 %v9738, %v9826
        %9828 = vmatmul.bf16.gmra.mxu0 %v9060
        %v9829 = vpop.f32.mrf.mxu0
        %v9830 = vadd.f32 %v9741, %v9829
        %v9831 = vpop.f32.mrf.mxu0
        %v9832 = vadd.f32 %v9743, %v9831
        %9833 = vmatmul.bf16.gmra.mxu0 %v9069
        %v9834 = vpop.f32.mrf.mxu0
        %v9835 = vadd.f32 %v9746, %v9834
        %v9836 = vpop.f32.mrf.mxu0
        %v9837 = vadd.f32 %v9748, %v9836
        %9838 = vmatmul.bf16.gmra.mxu0 %v9078
        %v9839 = vpop.f32.mrf.mxu0
        %v9840 = vadd.f32 %v9751, %v9839
        %v9841 = vpop.f32.mrf.mxu0
        %v9842 = vadd.f32 %v9753, %v9841
        %9843 = vmatmul.bf16.gmra.mxu0 %v9087
        %v9844 = vpop.f32.mrf.mxu0
        %v9845 = vadd.f32 %v9756, %v9844
        %v9846 = vpop.f32.mrf.mxu0
        %v9847 = vadd.f32 %v9758, %v9846
        %9848 = vdwg.mxu0
        %9849 = vmatpush.bf16.msra.mxu0 %v9550
        %9850 = vmatpush.bf16.msra.mxu0 %v9549
        %9851 = vmatpush.bf16.msra.mxu0 %v9548
        %9852 = vmatpush.bf16.msra.mxu0 %v9547
        %9853 = vmatpush.bf16.msra.mxu0 %v9546
        %9854 = vmatpush.bf16.msra.mxu0 %v9545
        %9855 = vmatpush.bf16.msra.mxu0 %v9544
        %9856 = vmatpush.bf16.msra.mxu0 %v9543
        %9857 = vmatmul.bf16.gmra.mxu0 %v8953
        %v9858 = vpop.f32.mrf.mxu0
        %v9859 = vadd.f32 %v9770, %v9858
        %v9860 = vpop.f32.mrf.mxu0
        %v9861 = vadd.f32 %v9772, %v9860
        %9862 = vmatmul.bf16.gmra.mxu0 %v8962
        %v9863 = vpop.f32.mrf.mxu0
        %v9864 = vadd.f32 %v9775, %v9863
        %v9865 = vpop.f32.mrf.mxu0
        %v9866 = vadd.f32 %v9777, %v9865
        %9867 = vmatmul.bf16.gmra.mxu0 %v8971
        %v9868 = vpop.f32.mrf.mxu0
        %v9869 = vadd.f32 %v9780, %v9868
        %v9870 = vpop.f32.mrf.mxu0
        %v9871 = vadd.f32 %v9782, %v9870
        %9872 = vmatmul.bf16.gmra.mxu0 %v8980
        %v9873 = vpop.f32.mrf.mxu0
        %v9874 = vadd.f32 %v9785, %v9873
        %v9875 = vpop.f32.mrf.mxu0
        %v9876 = vadd.f32 %v9787, %v9875
        %9877 = vmatmul.bf16.gmra.mxu0 %v8989
        %v9878 = vpop.f32.mrf.mxu0
        %v9879 = vadd.f32 %v9790, %v9878
        %v9880 = vpop.f32.mrf.mxu0
        %v9881 = vadd.f32 %v9792, %v9880
        %9882 = vmatmul.bf16.gmra.mxu0 %v8998
        %v9883 = vpop.f32.mrf.mxu0
        %v9884 = vadd.f32 %v9795, %v9883
        %v9885 = vpop.f32.mrf.mxu0
        %v9886 = vadd.f32 %v9797, %v9885
        %9887 = vmatmul.bf16.gmra.mxu0 %v9007
        %v9888 = vpop.f32.mrf.mxu0
        %v9889 = vadd.f32 %v9800, %v9888
        %v9890 = vpop.f32.mrf.mxu0
        %v9891 = vadd.f32 %v9802, %v9890
        %9892 = vmatmul.bf16.gmra.mxu0 %v9016
        %v9893 = vpop.f32.mrf.mxu0
        %v9894 = vadd.f32 %v9805, %v9893
        %v9895 = vpop.f32.mrf.mxu0
        %v9896 = vadd.f32 %v9807, %v9895
        %9897 = vmatmul.bf16.gmra.mxu0 %v9025
        %v9898 = vpop.f32.mrf.mxu0
        %v9899 = vadd.f32 %v9810, %v9898
        %v9900 = vpop.f32.mrf.mxu0
        %v9901 = vadd.f32 %v9812, %v9900
        %9902 = vmatmul.bf16.gmra.mxu0 %v9034
        %v9903 = vpop.f32.mrf.mxu0
        %v9904 = vadd.f32 %v9815, %v9903
        %v9905 = vpop.f32.mrf.mxu0
        %v9906 = vadd.f32 %v9817, %v9905
        %9907 = vmatmul.bf16.gmra.mxu0 %v9043
        %v9908 = vpop.f32.mrf.mxu0
        %v9909 = vadd.f32 %v9820, %v9908
        %v9910 = vpop.f32.mrf.mxu0
        %v9911 = vadd.f32 %v9822, %v9910
        %9912 = vmatmul.bf16.gmra.mxu0 %v9052
        %v9913 = vpop.f32.mrf.mxu0
        %v9914 = vadd.f32 %v9825, %v9913
        %v9915 = vpop.f32.mrf.mxu0
        %v9916 = vadd.f32 %v9827, %v9915
        %9917 = vmatmul.bf16.gmra.mxu0 %v9061
        %v9918 = vpop.f32.mrf.mxu0
        %v9919 = vadd.f32 %v9830, %v9918
        %v9920 = vpop.f32.mrf.mxu0
        %v9921 = vadd.f32 %v9832, %v9920
        %9922 = vmatmul.bf16.gmra.mxu0 %v9070
        %v9923 = vpop.f32.mrf.mxu0
        %v9924 = vadd.f32 %v9835, %v9923
        %v9925 = vpop.f32.mrf.mxu0
        %v9926 = vadd.f32 %v9837, %v9925
        %9927 = vmatmul.bf16.gmra.mxu0 %v9079
        %v9928 = vpop.f32.mrf.mxu0
        %v9929 = vadd.f32 %v9840, %v9928
        %v9930 = vpop.f32.mrf.mxu0
        %v9931 = vadd.f32 %v9842, %v9930
        %9932 = vmatmul.bf16.gmra.mxu0 %v9088
        %v9933 = vpop.f32.mrf.mxu0
        %v9934 = vadd.f32 %v9845, %v9933
        %v9935 = vpop.f32.mrf.mxu0
        %v9936 = vadd.f32 %v9847, %v9935
        %9937 = vdwg.mxu0
        %9938 = vmatpush.bf16.msra.mxu0 %v9558
        %9939 = vmatpush.bf16.msra.mxu0 %v9557
        %9940 = vmatpush.bf16.msra.mxu0 %v9556
        %9941 = vmatpush.bf16.msra.mxu0 %v9555
        %9942 = vmatpush.bf16.msra.mxu0 %v9554
        %9943 = vmatpush.bf16.msra.mxu0 %v9553
        %9944 = vmatpush.bf16.msra.mxu0 %v9552
        %9945 = vmatpush.bf16.msra.mxu0 %v9551
        %9946 = vmatmul.bf16.gmra.mxu0 %v8954
        %v9947 = vpop.f32.mrf.mxu0
        %v9948 = vadd.f32 %v9859, %v9947
        %v9949 = vpop.f32.mrf.mxu0
        %v9950 = vadd.f32 %v9861, %v9949
        %9951 = vmatmul.bf16.gmra.mxu0 %v8963
        %v9952 = vpop.f32.mrf.mxu0
        %v9953 = vadd.f32 %v9864, %v9952
        %v9954 = vpop.f32.mrf.mxu0
        %v9955 = vadd.f32 %v9866, %v9954
        %9956 = vmatmul.bf16.gmra.mxu0 %v8972
        %v9957 = vpop.f32.mrf.mxu0
        %v9958 = vadd.f32 %v9869, %v9957
        %v9959 = vpop.f32.mrf.mxu0
        %v9960 = vadd.f32 %v9871, %v9959
        %9961 = vmatmul.bf16.gmra.mxu0 %v8981
        %v9962 = vpop.f32.mrf.mxu0
        %v9963 = vadd.f32 %v9874, %v9962
        %v9964 = vpop.f32.mrf.mxu0
        %v9965 = vadd.f32 %v9876, %v9964
        %9966 = vmatmul.bf16.gmra.mxu0 %v8990
        %v9967 = vpop.f32.mrf.mxu0
        %v9968 = vadd.f32 %v9879, %v9967
        %v9969 = vpop.f32.mrf.mxu0
        %v9970 = vadd.f32 %v9881, %v9969
        %9971 = vmatmul.bf16.gmra.mxu0 %v8999
        %v9972 = vpop.f32.mrf.mxu0
        %v9973 = vadd.f32 %v9884, %v9972
        %v9974 = vpop.f32.mrf.mxu0
        %v9975 = vadd.f32 %v9886, %v9974
        %9976 = vmatmul.bf16.gmra.mxu0 %v9008
        %v9977 = vpop.f32.mrf.mxu0
        %v9978 = vadd.f32 %v9889, %v9977
        %v9979 = vpop.f32.mrf.mxu0
        %v9980 = vadd.f32 %v9891, %v9979
        %9981 = vmatmul.bf16.gmra.mxu0 %v9017
        %v9982 = vpop.f32.mrf.mxu0
        %v9983 = vadd.f32 %v9894, %v9982
        %v9984 = vpop.f32.mrf.mxu0
        %v9985 = vadd.f32 %v9896, %v9984
        %9986 = vmatmul.bf16.gmra.mxu0 %v9026
        %v9987 = vpop.f32.mrf.mxu0
        %v9988 = vadd.f32 %v9899, %v9987
        %v9989 = vpop.f32.mrf.mxu0
        %v9990 = vadd.f32 %v9901, %v9989
        %9991 = vmatmul.bf16.gmra.mxu0 %v9035
        %v9992 = vpop.f32.mrf.mxu0
        %v9993 = vadd.f32 %v9904, %v9992
        %v9994 = vpop.f32.mrf.mxu0
        %v9995 = vadd.f32 %v9906, %v9994
        %9996 = vmatmul.bf16.gmra.mxu0 %v9044
        %v9997 = vpop.f32.mrf.mxu0
        %v9998 = vadd.f32 %v9909, %v9997
        %v9999 = vpop.f32.mrf.mxu0
        %v10000 = vadd.f32 %v9911, %v9999
        %10001 = vmatmul.bf16.gmra.mxu0 %v9053
        %v10002 = vpop.f32.mrf.mxu0
        %v10003 = vadd.f32 %v9914, %v10002
        %v10004 = vpop.f32.mrf.mxu0
        %v10005 = vadd.f32 %v9916, %v10004
        %10006 = vmatmul.bf16.gmra.mxu0 %v9062
        %v10007 = vpop.f32.mrf.mxu0
        %v10008 = vadd.f32 %v9919, %v10007
        %v10009 = vpop.f32.mrf.mxu0
        %v10010 = vadd.f32 %v9921, %v10009
        %10011 = vmatmul.bf16.gmra.mxu0 %v9071
        %v10012 = vpop.f32.mrf.mxu0
        %v10013 = vadd.f32 %v9924, %v10012
        %v10014 = vpop.f32.mrf.mxu0
        %v10015 = vadd.f32 %v9926, %v10014
        %10016 = vmatmul.bf16.gmra.mxu0 %v9080
        %v10017 = vpop.f32.mrf.mxu0
        %v10018 = vadd.f32 %v9929, %v10017
        %v10019 = vpop.f32.mrf.mxu0
        %v10020 = vadd.f32 %v9931, %v10019
        %10021 = vmatmul.bf16.gmra.mxu0 %v9089
        %v10022 = vpop.f32.mrf.mxu0
        %v10023 = vadd.f32 %v9934, %v10022
        %v10024 = vpop.f32.mrf.mxu0
        %v10025 = vadd.f32 %v9936, %v10024
        %10026 = vdwg.mxu0
        %10027 = vmatpush.bf16.msra.mxu0 %v9566
        %10028 = vmatpush.bf16.msra.mxu0 %v9565
        %10029 = vmatpush.bf16.msra.mxu0 %v9564
        %10030 = vmatpush.bf16.msra.mxu0 %v9563
        %10031 = vmatpush.bf16.msra.mxu0 %v9562
        %10032 = vmatpush.bf16.msra.mxu0 %v9561
        %10033 = vmatpush.bf16.msra.mxu0 %v9560
        %10034 = vmatpush.bf16.msra.mxu0 %v9559
        %10035 = vmatmul.bf16.gmra.mxu0 %v8955
        %v10036 = vpop.f32.mrf.mxu0
        %v10037 = vadd.f32 %v9948, %v10036
        %v10038 = vpop.f32.mrf.mxu0
        %v10039 = vadd.f32 %v9950, %v10038
        %10040 = vmatmul.bf16.gmra.mxu0 %v8964
        %v10041 = vpop.f32.mrf.mxu0
        %v10042 = vadd.f32 %v9953, %v10041
        %v10043 = vpop.f32.mrf.mxu0
        %v10044 = vadd.f32 %v9955, %v10043
        %10045 = vmatmul.bf16.gmra.mxu0 %v8973
        %v10046 = vpop.f32.mrf.mxu0
        %v10047 = vadd.f32 %v9958, %v10046
        %v10048 = vpop.f32.mrf.mxu0
        %v10049 = vadd.f32 %v9960, %v10048
        %10050 = vmatmul.bf16.gmra.mxu0 %v8982
        %v10051 = vpop.f32.mrf.mxu0
        %v10052 = vadd.f32 %v9963, %v10051
        %v10053 = vpop.f32.mrf.mxu0
        %v10054 = vadd.f32 %v9965, %v10053
        %10055 = vmatmul.bf16.gmra.mxu0 %v8991
        %v10056 = vpop.f32.mrf.mxu0
        %v10057 = vadd.f32 %v9968, %v10056
        %v10058 = vpop.f32.mrf.mxu0
        %v10059 = vadd.f32 %v9970, %v10058
        %10060 = vmatmul.bf16.gmra.mxu0 %v9000
        %v10061 = vpop.f32.mrf.mxu0
        %v10062 = vadd.f32 %v9973, %v10061
        %v10063 = vpop.f32.mrf.mxu0
        %v10064 = vadd.f32 %v9975, %v10063
        %10065 = vmatmul.bf16.gmra.mxu0 %v9009
        %v10066 = vpop.f32.mrf.mxu0
        %v10067 = vadd.f32 %v9978, %v10066
        %v10068 = vpop.f32.mrf.mxu0
        %v10069 = vadd.f32 %v9980, %v10068
        %10070 = vmatmul.bf16.gmra.mxu0 %v9018
        %v10071 = vpop.f32.mrf.mxu0
        %v10072 = vadd.f32 %v9983, %v10071
        %v10073 = vpop.f32.mrf.mxu0
        %v10074 = vadd.f32 %v9985, %v10073
        %10075 = vmatmul.bf16.gmra.mxu0 %v9027
        %v10076 = vpop.f32.mrf.mxu0
        %v10077 = vadd.f32 %v9988, %v10076
        %v10078 = vpop.f32.mrf.mxu0
        %v10079 = vadd.f32 %v9990, %v10078
        %10080 = vmatmul.bf16.gmra.mxu0 %v9036
        %v10081 = vpop.f32.mrf.mxu0
        %v10082 = vadd.f32 %v9993, %v10081
        %v10083 = vpop.f32.mrf.mxu0
        %v10084 = vadd.f32 %v9995, %v10083
        %10085 = vmatmul.bf16.gmra.mxu0 %v9045
        %v10086 = vpop.f32.mrf.mxu0
        %v10087 = vadd.f32 %v9998, %v10086
        %v10088 = vpop.f32.mrf.mxu0
        %v10089 = vadd.f32 %v10000, %v10088
        %10090 = vmatmul.bf16.gmra.mxu0 %v9054
        %v10091 = vpop.f32.mrf.mxu0
        %v10092 = vadd.f32 %v10003, %v10091
        %v10093 = vpop.f32.mrf.mxu0
        %v10094 = vadd.f32 %v10005, %v10093
        %10095 = vmatmul.bf16.gmra.mxu0 %v9063
        %v10096 = vpop.f32.mrf.mxu0
        %v10097 = vadd.f32 %v10008, %v10096
        %v10098 = vpop.f32.mrf.mxu0
        %v10099 = vadd.f32 %v10010, %v10098
        %10100 = vmatmul.bf16.gmra.mxu0 %v9072
        %v10101 = vpop.f32.mrf.mxu0
        %v10102 = vadd.f32 %v10013, %v10101
        %v10103 = vpop.f32.mrf.mxu0
        %v10104 = vadd.f32 %v10015, %v10103
        %10105 = vmatmul.bf16.gmra.mxu0 %v9081
        %v10106 = vpop.f32.mrf.mxu0
        %v10107 = vadd.f32 %v10018, %v10106
        %v10108 = vpop.f32.mrf.mxu0
        %v10109 = vadd.f32 %v10020, %v10108
        %10110 = vmatmul.bf16.gmra.mxu0 %v9090
        %v10111 = vpop.f32.mrf.mxu0
        %v10112 = vadd.f32 %v10023, %v10111
        %v10113 = vpop.f32.mrf.mxu0
        %v10114 = vadd.f32 %v10025, %v10113
        %10115 = vdwg.mxu0
        %10116 = vmatpush.bf16.msra.mxu0 %v9574
        %10117 = vmatpush.bf16.msra.mxu0 %v9573
        %10118 = vmatpush.bf16.msra.mxu0 %v9572
        %10119 = vmatpush.bf16.msra.mxu0 %v9571
        %10120 = vmatpush.bf16.msra.mxu0 %v9570
        %10121 = vmatpush.bf16.msra.mxu0 %v9569
        %10122 = vmatpush.bf16.msra.mxu0 %v9568
        %10123 = vmatpush.bf16.msra.mxu0 %v9567
        %10124 = vmatmul.bf16.gmra.mxu0 %v8956
        %v10125 = vpop.f32.mrf.mxu0
        %v10126 = vadd.f32 %v10037, %v10125
        %v10127 = vpop.f32.mrf.mxu0
        %v10128 = vadd.f32 %v10039, %v10127
        %10129 = vmatmul.bf16.gmra.mxu0 %v8965
        %v10130 = vpop.f32.mrf.mxu0
        %v10131 = vadd.f32 %v10042, %v10130
        %v10132 = vpop.f32.mrf.mxu0
        %v10133 = vadd.f32 %v10044, %v10132
        %10134 = vmatmul.bf16.gmra.mxu0 %v8974
        %v10135 = vpop.f32.mrf.mxu0
        %v10136 = vadd.f32 %v10047, %v10135
        %v10137 = vpop.f32.mrf.mxu0
        %v10138 = vadd.f32 %v10049, %v10137
        %10139 = vmatmul.bf16.gmra.mxu0 %v8983
        %v10140 = vpop.f32.mrf.mxu0
        %v10141 = vadd.f32 %v10052, %v10140
        %v10142 = vpop.f32.mrf.mxu0
        %v10143 = vadd.f32 %v10054, %v10142
        %10144 = vmatmul.bf16.gmra.mxu0 %v8992
        %v10145 = vpop.f32.mrf.mxu0
        %v10146 = vadd.f32 %v10057, %v10145
        %v10147 = vpop.f32.mrf.mxu0
        %v10148 = vadd.f32 %v10059, %v10147
        %10149 = vmatmul.bf16.gmra.mxu0 %v9001
        %v10150 = vpop.f32.mrf.mxu0
        %v10151 = vadd.f32 %v10062, %v10150
        %v10152 = vpop.f32.mrf.mxu0
        %v10153 = vadd.f32 %v10064, %v10152
        %10154 = vmatmul.bf16.gmra.mxu0 %v9010
        %v10155 = vpop.f32.mrf.mxu0
        %v10156 = vadd.f32 %v10067, %v10155
        %v10157 = vpop.f32.mrf.mxu0
        %v10158 = vadd.f32 %v10069, %v10157
        %10159 = vmatmul.bf16.gmra.mxu0 %v9019
        %v10160 = vpop.f32.mrf.mxu0
        %v10161 = vadd.f32 %v10072, %v10160
        %v10162 = vpop.f32.mrf.mxu0
        %v10163 = vadd.f32 %v10074, %v10162
        %10164 = vmatmul.bf16.gmra.mxu0 %v9028
        %v10165 = vpop.f32.mrf.mxu0
        %v10166 = vadd.f32 %v10077, %v10165
        %v10167 = vpop.f32.mrf.mxu0
        %v10168 = vadd.f32 %v10079, %v10167
        %10169 = vmatmul.bf16.gmra.mxu0 %v9037
        %v10170 = vpop.f32.mrf.mxu0
        %v10171 = vadd.f32 %v10082, %v10170
        %v10172 = vpop.f32.mrf.mxu0
        %v10173 = vadd.f32 %v10084, %v10172
        %10174 = vmatmul.bf16.gmra.mxu0 %v9046
        %v10175 = vpop.f32.mrf.mxu0
        %v10176 = vadd.f32 %v10087, %v10175
        %v10177 = vpop.f32.mrf.mxu0
        %v10178 = vadd.f32 %v10089, %v10177
        %10179 = vmatmul.bf16.gmra.mxu0 %v9055
        %v10180 = vpop.f32.mrf.mxu0
        %v10181 = vadd.f32 %v10092, %v10180
        %v10182 = vpop.f32.mrf.mxu0
        %v10183 = vadd.f32 %v10094, %v10182
        %10184 = vmatmul.bf16.gmra.mxu0 %v9064
        %v10185 = vpop.f32.mrf.mxu0
        %v10186 = vadd.f32 %v10097, %v10185
        %v10187 = vpop.f32.mrf.mxu0
        %v10188 = vadd.f32 %v10099, %v10187
        %10189 = vmatmul.bf16.gmra.mxu0 %v9073
        %v10190 = vpop.f32.mrf.mxu0
        %v10191 = vadd.f32 %v10102, %v10190
        %v10192 = vpop.f32.mrf.mxu0
        %v10193 = vadd.f32 %v10104, %v10192
        %10194 = vmatmul.bf16.gmra.mxu0 %v9082
        %v10195 = vpop.f32.mrf.mxu0
        %v10196 = vadd.f32 %v10107, %v10195
        %v10197 = vpop.f32.mrf.mxu0
        %v10198 = vadd.f32 %v10109, %v10197
        %10199 = vmatmul.bf16.gmra.mxu0 %v9091
        %v10200 = vpop.f32.mrf.mxu0
        %v10201 = vadd.f32 %v10112, %v10200
        %v10202 = vpop.f32.mrf.mxu0
        %v10203 = vadd.f32 %v10114, %v10202
        %10204 = vdwg.mxu0
        %10205 = vmatpush.bf16.msra.mxu0 %v9582
        %10206 = vmatpush.bf16.msra.mxu0 %v9581
        %10207 = vmatpush.bf16.msra.mxu0 %v9580
        %10208 = vmatpush.bf16.msra.mxu0 %v9579
        %10209 = vmatpush.bf16.msra.mxu0 %v9578
        %10210 = vmatpush.bf16.msra.mxu0 %v9577
        %10211 = vmatpush.bf16.msra.mxu0 %v9576
        %10212 = vmatpush.bf16.msra.mxu0 %v9575
        %10213 = vmatmul.bf16.gmra.mxu0 %v8957
        %v10214 = vpop.f32.mrf.mxu0
        %v10215 = vadd.f32 %v10126, %v10214
        %v10216 = vpop.f32.mrf.mxu0
        %v10217 = vadd.f32 %v10128, %v10216
        %10218 = vmatmul.bf16.gmra.mxu0 %v8966
        %v10219 = vpop.f32.mrf.mxu0
        %v10220 = vadd.f32 %v10131, %v10219
        %v10221 = vpop.f32.mrf.mxu0
        %v10222 = vadd.f32 %v10133, %v10221
        %10223 = vmatmul.bf16.gmra.mxu0 %v8975
        %v10224 = vpop.f32.mrf.mxu0
        %v10225 = vadd.f32 %v10136, %v10224
        %v10226 = vpop.f32.mrf.mxu0
        %v10227 = vadd.f32 %v10138, %v10226
        %10228 = vmatmul.bf16.gmra.mxu0 %v8984
        %v10229 = vpop.f32.mrf.mxu0
        %v10230 = vadd.f32 %v10141, %v10229
        %v10231 = vpop.f32.mrf.mxu0
        %v10232 = vadd.f32 %v10143, %v10231
        %10233 = vmatmul.bf16.gmra.mxu0 %v8993
        %v10234 = vpop.f32.mrf.mxu0
        %v10235 = vadd.f32 %v10146, %v10234
        %v10236 = vpop.f32.mrf.mxu0
        %v10237 = vadd.f32 %v10148, %v10236
        %10238 = vmatmul.bf16.gmra.mxu0 %v9002
        %v10239 = vpop.f32.mrf.mxu0
        %v10240 = vadd.f32 %v10151, %v10239
        %v10241 = vpop.f32.mrf.mxu0
        %v10242 = vadd.f32 %v10153, %v10241
        %10243 = vmatmul.bf16.gmra.mxu0 %v9011
        %v10244 = vpop.f32.mrf.mxu0
        %v10245 = vadd.f32 %v10156, %v10244
        %v10246 = vpop.f32.mrf.mxu0
        %v10247 = vadd.f32 %v10158, %v10246
        %10248 = vmatmul.bf16.gmra.mxu0 %v9020
        %v10249 = vpop.f32.mrf.mxu0
        %v10250 = vadd.f32 %v10161, %v10249
        %v10251 = vpop.f32.mrf.mxu0
        %v10252 = vadd.f32 %v10163, %v10251
        %10253 = vmatmul.bf16.gmra.mxu0 %v9029
        %v10254 = vpop.f32.mrf.mxu0
        %v10255 = vadd.f32 %v10166, %v10254
        %v10256 = vpop.f32.mrf.mxu0
        %v10257 = vadd.f32 %v10168, %v10256
        %10258 = vmatmul.bf16.gmra.mxu0 %v9038
        %v10259 = vpop.f32.mrf.mxu0
        %v10260 = vadd.f32 %v10171, %v10259
        %v10261 = vpop.f32.mrf.mxu0
        %v10262 = vadd.f32 %v10173, %v10261
        %10263 = vmatmul.bf16.gmra.mxu0 %v9047
        %v10264 = vpop.f32.mrf.mxu0
        %v10265 = vadd.f32 %v10176, %v10264
        %v10266 = vpop.f32.mrf.mxu0
        %v10267 = vadd.f32 %v10178, %v10266
        %10268 = vmatmul.bf16.gmra.mxu0 %v9056
        %v10269 = vpop.f32.mrf.mxu0
        %v10270 = vadd.f32 %v10181, %v10269
        %v10271 = vpop.f32.mrf.mxu0
        %v10272 = vadd.f32 %v10183, %v10271
        %10273 = vmatmul.bf16.gmra.mxu0 %v9065
        %v10274 = vpop.f32.mrf.mxu0
        %v10275 = vadd.f32 %v10186, %v10274
        %v10276 = vpop.f32.mrf.mxu0
        %v10277 = vadd.f32 %v10188, %v10276
        %10278 = vmatmul.bf16.gmra.mxu0 %v9074
        %v10279 = vpop.f32.mrf.mxu0
        %v10280 = vadd.f32 %v10191, %v10279
        %v10281 = vpop.f32.mrf.mxu0
        %v10282 = vadd.f32 %v10193, %v10281
        %10283 = vmatmul.bf16.gmra.mxu0 %v9083
        %v10284 = vpop.f32.mrf.mxu0
        %v10285 = vadd.f32 %v10196, %v10284
        %v10286 = vpop.f32.mrf.mxu0
        %v10287 = vadd.f32 %v10198, %v10286
        %10288 = vmatmul.bf16.gmra.mxu0 %v9092
        %v10289 = vpop.f32.mrf.mxu0
        %v10290 = vadd.f32 %v10201, %v10289
        %v10291 = vpop.f32.mrf.mxu0
        %v10292 = vadd.f32 %v10203, %v10291
        %10293 = vdwg.mxu0
        %10294 = vmatpush.bf16.msra.mxu0 %v9590
        %10295 = vmatpush.bf16.msra.mxu0 %v9589
        %10296 = vmatpush.bf16.msra.mxu0 %v9588
        %10297 = vmatpush.bf16.msra.mxu0 %v9587
        %10298 = vmatpush.bf16.msra.mxu0 %v9586
        %10299 = vmatpush.bf16.msra.mxu0 %v9585
        %10300 = vmatpush.bf16.msra.mxu0 %v9584
        %10301 = vmatpush.bf16.msra.mxu0 %v9583
        %10302 = vmatmul.bf16.gmra.mxu0 %v8958
        %v10303 = vpop.f32.mrf.mxu0
        %v10304 = vadd.f32 %v10215, %v10303
        %v10305 = vpop.f32.mrf.mxu0
        %v10306 = vadd.f32 %v10217, %v10305
        %10307 = vmatmul.bf16.gmra.mxu0 %v8967
        %v10308 = vpop.f32.mrf.mxu0
        %v10309 = vadd.f32 %v10220, %v10308
        %v10310 = vpop.f32.mrf.mxu0
        %v10311 = vadd.f32 %v10222, %v10310
        %10312 = vmatmul.bf16.gmra.mxu0 %v8976
        %v10313 = vpop.f32.mrf.mxu0
        %v10314 = vadd.f32 %v10225, %v10313
        %v10315 = vpop.f32.mrf.mxu0
        %v10316 = vadd.f32 %v10227, %v10315
        %10317 = vmatmul.bf16.gmra.mxu0 %v8985
        %v10318 = vpop.f32.mrf.mxu0
        %v10319 = vadd.f32 %v10230, %v10318
        %v10320 = vpop.f32.mrf.mxu0
        %v10321 = vadd.f32 %v10232, %v10320
        %10322 = vmatmul.bf16.gmra.mxu0 %v8994
        %v10323 = vpop.f32.mrf.mxu0
        %v10324 = vadd.f32 %v10235, %v10323
        %v10325 = vpop.f32.mrf.mxu0
        %v10326 = vadd.f32 %v10237, %v10325
        %10327 = vmatmul.bf16.gmra.mxu0 %v9003
        %v10328 = vpop.f32.mrf.mxu0
        %v10329 = vadd.f32 %v10240, %v10328
        %v10330 = vpop.f32.mrf.mxu0
        %v10331 = vadd.f32 %v10242, %v10330
        %10332 = vmatmul.bf16.gmra.mxu0 %v9012
        %v10333 = vpop.f32.mrf.mxu0
        %v10334 = vadd.f32 %v10245, %v10333
        %v10335 = vpop.f32.mrf.mxu0
        %v10336 = vadd.f32 %v10247, %v10335
        %10337 = vmatmul.bf16.gmra.mxu0 %v9021
        %v10338 = vpop.f32.mrf.mxu0
        %v10339 = vadd.f32 %v10250, %v10338
        %v10340 = vpop.f32.mrf.mxu0
        %v10341 = vadd.f32 %v10252, %v10340
        %10342 = vmatmul.bf16.gmra.mxu0 %v9030
        %v10343 = vpop.f32.mrf.mxu0
        %v10344 = vadd.f32 %v10255, %v10343
        %v10345 = vpop.f32.mrf.mxu0
        %v10346 = vadd.f32 %v10257, %v10345
        %10347 = vmatmul.bf16.gmra.mxu0 %v9039
        %v10348 = vpop.f32.mrf.mxu0
        %v10349 = vadd.f32 %v10260, %v10348
        %v10350 = vpop.f32.mrf.mxu0
        %v10351 = vadd.f32 %v10262, %v10350
        %10352 = vmatmul.bf16.gmra.mxu0 %v9048
        %v10353 = vpop.f32.mrf.mxu0
        %v10354 = vadd.f32 %v10265, %v10353
        %v10355 = vpop.f32.mrf.mxu0
        %v10356 = vadd.f32 %v10267, %v10355
        %10357 = vmatmul.bf16.gmra.mxu0 %v9057
        %v10358 = vpop.f32.mrf.mxu0
        %v10359 = vadd.f32 %v10270, %v10358
        %v10360 = vpop.f32.mrf.mxu0
        %v10361 = vadd.f32 %v10272, %v10360
        %10362 = vmatmul.bf16.gmra.mxu0 %v9066
        %v10363 = vpop.f32.mrf.mxu0
        %v10364 = vadd.f32 %v10275, %v10363
        %v10365 = vpop.f32.mrf.mxu0
        %v10366 = vadd.f32 %v10277, %v10365
        %10367 = vmatmul.bf16.gmra.mxu0 %v9075
        %v10368 = vpop.f32.mrf.mxu0
        %v10369 = vadd.f32 %v10280, %v10368
        %v10370 = vpop.f32.mrf.mxu0
        %v10371 = vadd.f32 %v10282, %v10370
        %10372 = vmatmul.bf16.gmra.mxu0 %v9084
        %v10373 = vpop.f32.mrf.mxu0
        %v10374 = vadd.f32 %v10285, %v10373
        %v10375 = vpop.f32.mrf.mxu0
        %v10376 = vadd.f32 %v10287, %v10375
        %10377 = vmatmul.bf16.gmra.mxu0 %v9093
        %v10378 = vpop.f32.mrf.mxu0
        %v10379 = vadd.f32 %v10290, %v10378
        %v10380 = vpop.f32.mrf.mxu0
        %v10381 = vadd.f32 %v10292, %v10380
        %10382 = vdwg.mxu0
        %10383 = vmatpush.bf16.msra.mxu0 %v9598
        %10384 = vmatpush.bf16.msra.mxu0 %v9597
        %10385 = vmatpush.bf16.msra.mxu0 %v9596
        %10386 = vmatpush.bf16.msra.mxu0 %v9595
        %10387 = vmatpush.bf16.msra.mxu0 %v9594
        %10388 = vmatpush.bf16.msra.mxu0 %v9593
        %10389 = vmatpush.bf16.msra.mxu0 %v9592
        %10390 = vmatpush.bf16.msra.mxu0 %v9591
        %10391 = vmatmul.bf16.gmra.mxu0 %v8959
        %v10392 = vpop.f32.mrf.mxu0
        %v10393 = vadd.f32 %v10304, %v10392
        %v10394 = vpop.f32.mrf.mxu0
        %v10395 = vadd.f32 %v10306, %v10394
        %10396 = vmatmul.bf16.gmra.mxu0 %v8968
        %v10397 = vpop.f32.mrf.mxu0
        %v10398 = vadd.f32 %v10309, %v10397
        %v10399 = vpop.f32.mrf.mxu0
        %v10400 = vadd.f32 %v10311, %v10399
        %10401 = vmatmul.bf16.gmra.mxu0 %v8977
        %v10402 = vpop.f32.mrf.mxu0
        %v10403 = vadd.f32 %v10314, %v10402
        %v10404 = vpop.f32.mrf.mxu0
        %v10405 = vadd.f32 %v10316, %v10404
        %10406 = vmatmul.bf16.gmra.mxu0 %v8986
        %v10407 = vpop.f32.mrf.mxu0
        %v10408 = vadd.f32 %v10319, %v10407
        %v10409 = vpop.f32.mrf.mxu0
        %v10410 = vadd.f32 %v10321, %v10409
        %10411 = vmatmul.bf16.gmra.mxu0 %v8995
        %v10412 = vpop.f32.mrf.mxu0
        %v10413 = vadd.f32 %v10324, %v10412
        %v10414 = vpop.f32.mrf.mxu0
        %v10415 = vadd.f32 %v10326, %v10414
        %10416 = vmatmul.bf16.gmra.mxu0 %v9004
        %v10417 = vpop.f32.mrf.mxu0
        %v10418 = vadd.f32 %v10329, %v10417
        %v10419 = vpop.f32.mrf.mxu0
        %v10420 = vadd.f32 %v10331, %v10419
        %10421 = vmatmul.bf16.gmra.mxu0 %v9013
        %v10422 = vpop.f32.mrf.mxu0
        %v10423 = vadd.f32 %v10334, %v10422
        %v10424 = vpop.f32.mrf.mxu0
        %v10425 = vadd.f32 %v10336, %v10424
        %10426 = vmatmul.bf16.gmra.mxu0 %v9022
        %v10427 = vpop.f32.mrf.mxu0
        %v10428 = vadd.f32 %v10339, %v10427
        %v10429 = vpop.f32.mrf.mxu0
        %v10430 = vadd.f32 %v10341, %v10429
        %10431 = vmatmul.bf16.gmra.mxu0 %v9031
        %v10432 = vpop.f32.mrf.mxu0
        %v10433 = vadd.f32 %v10344, %v10432
        %v10434 = vpop.f32.mrf.mxu0
        %v10435 = vadd.f32 %v10346, %v10434
        %10436 = vmatmul.bf16.gmra.mxu0 %v9040
        %v10437 = vpop.f32.mrf.mxu0
        %v10438 = vadd.f32 %v10349, %v10437
        %v10439 = vpop.f32.mrf.mxu0
        %v10440 = vadd.f32 %v10351, %v10439
        %10441 = vmatmul.bf16.gmra.mxu0 %v9049
        %v10442 = vpop.f32.mrf.mxu0
        %v10443 = vadd.f32 %v10354, %v10442
        %v10444 = vpop.f32.mrf.mxu0
        %v10445 = vadd.f32 %v10356, %v10444
        %10446 = vmatmul.bf16.gmra.mxu0 %v9058
        %v10447 = vpop.f32.mrf.mxu0
        %v10448 = vadd.f32 %v10359, %v10447
        %v10449 = vpop.f32.mrf.mxu0
        %v10450 = vadd.f32 %v10361, %v10449
        %10451 = vmatmul.bf16.gmra.mxu0 %v9067
        %v10452 = vpop.f32.mrf.mxu0
        %v10453 = vadd.f32 %v10364, %v10452
        %v10454 = vpop.f32.mrf.mxu0
        %v10455 = vadd.f32 %v10366, %v10454
        %10456 = vmatmul.bf16.gmra.mxu0 %v9076
        %v10457 = vpop.f32.mrf.mxu0
        %v10458 = vadd.f32 %v10369, %v10457
        %v10459 = vpop.f32.mrf.mxu0
        %v10460 = vadd.f32 %v10371, %v10459
        %10461 = vmatmul.bf16.gmra.mxu0 %v9085
        %v10462 = vpop.f32.mrf.mxu0
        %v10463 = vadd.f32 %v10374, %v10462
        %v10464 = vpop.f32.mrf.mxu0
        %v10465 = vadd.f32 %v10376, %v10464
        %10466 = vmatmul.bf16.gmra.mxu0 %v9094
        %v10467 = vpop.f32.mrf.mxu0
        %v10468 = vadd.f32 %v10379, %v10467
        %v10469 = vpop.f32.mrf.mxu0
        %v10470 = vadd.f32 %v10381, %v10469
        %10471 = vdwg.mxu0
        %v10472 = vld [vmem:[%s1134] sm:$0xf]
        %v10473 = vld [vmem:[%s1134 + $0x4] sm:$0xf]
        %v10474 = vld [vmem:[%s1134 + $0x8] sm:$0x1]
        %v10475 = vld [vmem:[%s1134 + $0xc] sm:$0xf]
        %v10476 = vld [vmem:[%s1134 + $0x10] sm:$0xf]
        %v10477 = vld [vmem:[%s1134 + $0x14] sm:$0x1]
        %v10478 = vld [vmem:[%s1134 + $0x18] sm:$0xf]
        %v10479 = vld [vmem:[%s1134 + $0x1c] sm:$0xf]
        %v10480 = vld [vmem:[%s1134 + $0x20] sm:$0x1]
        %v10481 = vld [vmem:[%s1134 + $0x24] sm:$0xf]
        %v10482 = vld [vmem:[%s1134 + $0x28] sm:$0xf]
        %v10483 = vld [vmem:[%s1134 + $0x2c] sm:$0x1]
        %v10484 = vld [vmem:[%s1134 + $0x30] sm:$0xf]
        %v10485 = vld [vmem:[%s1134 + $0x34] sm:$0xf]
        %v10486 = vld [vmem:[%s1134 + $0x38] sm:$0x1]
        %v10487 = vld [vmem:[%s1134 + $0x3c] sm:$0xf]
        %v10488 = vld [vmem:[%s1134 + $0x40] sm:$0xf]
        %v10489 = vld [vmem:[%s1134 + $0x44] sm:$0x1]
        %v10490 = vld [vmem:[%s1134 + $0x48] sm:$0xf]
        %v10491 = vld [vmem:[%s1134 + $0x4c] sm:$0xf]
        %v10492 = vld [vmem:[%s1134 + $0x50] sm:$0x1]
        %v10493 = vld [vmem:[%s1134 + $0x54] sm:$0xf]
        %v10494 = vld [vmem:[%s1134 + $0x58] sm:$0xf]
        %v10495 = vld [vmem:[%s1134 + $0x5c] sm:$0x1]
        %v10496 = vld [vmem:[%s1134 + $0x60] sm:$0xf]
        %v10497 = vld [vmem:[%s1134 + $0x64] sm:$0xf]
        %v10498 = vld [vmem:[%s1134 + $0x68] sm:$0x1]
        %v10499 = vld [vmem:[%s1134 + $0x6c] sm:$0xf]
        %v10500 = vld [vmem:[%s1134 + $0x70] sm:$0xf]
        %v10501 = vld [vmem:[%s1134 + $0x74] sm:$0x1]
        %v10502 = vld [vmem:[%s1134 + $0x78] sm:$0xf]
        %v10503 = vld [vmem:[%s1134 + $0x7c] sm:$0xf]
        %v10504 = vld [vmem:[%s1134 + $0x80] sm:$0x1]
        %v10505 = vld [vmem:[%s1134 + $0x84] sm:$0xf]
        %v10506 = vld [vmem:[%s1134 + $0x88] sm:$0xf]
        %v10507 = vld [vmem:[%s1134 + $0x8c] sm:$0x1]
        %v10508 = vld [vmem:[%s1134 + $0x90] sm:$0xf]
        %v10509 = vld [vmem:[%s1134 + $0x94] sm:$0xf]
        %v10510 = vld [vmem:[%s1134 + $0x98] sm:$0x1]
        %v10511 = vld [vmem:[%s1134 + $0x9c] sm:$0xf]
        %v10512 = vld [vmem:[%s1134 + $0xa0] sm:$0xf]
        %v10513 = vld [vmem:[%s1134 + $0xa4] sm:$0x1]
        %v10514 = vld [vmem:[%s1134 + $0xa8] sm:$0xf]
        %v10515 = vld [vmem:[%s1134 + $0xac] sm:$0xf]
        %v10516 = vld [vmem:[%s1134 + $0xb0] sm:$0x1]
        %v10517 = vld [vmem:[%s1134 + $0xb4] sm:$0xf]
        %v10518 = vld [vmem:[%s1134 + $0xb8] sm:$0xf]
        %v10519 = vld [vmem:[%s1134 + $0xbc] sm:$0x1]
        %v10521 = vshrl.u32 %v10472, 16
        %v10523 = vrot.slane %v10521, 4
        %v10524 = vshll.u32 %v10472, 16
        %v10526 = vrot.slane %v10524, 5
        %v10527 = vor.u32 %v10523, %v10526
        %v10528 = vrot.slane %v10527, 4
        %v10530 = vshll.u32 %v10473, 16
        %v10532 = vrot.slane %v10530, 5
        %v10533 = vsel %vm410, %v10528, %v10532
        %v10534 = vshrl.u32 %v10473, 16
        %v10536 = vrot.slane %v10534, 4
        %v10537 = vor.u32 %v10536, %v10532
        %v10538 = vrot.slane %v10537, 4
        %v10540 = vshll.u32 %v10474, 16
        %v10542 = vrot.slane %v10540, 5
        %v10543 = vsel %vm410, %v10538, %v10542
        %v10545 = vshrl.u32 %v10475, 16
        %v10547 = vrot.slane %v10545, 4
        %v10548 = vshll.u32 %v10475, 16
        %v10550 = vrot.slane %v10548, 5
        %v10551 = vor.u32 %v10547, %v10550
        %v10552 = vrot.slane %v10551, 4
        %v10554 = vshll.u32 %v10476, 16
        %v10556 = vrot.slane %v10554, 5
        %v10557 = vsel %vm410, %v10552, %v10556
        %v10558 = vshrl.u32 %v10476, 16
        %v10560 = vrot.slane %v10558, 4
        %v10561 = vor.u32 %v10560, %v10556
        %v10562 = vrot.slane %v10561, 4
        %v10564 = vshll.u32 %v10477, 16
        %v10566 = vrot.slane %v10564, 5
        %v10567 = vsel %vm410, %v10562, %v10566
        %v10569 = vshrl.u32 %v10478, 16
        %v10571 = vrot.slane %v10569, 4
        %v10572 = vshll.u32 %v10478, 16
        %v10574 = vrot.slane %v10572, 5
        %v10575 = vor.u32 %v10571, %v10574
        %v10576 = vrot.slane %v10575, 4
        %v10578 = vshll.u32 %v10479, 16
        %v10580 = vrot.slane %v10578, 5
        %v10581 = vsel %vm410, %v10576, %v10580
        %v10582 = vshrl.u32 %v10479, 16
        %v10584 = vrot.slane %v10582, 4
        %v10585 = vor.u32 %v10584, %v10580
        %v10586 = vrot.slane %v10585, 4
        %v10588 = vshll.u32 %v10480, 16
        %v10590 = vrot.slane %v10588, 5
        %v10591 = vsel %vm410, %v10586, %v10590
        %v10593 = vshrl.u32 %v10481, 16
        %v10595 = vrot.slane %v10593, 4
        %v10596 = vshll.u32 %v10481, 16
        %v10598 = vrot.slane %v10596, 5
        %v10599 = vor.u32 %v10595, %v10598
        %v10600 = vrot.slane %v10599, 4
        %v10602 = vshll.u32 %v10482, 16
        %v10604 = vrot.slane %v10602, 5
        %v10605 = vsel %vm410, %v10600, %v10604
        %v10606 = vshrl.u32 %v10482, 16
        %v10608 = vrot.slane %v10606, 4
        %v10609 = vor.u32 %v10608, %v10604
        %v10610 = vrot.slane %v10609, 4
        %v10612 = vshll.u32 %v10483, 16
        %v10614 = vrot.slane %v10612, 5
        %v10615 = vsel %vm410, %v10610, %v10614
        %v10617 = vshrl.u32 %v10484, 16
        %v10619 = vrot.slane %v10617, 4
        %v10620 = vshll.u32 %v10484, 16
        %v10622 = vrot.slane %v10620, 5
        %v10623 = vor.u32 %v10619, %v10622
        %v10624 = vrot.slane %v10623, 4
        %v10626 = vshll.u32 %v10485, 16
        %v10628 = vrot.slane %v10626, 5
        %v10629 = vsel %vm410, %v10624, %v10628
        %v10630 = vshrl.u32 %v10485, 16
        %v10632 = vrot.slane %v10630, 4
        %v10633 = vor.u32 %v10632, %v10628
        %v10634 = vrot.slane %v10633, 4
        %v10636 = vshll.u32 %v10486, 16
        %v10638 = vrot.slane %v10636, 5
        %v10639 = vsel %vm410, %v10634, %v10638
        %v10641 = vshrl.u32 %v10487, 16
        %v10643 = vrot.slane %v10641, 4
        %v10644 = vshll.u32 %v10487, 16
        %v10646 = vrot.slane %v10644, 5
        %v10647 = vor.u32 %v10643, %v10646
        %v10648 = vrot.slane %v10647, 4
        %v10650 = vshll.u32 %v10488, 16
        %v10652 = vrot.slane %v10650, 5
        %v10653 = vsel %vm410, %v10648, %v10652
        %v10654 = vshrl.u32 %v10488, 16
        %v10656 = vrot.slane %v10654, 4
        %v10657 = vor.u32 %v10656, %v10652
        %v10658 = vrot.slane %v10657, 4
        %v10660 = vshll.u32 %v10489, 16
        %v10662 = vrot.slane %v10660, 5
        %v10663 = vsel %vm410, %v10658, %v10662
        %v10665 = vshrl.u32 %v10490, 16
        %v10667 = vrot.slane %v10665, 4
        %v10668 = vshll.u32 %v10490, 16
        %v10670 = vrot.slane %v10668, 5
        %v10671 = vor.u32 %v10667, %v10670
        %v10672 = vrot.slane %v10671, 4
        %v10674 = vshll.u32 %v10491, 16
        %v10676 = vrot.slane %v10674, 5
        %v10677 = vsel %vm410, %v10672, %v10676
        %v10678 = vshrl.u32 %v10491, 16
        %v10680 = vrot.slane %v10678, 4
        %v10681 = vor.u32 %v10680, %v10676
        %v10682 = vrot.slane %v10681, 4
        %v10684 = vshll.u32 %v10492, 16
        %v10686 = vrot.slane %v10684, 5
        %v10687 = vsel %vm410, %v10682, %v10686
        %v10689 = vshrl.u32 %v10493, 16
        %v10691 = vrot.slane %v10689, 4
        %v10692 = vshll.u32 %v10493, 16
        %v10694 = vrot.slane %v10692, 5
        %v10695 = vor.u32 %v10691, %v10694
        %v10696 = vrot.slane %v10695, 4
        %v10698 = vshll.u32 %v10494, 16
        %v10700 = vrot.slane %v10698, 5
        %v10701 = vsel %vm410, %v10696, %v10700
        %v10702 = vshrl.u32 %v10494, 16
        %v10704 = vrot.slane %v10702, 4
        %v10705 = vor.u32 %v10704, %v10700
        %v10706 = vrot.slane %v10705, 4
        %v10708 = vshll.u32 %v10495, 16
        %v10710 = vrot.slane %v10708, 5
        %v10711 = vsel %vm410, %v10706, %v10710
        %v10713 = vshrl.u32 %v10496, 16
        %v10715 = vrot.slane %v10713, 4
        %v10716 = vshll.u32 %v10496, 16
        %v10718 = vrot.slane %v10716, 5
        %v10719 = vor.u32 %v10715, %v10718
        %v10720 = vrot.slane %v10719, 4
        %v10722 = vshll.u32 %v10497, 16
        %v10724 = vrot.slane %v10722, 5
        %v10725 = vsel %vm410, %v10720, %v10724
        %v10726 = vshrl.u32 %v10497, 16
        %v10728 = vrot.slane %v10726, 4
        %v10729 = vor.u32 %v10728, %v10724
        %v10730 = vrot.slane %v10729, 4
        %v10732 = vshll.u32 %v10498, 16
        %v10734 = vrot.slane %v10732, 5
        %v10735 = vsel %vm410, %v10730, %v10734
        %v10737 = vshrl.u32 %v10499, 16
        %v10739 = vrot.slane %v10737, 4
        %v10740 = vshll.u32 %v10499, 16
        %v10742 = vrot.slane %v10740, 5
        %v10743 = vor.u32 %v10739, %v10742
        %v10744 = vrot.slane %v10743, 4
        %v10746 = vshll.u32 %v10500, 16
        %v10748 = vrot.slane %v10746, 5
        %v10749 = vsel %vm410, %v10744, %v10748
        %v10750 = vshrl.u32 %v10500, 16
        %v10752 = vrot.slane %v10750, 4
        %v10753 = vor.u32 %v10752, %v10748
        %v10754 = vrot.slane %v10753, 4
        %v10756 = vshll.u32 %v10501, 16
        %v10758 = vrot.slane %v10756, 5
        %v10759 = vsel %vm410, %v10754, %v10758
        %v10761 = vshrl.u32 %v10502, 16
        %v10763 = vrot.slane %v10761, 4
        %v10764 = vshll.u32 %v10502, 16
        %v10766 = vrot.slane %v10764, 5
        %v10767 = vor.u32 %v10763, %v10766
        %v10768 = vrot.slane %v10767, 4
        %v10770 = vshll.u32 %v10503, 16
        %v10772 = vrot.slane %v10770, 5
        %v10773 = vsel %vm410, %v10768, %v10772
        %v10774 = vshrl.u32 %v10503, 16
        %v10776 = vrot.slane %v10774, 4
        %v10777 = vor.u32 %v10776, %v10772
        %v10778 = vrot.slane %v10777, 4
        %v10780 = vshll.u32 %v10504, 16
        %v10782 = vrot.slane %v10780, 5
        %v10783 = vsel %vm410, %v10778, %v10782
        %v10785 = vshrl.u32 %v10505, 16
        %v10787 = vrot.slane %v10785, 4
        %v10788 = vshll.u32 %v10505, 16
        %v10790 = vrot.slane %v10788, 5
        %v10791 = vor.u32 %v10787, %v10790
        %v10792 = vrot.slane %v10791, 4
        %v10794 = vshll.u32 %v10506, 16
        %v10796 = vrot.slane %v10794, 5
        %v10797 = vsel %vm410, %v10792, %v10796
        %v10798 = vshrl.u32 %v10506, 16
        %v10800 = vrot.slane %v10798, 4
        %v10801 = vor.u32 %v10800, %v10796
        %v10802 = vrot.slane %v10801, 4
        %v10804 = vshll.u32 %v10507, 16
        %v10806 = vrot.slane %v10804, 5
        %v10807 = vsel %vm410, %v10802, %v10806
        %v10809 = vshrl.u32 %v10508, 16
        %v10811 = vrot.slane %v10809, 4
        %v10812 = vshll.u32 %v10508, 16
        %v10814 = vrot.slane %v10812, 5
        %v10815 = vor.u32 %v10811, %v10814
        %v10816 = vrot.slane %v10815, 4
        %v10818 = vshll.u32 %v10509, 16
        %v10820 = vrot.slane %v10818, 5
        %v10821 = vsel %vm410, %v10816, %v10820
        %v10822 = vshrl.u32 %v10509, 16
        %v10824 = vrot.slane %v10822, 4
        %v10825 = vor.u32 %v10824, %v10820
        %v10826 = vrot.slane %v10825, 4
        %v10828 = vshll.u32 %v10510, 16
        %v10830 = vrot.slane %v10828, 5
        %v10831 = vsel %vm410, %v10826, %v10830
        %v10833 = vshrl.u32 %v10511, 16
        %v10835 = vrot.slane %v10833, 4
        %v10836 = vshll.u32 %v10511, 16
        %v10838 = vrot.slane %v10836, 5
        %v10839 = vor.u32 %v10835, %v10838
        %v10840 = vrot.slane %v10839, 4
        %v10842 = vshll.u32 %v10512, 16
        %v10844 = vrot.slane %v10842, 5
        %v10845 = vsel %vm410, %v10840, %v10844
        %v10846 = vshrl.u32 %v10512, 16
        %v10848 = vrot.slane %v10846, 4
        %v10849 = vor.u32 %v10848, %v10844
        %v10850 = vrot.slane %v10849, 4
        %v10852 = vshll.u32 %v10513, 16
        %v10854 = vrot.slane %v10852, 5
        %v10855 = vsel %vm410, %v10850, %v10854
        %v10857 = vshrl.u32 %v10514, 16
        %v10859 = vrot.slane %v10857, 4
        %v10860 = vshll.u32 %v10514, 16
        %v10862 = vrot.slane %v10860, 5
        %v10863 = vor.u32 %v10859, %v10862
        %v10864 = vrot.slane %v10863, 4
        %v10866 = vshll.u32 %v10515, 16
        %v10868 = vrot.slane %v10866, 5
        %v10869 = vsel %vm410, %v10864, %v10868
        %v10870 = vshrl.u32 %v10515, 16
        %v10872 = vrot.slane %v10870, 4
        %v10873 = vor.u32 %v10872, %v10868
        %v10874 = vrot.slane %v10873, 4
        %v10876 = vshll.u32 %v10516, 16
        %v10878 = vrot.slane %v10876, 5
        %v10879 = vsel %vm410, %v10874, %v10878
        %v10881 = vshrl.u32 %v10517, 16
        %v10883 = vrot.slane %v10881, 4
        %v10884 = vshll.u32 %v10517, 16
        %v10886 = vrot.slane %v10884, 5
        %v10887 = vor.u32 %v10883, %v10886
        %v10888 = vrot.slane %v10887, 4
        %v10890 = vshll.u32 %v10518, 16
        %v10892 = vrot.slane %v10890, 5
        %v10893 = vsel %vm410, %v10888, %v10892
        %v10894 = vshrl.u32 %v10518, 16
        %v10896 = vrot.slane %v10894, 4
        %v10897 = vor.u32 %v10896, %v10892
        %v10898 = vrot.slane %v10897, 4
        %v10900 = vshll.u32 %v10519, 16
        %v10902 = vrot.slane %v10900, 5
        %v10903 = vsel %vm410, %v10898, %v10902
        %v10904 = vld [vmem:[%s5] sm:$0xf]
        %v10905 = vld [vmem:[%s5 + $0x4] sm:$0xf]
        %v10906 = vld [vmem:[%s5 + $0x8] sm:$0xf]
        %v10907 = vld [vmem:[%s5 + $0xc] sm:$0xf]
        %v10908 = vld [vmem:[%s5 + $0x10] sm:$0xf]
        %v10909 = vld [vmem:[%s5 + $0x14] sm:$0xf]
        %v10910 = vld [vmem:[%s5 + $0x18] sm:$0xf]
        %v10911 = vld [vmem:[%s5 + $0x1c] sm:$0xf]
        %v10912 = vld [vmem:[%s5 + $0x20] sm:$0xf]
        %v10913 = vld [vmem:[%s5 + $0x24] sm:$0xf]
        %v10914 = vld [vmem:[%s5 + $0x28] sm:$0xf]
        %v10915 = vld [vmem:[%s5 + $0x2c] sm:$0xf]
        %v10916 = vld [vmem:[%s5 + $0x30] sm:$0xf]
        %v10917 = vld [vmem:[%s5 + $0x34] sm:$0xf]
        %v10918 = vld [vmem:[%s5 + $0x38] sm:$0xf]
        %v10919 = vld [vmem:[%s5 + $0x3c] sm:$0xf]
        %v10920 = vld [vmem:[%s6] sm:$0x1]
        %v10922 = vperm.slane %v10920, 0
        %v10924 = vunpack.c.l.b16 %v10533
        %v10925 = vunpack.c.l.b16 %v10543
        %v10926 = vunpack.c.l.b16 %v10557
        %v10927 = vunpack.c.l.b16 %v10567
        %v10928 = vunpack.c.l.b16 %v10581
        %v10929 = vunpack.c.l.b16 %v10591
        %v10930 = vunpack.c.l.b16 %v10605
        %v10931 = vunpack.c.l.b16 %v10615
        %v10932 = vunpack.c.l.b16 %v10629
        %v10933 = vunpack.c.l.b16 %v10639
        %v10934 = vunpack.c.l.b16 %v10653
        %v10935 = vunpack.c.l.b16 %v10663
        %v10936 = vunpack.c.l.b16 %v10677
        %v10937 = vunpack.c.l.b16 %v10687
        %v10938 = vunpack.c.l.b16 %v10701
        %v10939 = vunpack.c.l.b16 %v10711
        %v10940 = vunpack.c.l.b16 %v10725
        %v10941 = vunpack.c.l.b16 %v10735
        %v10942 = vunpack.c.l.b16 %v10749
        %v10943 = vunpack.c.l.b16 %v10759
        %v10944 = vunpack.c.l.b16 %v10773
        %v10945 = vunpack.c.l.b16 %v10783
        %v10946 = vunpack.c.l.b16 %v10797
        %v10947 = vunpack.c.l.b16 %v10807
        %v10948 = vunpack.c.l.b16 %v10821
        %v10949 = vunpack.c.l.b16 %v10831
        %v10950 = vunpack.c.l.b16 %v10845
        %v10951 = vunpack.c.l.b16 %v10855
        %v10952 = vunpack.c.l.b16 %v10869
        %v10953 = vunpack.c.l.b16 %v10879
        %v10954 = vunpack.c.l.b16 %v10893
        %v10955 = vunpack.c.l.b16 %v10903
        %v10956 = vpack.c.b16 %v10925, %v10924
        %v10957 = vpack.c.b16 %v10927, %v10926
        %v10958 = vpack.c.b16 %v10929, %v10928
        %v10959 = vpack.c.b16 %v10931, %v10930
        %v10960 = vpack.c.b16 %v10933, %v10932
        %v10961 = vpack.c.b16 %v10935, %v10934
        %v10962 = vpack.c.b16 %v10937, %v10936
        %v10963 = vpack.c.b16 %v10939, %v10938
        %v10964 = vpack.c.b16 %v10941, %v10940
        %v10965 = vpack.c.b16 %v10943, %v10942
        %v10966 = vpack.c.b16 %v10945, %v10944
        %v10967 = vpack.c.b16 %v10947, %v10946
        %v10968 = vpack.c.b16 %v10949, %v10948
        %v10969 = vpack.c.b16 %v10951, %v10950
        %v10970 = vpack.c.b16 %v10953, %v10952
        %v10971 = vpack.c.b16 %v10955, %v10954
        %v11004 = vunpack.c.l.b16 %v10904
        %v11005 = vunpack.c.l.b16 %v10905
        %v11006 = vunpack.c.l.b16 %v10906
        %v11007 = vunpack.c.l.b16 %v10907
        %v11008 = vunpack.c.l.b16 %v10908
        %v11009 = vunpack.c.l.b16 %v10909
        %v11010 = vunpack.c.l.b16 %v10910
        %v11011 = vunpack.c.l.b16 %v10911
        %v11012 = vunpack.c.l.b16 %v10912
        %v11013 = vunpack.c.l.b16 %v10913
        %v11014 = vunpack.c.l.b16 %v10914
        %v11015 = vunpack.c.l.b16 %v10915
        %v11016 = vunpack.c.l.b16 %v10916
        %v11017 = vunpack.c.l.b16 %v10917
        %v11018 = vunpack.c.l.b16 %v10918
        %v11019 = vunpack.c.l.b16 %v10919
        %v11020 = vpack.c.b16 %v11005, %v11004
        %v11021 = vpack.c.b16 %v11007, %v11006
        %v11022 = vpack.c.b16 %v11009, %v11008
        %v11023 = vpack.c.b16 %v11011, %v11010
        %v11024 = vpack.c.b16 %v11013, %v11012
        %v11025 = vpack.c.b16 %v11015, %v11014
        %v11026 = vpack.c.b16 %v11017, %v11016
        %v11027 = vpack.c.b16 %v11019, %v11018
        %11036 = vmatpush.bf16.msra.mxu0 %v11027
        %11037 = vmatpush.bf16.msra.mxu0 %v11026
        %11038 = vmatpush.bf16.msra.mxu0 %v11025
        %11039 = vmatpush.bf16.msra.mxu0 %v11024
        %11040 = vmatpush.bf16.msra.mxu0 %v11023
        %11041 = vmatpush.bf16.msra.mxu0 %v11022
        %11042 = vmatpush.bf16.msra.mxu0 %v11021
        %11043 = vmatpush.bf16.msra.mxu0 %v11020
        %11044 = vmatmul.bf16.gmra.mxu0 %v10956
        %v11045 = vpop.f32.mrf.mxu0
        %v11046 = vadd.f32 %v10922, %v11045
        %v11047 = vpop.f32.mrf.mxu0
        %v11048 = vadd.f32 %v10922, %v11047
        %11049 = vmatmul.bf16.gmra.mxu0 %v10957
        %v11050 = vpop.f32.mrf.mxu0
        %v11051 = vadd.f32 %v10922, %v11050
        %v11052 = vpop.f32.mrf.mxu0
        %v11053 = vadd.f32 %v10922, %v11052
        %11054 = vmatmul.bf16.gmra.mxu0 %v10958
        %v11055 = vpop.f32.mrf.mxu0
        %v11056 = vadd.f32 %v10922, %v11055
        %v11057 = vpop.f32.mrf.mxu0
        %v11058 = vadd.f32 %v10922, %v11057
        %11059 = vmatmul.bf16.gmra.mxu0 %v10959
        %v11060 = vpop.f32.mrf.mxu0
        %v11061 = vadd.f32 %v10922, %v11060
        %v11062 = vpop.f32.mrf.mxu0
        %v11063 = vadd.f32 %v10922, %v11062
        %11064 = vmatmul.bf16.gmra.mxu0 %v10960
        %v11065 = vpop.f32.mrf.mxu0
        %v11066 = vadd.f32 %v10922, %v11065
        %v11067 = vpop.f32.mrf.mxu0
        %v11068 = vadd.f32 %v10922, %v11067
        %11069 = vmatmul.bf16.gmra.mxu0 %v10961
        %v11070 = vpop.f32.mrf.mxu0
        %v11071 = vadd.f32 %v10922, %v11070
        %v11072 = vpop.f32.mrf.mxu0
        %v11073 = vadd.f32 %v10922, %v11072
        %11074 = vmatmul.bf16.gmra.mxu0 %v10962
        %v11075 = vpop.f32.mrf.mxu0
        %v11076 = vadd.f32 %v10922, %v11075
        %v11077 = vpop.f32.mrf.mxu0
        %v11078 = vadd.f32 %v10922, %v11077
        %11079 = vmatmul.bf16.gmra.mxu0 %v10963
        %v11080 = vpop.f32.mrf.mxu0
        %v11081 = vadd.f32 %v10922, %v11080
        %v11082 = vpop.f32.mrf.mxu0
        %v11083 = vadd.f32 %v10922, %v11082
        %11084 = vmatmul.bf16.gmra.mxu0 %v10964
        %v11085 = vpop.f32.mrf.mxu0
        %v11086 = vadd.f32 %v10922, %v11085
        %v11087 = vpop.f32.mrf.mxu0
        %v11088 = vadd.f32 %v10922, %v11087
        %11089 = vmatmul.bf16.gmra.mxu0 %v10965
        %v11090 = vpop.f32.mrf.mxu0
        %v11091 = vadd.f32 %v10922, %v11090
        %v11092 = vpop.f32.mrf.mxu0
        %v11093 = vadd.f32 %v10922, %v11092
        %11094 = vmatmul.bf16.gmra.mxu0 %v10966
        %v11095 = vpop.f32.mrf.mxu0
        %v11096 = vadd.f32 %v10922, %v11095
        %v11097 = vpop.f32.mrf.mxu0
        %v11098 = vadd.f32 %v10922, %v11097
        %11099 = vmatmul.bf16.gmra.mxu0 %v10967
        %v11100 = vpop.f32.mrf.mxu0
        %v11101 = vadd.f32 %v10922, %v11100
        %v11102 = vpop.f32.mrf.mxu0
        %v11103 = vadd.f32 %v10922, %v11102
        %11104 = vmatmul.bf16.gmra.mxu0 %v10968
        %v11105 = vpop.f32.mrf.mxu0
        %v11106 = vadd.f32 %v10922, %v11105
        %v11107 = vpop.f32.mrf.mxu0
        %v11108 = vadd.f32 %v10922, %v11107
        %11109 = vmatmul.bf16.gmra.mxu0 %v10969
        %v11110 = vpop.f32.mrf.mxu0
        %v11111 = vadd.f32 %v10922, %v11110
        %v11112 = vpop.f32.mrf.mxu0
        %v11113 = vadd.f32 %v10922, %v11112
        %11114 = vmatmul.bf16.gmra.mxu0 %v10970
        %v11115 = vpop.f32.mrf.mxu0
        %v11116 = vadd.f32 %v10922, %v11115
        %v11117 = vpop.f32.mrf.mxu0
        %v11118 = vadd.f32 %v10922, %v11117
        %11119 = vmatmul.bf16.gmra.mxu0 %v10971
        %v11120 = vpop.f32.mrf.mxu0
        %v11121 = vadd.f32 %v10922, %v11120
        %v11122 = vpop.f32.mrf.mxu0
        %v11123 = vadd.f32 %v10922, %v11122
        %11124 = vdwg.mxu0
        %v11125 = vadd.f32 %v10393, %v11046
        %v11126 = vadd.f32 %v10395, %v11048
        %v11127 = vadd.f32 %v10398, %v11051
        %v11128 = vadd.f32 %v10400, %v11053
        %v11129 = vadd.f32 %v10403, %v11056
        %v11130 = vadd.f32 %v10405, %v11058
        %v11131 = vadd.f32 %v10408, %v11061
        %v11132 = vadd.f32 %v10410, %v11063
        %v11133 = vadd.f32 %v10413, %v11066
        %v11134 = vadd.f32 %v10415, %v11068
        %v11135 = vadd.f32 %v10418, %v11071
        %v11136 = vadd.f32 %v10420, %v11073
        %v11137 = vadd.f32 %v10423, %v11076
        %v11138 = vadd.f32 %v10425, %v11078
        %v11139 = vadd.f32 %v10428, %v11081
        %v11140 = vadd.f32 %v10430, %v11083
        %v11141 = vadd.f32 %v10433, %v11086
        %v11142 = vadd.f32 %v10435, %v11088
        %v11143 = vadd.f32 %v10438, %v11091
        %v11144 = vadd.f32 %v10440, %v11093
        %v11145 = vadd.f32 %v10443, %v11096
        %v11146 = vadd.f32 %v10445, %v11098
        %v11147 = vadd.f32 %v10448, %v11101
        %v11148 = vadd.f32 %v10450, %v11103
        %v11149 = vadd.f32 %v10453, %v11106
        %v11150 = vadd.f32 %v10455, %v11108
        %v11151 = vadd.f32 %v10458, %v11111
        %v11152 = vadd.f32 %v10460, %v11113
        %v11153 = vadd.f32 %v10463, %v11116
        %v11154 = vadd.f32 %v10465, %v11118
        %v11155 = vadd.f32 %v10468, %v11121
        %v11156 = vadd.f32 %v10470, %v11123
        %v11157 = vmax.f32 %v11125, 0.0
        %v11158 = vmax.f32 %v11126, 0.0
        %v11159 = vmax.f32 %v11127, 0.0
        %v11160 = vmax.f32 %v11128, 0.0
        %v11161 = vmax.f32 %v11129, 0.0
        %v11162 = vmax.f32 %v11130, 0.0
        %v11163 = vmax.f32 %v11131, 0.0
        %v11164 = vmax.f32 %v11132, 0.0
        %v11165 = vmax.f32 %v11133, 0.0
        %v11166 = vmax.f32 %v11134, 0.0
        %v11167 = vmax.f32 %v11135, 0.0
        %v11168 = vmax.f32 %v11136, 0.0
        %v11169 = vmax.f32 %v11137, 0.0
        %v11170 = vmax.f32 %v11138, 0.0
        %v11171 = vmax.f32 %v11139, 0.0
        %v11172 = vmax.f32 %v11140, 0.0
        %v11173 = vmax.f32 %v11141, 0.0
        %v11174 = vmax.f32 %v11142, 0.0
        %v11175 = vmax.f32 %v11143, 0.0
        %v11176 = vmax.f32 %v11144, 0.0
        %v11177 = vmax.f32 %v11145, 0.0
        %v11178 = vmax.f32 %v11146, 0.0
        %v11179 = vmax.f32 %v11147, 0.0
        %v11180 = vmax.f32 %v11148, 0.0
        %v11181 = vmax.f32 %v11149, 0.0
        %v11182 = vmax.f32 %v11150, 0.0
        %v11183 = vmax.f32 %v11151, 0.0
        %v11184 = vmax.f32 %v11152, 0.0
        %v11185 = vmax.f32 %v11153, 0.0
        %v11186 = vmax.f32 %v11154, 0.0
        %v11187 = vmax.f32 %v11155, 0.0
        %v11188 = vmax.f32 %v11156, 0.0
        %v11189 = vpack.c.bf16 %v11157, %v11157
        %v11190 = vpack.c.bf16 %v11158, %v11158
        %v11191 = vpack.c.bf16 %v11159, %v11159
        %v11192 = vpack.c.bf16 %v11160, %v11160
        %v11193 = vpack.c.bf16 %v11161, %v11161
        %v11194 = vpack.c.bf16 %v11162, %v11162
        %v11195 = vpack.c.bf16 %v11163, %v11163
        %v11196 = vpack.c.bf16 %v11164, %v11164
        %v11197 = vpack.c.bf16 %v11165, %v11165
        %v11198 = vpack.c.bf16 %v11166, %v11166
        %v11199 = vpack.c.bf16 %v11167, %v11167
        %v11200 = vpack.c.bf16 %v11168, %v11168
        %v11201 = vpack.c.bf16 %v11169, %v11169
        %v11202 = vpack.c.bf16 %v11170, %v11170
        %v11203 = vpack.c.bf16 %v11171, %v11171
        %v11204 = vpack.c.bf16 %v11172, %v11172
        %v11205 = vpack.c.bf16 %v11173, %v11173
        %v11206 = vpack.c.bf16 %v11174, %v11174
        %v11207 = vpack.c.bf16 %v11175, %v11175
        %v11208 = vpack.c.bf16 %v11176, %v11176
        %v11209 = vpack.c.bf16 %v11177, %v11177
        %v11210 = vpack.c.bf16 %v11178, %v11178
        %v11211 = vpack.c.bf16 %v11179, %v11179
        %v11212 = vpack.c.bf16 %v11180, %v11180
        %v11213 = vpack.c.bf16 %v11181, %v11181
        %v11214 = vpack.c.bf16 %v11182, %v11182
        %v11215 = vpack.c.bf16 %v11183, %v11183
        %v11216 = vpack.c.bf16 %v11184, %v11184
        %v11217 = vpack.c.bf16 %v11185, %v11185
        %v11218 = vpack.c.bf16 %v11186, %v11186
        %v11219 = vpack.c.bf16 %v11187, %v11187
        %v11220 = vpack.c.bf16 %v11188, %v11188
        %11221 = vst [vmem:[%s288] sm:$0xf] %v11189
        %11222 = vst [vmem:[%s288 + $0x4] sm:$0xf] %v11190
        %11223 = vst [vmem:[%s288 + $0x8] sm:$0xf] %v11191
        %11224 = vst [vmem:[%s288 + $0xc] sm:$0xf] %v11192
        %11225 = vst [vmem:[%s288 + $0x10] sm:$0xf] %v11193
        %11226 = vst [vmem:[%s288 + $0x14] sm:$0xf] %v11194
        %11227 = vst [vmem:[%s288 + $0x18] sm:$0xf] %v11195
        %11228 = vst [vmem:[%s288 + $0x1c] sm:$0xf] %v11196
        %11229 = vst [vmem:[%s288 + $0x20] sm:$0xf] %v11197
        %11230 = vst [vmem:[%s288 + $0x24] sm:$0xf] %v11198
        %11231 = vst [vmem:[%s288 + $0x28] sm:$0xf] %v11199
        %11232 = vst [vmem:[%s288 + $0x2c] sm:$0xf] %v11200
        %11233 = vst [vmem:[%s288 + $0x30] sm:$0xf] %v11201
        %11234 = vst [vmem:[%s288 + $0x34] sm:$0xf] %v11202
        %11235 = vst [vmem:[%s288 + $0x38] sm:$0xf] %v11203
        %11236 = vst [vmem:[%s288 + $0x3c] sm:$0xf] %v11204
        %11237 = vst [vmem:[%s288 + $0x40] sm:$0xf] %v11205
        %11238 = vst [vmem:[%s288 + $0x44] sm:$0xf] %v11206
        %11239 = vst [vmem:[%s288 + $0x48] sm:$0xf] %v11207
        %11240 = vst [vmem:[%s288 + $0x4c] sm:$0xf] %v11208
        %11241 = vst [vmem:[%s288 + $0x50] sm:$0xf] %v11209
        %11242 = vst [vmem:[%s288 + $0x54] sm:$0xf] %v11210
        %11243 = vst [vmem:[%s288 + $0x58] sm:$0xf] %v11211
        %11244 = vst [vmem:[%s288 + $0x5c] sm:$0xf] %v11212
        %11245 = vst [vmem:[%s288 + $0x60] sm:$0xf] %v11213
        %11246 = vst [vmem:[%s288 + $0x64] sm:$0xf] %v11214
        %11247 = vst [vmem:[%s288 + $0x68] sm:$0xf] %v11215
        %11248 = vst [vmem:[%s288 + $0x6c] sm:$0xf] %v11216
        %11249 = vst [vmem:[%s288 + $0x70] sm:$0xf] %v11217
        %11250 = vst [vmem:[%s288 + $0x74] sm:$0xf] %v11218
        %11251 = vst [vmem:[%s288 + $0x78] sm:$0xf] %v11219
        %11252 = vst [vmem:[%s288 + $0x7c] sm:$0xf] %v11220
        %s11253 = sand.u32 %s182, 1
        %s11254 = scalar_lea.sflag [#allocation6], %s11253
        %s11255 = sand.u32 %s182, 1
        %s11256 = smul.addr %s11255, 128
        %s11257 = scalar_lea.vmem [#allocation7], %s11256
        // Predicated region
        $region53: #{tpu_custom_call.1} parent=47 // pred_check
          %p11258 = pneg %p192
        $region54: #{tpu_custom_call.1} parent=47 // pred_check_branch
          %11260 = sbr.rel (%p11258) target = $region56
        $region55: #{tpu_custom_call.1} parent=47 // pred_region
          %s11261 = smul.u32 32, %s22
          %11263 = vsyncadd %s11254, 0
          %s11264 = smul.addr %s11261, 4
          %s11265 = scalar_lea.hbm %s7, %s11264
          %s11266 = sshll.u32 %s11257, 4
          %s11267 = int_to_ptr.vmem [resolvable:$true] %s11266
          %s11268 = sshll.u32 %s11265, 4
          %s11269 = int_to_ptr.hbm [resolvable:$true] %s11268
          %11274 = dma.vmem_to_hbm [thread:$0]  %s11267, 2048, %s11269, %s11254, 64, 64, 4
        $region56: #{tpu_custom_call.1} parent=47 // pred_fallthru
          _
      $region48: #{tpu_custom_call.1} parent=5 // pred_fallthru
        _
      %p11275 = scmp.le.s32.totalorder 2, %s17
      // Predicated region
      $region57: #{tpu_custom_call.1} parent=5 // pred_check
        %p11276 = pneg %p11275
      $region58: #{tpu_custom_call.1} parent=5 // pred_check_branch
        %11278 = sbr.rel (%p11276) target = $region60
      $region59: #{tpu_custom_call.1} parent=5 // pred_region
        %s11279 = ssub.s32 %s17, 2
        // Predicated region
        $region61: #{tpu_custom_call.1} parent=59 // pred_check
          %p11280 = pneg %p198
        $region62: #{tpu_custom_call.1} parent=59 // pred_check_branch
          %11282 = sbr.rel (%p11280) target = $region64
        $region63: #{tpu_custom_call.1} parent=59 // pred_region
          %s11283 = sand.u32 %s183, 1
          %s11284 = scalar_lea.sflag [#allocation6], %s11283
          %s11285 = sand.u32 %s183, 1
          %s11286 = smul.addr %s11285, 128
          %s11287 = scalar_lea.vmem [#allocation7], %s11286
          %11289 = dma.done %s11284, 2048
        $region64: #{tpu_custom_call.1} parent=59 // pred_fallthru
          _
      $region60: #{tpu_custom_call.1} parent=5 // pred_fallthru
        _
    $region6: #{tpu_custom_call.1} parent=1 // loop_footer
      %s21 = sadd.s32 1, %s17
    $region7: #{tpu_custom_call.1} parent=1 // loop_footer_branch
      %16 = sbr.rel target = $region3
    $region8: #{tpu_custom_call.1} parent=1 // loop_exit
      _
    %11290 = vsyncpa [#allocation5], 1
    %s11291 = scalar_lea.sflag [#allocation5], 1
    %11292 = vsyncpa %s11291, 1
    %11293 = vsyncpa [#allocation6], 1
    %s11294 = scalar_lea.sflag [#allocation6], 1
    %11295 = vsyncpa %s11294, 1

</llo_original>
